<compile_context>
chip_gen: v6e
topology: v6e:2x2x1
jax: 0.10.0
libtpu: 0.0.40
codegen_flags: <defaults>
</compile_context>

<pallas_src>
import functools

import jax
import jax.numpy as jnp
from jax.experimental import pallas as pl
from jax.experimental.pallas import tpu as pltpu

EPS = 1e-5                     # nn.BatchNorm2d default
VMEM_BUDGET = 24 * 2**20       # conservative, fits v7x's 64 MiB physical VMEM


def _round_up(x, m):
    return (x + m - 1) // m * m


def _elu(y):
    # ELU(alpha=1); exp only sees clamped-negative inputs (no spurious inf).
    return jnp.where(y > 0.0, y, jnp.exp(jnp.minimum(y, 0.0)) - 1.0)


def _masked_bn(x, mask, inv_count, gamma, beta):
    # Training-mode BatchNorm over rows where mask == 1 (biased variance).
    # Folded into a per-channel scale/shift so the big slab only sees one FMA.
    xm = x * mask
    s1 = jnp.sum(xm, axis=0, keepdims=True)
    s2 = jnp.sum(xm * xm, axis=0, keepdims=True)       # mask is 0/1
    mean = s1 * inv_count
    var = jnp.maximum(s2 * inv_count - mean * mean, 0.0)
    scale = gamma * jax.lax.rsqrt(var + EPS)            # (1, C)
    shift = beta - mean * scale                         # (1, C)
    return x * scale + shift


def _make_fused_kernel(N, H, W, F, stride):
    Hp, Wp = H + 2, W + 2
    L = N * Hp * Wp                     # rows of the padded grid (output rows)
    Ho = (H - 1) // stride + 1
    Wo = (W - 1) // stride + 1
    inv_bn1 = 1.0 / float(N * H * W)    # conv1/BN1 domain: every unpadded pos
    inv_bn2 = 1.0 / float(N * Ho * Wo)  # conv2/BN2/BN_out domain: strided pos

    def kernel(x_ref, m_in_ref, m_out_ref,
               w1_ref, b1_ref, g1_ref, be1_ref,
               w2_ref, b2_ref, g2_ref, be2_ref,
               w3_ref, b3_ref, w4_ref, b4_ref,
               go_ref, beo_ref,
               o_ref, a1_ref):
        mask_in = m_in_ref[...]         # (Mpad, 1): 1.0 on interior rows
        mask_out = m_out_ref[...]       # (L, 1):    1.0 on stride-valid rows

        # ---- conv1 (1x1) + BN1 + ELU; zeroing border rows realises conv2's
        # ---- zero padding.
        y1 = jnp.dot(x_ref[...].astype(jnp.bfloat16), w1_ref[...],
                     preferred_element_type=jnp.float32) + b1_ref[...]
        a1 = _elu(_masked_bn(y1, mask_in, inv_bn1, g1_ref[...], be1_ref[...]))
        a1_ref[...] = a1 * mask_in

        # ---- conv2 (3x3, pad=1; stride folded into mask_out): 9 accumulated
        # ---- MXU matmuls over row-shifted views of the VMEM-resident buffer.
        acc = jnp.zeros((L, F), jnp.float32)
        for t in range(9):
            dh, dw = divmod(t, 3)
            a_tap = a1_ref[pl.ds(dh * Wp + dw, L), :].astype(jnp.bfloat16)
            acc = acc + jnp.dot(a_tap, w2_ref[t],
                                preferred_element_type=jnp.float32)
        y2 = acc + b2_ref[...]
        a2 = _elu(_masked_bn(y2, mask_out, inv_bn2, g2_ref[...], be2_ref[...]))

        # ---- conv3 (1x1).
        y3 = jnp.dot(a2.astype(jnp.bfloat16), w3_ref[...],
                     preferred_element_type=jnp.float32) + b3_ref[...]

        # ---- conv4 projection shortcut (1x1, stride): a +(Wp+1)-row shift
        # ---- aligns x[n, h, w] with padded-grid row (n, h+1, w+1).
        x_sc = x_ref[pl.ds(Wp + 1, L), :].astype(jnp.bfloat16)
        sc = jnp.dot(x_sc, w4_ref[...],
                     preferred_element_type=jnp.float32) + b4_ref[...]

        # ---- residual add + BN_out + ELU (stats over stride-valid rows only).
        z = y3 + sc
        o_ref[...] = _elu(_masked_bn(z, mask_out, inv_bn2,
                                     go_ref[...], beo_ref[...]))

    return kernel


def init_params(key, cin, f):
    """Deterministic synthetic parameters mirroring resconv_L.__init__ shapes."""
    ks = jax.random.split(key, 12)
    n = lambda k, shp, s=0.1: s * jax.random.normal(k, shp, dtype=jnp.float32)
    return {
        # conv1: conv(cin, f, k=1, s=1) = Conv2d + BN + ELU
        "w1": n(ks[0], (f, cin, 1, 1)), "b1": n(ks[1], (f,)),
        "g1": 1.0 + n(ks[2], (f,)), "be1": n(ks[3], (f,)),
        # conv2: conv(f, f, k=3, stride) = Conv2d + BN + ELU
        "w2": n(ks[4], (f, f, 3, 3)), "b2": n(ks[5], (f,)),
        "g2": 1.0 + n(ks[6], (f,)), "be2": n(ks[7], (f,)),
        # conv3: Conv2d(f, 4f, 1, 1)
        "w3": n(ks[8], (4 * f, f, 1, 1)), "b3": n(ks[9], (4 * f,)),
        # conv4: Conv2d(cin, 4f, 1, stride)
        "w4": n(ks[10], (4 * f, cin, 1, 1)), "b4": n(ks[11], (4 * f,)),
        # final BatchNorm2d(4f)
        "g_out": jnp.ones((4 * f,), jnp.float32),
        "be_out": jnp.zeros((4 * f,), jnp.float32),
    }


@functools.partial(jax.jit, static_argnames=("stride",))
def resconv_L_forward(x_nchw, params, stride):
    p = params
    N, Cin, H, W = x_nchw.shape
    F = p["b1"].shape[0]
    F4 = 4 * F
    Hp, Wp = H + 2, W + 2
    Ho = (H - 1) // stride + 1
    Wo = (W - 1) // stride + 1
    L = N * Hp * Wp                       # rows of the padded grid
    Mpad = _round_up(L + 2 * Wp + 2, 8)   # + room for the largest row shift
    Cin_p = _round_up(Cin, 8)             # MXU/lane-friendly K

    # Everything is VMEM-resident inside one pallas_call; guard the footprint
    # with a budget derived for v7x (64 MiB physical VMEM).
    vmem_est = 4 * (Mpad * (Cin_p + 2 * F + 1) + L * (F + 4 * F4 + 1))
    if vmem_est > VMEM_BUDGET:
        # TODO(synk): M-tiled two-phase (stats then normalize) path for big maps.
        raise NotImplementedError(
            f"fused resconv_L kernel would need ~{vmem_est >> 20} MiB VMEM")

    # NCHW -> NHWC, zero-pad H/W by 1 (conv2's padding), flatten to rows, pad
    # the channel dim to a multiple of 8 and append scratch rows for the shifts.
    x = jnp.transpose(x_nchw, (0, 2, 3, 1))
    xp = jnp.pad(x, ((0, 0), (1, 1), (1, 1), (0, Cin_p - Cin)))
    x_flat = jnp.pad(xp.reshape(L, Cin_p), ((0, Mpad - L), (0, 0)))

    # Row masks (0/1): interior rows (= conv1/BN1 domain and conv2's zero
    # padding), and stride-valid rows (= conv2/BN2/BN_out/output domain).
    mask_in = jnp.pad(jnp.ones((N, H, W, 1), jnp.float32),
                      ((0, 0), (1, 1), (1, 1), (0, 0))).reshape(L, 1)
    mask_in = jnp.pad(mask_in, ((0, Mpad - L), (0, 0)))
    h_ok = (jnp.arange(Hp) % stride == 0) & (jnp.arange(Hp) < Ho * stride)
    w_ok = (jnp.arange(Wp) % stride == 0) & (jnp.arange(Wp) < Wo * stride)
    mask2d = (h_ok[:, None] & w_ok[None, :]).astype(jnp.float32)
    mask_out = jnp.broadcast_to(mask2d[None], (N, Hp, Wp)).reshape(L, 1)

    # Weights in matmul layout, bf16 operands (f32 accumulation in-kernel).
    def mat1x1(w, k_pad):  # (O, I, 1, 1) -> (k_pad, O) bf16
        m = jnp.transpose(w[:, :, 0, 0], (1, 0))
        m = jnp.pad(m, ((0, k_pad - m.shape[0]), (0, 0)))
        return m.astype(jnp.bfloat16)

    w1 = mat1x1(p["w1"], Cin_p)                                     # (Cin_p, F)
    w4 = mat1x1(p["w4"], Cin_p)                                     # (Cin_p, 4F)
    w3 = mat1x1(p["w3"], F)                                         # (F, 4F)
    w2 = jnp.transpose(p["w2"], (2, 3, 1, 0)).reshape(9, F, F).astype(jnp.bfloat16)
    row = lambda v: v.reshape(1, -1).astype(jnp.float32)

    args = (x_flat, mask_in, mask_out,
            w1, row(p["b1"]), row(p["g1"]), row(p["be1"]),
            w2, row(p["b2"]), row(p["g2"]), row(p["be2"]),
            w3, row(p["b3"]), w4, row(p["b4"]),
            row(p["g_out"]), row(p["be_out"]))

    kernel = _make_fused_kernel(N, H, W, F, stride)
    out = pl.pallas_call(
        kernel,
        out_shape=jax.ShapeDtypeStruct((L, F4), jnp.float32),
        grid=(1,),
        in_specs=[pl.BlockSpec(a.shape, lambda i, nd=a.ndim: (0,) * nd)
                  for a in args],
        out_specs=pl.BlockSpec((L, F4), lambda i: (0, 0)),
        scratch_shapes=[pltpu.VMEM((Mpad, F), jnp.float32)],
        compiler_params=pltpu.CompilerParams(
            dimension_semantics=("arbitrary",),
            vmem_limit_bytes=32 * 2**20),
    )(*args)

    # Drop the padded border, apply the conv stride, back to NCHW.
    out = out.reshape(N, Hp, Wp, F4)[:, ::stride, ::stride, :][:, :Ho, :Wo, :]
    return jnp.transpose(out, (0, 3, 1, 2))


# ----------------------------------------------------------------------------
# Pure-JAX reference (same math as the PyTorch module in train() mode).
# Matmul operands are rounded to bf16 like the kernel so the comparison
# isolates structural bugs from the deliberate low-precision operand choice.
# ----------------------------------------------------------------------------
@functools.partial(jax.jit, static_argnames=("stride",))
def _ref_forward(x_nchw, p, stride):
    bf = lambda a: a.astype(jnp.bfloat16).astype(jnp.float32)
    elu = lambda h: jnp.where(h > 0, h, jnp.exp(jnp.minimum(h, 0.0)) - 1.0)

    def bn(h, g, be):
        m = jnp.mean(h, axis=(0, 1, 2))
        v = jnp.mean(jnp.square(h - m), axis=(0, 1, 2))
        return g * (h - m) * jax.lax.rsqrt(v + EPS) + be

    def conv1x1(h, w, b, s=1):
        return jnp.einsum("nhwc,oc->nhwo", bf(h[:, ::s, ::s, :]),
                          bf(w[:, :, 0, 0]), precision="highest") + b

    x = jnp.transpose(x_nchw, (0, 2, 3, 1))
    a1 = elu(bn(conv1x1(x, p["w1"], p["b1"]), p["g1"], p["be1"]))
    N, H, W, F = a1.shape
    Ho, Wo = (H - 1) // stride + 1, (W - 1) // stride + 1
    ap = jnp.pad(a1, ((0, 0), (1, 1), (1, 1), (0, 0)))
    y2 = jnp.zeros((N, Ho, Wo, F), jnp.float32)
    for dh in range(3):
        for dw in range(3):
            sub = ap[:, dh:dh + (Ho - 1) * stride + 1:stride,
                     dw:dw + (Wo - 1) * stride + 1:stride, :]
            y2 = y2 + jnp.einsum("nhwc,oc->nhwo", bf(sub),
                                 bf(p["w2"][:, :, dh, dw]), precision="highest")
    a2 = elu(bn(y2 + p["b2"], p["g2"], p["be2"]))
    y3 = conv1x1(a2, p["w3"], p["b3"])
    sc = conv1x1(x, p["w4"], p["b4"], s=stride)
    out = elu(bn(y3 + sc, p["g_out"], p["be_out"]))
    return jnp.transpose(out, (0, 3, 1, 2))


if __name__ == "__main__":
    key = jax.random.PRNGKey(0)
    k_x, k_p = jax.random.split(key)

    N, Cin, H, W = 2, 4, 16, 16
    num_out_layers = 8
    stride = 2

    x = jax.random.normal(k_x, (N, Cin, H, W), dtype=jnp.float32)
    params = init_params(k_p, Cin, num_out_layers)

    out = resconv_L_forward(x, params, stride)
    out = jax.block_until_ready(out)

    expected_shape = (N, 4 * num_out_layers, H // stride, W // stride)
    assert out.shape == expected_shape, (out.shape, expected_shape)
    assert bool(jnp.all(jnp.isfinite(out)))

    ref = _ref_forward(x, params, stride)
    max_err = float(jnp.max(jnp.abs(out - ref)))
    assert bool(jnp.allclose(out, ref, atol=2e-2, rtol=2e-2)), max_err

    print("KERNEL_OK")
</pallas_src>

<mosaic_0001>
module attributes {stable_mosaic.version = 11 : i64} {
  func.func @kernel(%arg0: i32, %arg1: memref<688x8xf32, #tpu.memory_space<vmem>>, %arg2: memref<688x1xf32, #tpu.memory_space<vmem>>, %arg3: memref<648x1xf32, #tpu.memory_space<vmem>>, %arg4: memref<8x8xbf16, #tpu.memory_space<vmem>>, %arg5: memref<1x8xf32, #tpu.memory_space<vmem>>, %arg6: memref<1x8xf32, #tpu.memory_space<vmem>>, %arg7: memref<1x8xf32, #tpu.memory_space<vmem>>, %arg8: memref<9x8x8xbf16, #tpu.memory_space<vmem>>, %arg9: memref<1x8xf32, #tpu.memory_space<vmem>>, %arg10: memref<1x8xf32, #tpu.memory_space<vmem>>, %arg11: memref<1x8xf32, #tpu.memory_space<vmem>>, %arg12: memref<8x32xbf16, #tpu.memory_space<vmem>>, %arg13: memref<1x32xf32, #tpu.memory_space<vmem>>, %arg14: memref<8x32xbf16, #tpu.memory_space<vmem>>, %arg15: memref<1x32xf32, #tpu.memory_space<vmem>>, %arg16: memref<1x32xf32, #tpu.memory_space<vmem>>, %arg17: memref<1x32xf32, #tpu.memory_space<vmem>>, %arg18: memref<648x32xf32, #tpu.memory_space<vmem>>, %arg19: memref<688x8xf32, #tpu.memory_space<vmem>>) attributes {dimension_semantics = [#tpu.dimension_semantics<arbitrary>], iteration_bounds = array<i64: 1>, scalar_prefetch = 0 : i64, scratch_operands = 1 : i64, tpu.core_type = #tpu.core_type<tc>, window_params = [{pipeline_mode = #tpu.pipeline_mode<synchronous>, transform_indices = @transform_0, window_bounds = array<i64: 688, 8>}, {pipeline_mode = #tpu.pipeline_mode<synchronous>, transform_indices = @transform_1, window_bounds = array<i64: 688, 1>}, {pipeline_mode = #tpu.pipeline_mode<synchronous>, transform_indices = @transform_2, window_bounds = array<i64: 648, 1>}, {pipeline_mode = #tpu.pipeline_mode<synchronous>, transform_indices = @transform_3, window_bounds = array<i64: 8, 8>}, {pipeline_mode = #tpu.pipeline_mode<synchronous>, transform_indices = @transform_4, window_bounds = array<i64: 1, 8>}, {pipeline_mode = #tpu.pipeline_mode<synchronous>, transform_indices = @transform_5, window_bounds = array<i64: 1, 8>}, {pipeline_mode = #tpu.pipeline_mode<synchronous>, transform_indices = @transform_6, window_bounds = array<i64: 1, 8>}, {pipeline_mode = #tpu.pipeline_mode<synchronous>, transform_indices = @transform_7, window_bounds = array<i64: 9, 8, 8>}, {pipeline_mode = #tpu.pipeline_mode<synchronous>, transform_indices = @transform_8, window_bounds = array<i64: 1, 8>}, {pipeline_mode = #tpu.pipeline_mode<synchronous>, transform_indices = @transform_9, window_bounds = array<i64: 1, 8>}, {pipeline_mode = #tpu.pipeline_mode<synchronous>, transform_indices = @transform_10, window_bounds = array<i64: 1, 8>}, {pipeline_mode = #tpu.pipeline_mode<synchronous>, transform_indices = @transform_11, window_bounds = array<i64: 8, 32>}, {pipeline_mode = #tpu.pipeline_mode<synchronous>, transform_indices = @transform_12, window_bounds = array<i64: 1, 32>}, {pipeline_mode = #tpu.pipeline_mode<synchronous>, transform_indices = @transform_13, window_bounds = array<i64: 8, 32>}, {pipeline_mode = #tpu.pipeline_mode<synchronous>, transform_indices = @transform_14, window_bounds = array<i64: 1, 32>}, {pipeline_mode = #tpu.pipeline_mode<synchronous>, transform_indices = @transform_15, window_bounds = array<i64: 1, 32>}, {pipeline_mode = #tpu.pipeline_mode<synchronous>, transform_indices = @transform_16, window_bounds = array<i64: 1, 32>}, {pipeline_mode = #tpu.pipeline_mode<synchronous>, transform_indices = @transform_17, window_bounds = array<i64: 648, 32>}]} {
    %c0 = arith.constant 0 : index
    %c0_0 = arith.constant 0 : index
    %0 = vector.load %arg2[%c0, %c0_0] : memref<688x1xf32, #tpu.memory_space<vmem>>, vector<688x1xf32>
    %c0_1 = arith.constant 0 : index
    %c0_2 = arith.constant 0 : index
    %1 = vector.load %arg3[%c0_1, %c0_2] : memref<648x1xf32, #tpu.memory_space<vmem>>, vector<648x1xf32>
    %c0_3 = arith.constant 0 : index
    %c0_4 = arith.constant 0 : index
    %2 = vector.load %arg1[%c0_3, %c0_4] : memref<688x8xf32, #tpu.memory_space<vmem>>, vector<688x8xf32>
    %3 = arith.truncf %2 : vector<688x8xf32> to vector<688x8xbf16>
    %c0_5 = arith.constant 0 : index
    %c0_6 = arith.constant 0 : index
    %4 = vector.load %arg4[%c0_5, %c0_6] : memref<8x8xbf16, #tpu.memory_space<vmem>>, vector<8x8xbf16>
    %cst = arith.constant dense<0.000000e+00> : vector<688x8xf32>
    %5 = tpu.matmul %3, %4, %cst {dimension_numbers = #tpu.dot_dimension_numbers<[1], [0], [0], [1], [0, 0, 1, 1], [], []>} : vector<688x8xbf16>, vector<8x8xbf16>, vector<688x8xf32> -> vector<688x8xf32>
    %c0_7 = arith.constant 0 : index
    %c0_8 = arith.constant 0 : index
    %6 = vector.load %arg5[%c0_7, %c0_8] : memref<1x8xf32, #tpu.memory_space<vmem>>, vector<1x8xf32>
    %7 = vector.broadcast %6 : vector<1x8xf32> to vector<688x8xf32>
    %8 = arith.addf %5, %7 : vector<688x8xf32>
    %c0_9 = arith.constant 0 : index
    %c0_10 = arith.constant 0 : index
    %9 = vector.load %arg6[%c0_9, %c0_10] : memref<1x8xf32, #tpu.memory_space<vmem>>, vector<1x8xf32>
    %c0_11 = arith.constant 0 : index
    %c0_12 = arith.constant 0 : index
    %10 = vector.load %arg7[%c0_11, %c0_12] : memref<1x8xf32, #tpu.memory_space<vmem>>, vector<1x8xf32>
    %11 = vector.broadcast %0 : vector<688x1xf32> to vector<688x8xf32>
    %12 = arith.mulf %8, %11 : vector<688x8xf32>
    %cst_13 = arith.constant dense<0.000000e+00> : vector<8xf32>
    %13 = vector.multi_reduction <add>, %12, %cst_13 [0] : vector<688x8xf32> to vector<8xf32>
    %14 = vector.shape_cast %13 : vector<8xf32> to vector<1x8xf32>
    %15 = arith.mulf %12, %12 : vector<688x8xf32>
    %cst_14 = arith.constant dense<0.000000e+00> : vector<8xf32>
    %16 = vector.multi_reduction <add>, %15, %cst_14 [0] : vector<688x8xf32> to vector<8xf32>
    %17 = vector.shape_cast %16 : vector<8xf32> to vector<1x8xf32>
    %cst_15 = arith.constant 0.001953125 : f32
    %18 = vector.broadcast %cst_15 : f32 to vector<1x8xf32>
    %19 = arith.mulf %14, %18 : vector<1x8xf32>
    %cst_16 = arith.constant 0.001953125 : f32
    %20 = vector.broadcast %cst_16 : f32 to vector<1x8xf32>
    %21 = arith.mulf %17, %20 : vector<1x8xf32>
    %22 = arith.mulf %19, %19 : vector<1x8xf32>
    %23 = arith.subf %21, %22 : vector<1x8xf32>
    %cst_17 = arith.constant 0.000000e+00 : f32
    %24 = vector.broadcast %cst_17 : f32 to vector<1x8xf32>
    %25 = arith.maximumf %23, %24 : vector<1x8xf32>
    %cst_18 = arith.constant 9.99999974E-6 : f32
    %26 = vector.broadcast %cst_18 : f32 to vector<1x8xf32>
    %27 = arith.addf %25, %26 : vector<1x8xf32>
    %28 = math.rsqrt %27 : vector<1x8xf32>
    %29 = arith.mulf %9, %28 : vector<1x8xf32>
    %30 = arith.mulf %19, %29 : vector<1x8xf32>
    %31 = arith.subf %10, %30 : vector<1x8xf32>
    %32 = vector.broadcast %29 : vector<1x8xf32> to vector<688x8xf32>
    %33 = arith.mulf %8, %32 : vector<688x8xf32>
    %34 = vector.broadcast %31 : vector<1x8xf32> to vector<688x8xf32>
    %35 = arith.addf %33, %34 : vector<688x8xf32>
    %cst_19 = arith.constant 0.000000e+00 : f32
    %36 = vector.broadcast %cst_19 : f32 to vector<688x8xf32>
    %37 = arith.cmpf ogt, %35, %36 : vector<688x8xf32>
    %cst_20 = arith.constant 0.000000e+00 : f32
    %38 = vector.broadcast %cst_20 : f32 to vector<688x8xf32>
    %39 = arith.minimumf %35, %38 : vector<688x8xf32>
    %40 = math.exp %39 : vector<688x8xf32>
    %cst_21 = arith.constant 1.000000e+00 : f32
    %41 = vector.broadcast %cst_21 : f32 to vector<688x8xf32>
    %42 = arith.subf %40, %41 : vector<688x8xf32>
    %43 = arith.select %37, %35, %42 : vector<688x8xi1>, vector<688x8xf32>
    %44 = vector.broadcast %0 : vector<688x1xf32> to vector<688x8xf32>
    %45 = arith.mulf %43, %44 : vector<688x8xf32>
    %c0_22 = arith.constant 0 : index
    %c0_23 = arith.constant 0 : index
    %46 = vector.load %arg19[%c0_22, %c0_23] : memref<688x8xf32, #tpu.memory_space<vmem>>, vector<688x8xf32>
    tpu.vector_store %arg19[%c0_22, %c0_23], %45 {strides = array<i32>} : memref<688x8xf32, #tpu.memory_space<vmem>>, vector<688x8xf32>,
    %cst_24 = arith.constant 0.000000e+00 : f32
    %47 = vector.broadcast %cst_24 : f32 to vector<648x8xf32>
    %c0_25 = arith.constant 0 : index
    %c0_26 = arith.constant 0 : index
    %48 = vector.load %arg19[%c0_25, %c0_26] : memref<688x8xf32, #tpu.memory_space<vmem>>, vector<648x8xf32>
    %49 = arith.truncf %48 : vector<648x8xf32> to vector<648x8xbf16>
    %c0_27 = arith.constant 0 : index
    %c0_28 = arith.constant 0 : index
    %c0_29 = arith.constant 0 : index
    %50 = vector.load %arg8[%c0_27, %c0_28, %c0_29] : memref<9x8x8xbf16, #tpu.memory_space<vmem>>, vector<1x8x8xbf16>
    %51 = vector.shape_cast %50 : vector<1x8x8xbf16> to vector<8x8xbf16>
    %cst_30 = arith.constant dense<0.000000e+00> : vector<648x8xf32>
    %52 = tpu.matmul %49, %51, %cst_30 {dimension_numbers = #tpu.dot_dimension_numbers<[1], [0], [0], [1], [0, 0, 1, 1], [], []>} : vector<648x8xbf16>, vector<8x8xbf16>, vector<648x8xf32> -> vector<648x8xf32>
    %53 = arith.addf %47, %52 : vector<648x8xf32>
    %c1 = arith.constant 1 : index
    %c0_31 = arith.constant 0 : index
    %54 = vector.load %arg19[%c1, %c0_31] : memref<688x8xf32, #tpu.memory_space<vmem>>, vector<648x8xf32>
    %55 = arith.truncf %54 : vector<648x8xf32> to vector<648x8xbf16>
    %c1_32 = arith.constant 1 : index
    %c0_33 = arith.constant 0 : index
    %c0_34 = arith.constant 0 : index
    %56 = vector.load %arg8[%c1_32, %c0_33, %c0_34] : memref<9x8x8xbf16, #tpu.memory_space<vmem>>, vector<1x8x8xbf16>
    %57 = vector.shape_cast %56 : vector<1x8x8xbf16> to vector<8x8xbf16>
    %cst_35 = arith.constant dense<0.000000e+00> : vector<648x8xf32>
    %58 = tpu.matmul %55, %57, %cst_35 {dimension_numbers = #tpu.dot_dimension_numbers<[1], [0], [0], [1], [0, 0, 1, 1], [], []>} : vector<648x8xbf16>, vector<8x8xbf16>, vector<648x8xf32> -> vector<648x8xf32>
    %59 = arith.addf %53, %58 : vector<648x8xf32>
    %c2 = arith.constant 2 : index
    %c0_36 = arith.constant 0 : index
    %60 = vector.load %arg19[%c2, %c0_36] : memref<688x8xf32, #tpu.memory_space<vmem>>, vector<648x8xf32>
    %61 = arith.truncf %60 : vector<648x8xf32> to vector<648x8xbf16>
    %c2_37 = arith.constant 2 : index
    %c0_38 = arith.constant 0 : index
    %c0_39 = arith.constant 0 : index
    %62 = vector.load %arg8[%c2_37, %c0_38, %c0_39] : memref<9x8x8xbf16, #tpu.memory_space<vmem>>, vector<1x8x8xbf16>
    %63 = vector.shape_cast %62 : vector<1x8x8xbf16> to vector<8x8xbf16>
    %cst_40 = arith.constant dense<0.000000e+00> : vector<648x8xf32>
    %64 = tpu.matmul %61, %63, %cst_40 {dimension_numbers = #tpu.dot_dimension_numbers<[1], [0], [0], [1], [0, 0, 1, 1], [], []>} : vector<648x8xbf16>, vector<8x8xbf16>, vector<648x8xf32> -> vector<648x8xf32>
    %65 = arith.addf %59, %64 : vector<648x8xf32>
    %c18 = arith.constant 18 : index
    %c0_41 = arith.constant 0 : index
    %66 = vector.load %arg19[%c18, %c0_41] : memref<688x8xf32, #tpu.memory_space<vmem>>, vector<648x8xf32>
    %67 = arith.truncf %66 : vector<648x8xf32> to vector<648x8xbf16>
    %c3 = arith.constant 3 : index
    %c0_42 = arith.constant 0 : index
    %c0_43 = arith.constant 0 : index
    %68 = vector.load %arg8[%c3, %c0_42, %c0_43] : memref<9x8x8xbf16, #tpu.memory_space<vmem>>, vector<1x8x8xbf16>
    %69 = vector.shape_cast %68 : vector<1x8x8xbf16> to vector<8x8xbf16>
    %cst_44 = arith.constant dense<0.000000e+00> : vector<648x8xf32>
    %70 = tpu.matmul %67, %69, %cst_44 {dimension_numbers = #tpu.dot_dimension_numbers<[1], [0], [0], [1], [0, 0, 1, 1], [], []>} : vector<648x8xbf16>, vector<8x8xbf16>, vector<648x8xf32> -> vector<648x8xf32>
    %71 = arith.addf %65, %70 : vector<648x8xf32>
    %c19 = arith.constant 19 : index
    %c0_45 = arith.constant 0 : index
    %72 = vector.load %arg19[%c19, %c0_45] : memref<688x8xf32, #tpu.memory_space<vmem>>, vector<648x8xf32>
    %73 = arith.truncf %72 : vector<648x8xf32> to vector<648x8xbf16>
    %c4 = arith.constant 4 : index
    %c0_46 = arith.constant 0 : index
    %c0_47 = arith.constant 0 : index
    %74 = vector.load %arg8[%c4, %c0_46, %c0_47] : memref<9x8x8xbf16, #tpu.memory_space<vmem>>, vector<1x8x8xbf16>
    %75 = vector.shape_cast %74 : vector<1x8x8xbf16> to vector<8x8xbf16>
    %cst_48 = arith.constant dense<0.000000e+00> : vector<648x8xf32>
    %76 = tpu.matmul %73, %75, %cst_48 {dimension_numbers = #tpu.dot_dimension_numbers<[1], [0], [0], [1], [0, 0, 1, 1], [], []>} : vector<648x8xbf16>, vector<8x8xbf16>, vector<648x8xf32> -> vector<648x8xf32>
    %77 = arith.addf %71, %76 : vector<648x8xf32>
    %c20 = arith.constant 20 : index
    %c0_49 = arith.constant 0 : index
    %78 = vector.load %arg19[%c20, %c0_49] : memref<688x8xf32, #tpu.memory_space<vmem>>, vector<648x8xf32>
    %79 = arith.truncf %78 : vector<648x8xf32> to vector<648x8xbf16>
    %c5 = arith.constant 5 : index
    %c0_50 = arith.constant 0 : index
    %c0_51 = arith.constant 0 : index
    %80 = vector.load %arg8[%c5, %c0_50, %c0_51] : memref<9x8x8xbf16, #tpu.memory_space<vmem>>, vector<1x8x8xbf16>
    %81 = vector.shape_cast %80 : vector<1x8x8xbf16> to vector<8x8xbf16>
    %cst_52 = arith.constant dense<0.000000e+00> : vector<648x8xf32>
    %82 = tpu.matmul %79, %81, %cst_52 {dimension_numbers = #tpu.dot_dimension_numbers<[1], [0], [0], [1], [0, 0, 1, 1], [], []>} : vector<648x8xbf16>, vector<8x8xbf16>, vector<648x8xf32> -> vector<648x8xf32>
    %83 = arith.addf %77, %82 : vector<648x8xf32>
    %c36 = arith.constant 36 : index
    %c0_53 = arith.constant 0 : index
    %84 = vector.load %arg19[%c36, %c0_53] : memref<688x8xf32, #tpu.memory_space<vmem>>, vector<648x8xf32>
    %85 = arith.truncf %84 : vector<648x8xf32> to vector<648x8xbf16>
    %c6 = arith.constant 6 : index
    %c0_54 = arith.constant 0 : index
    %c0_55 = arith.constant 0 : index
    %86 = vector.load %arg8[%c6, %c0_54, %c0_55] : memref<9x8x8xbf16, #tpu.memory_space<vmem>>, vector<1x8x8xbf16>
    %87 = vector.shape_cast %86 : vector<1x8x8xbf16> to vector<8x8xbf16>
    %cst_56 = arith.constant dense<0.000000e+00> : vector<648x8xf32>
    %88 = tpu.matmul %85, %87, %cst_56 {dimension_numbers = #tpu.dot_dimension_numbers<[1], [0], [0], [1], [0, 0, 1, 1], [], []>} : vector<648x8xbf16>, vector<8x8xbf16>, vector<648x8xf32> -> vector<648x8xf32>
    %89 = arith.addf %83, %88 : vector<648x8xf32>
    %c37 = arith.constant 37 : index
    %c0_57 = arith.constant 0 : index
    %90 = vector.load %arg19[%c37, %c0_57] : memref<688x8xf32, #tpu.memory_space<vmem>>, vector<648x8xf32>
    %91 = arith.truncf %90 : vector<648x8xf32> to vector<648x8xbf16>
    %c7 = arith.constant 7 : index
    %c0_58 = arith.constant 0 : index
    %c0_59 = arith.constant 0 : index
    %92 = vector.load %arg8[%c7, %c0_58, %c0_59] : memref<9x8x8xbf16, #tpu.memory_space<vmem>>, vector<1x8x8xbf16>
    %93 = vector.shape_cast %92 : vector<1x8x8xbf16> to vector<8x8xbf16>
    %cst_60 = arith.constant dense<0.000000e+00> : vector<648x8xf32>
    %94 = tpu.matmul %91, %93, %cst_60 {dimension_numbers = #tpu.dot_dimension_numbers<[1], [0], [0], [1], [0, 0, 1, 1], [], []>} : vector<648x8xbf16>, vector<8x8xbf16>, vector<648x8xf32> -> vector<648x8xf32>
    %95 = arith.addf %89, %94 : vector<648x8xf32>
    %c38 = arith.constant 38 : index
    %c0_61 = arith.constant 0 : index
    %96 = vector.load %arg19[%c38, %c0_61] : memref<688x8xf32, #tpu.memory_space<vmem>>, vector<648x8xf32>
    %97 = arith.truncf %96 : vector<648x8xf32> to vector<648x8xbf16>
    %c8 = arith.constant 8 : index
    %c0_62 = arith.constant 0 : index
    %c0_63 = arith.constant 0 : index
    %98 = vector.load %arg8[%c8, %c0_62, %c0_63] : memref<9x8x8xbf16, #tpu.memory_space<vmem>>, vector<1x8x8xbf16>
    %99 = vector.shape_cast %98 : vector<1x8x8xbf16> to vector<8x8xbf16>
    %cst_64 = arith.constant dense<0.000000e+00> : vector<648x8xf32>
    %100 = tpu.matmul %97, %99, %cst_64 {dimension_numbers = #tpu.dot_dimension_numbers<[1], [0], [0], [1], [0, 0, 1, 1], [], []>} : vector<648x8xbf16>, vector<8x8xbf16>, vector<648x8xf32> -> vector<648x8xf32>
    %101 = arith.addf %95, %100 : vector<648x8xf32>
    %c0_65 = arith.constant 0 : index
    %c0_66 = arith.constant 0 : index
    %102 = vector.load %arg9[%c0_65, %c0_66] : memref<1x8xf32, #tpu.memory_space<vmem>>, vector<1x8xf32>
    %103 = vector.broadcast %102 : vector<1x8xf32> to vector<648x8xf32>
    %104 = arith.addf %101, %103 : vector<648x8xf32>
    %c0_67 = arith.constant 0 : index
    %c0_68 = arith.constant 0 : index
    %105 = vector.load %arg10[%c0_67, %c0_68] : memref<1x8xf32, #tpu.memory_space<vmem>>, vector<1x8xf32>
    %c0_69 = arith.constant 0 : index
    %c0_70 = arith.constant 0 : index
    %106 = vector.load %arg11[%c0_69, %c0_70] : memref<1x8xf32, #tpu.memory_space<vmem>>, vector<1x8xf32>
    %107 = vector.broadcast %1 : vector<648x1xf32> to vector<648x8xf32>
    %108 = arith.mulf %104, %107 : vector<648x8xf32>
    %cst_71 = arith.constant dense<0.000000e+00> : vector<8xf32>
    %109 = vector.multi_reduction <add>, %108, %cst_71 [0] : vector<648x8xf32> to vector<8xf32>
    %110 = vector.shape_cast %109 : vector<8xf32> to vector<1x8xf32>
    %111 = arith.mulf %108, %108 : vector<648x8xf32>
    %cst_72 = arith.constant dense<0.000000e+00> : vector<8xf32>
    %112 = vector.multi_reduction <add>, %111, %cst_72 [0] : vector<648x8xf32> to vector<8xf32>
    %113 = vector.shape_cast %112 : vector<8xf32> to vector<1x8xf32>
    %cst_73 = arith.constant 7.812500e-03 : f32
    %114 = vector.broadcast %cst_73 : f32 to vector<1x8xf32>
    %115 = arith.mulf %110, %114 : vector<1x8xf32>
    %cst_74 = arith.constant 7.812500e-03 : f32
    %116 = vector.broadcast %cst_74 : f32 to vector<1x8xf32>
    %117 = arith.mulf %113, %116 : vector<1x8xf32>
    %118 = arith.mulf %115, %115 : vector<1x8xf32>
    %119 = arith.subf %117, %118 : vector<1x8xf32>
    %cst_75 = arith.constant 0.000000e+00 : f32
    %120 = vector.broadcast %cst_75 : f32 to vector<1x8xf32>
    %121 = arith.maximumf %119, %120 : vector<1x8xf32>
    %cst_76 = arith.constant 9.99999974E-6 : f32
    %122 = vector.broadcast %cst_76 : f32 to vector<1x8xf32>
    %123 = arith.addf %121, %122 : vector<1x8xf32>
    %124 = math.rsqrt %123 : vector<1x8xf32>
    %125 = arith.mulf %105, %124 : vector<1x8xf32>
    %126 = arith.mulf %115, %125 : vector<1x8xf32>
    %127 = arith.subf %106, %126 : vector<1x8xf32>
    %128 = vector.broadcast %125 : vector<1x8xf32> to vector<648x8xf32>
    %129 = arith.mulf %104, %128 : vector<648x8xf32>
    %130 = vector.broadcast %127 : vector<1x8xf32> to vector<648x8xf32>
    %131 = arith.addf %129, %130 : vector<648x8xf32>
    %cst_77 = arith.constant 0.000000e+00 : f32
    %132 = vector.broadcast %cst_77 : f32 to vector<648x8xf32>
    %133 = arith.cmpf ogt, %131, %132 : vector<648x8xf32>
    %cst_78 = arith.constant 0.000000e+00 : f32
    %134 = vector.broadcast %cst_78 : f32 to vector<648x8xf32>
    %135 = arith.minimumf %131, %134 : vector<648x8xf32>
    %136 = math.exp %135 : vector<648x8xf32>
    %cst_79 = arith.constant 1.000000e+00 : f32
    %137 = vector.broadcast %cst_79 : f32 to vector<648x8xf32>
    %138 = arith.subf %136, %137 : vector<648x8xf32>
    %139 = arith.select %133, %131, %138 : vector<648x8xi1>, vector<648x8xf32>
    %140 = arith.truncf %139 : vector<648x8xf32> to vector<648x8xbf16>
    %c0_80 = arith.constant 0 : index
    %c0_81 = arith.constant 0 : index
    %141 = vector.load %arg12[%c0_80, %c0_81] : memref<8x32xbf16, #tpu.memory_space<vmem>>, vector<8x32xbf16>
    %cst_82 = arith.constant dense<0.000000e+00> : vector<648x32xf32>
    %142 = tpu.matmul %140, %141, %cst_82 {dimension_numbers = #tpu.dot_dimension_numbers<[1], [0], [0], [1], [0, 0, 1, 1], [], []>} : vector<648x8xbf16>, vector<8x32xbf16>, vector<648x32xf32> -> vector<648x32xf32>
    %c0_83 = arith.constant 0 : index
    %c0_84 = arith.constant 0 : index
    %143 = vector.load %arg13[%c0_83, %c0_84] : memref<1x32xf32, #tpu.memory_space<vmem>>, vector<1x32xf32>
    %144 = vector.broadcast %143 : vector<1x32xf32> to vector<648x32xf32>
    %145 = arith.addf %142, %144 : vector<648x32xf32>
    %c19_85 = arith.constant 19 : index
    %c0_86 = arith.constant 0 : index
    %146 = vector.load %arg1[%c19_85, %c0_86] : memref<688x8xf32, #tpu.memory_space<vmem>>, vector<648x8xf32>
    %147 = arith.truncf %146 : vector<648x8xf32> to vector<648x8xbf16>
    %c0_87 = arith.constant 0 : index
    %c0_88 = arith.constant 0 : index
    %148 = vector.load %arg14[%c0_87, %c0_88] : memref<8x32xbf16, #tpu.memory_space<vmem>>, vector<8x32xbf16>
    %cst_89 = arith.constant dense<0.000000e+00> : vector<648x32xf32>
    %149 = tpu.matmul %147, %148, %cst_89 {dimension_numbers = #tpu.dot_dimension_numbers<[1], [0], [0], [1], [0, 0, 1, 1], [], []>} : vector<648x8xbf16>, vector<8x32xbf16>, vector<648x32xf32> -> vector<648x32xf32>
    %c0_90 = arith.constant 0 : index
    %c0_91 = arith.constant 0 : index
    %150 = vector.load %arg15[%c0_90, %c0_91] : memref<1x32xf32, #tpu.memory_space<vmem>>, vector<1x32xf32>
    %151 = vector.broadcast %150 : vector<1x32xf32> to vector<648x32xf32>
    %152 = arith.addf %149, %151 : vector<648x32xf32>
    %153 = arith.addf %145, %152 : vector<648x32xf32>
    %c0_92 = arith.constant 0 : index
    %c0_93 = arith.constant 0 : index
    %154 = vector.load %arg16[%c0_92, %c0_93] : memref<1x32xf32, #tpu.memory_space<vmem>>, vector<1x32xf32>
    %c0_94 = arith.constant 0 : index
    %c0_95 = arith.constant 0 : index
    %155 = vector.load %arg17[%c0_94, %c0_95] : memref<1x32xf32, #tpu.memory_space<vmem>>, vector<1x32xf32>
    %156 = vector.broadcast %1 : vector<648x1xf32> to vector<648x32xf32>
    %157 = arith.mulf %153, %156 : vector<648x32xf32>
    %cst_96 = arith.constant dense<0.000000e+00> : vector<32xf32>
    %158 = vector.multi_reduction <add>, %157, %cst_96 [0] : vector<648x32xf32> to vector<32xf32>
    %159 = vector.shape_cast %158 : vector<32xf32> to vector<1x32xf32>
    %160 = arith.mulf %157, %157 : vector<648x32xf32>
    %cst_97 = arith.constant dense<0.000000e+00> : vector<32xf32>
    %161 = vector.multi_reduction <add>, %160, %cst_97 [0] : vector<648x32xf32> to vector<32xf32>
    %162 = vector.shape_cast %161 : vector<32xf32> to vector<1x32xf32>
    %cst_98 = arith.constant 7.812500e-03 : f32
    %163 = vector.broadcast %cst_98 : f32 to vector<1x32xf32>
    %164 = arith.mulf %159, %163 : vector<1x32xf32>
    %cst_99 = arith.constant 7.812500e-03 : f32
    %165 = vector.broadcast %cst_99 : f32 to vector<1x32xf32>
    %166 = arith.mulf %162, %165 : vector<1x32xf32>
    %167 = arith.mulf %164, %164 : vector<1x32xf32>
    %168 = arith.subf %166, %167 : vector<1x32xf32>
    %cst_100 = arith.constant 0.000000e+00 : f32
    %169 = vector.broadcast %cst_100 : f32 to vector<1x32xf32>
    %170 = arith.maximumf %168, %169 : vector<1x32xf32>
    %cst_101 = arith.constant 9.99999974E-6 : f32
    %171 = vector.broadcast %cst_101 : f32 to vector<1x32xf32>
    %172 = arith.addf %170, %171 : vector<1x32xf32>
    %173 = math.rsqrt %172 : vector<1x32xf32>
    %174 = arith.mulf %154, %173 : vector<1x32xf32>
    %175 = arith.mulf %164, %174 : vector<1x32xf32>
    %176 = arith.subf %155, %175 : vector<1x32xf32>
    %177 = vector.broadcast %174 : vector<1x32xf32> to vector<648x32xf32>
    %178 = arith.mulf %153, %177 : vector<648x32xf32>
    %179 = vector.broadcast %176 : vector<1x32xf32> to vector<648x32xf32>
    %180 = arith.addf %178, %179 : vector<648x32xf32>
    %cst_102 = arith.constant 0.000000e+00 : f32
    %181 = vector.broadcast %cst_102 : f32 to vector<648x32xf32>
    %182 = arith.cmpf ogt, %180, %181 : vector<648x32xf32>
    %cst_103 = arith.constant 0.000000e+00 : f32
    %183 = vector.broadcast %cst_103 : f32 to vector<648x32xf32>
    %184 = arith.minimumf %180, %183 : vector<648x32xf32>
    %185 = math.exp %184 : vector<648x32xf32>
    %cst_104 = arith.constant 1.000000e+00 : f32
    %186 = vector.broadcast %cst_104 : f32 to vector<648x32xf32>
    %187 = arith.subf %185, %186 : vector<648x32xf32>
    %188 = arith.select %182, %180, %187 : vector<648x32xi1>, vector<648x32xf32>
    %c0_105 = arith.constant 0 : index
    %c0_106 = arith.constant 0 : index
    %189 = vector.load %arg18[%c0_105, %c0_106] : memref<648x32xf32, #tpu.memory_space<vmem>>, vector<648x32xf32>
    tpu.vector_store %arg18[%c0_105, %c0_106], %188 {strides = array<i32>} : memref<648x32xf32, #tpu.memory_space<vmem>>, vector<648x32xf32>,
    return
  }
  func.func @transform_0(%arg0: i32) -> (i32, i32) {
    %c0_i32 = arith.constant 0 : i32
    %c0_i32_0 = arith.constant 0 : i32
    %c0_i32_1 = arith.constant 0 : i32
    return %c0_i32, %c0_i32_0 : i32, i32
  }
  func.func @transform_1(%arg0: i32) -> (i32, i32) {
    %c0_i32 = arith.constant 0 : i32
    %c0_i32_0 = arith.constant 0 : i32
    %c0_i32_1 = arith.constant 0 : i32
    return %c0_i32, %c0_i32_0 : i32, i32
  }
  func.func @transform_2(%arg0: i32) -> (i32, i32) {
    %c0_i32 = arith.constant 0 : i32
    %c0_i32_0 = arith.constant 0 : i32
    %c0_i32_1 = arith.constant 0 : i32
    return %c0_i32, %c0_i32_0 : i32, i32
  }
  func.func @transform_3(%arg0: i32) -> (i32, i32) {
    %c0_i32 = arith.constant 0 : i32
    %c0_i32_0 = arith.constant 0 : i32
    %c0_i32_1 = arith.constant 0 : i32
    return %c0_i32, %c0_i32_0 : i32, i32
  }
  func.func @transform_4(%arg0: i32) -> (i32, i32) {
    %c0_i32 = arith.constant 0 : i32
    %c0_i32_0 = arith.constant 0 : i32
    %c0_i32_1 = arith.constant 0 : i32
    return %c0_i32, %c0_i32_0 : i32, i32
  }
  func.func @transform_5(%arg0: i32) -> (i32, i32) {
    %c0_i32 = arith.constant 0 : i32
    %c0_i32_0 = arith.constant 0 : i32
    %c0_i32_1 = arith.constant 0 : i32
    return %c0_i32, %c0_i32_0 : i32, i32
  }
  func.func @transform_6(%arg0: i32) -> (i32, i32) {
    %c0_i32 = arith.constant 0 : i32
    %c0_i32_0 = arith.constant 0 : i32
    %c0_i32_1 = arith.constant 0 : i32
    return %c0_i32, %c0_i32_0 : i32, i32
  }
  func.func @transform_7(%arg0: i32) -> (i32, i32, i32) {
    %c0_i32 = arith.constant 0 : i32
    %c0_i32_0 = arith.constant 0 : i32
    %c0_i32_1 = arith.constant 0 : i32
    %c0_i32_2 = arith.constant 0 : i32
    return %c0_i32, %c0_i32_0, %c0_i32_1 : i32, i32, i32
  }
  func.func @transform_8(%arg0: i32) -> (i32, i32) {
    %c0_i32 = arith.constant 0 : i32
    %c0_i32_0 = arith.constant 0 : i32
    %c0_i32_1 = arith.constant 0 : i32
    return %c0_i32, %c0_i32_0 : i32, i32
  }
  func.func @transform_9(%arg0: i32) -> (i32, i32) {
    %c0_i32 = arith.constant 0 : i32
    %c0_i32_0 = arith.constant 0 : i32
    %c0_i32_1 = arith.constant 0 : i32
    return %c0_i32, %c0_i32_0 : i32, i32
  }
  func.func @transform_10(%arg0: i32) -> (i32, i32) {
    %c0_i32 = arith.constant 0 : i32
    %c0_i32_0 = arith.constant 0 : i32
    %c0_i32_1 = arith.constant 0 : i32
    return %c0_i32, %c0_i32_0 : i32, i32
  }
  func.func @transform_11(%arg0: i32) -> (i32, i32) {
    %c0_i32 = arith.constant 0 : i32
    %c0_i32_0 = arith.constant 0 : i32
    %c0_i32_1 = arith.constant 0 : i32
    return %c0_i32, %c0_i32_0 : i32, i32
  }
  func.func @transform_12(%arg0: i32) -> (i32, i32) {
    %c0_i32 = arith.constant 0 : i32
    %c0_i32_0 = arith.constant 0 : i32
    %c0_i32_1 = arith.constant 0 : i32
    return %c0_i32, %c0_i32_0 : i32, i32
  }
  func.func @transform_13(%arg0: i32) -> (i32, i32) {
    %c0_i32 = arith.constant 0 : i32
    %c0_i32_0 = arith.constant 0 : i32
    %c0_i32_1 = arith.constant 0 : i32
    return %c0_i32, %c0_i32_0 : i32, i32
  }
  func.func @transform_14(%arg0: i32) -> (i32, i32) {
    %c0_i32 = arith.constant 0 : i32
    %c0_i32_0 = arith.constant 0 : i32
    %c0_i32_1 = arith.constant 0 : i32
    return %c0_i32, %c0_i32_0 : i32, i32
  }
  func.func @transform_15(%arg0: i32) -> (i32, i32) {
    %c0_i32 = arith.constant 0 : i32
    %c0_i32_0 = arith.constant 0 : i32
    %c0_i32_1 = arith.constant 0 : i32
    return %c0_i32, %c0_i32_0 : i32, i32
  }
  func.func @transform_16(%arg0: i32) -> (i32, i32) {
    %c0_i32 = arith.constant 0 : i32
    %c0_i32_0 = arith.constant 0 : i32
    %c0_i32_1 = arith.constant 0 : i32
    return %c0_i32, %c0_i32_0 : i32, i32
  }
  func.func @transform_17(%arg0: i32) -> (i32, i32) {
    %c0_i32 = arith.constant 0 : i32
    %c0_i32_0 = arith.constant 0 : i32
    %c0_i32_1 = arith.constant 0 : i32
    return %c0_i32, %c0_i32_0 : i32, i32
  }
}

</mosaic_0001>

<llo_original>
// kernel: resconv_L_forward.1
$region0: #{resconv_L_forward.1}
  #allocation0 [shape = 'u32[]', space=smem, size = 0x4, offset = 0x4, fixed_abs, tag = 'smem constant byte address 0x4 - core index']
  #allocation1 [shape = 'u32[144,128]{1,0:T(1,128)}', space=vmem, size = 0x12000, scoped, tag = 'internal scratch']
  #allocation2 [shape = 'f32[688,8]{1,0:T(8,128)}', space=vmem, size = 0x56000, scoped, tag = 'scratch operand']
  %s0 = inlined_call_operand.vmem [shape: f32[688,8], index: 0, kind: input, shape index: {}]
  %s1 = inlined_call_operand.vmem [shape: f32[688,1], index: 1, kind: input, shape index: {}]
  %s2 = inlined_call_operand.vmem [shape: f32[648,1], index: 2, kind: input, shape index: {}]
  %s3 = inlined_call_operand.vmem [shape: bf16[8,8], index: 3, kind: input, shape index: {}]
  %s4 = inlined_call_operand.vmem [shape: f32[1,8], index: 4, kind: input, shape index: {}]
  %s5 = inlined_call_operand.vmem [shape: f32[1,8], index: 5, kind: input, shape index: {}]
  %s6 = inlined_call_operand.vmem [shape: f32[1,8], index: 6, kind: input, shape index: {}]
  %s7 = inlined_call_operand.vmem [shape: bf16[9,8,8], index: 7, kind: input, shape index: {}]
  %s8 = inlined_call_operand.vmem [shape: f32[1,8], index: 8, kind: input, shape index: {}]
  %s9 = inlined_call_operand.vmem [shape: f32[1,8], index: 9, kind: input, shape index: {}]
  %s10 = inlined_call_operand.vmem [shape: f32[1,8], index: 10, kind: input, shape index: {}]
  %s11 = inlined_call_operand.vmem [shape: bf16[8,32], index: 11, kind: input, shape index: {}]
  %s12 = inlined_call_operand.vmem [shape: f32[1,32], index: 12, kind: input, shape index: {}]
  %s13 = inlined_call_operand.vmem [shape: bf16[8,32], index: 13, kind: input, shape index: {}]
  %s14 = inlined_call_operand.vmem [shape: f32[1,32], index: 14, kind: input, shape index: {}]
  %s15 = inlined_call_operand.vmem [shape: f32[1,32], index: 15, kind: input, shape index: {}]
  %s16 = inlined_call_operand.vmem [shape: f32[1,32], index: 16, kind: input, shape index: {}]
  %s17 = inlined_call_operand.vmem [shape: f32[648,32], index: 17, kind: output, shape index: {}]
  %s18 = sld [smem:[#allocation0]]
  $region78: #{resconv_L_forward.1} parent=0
    _
  %s20 = ssub.s32 1, %s18
  %s21 = scalar_select 0, %s20, %s18
  // Predicated region
  $region2: #{resconv_L_forward.1} parent=0 // pred_check
    _
  $region3: #{resconv_L_forward.1} parent=0 // pred_check_branch
    %23 = sbr.rel (0) target = $region5
  $region4: #{resconv_L_forward.1} parent=0 // pred_region
    _
  $region5: #{resconv_L_forward.1} parent=0 // pred_fallthru
    _
  // Predicated region
  $region6: #{resconv_L_forward.1} parent=0 // pred_check
    _
  $region7: #{resconv_L_forward.1} parent=0 // pred_check_branch
    %25 = sbr.rel (0) target = $region9
  $region8: #{resconv_L_forward.1} parent=0 // pred_region
    _
  $region9: #{resconv_L_forward.1} parent=0 // pred_fallthru
    _
  // Predicated region
  $region10: #{resconv_L_forward.1} parent=0 // pred_check
    _
  $region11: #{resconv_L_forward.1} parent=0 // pred_check_branch
    %27 = sbr.rel (0) target = $region13
  $region12: #{resconv_L_forward.1} parent=0 // pred_region
    _
  $region13: #{resconv_L_forward.1} parent=0 // pred_fallthru
    _
  // Predicated region
  $region14: #{resconv_L_forward.1} parent=0 // pred_check
    _
  $region15: #{resconv_L_forward.1} parent=0 // pred_check_branch
    %29 = sbr.rel (0) target = $region17
  $region16: #{resconv_L_forward.1} parent=0 // pred_region
    _
  $region17: #{resconv_L_forward.1} parent=0 // pred_fallthru
    _
  // Predicated region
  $region18: #{resconv_L_forward.1} parent=0 // pred_check
    _
  $region19: #{resconv_L_forward.1} parent=0 // pred_check_branch
    %31 = sbr.rel (0) target = $region21
  $region20: #{resconv_L_forward.1} parent=0 // pred_region
    _
  $region21: #{resconv_L_forward.1} parent=0 // pred_fallthru
    _
  // Predicated region
  $region22: #{resconv_L_forward.1} parent=0 // pred_check
    _
  $region23: #{resconv_L_forward.1} parent=0 // pred_check_branch
    %33 = sbr.rel (0) target = $region25
  $region24: #{resconv_L_forward.1} parent=0 // pred_region
    _
  $region25: #{resconv_L_forward.1} parent=0 // pred_fallthru
    _
  // Predicated region
  $region26: #{resconv_L_forward.1} parent=0 // pred_check
    _
  $region27: #{resconv_L_forward.1} parent=0 // pred_check_branch
    %35 = sbr.rel (0) target = $region29
  $region28: #{resconv_L_forward.1} parent=0 // pred_region
    _
  $region29: #{resconv_L_forward.1} parent=0 // pred_fallthru
    _
  // Predicated region
  $region30: #{resconv_L_forward.1} parent=0 // pred_check
    _
  $region31: #{resconv_L_forward.1} parent=0 // pred_check_branch
    %37 = sbr.rel (0) target = $region33
  $region32: #{resconv_L_forward.1} parent=0 // pred_region
    _
  $region33: #{resconv_L_forward.1} parent=0 // pred_fallthru
    _
  // Predicated region
  $region34: #{resconv_L_forward.1} parent=0 // pred_check
    _
  $region35: #{resconv_L_forward.1} parent=0 // pred_check_branch
    %39 = sbr.rel (0) target = $region37
  $region36: #{resconv_L_forward.1} parent=0 // pred_region
    _
  $region37: #{resconv_L_forward.1} parent=0 // pred_fallthru
    _
  // Predicated region
  $region38: #{resconv_L_forward.1} parent=0 // pred_check
    _
  $region39: #{resconv_L_forward.1} parent=0 // pred_check_branch
    %41 = sbr.rel (0) target = $region41
  $region40: #{resconv_L_forward.1} parent=0 // pred_region
    _
  $region41: #{resconv_L_forward.1} parent=0 // pred_fallthru
    _
  // Predicated region
  $region42: #{resconv_L_forward.1} parent=0 // pred_check
    _
  $region43: #{resconv_L_forward.1} parent=0 // pred_check_branch
    %43 = sbr.rel (0) target = $region45
  $region44: #{resconv_L_forward.1} parent=0 // pred_region
    _
  $region45: #{resconv_L_forward.1} parent=0 // pred_fallthru
    _
  // Predicated region
  $region46: #{resconv_L_forward.1} parent=0 // pred_check
    _
  $region47: #{resconv_L_forward.1} parent=0 // pred_check_branch
    %45 = sbr.rel (0) target = $region49
  $region48: #{resconv_L_forward.1} parent=0 // pred_region
    _
  $region49: #{resconv_L_forward.1} parent=0 // pred_fallthru
    _
  // Predicated region
  $region50: #{resconv_L_forward.1} parent=0 // pred_check
    _
  $region51: #{resconv_L_forward.1} parent=0 // pred_check_branch
    %47 = sbr.rel (0) target = $region53
  $region52: #{resconv_L_forward.1} parent=0 // pred_region
    _
  $region53: #{resconv_L_forward.1} parent=0 // pred_fallthru
    _
  // Predicated region
  $region54: #{resconv_L_forward.1} parent=0 // pred_check
    _
  $region55: #{resconv_L_forward.1} parent=0 // pred_check_branch
    %49 = sbr.rel (0) target = $region57
  $region56: #{resconv_L_forward.1} parent=0 // pred_region
    _
  $region57: #{resconv_L_forward.1} parent=0 // pred_fallthru
    _
  // Predicated region
  $region58: #{resconv_L_forward.1} parent=0 // pred_check
    _
  $region59: #{resconv_L_forward.1} parent=0 // pred_check_branch
    %51 = sbr.rel (0) target = $region61
  $region60: #{resconv_L_forward.1} parent=0 // pred_region
    _
  $region61: #{resconv_L_forward.1} parent=0 // pred_fallthru
    _
  // Predicated region
  $region62: #{resconv_L_forward.1} parent=0 // pred_check
    _
  $region63: #{resconv_L_forward.1} parent=0 // pred_check_branch
    %53 = sbr.rel (0) target = $region65
  $region64: #{resconv_L_forward.1} parent=0 // pred_region
    _
  $region65: #{resconv_L_forward.1} parent=0 // pred_fallthru
    _
  // Predicated region
  $region66: #{resconv_L_forward.1} parent=0 // pred_check
    _
  $region67: #{resconv_L_forward.1} parent=0 // pred_check_branch
    %55 = sbr.rel (0) target = $region69
  $region68: #{resconv_L_forward.1} parent=0 // pred_region
    _
  $region69: #{resconv_L_forward.1} parent=0 // pred_fallthru
    _
  %v57 = vld [vmem:[%s1] sm:$0xff]
  %v58 = vld [vmem:[%s1 + $0x8] sm:$0xff]
  %v59 = vld [vmem:[%s1 + $0x10] sm:$0xff]
  %v60 = vld [vmem:[%s1 + $0x18] sm:$0xff]
  %v61 = vld [vmem:[%s1 + $0x20] sm:$0xff]
  %v62 = vld [vmem:[%s1 + $0x28] sm:$0xff]
  %v63 = vld [vmem:[%s1 + $0x30] sm:$0xff]
  %v64 = vld [vmem:[%s1 + $0x38] sm:$0xff]
  %v65 = vld [vmem:[%s1 + $0x40] sm:$0xff]
  %v66 = vld [vmem:[%s1 + $0x48] sm:$0xff]
  %v67 = vld [vmem:[%s1 + $0x50] sm:$0xff]
  %v68 = vld [vmem:[%s1 + $0x58] sm:$0xff]
  %v69 = vld [vmem:[%s1 + $0x60] sm:$0xff]
  %v70 = vld [vmem:[%s1 + $0x68] sm:$0xff]
  %v71 = vld [vmem:[%s1 + $0x70] sm:$0xff]
  %v72 = vld [vmem:[%s1 + $0x78] sm:$0xff]
  %v73 = vld [vmem:[%s1 + $0x80] sm:$0xff]
  %v74 = vld [vmem:[%s1 + $0x88] sm:$0xff]
  %v75 = vld [vmem:[%s1 + $0x90] sm:$0xff]
  %v76 = vld [vmem:[%s1 + $0x98] sm:$0xff]
  %v77 = vld [vmem:[%s1 + $0xa0] sm:$0xff]
  %v78 = vld [vmem:[%s1 + $0xa8] sm:$0xff]
  %v79 = vld [vmem:[%s1 + $0xb0] sm:$0xff]
  %v80 = vld [vmem:[%s1 + $0xb8] sm:$0xff]
  %v81 = vld [vmem:[%s1 + $0xc0] sm:$0xff]
  %v82 = vld [vmem:[%s1 + $0xc8] sm:$0xff]
  %v83 = vld [vmem:[%s1 + $0xd0] sm:$0xff]
  %v84 = vld [vmem:[%s1 + $0xd8] sm:$0xff]
  %v85 = vld [vmem:[%s1 + $0xe0] sm:$0xff]
  %v86 = vld [vmem:[%s1 + $0xe8] sm:$0xff]
  %v87 = vld [vmem:[%s1 + $0xf0] sm:$0xff]
  %v88 = vld [vmem:[%s1 + $0xf8] sm:$0xff]
  %v89 = vld [vmem:[%s1 + $0x100] sm:$0xff]
  %v90 = vld [vmem:[%s1 + $0x108] sm:$0xff]
  %v91 = vld [vmem:[%s1 + $0x110] sm:$0xff]
  %v92 = vld [vmem:[%s1 + $0x118] sm:$0xff]
  %v93 = vld [vmem:[%s1 + $0x120] sm:$0xff]
  %v94 = vld [vmem:[%s1 + $0x128] sm:$0xff]
  %v95 = vld [vmem:[%s1 + $0x130] sm:$0xff]
  %v96 = vld [vmem:[%s1 + $0x138] sm:$0xff]
  %v97 = vld [vmem:[%s1 + $0x140] sm:$0xff]
  %v98 = vld [vmem:[%s1 + $0x148] sm:$0xff]
  %v99 = vld [vmem:[%s1 + $0x150] sm:$0xff]
  %v100 = vld [vmem:[%s1 + $0x158] sm:$0xff]
  %v101 = vld [vmem:[%s1 + $0x160] sm:$0xff]
  %v102 = vld [vmem:[%s1 + $0x168] sm:$0xff]
  %v103 = vld [vmem:[%s1 + $0x170] sm:$0xff]
  %v104 = vld [vmem:[%s1 + $0x178] sm:$0xff]
  %v105 = vld [vmem:[%s1 + $0x180] sm:$0xff]
  %v106 = vld [vmem:[%s1 + $0x188] sm:$0xff]
  %v107 = vld [vmem:[%s1 + $0x190] sm:$0xff]
  %v108 = vld [vmem:[%s1 + $0x198] sm:$0xff]
  %v109 = vld [vmem:[%s1 + $0x1a0] sm:$0xff]
  %v110 = vld [vmem:[%s1 + $0x1a8] sm:$0xff]
  %v111 = vld [vmem:[%s1 + $0x1b0] sm:$0xff]
  %v112 = vld [vmem:[%s1 + $0x1b8] sm:$0xff]
  %v113 = vld [vmem:[%s1 + $0x1c0] sm:$0xff]
  %v114 = vld [vmem:[%s1 + $0x1c8] sm:$0xff]
  %v115 = vld [vmem:[%s1 + $0x1d0] sm:$0xff]
  %v116 = vld [vmem:[%s1 + $0x1d8] sm:$0xff]
  %v117 = vld [vmem:[%s1 + $0x1e0] sm:$0xff]
  %v118 = vld [vmem:[%s1 + $0x1e8] sm:$0xff]
  %v119 = vld [vmem:[%s1 + $0x1f0] sm:$0xff]
  %v120 = vld [vmem:[%s1 + $0x1f8] sm:$0xff]
  %v121 = vld [vmem:[%s1 + $0x200] sm:$0xff]
  %v122 = vld [vmem:[%s1 + $0x208] sm:$0xff]
  %v123 = vld [vmem:[%s1 + $0x210] sm:$0xff]
  %v124 = vld [vmem:[%s1 + $0x218] sm:$0xff]
  %v125 = vld [vmem:[%s1 + $0x220] sm:$0xff]
  %v126 = vld [vmem:[%s1 + $0x228] sm:$0xff]
  %v127 = vld [vmem:[%s1 + $0x230] sm:$0xff]
  %v128 = vld [vmem:[%s1 + $0x238] sm:$0xff]
  %v129 = vld [vmem:[%s1 + $0x240] sm:$0xff]
  %v130 = vld [vmem:[%s1 + $0x248] sm:$0xff]
  %v131 = vld [vmem:[%s1 + $0x250] sm:$0xff]
  %v132 = vld [vmem:[%s1 + $0x258] sm:$0xff]
  %v133 = vld [vmem:[%s1 + $0x260] sm:$0xff]
  %v134 = vld [vmem:[%s1 + $0x268] sm:$0xff]
  %v135 = vld [vmem:[%s1 + $0x270] sm:$0xff]
  %v136 = vld [vmem:[%s1 + $0x278] sm:$0xff]
  %v137 = vld [vmem:[%s1 + $0x280] sm:$0xff]
  %v138 = vld [vmem:[%s1 + $0x288] sm:$0xff]
  %v139 = vld [vmem:[%s1 + $0x290] sm:$0xff]
  %v140 = vld [vmem:[%s1 + $0x298] sm:$0xff]
  %v141 = vld [vmem:[%s1 + $0x2a0] sm:$0xff]
  %v142 = vld [vmem:[%s1 + $0x2a8] sm:$0xff]
  %v143 = vld [vmem:[%s2] sm:$0xff]
  %v144 = vld [vmem:[%s2 + $0x8] sm:$0xff]
  %v145 = vld [vmem:[%s2 + $0x10] sm:$0xff]
  %v146 = vld [vmem:[%s2 + $0x18] sm:$0xff]
  %v147 = vld [vmem:[%s2 + $0x20] sm:$0xff]
  %v148 = vld [vmem:[%s2 + $0x28] sm:$0xff]
  %v149 = vld [vmem:[%s2 + $0x30] sm:$0xff]
  %v150 = vld [vmem:[%s2 + $0x38] sm:$0xff]
  %v151 = vld [vmem:[%s2 + $0x40] sm:$0xff]
  %v152 = vld [vmem:[%s2 + $0x48] sm:$0xff]
  %v153 = vld [vmem:[%s2 + $0x50] sm:$0xff]
  %v154 = vld [vmem:[%s2 + $0x58] sm:$0xff]
  %v155 = vld [vmem:[%s2 + $0x60] sm:$0xff]
  %v156 = vld [vmem:[%s2 + $0x68] sm:$0xff]
  %v157 = vld [vmem:[%s2 + $0x70] sm:$0xff]
  %v158 = vld [vmem:[%s2 + $0x78] sm:$0xff]
  %v159 = vld [vmem:[%s2 + $0x80] sm:$0xff]
  %v160 = vld [vmem:[%s2 + $0x88] sm:$0xff]
  %v161 = vld [vmem:[%s2 + $0x90] sm:$0xff]
  %v162 = vld [vmem:[%s2 + $0x98] sm:$0xff]
  %v163 = vld [vmem:[%s2 + $0xa0] sm:$0xff]
  %v164 = vld [vmem:[%s2 + $0xa8] sm:$0xff]
  %v165 = vld [vmem:[%s2 + $0xb0] sm:$0xff]
  %v166 = vld [vmem:[%s2 + $0xb8] sm:$0xff]
  %v167 = vld [vmem:[%s2 + $0xc0] sm:$0xff]
  %v168 = vld [vmem:[%s2 + $0xc8] sm:$0xff]
  %v169 = vld [vmem:[%s2 + $0xd0] sm:$0xff]
  %v170 = vld [vmem:[%s2 + $0xd8] sm:$0xff]
  %v171 = vld [vmem:[%s2 + $0xe0] sm:$0xff]
  %v172 = vld [vmem:[%s2 + $0xe8] sm:$0xff]
  %v173 = vld [vmem:[%s2 + $0xf0] sm:$0xff]
  %v174 = vld [vmem:[%s2 + $0xf8] sm:$0xff]
  %v175 = vld [vmem:[%s2 + $0x100] sm:$0xff]
  %v176 = vld [vmem:[%s2 + $0x108] sm:$0xff]
  %v177 = vld [vmem:[%s2 + $0x110] sm:$0xff]
  %v178 = vld [vmem:[%s2 + $0x118] sm:$0xff]
  %v179 = vld [vmem:[%s2 + $0x120] sm:$0xff]
  %v180 = vld [vmem:[%s2 + $0x128] sm:$0xff]
  %v181 = vld [vmem:[%s2 + $0x130] sm:$0xff]
  %v182 = vld [vmem:[%s2 + $0x138] sm:$0xff]
  %v183 = vld [vmem:[%s2 + $0x140] sm:$0xff]
  %v184 = vld [vmem:[%s2 + $0x148] sm:$0xff]
  %v185 = vld [vmem:[%s2 + $0x150] sm:$0xff]
  %v186 = vld [vmem:[%s2 + $0x158] sm:$0xff]
  %v187 = vld [vmem:[%s2 + $0x160] sm:$0xff]
  %v188 = vld [vmem:[%s2 + $0x168] sm:$0xff]
  %v189 = vld [vmem:[%s2 + $0x170] sm:$0xff]
  %v190 = vld [vmem:[%s2 + $0x178] sm:$0xff]
  %v191 = vld [vmem:[%s2 + $0x180] sm:$0xff]
  %v192 = vld [vmem:[%s2 + $0x188] sm:$0xff]
  %v193 = vld [vmem:[%s2 + $0x190] sm:$0xff]
  %v194 = vld [vmem:[%s2 + $0x198] sm:$0xff]
  %v195 = vld [vmem:[%s2 + $0x1a0] sm:$0xff]
  %v196 = vld [vmem:[%s2 + $0x1a8] sm:$0xff]
  %v197 = vld [vmem:[%s2 + $0x1b0] sm:$0xff]
  %v198 = vld [vmem:[%s2 + $0x1b8] sm:$0xff]
  %v199 = vld [vmem:[%s2 + $0x1c0] sm:$0xff]
  %v200 = vld [vmem:[%s2 + $0x1c8] sm:$0xff]
  %v201 = vld [vmem:[%s2 + $0x1d0] sm:$0xff]
  %v202 = vld [vmem:[%s2 + $0x1d8] sm:$0xff]
  %v203 = vld [vmem:[%s2 + $0x1e0] sm:$0xff]
  %v204 = vld [vmem:[%s2 + $0x1e8] sm:$0xff]
  %v205 = vld [vmem:[%s2 + $0x1f0] sm:$0xff]
  %v206 = vld [vmem:[%s2 + $0x1f8] sm:$0xff]
  %v207 = vld [vmem:[%s2 + $0x200] sm:$0xff]
  %v208 = vld [vmem:[%s2 + $0x208] sm:$0xff]
  %v209 = vld [vmem:[%s2 + $0x210] sm:$0xff]
  %v210 = vld [vmem:[%s2 + $0x218] sm:$0xff]
  %v211 = vld [vmem:[%s2 + $0x220] sm:$0xff]
  %v212 = vld [vmem:[%s2 + $0x228] sm:$0xff]
  %v213 = vld [vmem:[%s2 + $0x230] sm:$0xff]
  %v214 = vld [vmem:[%s2 + $0x238] sm:$0xff]
  %v215 = vld [vmem:[%s2 + $0x240] sm:$0xff]
  %v216 = vld [vmem:[%s2 + $0x248] sm:$0xff]
  %v217 = vld [vmem:[%s2 + $0x250] sm:$0xff]
  %v218 = vld [vmem:[%s2 + $0x258] sm:$0xff]
  %v219 = vld [vmem:[%s2 + $0x260] sm:$0xff]
  %v220 = vld [vmem:[%s2 + $0x268] sm:$0xff]
  %v221 = vld [vmem:[%s2 + $0x270] sm:$0xff]
  %v222 = vld [vmem:[%s2 + $0x278] sm:$0xff]
  %v223 = vld [vmem:[%s2 + $0x280] sm:$0xff]
  %v224 = vld [vmem:[%s0] sm:$0xff]
  %v225 = vld [vmem:[%s0 + $0x8] sm:$0xff]
  %v226 = vld [vmem:[%s0 + $0x10] sm:$0xff]
  %v227 = vld [vmem:[%s0 + $0x18] sm:$0xff]
  %v228 = vld [vmem:[%s0 + $0x20] sm:$0xff]
  %v229 = vld [vmem:[%s0 + $0x28] sm:$0xff]
  %v230 = vld [vmem:[%s0 + $0x30] sm:$0xff]
  %v231 = vld [vmem:[%s0 + $0x38] sm:$0xff]
  %v232 = vld [vmem:[%s0 + $0x40] sm:$0xff]
  %v233 = vld [vmem:[%s0 + $0x48] sm:$0xff]
  %v234 = vld [vmem:[%s0 + $0x50] sm:$0xff]
  %v235 = vld [vmem:[%s0 + $0x58] sm:$0xff]
  %v236 = vld [vmem:[%s0 + $0x60] sm:$0xff]
  %v237 = vld [vmem:[%s0 + $0x68] sm:$0xff]
  %v238 = vld [vmem:[%s0 + $0x70] sm:$0xff]
  %v239 = vld [vmem:[%s0 + $0x78] sm:$0xff]
  %v240 = vld [vmem:[%s0 + $0x80] sm:$0xff]
  %v241 = vld [vmem:[%s0 + $0x88] sm:$0xff]
  %v242 = vld [vmem:[%s0 + $0x90] sm:$0xff]
  %v243 = vld [vmem:[%s0 + $0x98] sm:$0xff]
  %v244 = vld [vmem:[%s0 + $0xa0] sm:$0xff]
  %v245 = vld [vmem:[%s0 + $0xa8] sm:$0xff]
  %v246 = vld [vmem:[%s0 + $0xb0] sm:$0xff]
  %v247 = vld [vmem:[%s0 + $0xb8] sm:$0xff]
  %v248 = vld [vmem:[%s0 + $0xc0] sm:$0xff]
  %v249 = vld [vmem:[%s0 + $0xc8] sm:$0xff]
  %v250 = vld [vmem:[%s0 + $0xd0] sm:$0xff]
  %v251 = vld [vmem:[%s0 + $0xd8] sm:$0xff]
  %v252 = vld [vmem:[%s0 + $0xe0] sm:$0xff]
  %v253 = vld [vmem:[%s0 + $0xe8] sm:$0xff]
  %v254 = vld [vmem:[%s0 + $0xf0] sm:$0xff]
  %v255 = vld [vmem:[%s0 + $0xf8] sm:$0xff]
  %v256 = vld [vmem:[%s0 + $0x100] sm:$0xff]
  %v257 = vld [vmem:[%s0 + $0x108] sm:$0xff]
  %v258 = vld [vmem:[%s0 + $0x110] sm:$0xff]
  %v259 = vld [vmem:[%s0 + $0x118] sm:$0xff]
  %v260 = vld [vmem:[%s0 + $0x120] sm:$0xff]
  %v261 = vld [vmem:[%s0 + $0x128] sm:$0xff]
  %v262 = vld [vmem:[%s0 + $0x130] sm:$0xff]
  %v263 = vld [vmem:[%s0 + $0x138] sm:$0xff]
  %v264 = vld [vmem:[%s0 + $0x140] sm:$0xff]
  %v265 = vld [vmem:[%s0 + $0x148] sm:$0xff]
  %v266 = vld [vmem:[%s0 + $0x150] sm:$0xff]
  %v267 = vld [vmem:[%s0 + $0x158] sm:$0xff]
  %v268 = vld [vmem:[%s0 + $0x160] sm:$0xff]
  %v269 = vld [vmem:[%s0 + $0x168] sm:$0xff]
  %v270 = vld [vmem:[%s0 + $0x170] sm:$0xff]
  %v271 = vld [vmem:[%s0 + $0x178] sm:$0xff]
  %v272 = vld [vmem:[%s0 + $0x180] sm:$0xff]
  %v273 = vld [vmem:[%s0 + $0x188] sm:$0xff]
  %v274 = vld [vmem:[%s0 + $0x190] sm:$0xff]
  %v275 = vld [vmem:[%s0 + $0x198] sm:$0xff]
  %v276 = vld [vmem:[%s0 + $0x1a0] sm:$0xff]
  %v277 = vld [vmem:[%s0 + $0x1a8] sm:$0xff]
  %v278 = vld [vmem:[%s0 + $0x1b0] sm:$0xff]
  %v279 = vld [vmem:[%s0 + $0x1b8] sm:$0xff]
  %v280 = vld [vmem:[%s0 + $0x1c0] sm:$0xff]
  %v281 = vld [vmem:[%s0 + $0x1c8] sm:$0xff]
  %v282 = vld [vmem:[%s0 + $0x1d0] sm:$0xff]
  %v283 = vld [vmem:[%s0 + $0x1d8] sm:$0xff]
  %v284 = vld [vmem:[%s0 + $0x1e0] sm:$0xff]
  %v285 = vld [vmem:[%s0 + $0x1e8] sm:$0xff]
  %v286 = vld [vmem:[%s0 + $0x1f0] sm:$0xff]
  %v287 = vld [vmem:[%s0 + $0x1f8] sm:$0xff]
  %v288 = vld [vmem:[%s0 + $0x200] sm:$0xff]
  %v289 = vld [vmem:[%s0 + $0x208] sm:$0xff]
  %v290 = vld [vmem:[%s0 + $0x210] sm:$0xff]
  %v291 = vld [vmem:[%s0 + $0x218] sm:$0xff]
  %v292 = vld [vmem:[%s0 + $0x220] sm:$0xff]
  %v293 = vld [vmem:[%s0 + $0x228] sm:$0xff]
  %v294 = vld [vmem:[%s0 + $0x230] sm:$0xff]
  %v295 = vld [vmem:[%s0 + $0x238] sm:$0xff]
  %v296 = vld [vmem:[%s0 + $0x240] sm:$0xff]
  %v297 = vld [vmem:[%s0 + $0x248] sm:$0xff]
  %v298 = vld [vmem:[%s0 + $0x250] sm:$0xff]
  %v299 = vld [vmem:[%s0 + $0x258] sm:$0xff]
  %v300 = vld [vmem:[%s0 + $0x260] sm:$0xff]
  %v301 = vld [vmem:[%s0 + $0x268] sm:$0xff]
  %v302 = vld [vmem:[%s0 + $0x270] sm:$0xff]
  %v303 = vld [vmem:[%s0 + $0x278] sm:$0xff]
  %v304 = vld [vmem:[%s0 + $0x280] sm:$0xff]
  %v305 = vld [vmem:[%s0 + $0x288] sm:$0xff]
  %v306 = vld [vmem:[%s0 + $0x290] sm:$0xff]
  %v307 = vld [vmem:[%s0 + $0x298] sm:$0xff]
  %v308 = vld [vmem:[%s0 + $0x2a0] sm:$0xff]
  %v309 = vld [vmem:[%s0 + $0x2a8] sm:$0xff]
  %v310 = vpack.c.bf16 %v225, %v224
  %v311 = vpack.c.bf16 %v227, %v226
  %v312 = vpack.c.bf16 %v229, %v228
  %v313 = vpack.c.bf16 %v231, %v230
  %v314 = vpack.c.bf16 %v233, %v232
  %v315 = vpack.c.bf16 %v235, %v234
  %v316 = vpack.c.bf16 %v237, %v236
  %v317 = vpack.c.bf16 %v239, %v238
  %v318 = vpack.c.bf16 %v241, %v240
  %v319 = vpack.c.bf16 %v243, %v242
  %v320 = vpack.c.bf16 %v245, %v244
  %v321 = vpack.c.bf16 %v247, %v246
  %v322 = vpack.c.bf16 %v249, %v248
  %v323 = vpack.c.bf16 %v251, %v250
  %v324 = vpack.c.bf16 %v253, %v252
  %v325 = vpack.c.bf16 %v255, %v254
  %v326 = vpack.c.bf16 %v257, %v256
  %v327 = vpack.c.bf16 %v259, %v258
  %v328 = vpack.c.bf16 %v261, %v260
  %v329 = vpack.c.bf16 %v263, %v262
  %v330 = vpack.c.bf16 %v265, %v264
  %v331 = vpack.c.bf16 %v267, %v266
  %v332 = vpack.c.bf16 %v269, %v268
  %v333 = vpack.c.bf16 %v271, %v270
  %v334 = vpack.c.bf16 %v273, %v272
  %v335 = vpack.c.bf16 %v275, %v274
  %v336 = vpack.c.bf16 %v277, %v276
  %v337 = vpack.c.bf16 %v279, %v278
  %v338 = vpack.c.bf16 %v281, %v280
  %v339 = vpack.c.bf16 %v283, %v282
  %v340 = vpack.c.bf16 %v285, %v284
  %v341 = vpack.c.bf16 %v287, %v286
  %v342 = vpack.c.bf16 %v289, %v288
  %v343 = vpack.c.bf16 %v291, %v290
  %v344 = vpack.c.bf16 %v293, %v292
  %v345 = vpack.c.bf16 %v295, %v294
  %v346 = vpack.c.bf16 %v297, %v296
  %v347 = vpack.c.bf16 %v299, %v298
  %v348 = vpack.c.bf16 %v301, %v300
  %v349 = vpack.c.bf16 %v303, %v302
  %v350 = vpack.c.bf16 %v305, %v304
  %v351 = vpack.c.bf16 %v307, %v306
  %v352 = vpack.c.bf16 %v309, %v308
  %v353 = vld [vmem:[%s3] sm:$0xf]
  %v354 = vld [vmem:[%s4] sm:$0x1]
  %v356 = vlaneseq
  %v357 = vshrl.u32 %v356, 7
  %v358 = vsub.s32 0, %v357
  %v359 = vrot.slane %v354, %v358
  %vm361 = vcmask 64512
  %v363 = vsel %vm361, %v310, 0
  %v366 = vsel %vm361, %v311, 0
  %v369 = vsel %vm361, %v312, 0
  %v372 = vsel %vm361, %v313, 0
  %v375 = vsel %vm361, %v314, 0
  %v378 = vsel %vm361, %v315, 0
  %v381 = vsel %vm361, %v316, 0
  %v384 = vsel %vm361, %v317, 0
  %v387 = vsel %vm361, %v318, 0
  %v390 = vsel %vm361, %v319, 0
  %v393 = vsel %vm361, %v320, 0
  %v396 = vsel %vm361, %v321, 0
  %v399 = vsel %vm361, %v322, 0
  %v402 = vsel %vm361, %v323, 0
  %v405 = vsel %vm361, %v324, 0
  %v408 = vsel %vm361, %v325, 0
  %v411 = vsel %vm361, %v326, 0
  %v414 = vsel %vm361, %v327, 0
  %v417 = vsel %vm361, %v328, 0
  %v420 = vsel %vm361, %v329, 0
  %v423 = vsel %vm361, %v330, 0
  %v426 = vsel %vm361, %v331, 0
  %v429 = vsel %vm361, %v332, 0
  %v432 = vsel %vm361, %v333, 0
  %v435 = vsel %vm361, %v334, 0
  %v438 = vsel %vm361, %v335, 0
  %v441 = vsel %vm361, %v336, 0
  %v444 = vsel %vm361, %v337, 0
  %v447 = vsel %vm361, %v338, 0
  %v450 = vsel %vm361, %v339, 0
  %v453 = vsel %vm361, %v340, 0
  %v456 = vsel %vm361, %v341, 0
  %v459 = vsel %vm361, %v342, 0
  %v462 = vsel %vm361, %v343, 0
  %v465 = vsel %vm361, %v344, 0
  %v468 = vsel %vm361, %v345, 0
  %v471 = vsel %vm361, %v346, 0
  %v474 = vsel %vm361, %v347, 0
  %v477 = vsel %vm361, %v348, 0
  %v480 = vsel %vm361, %v349, 0
  %v483 = vsel %vm361, %v350, 0
  %v486 = vsel %vm361, %v351, 0
  %v489 = vsel %vm361, %v352, 0
  %vm491 = vcmask 1043456
  %v493 = vsel %vm491, %v353, 0
  %495 = vmatprep.subr.bf16.mxu0 0
  %496 = vmatpush1.bf16.msra.mxu0 0
  %497 = vmatprep.subr.bf16.mxu0 0
  %498 = vmatpush1.bf16.msra.mxu0 0
  %499 = vmatprep.subr.bf16.mxu0 0
  %500 = vmatpush1.bf16.msra.mxu0 0
  %501 = vmatprep.subr.bf16.mxu0 0
  %502 = vmatpush1.bf16.msra.mxu0 0
  %503 = vmatprep.subr.bf16.mxu0 0
  %504 = vmatpush1.bf16.msra.mxu0 0
  %505 = vmatprep.subr.bf16.mxu0 0
  %506 = vmatpush1.bf16.msra.mxu0 0
  %507 = vmatprep.subr.bf16.mxu0 0
  %508 = vmatpush1.bf16.msra.mxu0 0
  %509 = vmatprep.subr.bf16.mxu0 0
  %510 = vmatpush1.bf16.msra.mxu0 %v493
  %511 = vmatprep.subr.bf16.mxu0 0
  %512 = vmatpush2.bf16.msra.mxu0 0
  %513 = vmatprep.subr.bf16.mxu0 0
  %514 = vmatpush2.bf16.msra.mxu0 0
  %515 = vmatprep.subr.bf16.mxu0 0
  %516 = vmatpush2.bf16.msra.mxu0 0
  %517 = vmatprep.subr.bf16.mxu0 0
  %518 = vmatpush2.bf16.msra.mxu0 0
  %519 = vmatprep.subr.bf16.mxu0 0
  %520 = vmatpush2.bf16.msra.mxu0 0
  %521 = vmatprep.subr.bf16.mxu0 0
  %522 = vmatpush2.bf16.msra.mxu0 0
  %523 = vmatprep.subr.bf16.mxu0 0
  %524 = vmatpush2.bf16.msra.mxu0 0
  %525 = vmatprep.subr.bf16.mxu0 0
  %526 = vmatpush2.bf16.msra.mxu0 0
  %527 = vmatprep.mubr.bf16.mxu0 0
  %528 = vmatmul.mubr.bf16.gmra.mxu0 %v363
  %v529 = vpop.f32.mrf.mxu0
  %v530 = vadd.f32 %v359, %v529
  %v531 = vpop.f32.mrf.mxu0
  %v532 = vpop.f32.mrf.mxu0
  %v533 = vadd.f32 %v359, %v532
  %v534 = vpop.f32.mrf.mxu0
  %535 = vmatprep.mubr.bf16.mxu0 0
  %536 = vmatmul.mubr.bf16.gmra.mxu0 %v366
  %v537 = vpop.f32.mrf.mxu0
  %v538 = vadd.f32 %v359, %v537
  %v539 = vpop.f32.mrf.mxu0
  %v540 = vpop.f32.mrf.mxu0
  %v541 = vadd.f32 %v359, %v540
  %v542 = vpop.f32.mrf.mxu0
  %543 = vmatprep.mubr.bf16.mxu0 0
  %544 = vmatmul.mubr.bf16.gmra.mxu0 %v369
  %v545 = vpop.f32.mrf.mxu0
  %v546 = vadd.f32 %v359, %v545
  %v547 = vpop.f32.mrf.mxu0
  %v548 = vpop.f32.mrf.mxu0
  %v549 = vadd.f32 %v359, %v548
  %v550 = vpop.f32.mrf.mxu0
  %551 = vmatprep.mubr.bf16.mxu0 0
  %552 = vmatmul.mubr.bf16.gmra.mxu0 %v372
  %v553 = vpop.f32.mrf.mxu0
  %v554 = vadd.f32 %v359, %v553
  %v555 = vpop.f32.mrf.mxu0
  %v556 = vpop.f32.mrf.mxu0
  %v557 = vadd.f32 %v359, %v556
  %v558 = vpop.f32.mrf.mxu0
  %559 = vmatprep.mubr.bf16.mxu0 0
  %560 = vmatmul.mubr.bf16.gmra.mxu0 %v375
  %v561 = vpop.f32.mrf.mxu0
  %v562 = vadd.f32 %v359, %v561
  %v563 = vpop.f32.mrf.mxu0
  %v564 = vpop.f32.mrf.mxu0
  %v565 = vadd.f32 %v359, %v564
  %v566 = vpop.f32.mrf.mxu0
  %567 = vmatprep.mubr.bf16.mxu0 0
  %568 = vmatmul.mubr.bf16.gmra.mxu0 %v378
  %v569 = vpop.f32.mrf.mxu0
  %v570 = vadd.f32 %v359, %v569
  %v571 = vpop.f32.mrf.mxu0
  %v572 = vpop.f32.mrf.mxu0
  %v573 = vadd.f32 %v359, %v572
  %v574 = vpop.f32.mrf.mxu0
  %575 = vmatprep.mubr.bf16.mxu0 0
  %576 = vmatmul.mubr.bf16.gmra.mxu0 %v381
  %v577 = vpop.f32.mrf.mxu0
  %v578 = vadd.f32 %v359, %v577
  %v579 = vpop.f32.mrf.mxu0
  %v580 = vpop.f32.mrf.mxu0
  %v581 = vadd.f32 %v359, %v580
  %v582 = vpop.f32.mrf.mxu0
  %583 = vmatprep.mubr.bf16.mxu0 0
  %584 = vmatmul.mubr.bf16.gmra.mxu0 %v384
  %v585 = vpop.f32.mrf.mxu0
  %v586 = vadd.f32 %v359, %v585
  %v587 = vpop.f32.mrf.mxu0
  %v588 = vpop.f32.mrf.mxu0
  %v589 = vadd.f32 %v359, %v588
  %v590 = vpop.f32.mrf.mxu0
  %591 = vmatprep.mubr.bf16.mxu0 0
  %592 = vmatmul.mubr.bf16.gmra.mxu0 %v387
  %v593 = vpop.f32.mrf.mxu0
  %v594 = vadd.f32 %v359, %v593
  %v595 = vpop.f32.mrf.mxu0
  %v596 = vpop.f32.mrf.mxu0
  %v597 = vadd.f32 %v359, %v596
  %v598 = vpop.f32.mrf.mxu0
  %599 = vmatprep.mubr.bf16.mxu0 0
  %600 = vmatmul.mubr.bf16.gmra.mxu0 %v390
  %v601 = vpop.f32.mrf.mxu0
  %v602 = vadd.f32 %v359, %v601
  %v603 = vpop.f32.mrf.mxu0
  %v604 = vpop.f32.mrf.mxu0
  %v605 = vadd.f32 %v359, %v604
  %v606 = vpop.f32.mrf.mxu0
  %607 = vmatprep.mubr.bf16.mxu0 0
  %608 = vmatmul.mubr.bf16.gmra.mxu0 %v393
  %v609 = vpop.f32.mrf.mxu0
  %v610 = vadd.f32 %v359, %v609
  %v611 = vpop.f32.mrf.mxu0
  %v612 = vpop.f32.mrf.mxu0
  %v613 = vadd.f32 %v359, %v612
  %v614 = vpop.f32.mrf.mxu0
  %615 = vmatprep.mubr.bf16.mxu0 0
  %616 = vmatmul.mubr.bf16.gmra.mxu0 %v396
  %v617 = vpop.f32.mrf.mxu0
  %v618 = vadd.f32 %v359, %v617
  %v619 = vpop.f32.mrf.mxu0
  %v620 = vpop.f32.mrf.mxu0
  %v621 = vadd.f32 %v359, %v620
  %v622 = vpop.f32.mrf.mxu0
  %623 = vmatprep.mubr.bf16.mxu0 0
  %624 = vmatmul.mubr.bf16.gmra.mxu0 %v399
  %v625 = vpop.f32.mrf.mxu0
  %v626 = vadd.f32 %v359, %v625
  %v627 = vpop.f32.mrf.mxu0
  %v628 = vpop.f32.mrf.mxu0
  %v629 = vadd.f32 %v359, %v628
  %v630 = vpop.f32.mrf.mxu0
  %631 = vmatprep.mubr.bf16.mxu0 0
  %632 = vmatmul.mubr.bf16.gmra.mxu0 %v402
  %v633 = vpop.f32.mrf.mxu0
  %v634 = vadd.f32 %v359, %v633
  %v635 = vpop.f32.mrf.mxu0
  %v636 = vpop.f32.mrf.mxu0
  %v637 = vadd.f32 %v359, %v636
  %v638 = vpop.f32.mrf.mxu0
  %639 = vmatprep.mubr.bf16.mxu0 0
  %640 = vmatmul.mubr.bf16.gmra.mxu0 %v405
  %v641 = vpop.f32.mrf.mxu0
  %v642 = vadd.f32 %v359, %v641
  %v643 = vpop.f32.mrf.mxu0
  %v644 = vpop.f32.mrf.mxu0
  %v645 = vadd.f32 %v359, %v644
  %v646 = vpop.f32.mrf.mxu0
  %647 = vmatprep.mubr.bf16.mxu0 0
  %648 = vmatmul.mubr.bf16.gmra.mxu0 %v408
  %v649 = vpop.f32.mrf.mxu0
  %v650 = vadd.f32 %v359, %v649
  %v651 = vpop.f32.mrf.mxu0
  %v652 = vpop.f32.mrf.mxu0
  %v653 = vadd.f32 %v359, %v652
  %v654 = vpop.f32.mrf.mxu0
  %655 = vmatprep.mubr.bf16.mxu0 0
  %656 = vmatmul.mubr.bf16.gmra.mxu0 %v411
  %v657 = vpop.f32.mrf.mxu0
  %v658 = vadd.f32 %v359, %v657
  %v659 = vpop.f32.mrf.mxu0
  %v660 = vpop.f32.mrf.mxu0
  %v661 = vadd.f32 %v359, %v660
  %v662 = vpop.f32.mrf.mxu0
  %663 = vmatprep.mubr.bf16.mxu0 0
  %664 = vmatmul.mubr.bf16.gmra.mxu0 %v414
  %v665 = vpop.f32.mrf.mxu0
  %v666 = vadd.f32 %v359, %v665
  %v667 = vpop.f32.mrf.mxu0
  %v668 = vpop.f32.mrf.mxu0
  %v669 = vadd.f32 %v359, %v668
  %v670 = vpop.f32.mrf.mxu0
  %671 = vmatprep.mubr.bf16.mxu0 0
  %672 = vmatmul.mubr.bf16.gmra.mxu0 %v417
  %v673 = vpop.f32.mrf.mxu0
  %v674 = vadd.f32 %v359, %v673
  %v675 = vpop.f32.mrf.mxu0
  %v676 = vpop.f32.mrf.mxu0
  %v677 = vadd.f32 %v359, %v676
  %v678 = vpop.f32.mrf.mxu0
  %679 = vmatprep.mubr.bf16.mxu0 0
  %680 = vmatmul.mubr.bf16.gmra.mxu0 %v420
  %v681 = vpop.f32.mrf.mxu0
  %v682 = vadd.f32 %v359, %v681
  %v683 = vpop.f32.mrf.mxu0
  %v684 = vpop.f32.mrf.mxu0
  %v685 = vadd.f32 %v359, %v684
  %v686 = vpop.f32.mrf.mxu0
  %687 = vmatprep.mubr.bf16.mxu0 0
  %688 = vmatmul.mubr.bf16.gmra.mxu0 %v423
  %v689 = vpop.f32.mrf.mxu0
  %v690 = vadd.f32 %v359, %v689
  %v691 = vpop.f32.mrf.mxu0
  %v692 = vpop.f32.mrf.mxu0
  %v693 = vadd.f32 %v359, %v692
  %v694 = vpop.f32.mrf.mxu0
  %695 = vmatprep.mubr.bf16.mxu0 0
  %696 = vmatmul.mubr.bf16.gmra.mxu0 %v426
  %v697 = vpop.f32.mrf.mxu0
  %v698 = vadd.f32 %v359, %v697
  %v699 = vpop.f32.mrf.mxu0
  %v700 = vpop.f32.mrf.mxu0
  %v701 = vadd.f32 %v359, %v700
  %v702 = vpop.f32.mrf.mxu0
  %703 = vmatprep.mubr.bf16.mxu0 0
  %704 = vmatmul.mubr.bf16.gmra.mxu0 %v429
  %v705 = vpop.f32.mrf.mxu0
  %v706 = vadd.f32 %v359, %v705
  %v707 = vpop.f32.mrf.mxu0
  %v708 = vpop.f32.mrf.mxu0
  %v709 = vadd.f32 %v359, %v708
  %v710 = vpop.f32.mrf.mxu0
  %711 = vmatprep.mubr.bf16.mxu0 0
  %712 = vmatmul.mubr.bf16.gmra.mxu0 %v432
  %v713 = vpop.f32.mrf.mxu0
  %v714 = vadd.f32 %v359, %v713
  %v715 = vpop.f32.mrf.mxu0
  %v716 = vpop.f32.mrf.mxu0
  %v717 = vadd.f32 %v359, %v716
  %v718 = vpop.f32.mrf.mxu0
  %719 = vmatprep.mubr.bf16.mxu0 0
  %720 = vmatmul.mubr.bf16.gmra.mxu0 %v435
  %v721 = vpop.f32.mrf.mxu0
  %v722 = vadd.f32 %v359, %v721
  %v723 = vpop.f32.mrf.mxu0
  %v724 = vpop.f32.mrf.mxu0
  %v725 = vadd.f32 %v359, %v724
  %v726 = vpop.f32.mrf.mxu0
  %727 = vmatprep.mubr.bf16.mxu0 0
  %728 = vmatmul.mubr.bf16.gmra.mxu0 %v438
  %v729 = vpop.f32.mrf.mxu0
  %v730 = vadd.f32 %v359, %v729
  %v731 = vpop.f32.mrf.mxu0
  %v732 = vpop.f32.mrf.mxu0
  %v733 = vadd.f32 %v359, %v732
  %v734 = vpop.f32.mrf.mxu0
  %735 = vmatprep.mubr.bf16.mxu0 0
  %736 = vmatmul.mubr.bf16.gmra.mxu0 %v441
  %v737 = vpop.f32.mrf.mxu0
  %v738 = vadd.f32 %v359, %v737
  %v739 = vpop.f32.mrf.mxu0
  %v740 = vpop.f32.mrf.mxu0
  %v741 = vadd.f32 %v359, %v740
  %v742 = vpop.f32.mrf.mxu0
  %743 = vmatprep.mubr.bf16.mxu0 0
  %744 = vmatmul.mubr.bf16.gmra.mxu0 %v444
  %v745 = vpop.f32.mrf.mxu0
  %v746 = vadd.f32 %v359, %v745
  %v747 = vpop.f32.mrf.mxu0
  %v748 = vpop.f32.mrf.mxu0
  %v749 = vadd.f32 %v359, %v748
  %v750 = vpop.f32.mrf.mxu0
  %751 = vmatprep.mubr.bf16.mxu0 0
  %752 = vmatmul.mubr.bf16.gmra.mxu0 %v447
  %v753 = vpop.f32.mrf.mxu0
  %v754 = vadd.f32 %v359, %v753
  %v755 = vpop.f32.mrf.mxu0
  %v756 = vpop.f32.mrf.mxu0
  %v757 = vadd.f32 %v359, %v756
  %v758 = vpop.f32.mrf.mxu0
  %759 = vmatprep.mubr.bf16.mxu0 0
  %760 = vmatmul.mubr.bf16.gmra.mxu0 %v450
  %v761 = vpop.f32.mrf.mxu0
  %v762 = vadd.f32 %v359, %v761
  %v763 = vpop.f32.mrf.mxu0
  %v764 = vpop.f32.mrf.mxu0
  %v765 = vadd.f32 %v359, %v764
  %v766 = vpop.f32.mrf.mxu0
  %767 = vmatprep.mubr.bf16.mxu0 0
  %768 = vmatmul.mubr.bf16.gmra.mxu0 %v453
  %v769 = vpop.f32.mrf.mxu0
  %v770 = vadd.f32 %v359, %v769
  %v771 = vpop.f32.mrf.mxu0
  %v772 = vpop.f32.mrf.mxu0
  %v773 = vadd.f32 %v359, %v772
  %v774 = vpop.f32.mrf.mxu0
  %775 = vmatprep.mubr.bf16.mxu0 0
  %776 = vmatmul.mubr.bf16.gmra.mxu0 %v456
  %v777 = vpop.f32.mrf.mxu0
  %v778 = vadd.f32 %v359, %v777
  %v779 = vpop.f32.mrf.mxu0
  %v780 = vpop.f32.mrf.mxu0
  %v781 = vadd.f32 %v359, %v780
  %v782 = vpop.f32.mrf.mxu0
  %783 = vmatprep.mubr.bf16.mxu0 0
  %784 = vmatmul.mubr.bf16.gmra.mxu0 %v459
  %v785 = vpop.f32.mrf.mxu0
  %v786 = vadd.f32 %v359, %v785
  %v787 = vpop.f32.mrf.mxu0
  %v788 = vpop.f32.mrf.mxu0
  %v789 = vadd.f32 %v359, %v788
  %v790 = vpop.f32.mrf.mxu0
  %791 = vmatprep.mubr.bf16.mxu0 0
  %792 = vmatmul.mubr.bf16.gmra.mxu0 %v462
  %v793 = vpop.f32.mrf.mxu0
  %v794 = vadd.f32 %v359, %v793
  %v795 = vpop.f32.mrf.mxu0
  %v796 = vpop.f32.mrf.mxu0
  %v797 = vadd.f32 %v359, %v796
  %v798 = vpop.f32.mrf.mxu0
  %799 = vmatprep.mubr.bf16.mxu0 0
  %800 = vmatmul.mubr.bf16.gmra.mxu0 %v465
  %v801 = vpop.f32.mrf.mxu0
  %v802 = vadd.f32 %v359, %v801
  %v803 = vpop.f32.mrf.mxu0
  %v804 = vpop.f32.mrf.mxu0
  %v805 = vadd.f32 %v359, %v804
  %v806 = vpop.f32.mrf.mxu0
  %807 = vmatprep.mubr.bf16.mxu0 0
  %808 = vmatmul.mubr.bf16.gmra.mxu0 %v468
  %v809 = vpop.f32.mrf.mxu0
  %v810 = vadd.f32 %v359, %v809
  %v811 = vpop.f32.mrf.mxu0
  %v812 = vpop.f32.mrf.mxu0
  %v813 = vadd.f32 %v359, %v812
  %v814 = vpop.f32.mrf.mxu0
  %815 = vmatprep.mubr.bf16.mxu0 0
  %816 = vmatmul.mubr.bf16.gmra.mxu0 %v471
  %v817 = vpop.f32.mrf.mxu0
  %v818 = vadd.f32 %v359, %v817
  %v819 = vpop.f32.mrf.mxu0
  %v820 = vpop.f32.mrf.mxu0
  %v821 = vadd.f32 %v359, %v820
  %v822 = vpop.f32.mrf.mxu0
  %823 = vmatprep.mubr.bf16.mxu0 0
  %824 = vmatmul.mubr.bf16.gmra.mxu0 %v474
  %v825 = vpop.f32.mrf.mxu0
  %v826 = vadd.f32 %v359, %v825
  %v827 = vpop.f32.mrf.mxu0
  %v828 = vpop.f32.mrf.mxu0
  %v829 = vadd.f32 %v359, %v828
  %v830 = vpop.f32.mrf.mxu0
  %831 = vmatprep.mubr.bf16.mxu0 0
  %832 = vmatmul.mubr.bf16.gmra.mxu0 %v477
  %v833 = vpop.f32.mrf.mxu0
  %v834 = vadd.f32 %v359, %v833
  %v835 = vpop.f32.mrf.mxu0
  %v836 = vpop.f32.mrf.mxu0
  %v837 = vadd.f32 %v359, %v836
  %v838 = vpop.f32.mrf.mxu0
  %839 = vmatprep.mubr.bf16.mxu0 0
  %840 = vmatmul.mubr.bf16.gmra.mxu0 %v480
  %v841 = vpop.f32.mrf.mxu0
  %v842 = vadd.f32 %v359, %v841
  %v843 = vpop.f32.mrf.mxu0
  %v844 = vpop.f32.mrf.mxu0
  %v845 = vadd.f32 %v359, %v844
  %v846 = vpop.f32.mrf.mxu0
  %847 = vmatprep.mubr.bf16.mxu0 0
  %848 = vmatmul.mubr.bf16.gmra.mxu0 %v483
  %v849 = vpop.f32.mrf.mxu0
  %v850 = vadd.f32 %v359, %v849
  %v851 = vpop.f32.mrf.mxu0
  %v852 = vpop.f32.mrf.mxu0
  %v853 = vadd.f32 %v359, %v852
  %v854 = vpop.f32.mrf.mxu0
  %855 = vmatprep.mubr.bf16.mxu0 0
  %856 = vmatmul.mubr.bf16.gmra.mxu0 %v486
  %v857 = vpop.f32.mrf.mxu0
  %v858 = vadd.f32 %v359, %v857
  %v859 = vpop.f32.mrf.mxu0
  %v860 = vpop.f32.mrf.mxu0
  %v861 = vadd.f32 %v359, %v860
  %v862 = vpop.f32.mrf.mxu0
  %863 = vmatprep.mubr.bf16.mxu0 0
  %864 = vmatmul.mubr.bf16.gmra.mxu0 %v489
  %v865 = vpop.f32.mrf.mxu0
  %v866 = vadd.f32 %v359, %v865
  %v867 = vpop.f32.mrf.mxu0
  %v868 = vpop.f32.mrf.mxu0
  %v869 = vadd.f32 %v359, %v868
  %v870 = vpop.f32.mrf.mxu0
  %871 = vdwg.mxu0
  %v872 = vld [vmem:[%s5] sm:$0x1]
  %v873 = vld [vmem:[%s6] sm:$0x1]
  %875 = vset.pattern.permute.xlu0 0
  %876 = vperm.xlu0 %875, %v57
  %v877 = vpop.permute.xlu0 %876
  %880 = vset.pattern.permute.xlu0 0
  %881 = vperm.xlu0 %880, %v58
  %v882 = vpop.permute.xlu0 %881
  %885 = vset.pattern.permute.xlu0 0
  %886 = vperm.xlu0 %885, %v59
  %v887 = vpop.permute.xlu0 %886
  %890 = vset.pattern.permute.xlu0 0
  %891 = vperm.xlu0 %890, %v60
  %v892 = vpop.permute.xlu0 %891
  %895 = vset.pattern.permute.xlu0 0
  %896 = vperm.xlu0 %895, %v61
  %v897 = vpop.permute.xlu0 %896
  %900 = vset.pattern.permute.xlu0 0
  %901 = vperm.xlu0 %900, %v62
  %v902 = vpop.permute.xlu0 %901
  %905 = vset.pattern.permute.xlu0 0
  %906 = vperm.xlu0 %905, %v63
  %v907 = vpop.permute.xlu0 %906
  %910 = vset.pattern.permute.xlu0 0
  %911 = vperm.xlu0 %910, %v64
  %v912 = vpop.permute.xlu0 %911
  %915 = vset.pattern.permute.xlu0 0
  %916 = vperm.xlu0 %915, %v65
  %v917 = vpop.permute.xlu0 %916
  %920 = vset.pattern.permute.xlu0 0
  %921 = vperm.xlu0 %920, %v66
  %v922 = vpop.permute.xlu0 %921
  %925 = vset.pattern.permute.xlu0 0
  %926 = vperm.xlu0 %925, %v67
  %v927 = vpop.permute.xlu0 %926
  %930 = vset.pattern.permute.xlu0 0
  %931 = vperm.xlu0 %930, %v68
  %v932 = vpop.permute.xlu0 %931
  %935 = vset.pattern.permute.xlu0 0
  %936 = vperm.xlu0 %935, %v69
  %v937 = vpop.permute.xlu0 %936
  %940 = vset.pattern.permute.xlu0 0
  %941 = vperm.xlu0 %940, %v70
  %v942 = vpop.permute.xlu0 %941
  %945 = vset.pattern.permute.xlu0 0
  %946 = vperm.xlu0 %945, %v71
  %v947 = vpop.permute.xlu0 %946
  %950 = vset.pattern.permute.xlu0 0
  %951 = vperm.xlu0 %950, %v72
  %v952 = vpop.permute.xlu0 %951
  %955 = vset.pattern.permute.xlu0 0
  %956 = vperm.xlu0 %955, %v73
  %v957 = vpop.permute.xlu0 %956
  %960 = vset.pattern.permute.xlu0 0
  %961 = vperm.xlu0 %960, %v74
  %v962 = vpop.permute.xlu0 %961
  %965 = vset.pattern.permute.xlu0 0
  %966 = vperm.xlu0 %965, %v75
  %v967 = vpop.permute.xlu0 %966
  %970 = vset.pattern.permute.xlu0 0
  %971 = vperm.xlu0 %970, %v76
  %v972 = vpop.permute.xlu0 %971
  %975 = vset.pattern.permute.xlu0 0
  %976 = vperm.xlu0 %975, %v77
  %v977 = vpop.permute.xlu0 %976
  %980 = vset.pattern.permute.xlu0 0
  %981 = vperm.xlu0 %980, %v78
  %v982 = vpop.permute.xlu0 %981
  %985 = vset.pattern.permute.xlu0 0
  %986 = vperm.xlu0 %985, %v79
  %v987 = vpop.permute.xlu0 %986
  %990 = vset.pattern.permute.xlu0 0
  %991 = vperm.xlu0 %990, %v80
  %v992 = vpop.permute.xlu0 %991
  %995 = vset.pattern.permute.xlu0 0
  %996 = vperm.xlu0 %995, %v81
  %v997 = vpop.permute.xlu0 %996
  %1000 = vset.pattern.permute.xlu0 0
  %1001 = vperm.xlu0 %1000, %v82
  %v1002 = vpop.permute.xlu0 %1001
  %1005 = vset.pattern.permute.xlu0 0
  %1006 = vperm.xlu0 %1005, %v83
  %v1007 = vpop.permute.xlu0 %1006
  %1010 = vset.pattern.permute.xlu0 0
  %1011 = vperm.xlu0 %1010, %v84
  %v1012 = vpop.permute.xlu0 %1011
  %1015 = vset.pattern.permute.xlu0 0
  %1016 = vperm.xlu0 %1015, %v85
  %v1017 = vpop.permute.xlu0 %1016
  %1020 = vset.pattern.permute.xlu0 0
  %1021 = vperm.xlu0 %1020, %v86
  %v1022 = vpop.permute.xlu0 %1021
  %1025 = vset.pattern.permute.xlu0 0
  %1026 = vperm.xlu0 %1025, %v87
  %v1027 = vpop.permute.xlu0 %1026
  %1030 = vset.pattern.permute.xlu0 0
  %1031 = vperm.xlu0 %1030, %v88
  %v1032 = vpop.permute.xlu0 %1031
  %1035 = vset.pattern.permute.xlu0 0
  %1036 = vperm.xlu0 %1035, %v89
  %v1037 = vpop.permute.xlu0 %1036
  %1040 = vset.pattern.permute.xlu0 0
  %1041 = vperm.xlu0 %1040, %v90
  %v1042 = vpop.permute.xlu0 %1041
  %1045 = vset.pattern.permute.xlu0 0
  %1046 = vperm.xlu0 %1045, %v91
  %v1047 = vpop.permute.xlu0 %1046
  %1050 = vset.pattern.permute.xlu0 0
  %1051 = vperm.xlu0 %1050, %v92
  %v1052 = vpop.permute.xlu0 %1051
  %1055 = vset.pattern.permute.xlu0 0
  %1056 = vperm.xlu0 %1055, %v93
  %v1057 = vpop.permute.xlu0 %1056
  %1060 = vset.pattern.permute.xlu0 0
  %1061 = vperm.xlu0 %1060, %v94
  %v1062 = vpop.permute.xlu0 %1061
  %1065 = vset.pattern.permute.xlu0 0
  %1066 = vperm.xlu0 %1065, %v95
  %v1067 = vpop.permute.xlu0 %1066
  %1070 = vset.pattern.permute.xlu0 0
  %1071 = vperm.xlu0 %1070, %v96
  %v1072 = vpop.permute.xlu0 %1071
  %1075 = vset.pattern.permute.xlu0 0
  %1076 = vperm.xlu0 %1075, %v97
  %v1077 = vpop.permute.xlu0 %1076
  %1080 = vset.pattern.permute.xlu0 0
  %1081 = vperm.xlu0 %1080, %v98
  %v1082 = vpop.permute.xlu0 %1081
  %1085 = vset.pattern.permute.xlu0 0
  %1086 = vperm.xlu0 %1085, %v99
  %v1087 = vpop.permute.xlu0 %1086
  %1090 = vset.pattern.permute.xlu0 0
  %1091 = vperm.xlu0 %1090, %v100
  %v1092 = vpop.permute.xlu0 %1091
  %1095 = vset.pattern.permute.xlu0 0
  %1096 = vperm.xlu0 %1095, %v101
  %v1097 = vpop.permute.xlu0 %1096
  %1100 = vset.pattern.permute.xlu0 0
  %1101 = vperm.xlu0 %1100, %v102
  %v1102 = vpop.permute.xlu0 %1101
  %1105 = vset.pattern.permute.xlu0 0
  %1106 = vperm.xlu0 %1105, %v103
  %v1107 = vpop.permute.xlu0 %1106
  %1110 = vset.pattern.permute.xlu0 0
  %1111 = vperm.xlu0 %1110, %v104
  %v1112 = vpop.permute.xlu0 %1111
  %1115 = vset.pattern.permute.xlu0 0
  %1116 = vperm.xlu0 %1115, %v105
  %v1117 = vpop.permute.xlu0 %1116
  %1120 = vset.pattern.permute.xlu0 0
  %1121 = vperm.xlu0 %1120, %v106
  %v1122 = vpop.permute.xlu0 %1121
  %1125 = vset.pattern.permute.xlu0 0
  %1126 = vperm.xlu0 %1125, %v107
  %v1127 = vpop.permute.xlu0 %1126
  %1130 = vset.pattern.permute.xlu0 0
  %1131 = vperm.xlu0 %1130, %v108
  %v1132 = vpop.permute.xlu0 %1131
  %1135 = vset.pattern.permute.xlu0 0
  %1136 = vperm.xlu0 %1135, %v109
  %v1137 = vpop.permute.xlu0 %1136
  %1140 = vset.pattern.permute.xlu0 0
  %1141 = vperm.xlu0 %1140, %v110
  %v1142 = vpop.permute.xlu0 %1141
  %1145 = vset.pattern.permute.xlu0 0
  %1146 = vperm.xlu0 %1145, %v111
  %v1147 = vpop.permute.xlu0 %1146
  %1150 = vset.pattern.permute.xlu0 0
  %1151 = vperm.xlu0 %1150, %v112
  %v1152 = vpop.permute.xlu0 %1151
  %1155 = vset.pattern.permute.xlu0 0
  %1156 = vperm.xlu0 %1155, %v113
  %v1157 = vpop.permute.xlu0 %1156
  %1160 = vset.pattern.permute.xlu0 0
  %1161 = vperm.xlu0 %1160, %v114
  %v1162 = vpop.permute.xlu0 %1161
  %1165 = vset.pattern.permute.xlu0 0
  %1166 = vperm.xlu0 %1165, %v115
  %v1167 = vpop.permute.xlu0 %1166
  %1170 = vset.pattern.permute.xlu0 0
  %1171 = vperm.xlu0 %1170, %v116
  %v1172 = vpop.permute.xlu0 %1171
  %1175 = vset.pattern.permute.xlu0 0
  %1176 = vperm.xlu0 %1175, %v117
  %v1177 = vpop.permute.xlu0 %1176
  %1180 = vset.pattern.permute.xlu0 0
  %1181 = vperm.xlu0 %1180, %v118
  %v1182 = vpop.permute.xlu0 %1181
  %1185 = vset.pattern.permute.xlu0 0
  %1186 = vperm.xlu0 %1185, %v119
  %v1187 = vpop.permute.xlu0 %1186
  %1190 = vset.pattern.permute.xlu0 0
  %1191 = vperm.xlu0 %1190, %v120
  %v1192 = vpop.permute.xlu0 %1191
  %1195 = vset.pattern.permute.xlu0 0
  %1196 = vperm.xlu0 %1195, %v121
  %v1197 = vpop.permute.xlu0 %1196
  %1200 = vset.pattern.permute.xlu0 0
  %1201 = vperm.xlu0 %1200, %v122
  %v1202 = vpop.permute.xlu0 %1201
  %1205 = vset.pattern.permute.xlu0 0
  %1206 = vperm.xlu0 %1205, %v123
  %v1207 = vpop.permute.xlu0 %1206
  %1210 = vset.pattern.permute.xlu0 0
  %1211 = vperm.xlu0 %1210, %v124
  %v1212 = vpop.permute.xlu0 %1211
  %1215 = vset.pattern.permute.xlu0 0
  %1216 = vperm.xlu0 %1215, %v125
  %v1217 = vpop.permute.xlu0 %1216
  %1220 = vset.pattern.permute.xlu0 0
  %1221 = vperm.xlu0 %1220, %v126
  %v1222 = vpop.permute.xlu0 %1221
  %1225 = vset.pattern.permute.xlu0 0
  %1226 = vperm.xlu0 %1225, %v127
  %v1227 = vpop.permute.xlu0 %1226
  %1230 = vset.pattern.permute.xlu0 0
  %1231 = vperm.xlu0 %1230, %v128
  %v1232 = vpop.permute.xlu0 %1231
  %1235 = vset.pattern.permute.xlu0 0
  %1236 = vperm.xlu0 %1235, %v129
  %v1237 = vpop.permute.xlu0 %1236
  %1240 = vset.pattern.permute.xlu0 0
  %1241 = vperm.xlu0 %1240, %v130
  %v1242 = vpop.permute.xlu0 %1241
  %1245 = vset.pattern.permute.xlu0 0
  %1246 = vperm.xlu0 %1245, %v131
  %v1247 = vpop.permute.xlu0 %1246
  %1250 = vset.pattern.permute.xlu0 0
  %1251 = vperm.xlu0 %1250, %v132
  %v1252 = vpop.permute.xlu0 %1251
  %1255 = vset.pattern.permute.xlu0 0
  %1256 = vperm.xlu0 %1255, %v133
  %v1257 = vpop.permute.xlu0 %1256
  %1260 = vset.pattern.permute.xlu0 0
  %1261 = vperm.xlu0 %1260, %v134
  %v1262 = vpop.permute.xlu0 %1261
  %1265 = vset.pattern.permute.xlu0 0
  %1266 = vperm.xlu0 %1265, %v135
  %v1267 = vpop.permute.xlu0 %1266
  %1270 = vset.pattern.permute.xlu0 0
  %1271 = vperm.xlu0 %1270, %v136
  %v1272 = vpop.permute.xlu0 %1271
  %1275 = vset.pattern.permute.xlu0 0
  %1276 = vperm.xlu0 %1275, %v137
  %v1277 = vpop.permute.xlu0 %1276
  %1280 = vset.pattern.permute.xlu0 0
  %1281 = vperm.xlu0 %1280, %v138
  %v1282 = vpop.permute.xlu0 %1281
  %1285 = vset.pattern.permute.xlu0 0
  %1286 = vperm.xlu0 %1285, %v139
  %v1287 = vpop.permute.xlu0 %1286
  %1290 = vset.pattern.permute.xlu0 0
  %1291 = vperm.xlu0 %1290, %v140
  %v1292 = vpop.permute.xlu0 %1291
  %1295 = vset.pattern.permute.xlu0 0
  %1296 = vperm.xlu0 %1295, %v141
  %v1297 = vpop.permute.xlu0 %1296
  %1300 = vset.pattern.permute.xlu0 0
  %1301 = vperm.xlu0 %1300, %v142
  %v1302 = vpop.permute.xlu0 %1301
  %v1304 = vmul.f32 %v530, %v877
  %v1305 = vmul.f32 %v533, %v882
  %v1306 = vmul.f32 %v538, %v887
  %v1307 = vmul.f32 %v541, %v892
  %v1308 = vmul.f32 %v546, %v897
  %v1309 = vmul.f32 %v549, %v902
  %v1310 = vmul.f32 %v554, %v907
  %v1311 = vmul.f32 %v557, %v912
  %v1312 = vmul.f32 %v562, %v917
  %v1313 = vmul.f32 %v565, %v922
  %v1314 = vmul.f32 %v570, %v927
  %v1315 = vmul.f32 %v573, %v932
  %v1316 = vmul.f32 %v578, %v937
  %v1317 = vmul.f32 %v581, %v942
  %v1318 = vmul.f32 %v586, %v947
  %v1319 = vmul.f32 %v589, %v952
  %v1320 = vmul.f32 %v594, %v957
  %v1321 = vmul.f32 %v597, %v962
  %v1322 = vmul.f32 %v602, %v967
  %v1323 = vmul.f32 %v605, %v972
  %v1324 = vmul.f32 %v610, %v977
  %v1325 = vmul.f32 %v613, %v982
  %v1326 = vmul.f32 %v618, %v987
  %v1327 = vmul.f32 %v621, %v992
  %v1328 = vmul.f32 %v626, %v997
  %v1329 = vmul.f32 %v629, %v1002
  %v1330 = vmul.f32 %v634, %v1007
  %v1331 = vmul.f32 %v637, %v1012
  %v1332 = vmul.f32 %v642, %v1017
  %v1333 = vmul.f32 %v645, %v1022
  %v1334 = vmul.f32 %v650, %v1027
  %v1335 = vmul.f32 %v653, %v1032
  %v1336 = vmul.f32 %v658, %v1037
  %v1337 = vmul.f32 %v661, %v1042
  %v1338 = vmul.f32 %v666, %v1047
  %v1339 = vmul.f32 %v669, %v1052
  %v1340 = vmul.f32 %v674, %v1057
  %v1341 = vmul.f32 %v677, %v1062
  %v1342 = vmul.f32 %v682, %v1067
  %v1343 = vmul.f32 %v685, %v1072
  %v1344 = vmul.f32 %v690, %v1077
  %v1345 = vmul.f32 %v693, %v1082
  %v1346 = vmul.f32 %v698, %v1087
  %v1347 = vmul.f32 %v701, %v1092
  %v1348 = vmul.f32 %v706, %v1097
  %v1349 = vmul.f32 %v709, %v1102
  %v1350 = vmul.f32 %v714, %v1107
  %v1351 = vmul.f32 %v717, %v1112
  %v1352 = vmul.f32 %v722, %v1117
  %v1353 = vmul.f32 %v725, %v1122
  %v1354 = vmul.f32 %v730, %v1127
  %v1355 = vmul.f32 %v733, %v1132
  %v1356 = vmul.f32 %v738, %v1137
  %v1357 = vmul.f32 %v741, %v1142
  %v1358 = vmul.f32 %v746, %v1147
  %v1359 = vmul.f32 %v749, %v1152
  %v1360 = vmul.f32 %v754, %v1157
  %v1361 = vmul.f32 %v757, %v1162
  %v1362 = vmul.f32 %v762, %v1167
  %v1363 = vmul.f32 %v765, %v1172
  %v1364 = vmul.f32 %v770, %v1177
  %v1365 = vmul.f32 %v773, %v1182
  %v1366 = vmul.f32 %v778, %v1187
  %v1367 = vmul.f32 %v781, %v1192
  %v1368 = vmul.f32 %v786, %v1197
  %v1369 = vmul.f32 %v789, %v1202
  %v1370 = vmul.f32 %v794, %v1207
  %v1371 = vmul.f32 %v797, %v1212
  %v1372 = vmul.f32 %v802, %v1217
  %v1373 = vmul.f32 %v805, %v1222
  %v1374 = vmul.f32 %v810, %v1227
  %v1375 = vmul.f32 %v813, %v1232
  %v1376 = vmul.f32 %v818, %v1237
  %v1377 = vmul.f32 %v821, %v1242
  %v1378 = vmul.f32 %v826, %v1247
  %v1379 = vmul.f32 %v829, %v1252
  %v1380 = vmul.f32 %v834, %v1257
  %v1381 = vmul.f32 %v837, %v1262
  %v1382 = vmul.f32 %v842, %v1267
  %v1383 = vmul.f32 %v845, %v1272
  %v1384 = vmul.f32 %v850, %v1277
  %v1385 = vmul.f32 %v853, %v1282
  %v1386 = vmul.f32 %v858, %v1287
  %v1387 = vmul.f32 %v861, %v1292
  %v1388 = vmul.f32 %v866, %v1297
  %v1389 = vmul.f32 %v869, %v1302
  %v1390 = vsel %vm361, %v1304, 0.0
  %v1391 = vsel %vm361, %v1305, 0.0
  %v1392 = vadd.f32 %v1390, %v1391
  %v1393 = vsel %vm361, %v1306, 0.0
  %v1394 = vadd.f32 %v1392, %v1393
  %v1395 = vsel %vm361, %v1307, 0.0
  %v1396 = vadd.f32 %v1394, %v1395
  %v1397 = vsel %vm361, %v1308, 0.0
  %v1398 = vadd.f32 %v1396, %v1397
  %v1399 = vsel %vm361, %v1309, 0.0
  %v1400 = vadd.f32 %v1398, %v1399
  %v1401 = vsel %vm361, %v1310, 0.0
  %v1402 = vadd.f32 %v1400, %v1401
  %v1403 = vsel %vm361, %v1311, 0.0
  %v1404 = vadd.f32 %v1402, %v1403
  %v1405 = vsel %vm361, %v1312, 0.0
  %v1406 = vadd.f32 %v1404, %v1405
  %v1407 = vsel %vm361, %v1313, 0.0
  %v1408 = vadd.f32 %v1406, %v1407
  %v1409 = vsel %vm361, %v1314, 0.0
  %v1410 = vadd.f32 %v1408, %v1409
  %v1411 = vsel %vm361, %v1315, 0.0
  %v1412 = vadd.f32 %v1410, %v1411
  %v1413 = vsel %vm361, %v1316, 0.0
  %v1414 = vadd.f32 %v1412, %v1413
  %v1415 = vsel %vm361, %v1317, 0.0
  %v1416 = vadd.f32 %v1414, %v1415
  %v1417 = vsel %vm361, %v1318, 0.0
  %v1418 = vadd.f32 %v1416, %v1417
  %v1419 = vsel %vm361, %v1319, 0.0
  %v1420 = vadd.f32 %v1418, %v1419
  %v1421 = vsel %vm361, %v1320, 0.0
  %v1422 = vadd.f32 %v1420, %v1421
  %v1423 = vsel %vm361, %v1321, 0.0
  %v1424 = vadd.f32 %v1422, %v1423
  %v1425 = vsel %vm361, %v1322, 0.0
  %v1426 = vadd.f32 %v1424, %v1425
  %v1427 = vsel %vm361, %v1323, 0.0
  %v1428 = vadd.f32 %v1426, %v1427
  %v1429 = vsel %vm361, %v1324, 0.0
  %v1430 = vadd.f32 %v1428, %v1429
  %v1431 = vsel %vm361, %v1325, 0.0
  %v1432 = vadd.f32 %v1430, %v1431
  %v1433 = vsel %vm361, %v1326, 0.0
  %v1434 = vadd.f32 %v1432, %v1433
  %v1435 = vsel %vm361, %v1327, 0.0
  %v1436 = vadd.f32 %v1434, %v1435
  %v1437 = vsel %vm361, %v1328, 0.0
  %v1438 = vadd.f32 %v1436, %v1437
  %v1439 = vsel %vm361, %v1329, 0.0
  %v1440 = vadd.f32 %v1438, %v1439
  %v1441 = vsel %vm361, %v1330, 0.0
  %v1442 = vadd.f32 %v1440, %v1441
  %v1443 = vsel %vm361, %v1331, 0.0
  %v1444 = vadd.f32 %v1442, %v1443
  %v1445 = vsel %vm361, %v1332, 0.0
  %v1446 = vadd.f32 %v1444, %v1445
  %v1447 = vsel %vm361, %v1333, 0.0
  %v1448 = vadd.f32 %v1446, %v1447
  %v1449 = vsel %vm361, %v1334, 0.0
  %v1450 = vadd.f32 %v1448, %v1449
  %v1451 = vsel %vm361, %v1335, 0.0
  %v1452 = vadd.f32 %v1450, %v1451
  %v1453 = vsel %vm361, %v1336, 0.0
  %v1454 = vadd.f32 %v1452, %v1453
  %v1455 = vsel %vm361, %v1337, 0.0
  %v1456 = vadd.f32 %v1454, %v1455
  %v1457 = vsel %vm361, %v1338, 0.0
  %v1458 = vadd.f32 %v1456, %v1457
  %v1459 = vsel %vm361, %v1339, 0.0
  %v1460 = vadd.f32 %v1458, %v1459
  %v1461 = vsel %vm361, %v1340, 0.0
  %v1462 = vadd.f32 %v1460, %v1461
  %v1463 = vsel %vm361, %v1341, 0.0
  %v1464 = vadd.f32 %v1462, %v1463
  %v1465 = vsel %vm361, %v1342, 0.0
  %v1466 = vadd.f32 %v1464, %v1465
  %v1467 = vsel %vm361, %v1343, 0.0
  %v1468 = vadd.f32 %v1466, %v1467
  %v1469 = vsel %vm361, %v1344, 0.0
  %v1470 = vadd.f32 %v1468, %v1469
  %v1471 = vsel %vm361, %v1345, 0.0
  %v1472 = vadd.f32 %v1470, %v1471
  %v1473 = vsel %vm361, %v1346, 0.0
  %v1474 = vadd.f32 %v1472, %v1473
  %v1475 = vsel %vm361, %v1347, 0.0
  %v1476 = vadd.f32 %v1474, %v1475
  %v1477 = vsel %vm361, %v1348, 0.0
  %v1478 = vadd.f32 %v1476, %v1477
  %v1479 = vsel %vm361, %v1349, 0.0
  %v1480 = vadd.f32 %v1478, %v1479
  %v1481 = vsel %vm361, %v1350, 0.0
  %v1482 = vadd.f32 %v1480, %v1481
  %v1483 = vsel %vm361, %v1351, 0.0
  %v1484 = vadd.f32 %v1482, %v1483
  %v1485 = vsel %vm361, %v1352, 0.0
  %v1486 = vadd.f32 %v1484, %v1485
  %v1487 = vsel %vm361, %v1353, 0.0
  %v1488 = vadd.f32 %v1486, %v1487
  %v1489 = vsel %vm361, %v1354, 0.0
  %v1490 = vadd.f32 %v1488, %v1489
  %v1491 = vsel %vm361, %v1355, 0.0
  %v1492 = vadd.f32 %v1490, %v1491
  %v1493 = vsel %vm361, %v1356, 0.0
  %v1494 = vadd.f32 %v1492, %v1493
  %v1495 = vsel %vm361, %v1357, 0.0
  %v1496 = vadd.f32 %v1494, %v1495
  %v1497 = vsel %vm361, %v1358, 0.0
  %v1498 = vadd.f32 %v1496, %v1497
  %v1499 = vsel %vm361, %v1359, 0.0
  %v1500 = vadd.f32 %v1498, %v1499
  %v1501 = vsel %vm361, %v1360, 0.0
  %v1502 = vadd.f32 %v1500, %v1501
  %v1503 = vsel %vm361, %v1361, 0.0
  %v1504 = vadd.f32 %v1502, %v1503
  %v1505 = vsel %vm361, %v1362, 0.0
  %v1506 = vadd.f32 %v1504, %v1505
  %v1507 = vsel %vm361, %v1363, 0.0
  %v1508 = vadd.f32 %v1506, %v1507
  %v1509 = vsel %vm361, %v1364, 0.0
  %v1510 = vadd.f32 %v1508, %v1509
  %v1511 = vsel %vm361, %v1365, 0.0
  %v1512 = vadd.f32 %v1510, %v1511
  %v1513 = vsel %vm361, %v1366, 0.0
  %v1514 = vadd.f32 %v1512, %v1513
  %v1515 = vsel %vm361, %v1367, 0.0
  %v1516 = vadd.f32 %v1514, %v1515
  %v1517 = vsel %vm361, %v1368, 0.0
  %v1518 = vadd.f32 %v1516, %v1517
  %v1519 = vsel %vm361, %v1369, 0.0
  %v1520 = vadd.f32 %v1518, %v1519
  %v1521 = vsel %vm361, %v1370, 0.0
  %v1522 = vadd.f32 %v1520, %v1521
  %v1523 = vsel %vm361, %v1371, 0.0
  %v1524 = vadd.f32 %v1522, %v1523
  %v1525 = vsel %vm361, %v1372, 0.0
  %v1526 = vadd.f32 %v1524, %v1525
  %v1527 = vsel %vm361, %v1373, 0.0
  %v1528 = vadd.f32 %v1526, %v1527
  %v1529 = vsel %vm361, %v1374, 0.0
  %v1530 = vadd.f32 %v1528, %v1529
  %v1531 = vsel %vm361, %v1375, 0.0
  %v1532 = vadd.f32 %v1530, %v1531
  %v1533 = vsel %vm361, %v1376, 0.0
  %v1534 = vadd.f32 %v1532, %v1533
  %v1535 = vsel %vm361, %v1377, 0.0
  %v1536 = vadd.f32 %v1534, %v1535
  %v1537 = vsel %vm361, %v1378, 0.0
  %v1538 = vadd.f32 %v1536, %v1537
  %v1539 = vsel %vm361, %v1379, 0.0
  %v1540 = vadd.f32 %v1538, %v1539
  %v1541 = vsel %vm361, %v1380, 0.0
  %v1542 = vadd.f32 %v1540, %v1541
  %v1543 = vsel %vm361, %v1381, 0.0
  %v1544 = vadd.f32 %v1542, %v1543
  %v1545 = vsel %vm361, %v1382, 0.0
  %v1546 = vadd.f32 %v1544, %v1545
  %v1547 = vsel %vm361, %v1383, 0.0
  %v1548 = vadd.f32 %v1546, %v1547
  %v1549 = vsel %vm361, %v1384, 0.0
  %v1550 = vadd.f32 %v1548, %v1549
  %v1551 = vsel %vm361, %v1385, 0.0
  %v1552 = vadd.f32 %v1550, %v1551
  %v1553 = vsel %vm361, %v1386, 0.0
  %v1554 = vadd.f32 %v1552, %v1553
  %v1555 = vsel %vm361, %v1387, 0.0
  %v1556 = vadd.f32 %v1554, %v1555
  %v1557 = vsel %vm361, %v1388, 0.0
  %v1558 = vadd.f32 %v1556, %v1557
  %v1559 = vsel %vm361, %v1389, 0.0
  %v1560 = vadd.f32 %v1558, %v1559
  %v1561 = vrot.slane %v1560, 4
  %v1562 = vadd.f32 %v1560, %v1561
  %v1563 = vrot.slane %v1562, 2
  %v1564 = vadd.f32 %v1562, %v1563
  %v1565 = vrot.slane %v1564, 1
  %v1566 = vadd.f32 %v1564, %v1565
  %v1567 = vmul.f32 %v1304, %v1304
  %v1568 = vmul.f32 %v1305, %v1305
  %v1569 = vmul.f32 %v1306, %v1306
  %v1570 = vmul.f32 %v1307, %v1307
  %v1571 = vmul.f32 %v1308, %v1308
  %v1572 = vmul.f32 %v1309, %v1309
  %v1573 = vmul.f32 %v1310, %v1310
  %v1574 = vmul.f32 %v1311, %v1311
  %v1575 = vmul.f32 %v1312, %v1312
  %v1576 = vmul.f32 %v1313, %v1313
  %v1577 = vmul.f32 %v1314, %v1314
  %v1578 = vmul.f32 %v1315, %v1315
  %v1579 = vmul.f32 %v1316, %v1316
  %v1580 = vmul.f32 %v1317, %v1317
  %v1581 = vmul.f32 %v1318, %v1318
  %v1582 = vmul.f32 %v1319, %v1319
  %v1583 = vmul.f32 %v1320, %v1320
  %v1584 = vmul.f32 %v1321, %v1321
  %v1585 = vmul.f32 %v1322, %v1322
  %v1586 = vmul.f32 %v1323, %v1323
  %v1587 = vmul.f32 %v1324, %v1324
  %v1588 = vmul.f32 %v1325, %v1325
  %v1589 = vmul.f32 %v1326, %v1326
  %v1590 = vmul.f32 %v1327, %v1327
  %v1591 = vmul.f32 %v1328, %v1328
  %v1592 = vmul.f32 %v1329, %v1329
  %v1593 = vmul.f32 %v1330, %v1330
  %v1594 = vmul.f32 %v1331, %v1331
  %v1595 = vmul.f32 %v1332, %v1332
  %v1596 = vmul.f32 %v1333, %v1333
  %v1597 = vmul.f32 %v1334, %v1334
  %v1598 = vmul.f32 %v1335, %v1335
  %v1599 = vmul.f32 %v1336, %v1336
  %v1600 = vmul.f32 %v1337, %v1337
  %v1601 = vmul.f32 %v1338, %v1338
  %v1602 = vmul.f32 %v1339, %v1339
  %v1603 = vmul.f32 %v1340, %v1340
  %v1604 = vmul.f32 %v1341, %v1341
  %v1605 = vmul.f32 %v1342, %v1342
  %v1606 = vmul.f32 %v1343, %v1343
  %v1607 = vmul.f32 %v1344, %v1344
  %v1608 = vmul.f32 %v1345, %v1345
  %v1609 = vmul.f32 %v1346, %v1346
  %v1610 = vmul.f32 %v1347, %v1347
  %v1611 = vmul.f32 %v1348, %v1348
  %v1612 = vmul.f32 %v1349, %v1349
  %v1613 = vmul.f32 %v1350, %v1350
  %v1614 = vmul.f32 %v1351, %v1351
  %v1615 = vmul.f32 %v1352, %v1352
  %v1616 = vmul.f32 %v1353, %v1353
  %v1617 = vmul.f32 %v1354, %v1354
  %v1618 = vmul.f32 %v1355, %v1355
  %v1619 = vmul.f32 %v1356, %v1356
  %v1620 = vmul.f32 %v1357, %v1357
  %v1621 = vmul.f32 %v1358, %v1358
  %v1622 = vmul.f32 %v1359, %v1359
  %v1623 = vmul.f32 %v1360, %v1360
  %v1624 = vmul.f32 %v1361, %v1361
  %v1625 = vmul.f32 %v1362, %v1362
  %v1626 = vmul.f32 %v1363, %v1363
  %v1627 = vmul.f32 %v1364, %v1364
  %v1628 = vmul.f32 %v1365, %v1365
  %v1629 = vmul.f32 %v1366, %v1366
  %v1630 = vmul.f32 %v1367, %v1367
  %v1631 = vmul.f32 %v1368, %v1368
  %v1632 = vmul.f32 %v1369, %v1369
  %v1633 = vmul.f32 %v1370, %v1370
  %v1634 = vmul.f32 %v1371, %v1371
  %v1635 = vmul.f32 %v1372, %v1372
  %v1636 = vmul.f32 %v1373, %v1373
  %v1637 = vmul.f32 %v1374, %v1374
  %v1638 = vmul.f32 %v1375, %v1375
  %v1639 = vmul.f32 %v1376, %v1376
  %v1640 = vmul.f32 %v1377, %v1377
  %v1641 = vmul.f32 %v1378, %v1378
  %v1642 = vmul.f32 %v1379, %v1379
  %v1643 = vmul.f32 %v1380, %v1380
  %v1644 = vmul.f32 %v1381, %v1381
  %v1645 = vmul.f32 %v1382, %v1382
  %v1646 = vmul.f32 %v1383, %v1383
  %v1647 = vmul.f32 %v1384, %v1384
  %v1648 = vmul.f32 %v1385, %v1385
  %v1649 = vmul.f32 %v1386, %v1386
  %v1650 = vmul.f32 %v1387, %v1387
  %v1651 = vmul.f32 %v1388, %v1388
  %v1652 = vmul.f32 %v1389, %v1389
  %v1653 = vsel %vm361, %v1567, 0.0
  %v1654 = vsel %vm361, %v1568, 0.0
  %v1655 = vadd.f32 %v1653, %v1654
  %v1656 = vsel %vm361, %v1569, 0.0
  %v1657 = vadd.f32 %v1655, %v1656
  %v1658 = vsel %vm361, %v1570, 0.0
  %v1659 = vadd.f32 %v1657, %v1658
  %v1660 = vsel %vm361, %v1571, 0.0
  %v1661 = vadd.f32 %v1659, %v1660
  %v1662 = vsel %vm361, %v1572, 0.0
  %v1663 = vadd.f32 %v1661, %v1662
  %v1664 = vsel %vm361, %v1573, 0.0
  %v1665 = vadd.f32 %v1663, %v1664
  %v1666 = vsel %vm361, %v1574, 0.0
  %v1667 = vadd.f32 %v1665, %v1666
  %v1668 = vsel %vm361, %v1575, 0.0
  %v1669 = vadd.f32 %v1667, %v1668
  %v1670 = vsel %vm361, %v1576, 0.0
  %v1671 = vadd.f32 %v1669, %v1670
  %v1672 = vsel %vm361, %v1577, 0.0
  %v1673 = vadd.f32 %v1671, %v1672
  %v1674 = vsel %vm361, %v1578, 0.0
  %v1675 = vadd.f32 %v1673, %v1674
  %v1676 = vsel %vm361, %v1579, 0.0
  %v1677 = vadd.f32 %v1675, %v1676
  %v1678 = vsel %vm361, %v1580, 0.0
  %v1679 = vadd.f32 %v1677, %v1678
  %v1680 = vsel %vm361, %v1581, 0.0
  %v1681 = vadd.f32 %v1679, %v1680
  %v1682 = vsel %vm361, %v1582, 0.0
  %v1683 = vadd.f32 %v1681, %v1682
  %v1684 = vsel %vm361, %v1583, 0.0
  %v1685 = vadd.f32 %v1683, %v1684
  %v1686 = vsel %vm361, %v1584, 0.0
  %v1687 = vadd.f32 %v1685, %v1686
  %v1688 = vsel %vm361, %v1585, 0.0
  %v1689 = vadd.f32 %v1687, %v1688
  %v1690 = vsel %vm361, %v1586, 0.0
  %v1691 = vadd.f32 %v1689, %v1690
  %v1692 = vsel %vm361, %v1587, 0.0
  %v1693 = vadd.f32 %v1691, %v1692
  %v1694 = vsel %vm361, %v1588, 0.0
  %v1695 = vadd.f32 %v1693, %v1694
  %v1696 = vsel %vm361, %v1589, 0.0
  %v1697 = vadd.f32 %v1695, %v1696
  %v1698 = vsel %vm361, %v1590, 0.0
  %v1699 = vadd.f32 %v1697, %v1698
  %v1700 = vsel %vm361, %v1591, 0.0
  %v1701 = vadd.f32 %v1699, %v1700
  %v1702 = vsel %vm361, %v1592, 0.0
  %v1703 = vadd.f32 %v1701, %v1702
  %v1704 = vsel %vm361, %v1593, 0.0
  %v1705 = vadd.f32 %v1703, %v1704
  %v1706 = vsel %vm361, %v1594, 0.0
  %v1707 = vadd.f32 %v1705, %v1706
  %v1708 = vsel %vm361, %v1595, 0.0
  %v1709 = vadd.f32 %v1707, %v1708
  %v1710 = vsel %vm361, %v1596, 0.0
  %v1711 = vadd.f32 %v1709, %v1710
  %v1712 = vsel %vm361, %v1597, 0.0
  %v1713 = vadd.f32 %v1711, %v1712
  %v1714 = vsel %vm361, %v1598, 0.0
  %v1715 = vadd.f32 %v1713, %v1714
  %v1716 = vsel %vm361, %v1599, 0.0
  %v1717 = vadd.f32 %v1715, %v1716
  %v1718 = vsel %vm361, %v1600, 0.0
  %v1719 = vadd.f32 %v1717, %v1718
  %v1720 = vsel %vm361, %v1601, 0.0
  %v1721 = vadd.f32 %v1719, %v1720
  %v1722 = vsel %vm361, %v1602, 0.0
  %v1723 = vadd.f32 %v1721, %v1722
  %v1724 = vsel %vm361, %v1603, 0.0
  %v1725 = vadd.f32 %v1723, %v1724
  %v1726 = vsel %vm361, %v1604, 0.0
  %v1727 = vadd.f32 %v1725, %v1726
  %v1728 = vsel %vm361, %v1605, 0.0
  %v1729 = vadd.f32 %v1727, %v1728
  %v1730 = vsel %vm361, %v1606, 0.0
  %v1731 = vadd.f32 %v1729, %v1730
  %v1732 = vsel %vm361, %v1607, 0.0
  %v1733 = vadd.f32 %v1731, %v1732
  %v1734 = vsel %vm361, %v1608, 0.0
  %v1735 = vadd.f32 %v1733, %v1734
  %v1736 = vsel %vm361, %v1609, 0.0
  %v1737 = vadd.f32 %v1735, %v1736
  %v1738 = vsel %vm361, %v1610, 0.0
  %v1739 = vadd.f32 %v1737, %v1738
  %v1740 = vsel %vm361, %v1611, 0.0
  %v1741 = vadd.f32 %v1739, %v1740
  %v1742 = vsel %vm361, %v1612, 0.0
  %v1743 = vadd.f32 %v1741, %v1742
  %v1744 = vsel %vm361, %v1613, 0.0
  %v1745 = vadd.f32 %v1743, %v1744
  %v1746 = vsel %vm361, %v1614, 0.0
  %v1747 = vadd.f32 %v1745, %v1746
  %v1748 = vsel %vm361, %v1615, 0.0
  %v1749 = vadd.f32 %v1747, %v1748
  %v1750 = vsel %vm361, %v1616, 0.0
  %v1751 = vadd.f32 %v1749, %v1750
  %v1752 = vsel %vm361, %v1617, 0.0
  %v1753 = vadd.f32 %v1751, %v1752
  %v1754 = vsel %vm361, %v1618, 0.0
  %v1755 = vadd.f32 %v1753, %v1754
  %v1756 = vsel %vm361, %v1619, 0.0
  %v1757 = vadd.f32 %v1755, %v1756
  %v1758 = vsel %vm361, %v1620, 0.0
  %v1759 = vadd.f32 %v1757, %v1758
  %v1760 = vsel %vm361, %v1621, 0.0
  %v1761 = vadd.f32 %v1759, %v1760
  %v1762 = vsel %vm361, %v1622, 0.0
  %v1763 = vadd.f32 %v1761, %v1762
  %v1764 = vsel %vm361, %v1623, 0.0
  %v1765 = vadd.f32 %v1763, %v1764
  %v1766 = vsel %vm361, %v1624, 0.0
  %v1767 = vadd.f32 %v1765, %v1766
  %v1768 = vsel %vm361, %v1625, 0.0
  %v1769 = vadd.f32 %v1767, %v1768
  %v1770 = vsel %vm361, %v1626, 0.0
  %v1771 = vadd.f32 %v1769, %v1770
  %v1772 = vsel %vm361, %v1627, 0.0
  %v1773 = vadd.f32 %v1771, %v1772
  %v1774 = vsel %vm361, %v1628, 0.0
  %v1775 = vadd.f32 %v1773, %v1774
  %v1776 = vsel %vm361, %v1629, 0.0
  %v1777 = vadd.f32 %v1775, %v1776
  %v1778 = vsel %vm361, %v1630, 0.0
  %v1779 = vadd.f32 %v1777, %v1778
  %v1780 = vsel %vm361, %v1631, 0.0
  %v1781 = vadd.f32 %v1779, %v1780
  %v1782 = vsel %vm361, %v1632, 0.0
  %v1783 = vadd.f32 %v1781, %v1782
  %v1784 = vsel %vm361, %v1633, 0.0
  %v1785 = vadd.f32 %v1783, %v1784
  %v1786 = vsel %vm361, %v1634, 0.0
  %v1787 = vadd.f32 %v1785, %v1786
  %v1788 = vsel %vm361, %v1635, 0.0
  %v1789 = vadd.f32 %v1787, %v1788
  %v1790 = vsel %vm361, %v1636, 0.0
  %v1791 = vadd.f32 %v1789, %v1790
  %v1792 = vsel %vm361, %v1637, 0.0
  %v1793 = vadd.f32 %v1791, %v1792
  %v1794 = vsel %vm361, %v1638, 0.0
  %v1795 = vadd.f32 %v1793, %v1794
  %v1796 = vsel %vm361, %v1639, 0.0
  %v1797 = vadd.f32 %v1795, %v1796
  %v1798 = vsel %vm361, %v1640, 0.0
  %v1799 = vadd.f32 %v1797, %v1798
  %v1800 = vsel %vm361, %v1641, 0.0
  %v1801 = vadd.f32 %v1799, %v1800
  %v1802 = vsel %vm361, %v1642, 0.0
  %v1803 = vadd.f32 %v1801, %v1802
  %v1804 = vsel %vm361, %v1643, 0.0
  %v1805 = vadd.f32 %v1803, %v1804
  %v1806 = vsel %vm361, %v1644, 0.0
  %v1807 = vadd.f32 %v1805, %v1806
  %v1808 = vsel %vm361, %v1645, 0.0
  %v1809 = vadd.f32 %v1807, %v1808
  %v1810 = vsel %vm361, %v1646, 0.0
  %v1811 = vadd.f32 %v1809, %v1810
  %v1812 = vsel %vm361, %v1647, 0.0
  %v1813 = vadd.f32 %v1811, %v1812
  %v1814 = vsel %vm361, %v1648, 0.0
  %v1815 = vadd.f32 %v1813, %v1814
  %v1816 = vsel %vm361, %v1649, 0.0
  %v1817 = vadd.f32 %v1815, %v1816
  %v1818 = vsel %vm361, %v1650, 0.0
  %v1819 = vadd.f32 %v1817, %v1818
  %v1820 = vsel %vm361, %v1651, 0.0
  %v1821 = vadd.f32 %v1819, %v1820
  %v1822 = vsel %vm361, %v1652, 0.0
  %v1823 = vadd.f32 %v1821, %v1822
  %v1824 = vrot.slane %v1823, 4
  %v1825 = vadd.f32 %v1823, %v1824
  %v1826 = vrot.slane %v1825, 2
  %v1827 = vadd.f32 %v1825, %v1826
  %v1828 = vrot.slane %v1827, 1
  %v1829 = vadd.f32 %v1827, %v1828
  %v1830 = vmul.f32 %v1566, 0.001953125
  %v1831 = vmul.f32 %v1829, 0.001953125
  %v1832 = vmul.f32 %v1830, %v1830
  %v1833 = vsub.f32 %v1831, %v1832
  %v1834 = vmax.f32 %v1833, 0.0
  %v1835 = vadd.f32 %v1834, 1e-05
  %v1836 = vrsqrt.pop %v1835
  %v1837 = vmul.f32 %v872, %v1836
  %v1838 = vmul.f32 %v1830, %v1837
  %v1839 = vsub.f32 %v873, %v1838
  %v1841 = vlaneseq
  %v1842 = vshrl.u32 %v1841, 7
  %v1843 = vsub.s32 0, %v1842
  %v1844 = vrot.slane %v1837, %v1843
  %v1846 = vmul.f32 %v530, %v1844
  %v1847 = vmul.f32 %v533, %v1844
  %v1848 = vmul.f32 %v538, %v1844
  %v1849 = vmul.f32 %v541, %v1844
  %v1850 = vmul.f32 %v546, %v1844
  %v1851 = vmul.f32 %v549, %v1844
  %v1852 = vmul.f32 %v554, %v1844
  %v1853 = vmul.f32 %v557, %v1844
  %v1854 = vmul.f32 %v562, %v1844
  %v1855 = vmul.f32 %v565, %v1844
  %v1856 = vmul.f32 %v570, %v1844
  %v1857 = vmul.f32 %v573, %v1844
  %v1858 = vmul.f32 %v578, %v1844
  %v1859 = vmul.f32 %v581, %v1844
  %v1860 = vmul.f32 %v586, %v1844
  %v1861 = vmul.f32 %v589, %v1844
  %v1862 = vmul.f32 %v594, %v1844
  %v1863 = vmul.f32 %v597, %v1844
  %v1864 = vmul.f32 %v602, %v1844
  %v1865 = vmul.f32 %v605, %v1844
  %v1866 = vmul.f32 %v610, %v1844
  %v1867 = vmul.f32 %v613, %v1844
  %v1868 = vmul.f32 %v618, %v1844
  %v1869 = vmul.f32 %v621, %v1844
  %v1870 = vmul.f32 %v626, %v1844
  %v1871 = vmul.f32 %v629, %v1844
  %v1872 = vmul.f32 %v634, %v1844
  %v1873 = vmul.f32 %v637, %v1844
  %v1874 = vmul.f32 %v642, %v1844
  %v1875 = vmul.f32 %v645, %v1844
  %v1876 = vmul.f32 %v650, %v1844
  %v1877 = vmul.f32 %v653, %v1844
  %v1878 = vmul.f32 %v658, %v1844
  %v1879 = vmul.f32 %v661, %v1844
  %v1880 = vmul.f32 %v666, %v1844
  %v1881 = vmul.f32 %v669, %v1844
  %v1882 = vmul.f32 %v674, %v1844
  %v1883 = vmul.f32 %v677, %v1844
  %v1884 = vmul.f32 %v682, %v1844
  %v1885 = vmul.f32 %v685, %v1844
  %v1886 = vmul.f32 %v690, %v1844
  %v1887 = vmul.f32 %v693, %v1844
  %v1888 = vmul.f32 %v698, %v1844
  %v1889 = vmul.f32 %v701, %v1844
  %v1890 = vmul.f32 %v706, %v1844
  %v1891 = vmul.f32 %v709, %v1844
  %v1892 = vmul.f32 %v714, %v1844
  %v1893 = vmul.f32 %v717, %v1844
  %v1894 = vmul.f32 %v722, %v1844
  %v1895 = vmul.f32 %v725, %v1844
  %v1896 = vmul.f32 %v730, %v1844
  %v1897 = vmul.f32 %v733, %v1844
  %v1898 = vmul.f32 %v738, %v1844
  %v1899 = vmul.f32 %v741, %v1844
  %v1900 = vmul.f32 %v746, %v1844
  %v1901 = vmul.f32 %v749, %v1844
  %v1902 = vmul.f32 %v754, %v1844
  %v1903 = vmul.f32 %v757, %v1844
  %v1904 = vmul.f32 %v762, %v1844
  %v1905 = vmul.f32 %v765, %v1844
  %v1906 = vmul.f32 %v770, %v1844
  %v1907 = vmul.f32 %v773, %v1844
  %v1908 = vmul.f32 %v778, %v1844
  %v1909 = vmul.f32 %v781, %v1844
  %v1910 = vmul.f32 %v786, %v1844
  %v1911 = vmul.f32 %v789, %v1844
  %v1912 = vmul.f32 %v794, %v1844
  %v1913 = vmul.f32 %v797, %v1844
  %v1914 = vmul.f32 %v802, %v1844
  %v1915 = vmul.f32 %v805, %v1844
  %v1916 = vmul.f32 %v810, %v1844
  %v1917 = vmul.f32 %v813, %v1844
  %v1918 = vmul.f32 %v818, %v1844
  %v1919 = vmul.f32 %v821, %v1844
  %v1920 = vmul.f32 %v826, %v1844
  %v1921 = vmul.f32 %v829, %v1844
  %v1922 = vmul.f32 %v834, %v1844
  %v1923 = vmul.f32 %v837, %v1844
  %v1924 = vmul.f32 %v842, %v1844
  %v1925 = vmul.f32 %v845, %v1844
  %v1926 = vmul.f32 %v850, %v1844
  %v1927 = vmul.f32 %v853, %v1844
  %v1928 = vmul.f32 %v858, %v1844
  %v1929 = vmul.f32 %v861, %v1844
  %v1930 = vmul.f32 %v866, %v1844
  %v1931 = vmul.f32 %v869, %v1844
  %v1933 = vlaneseq
  %v1934 = vshrl.u32 %v1933, 7
  %v1935 = vsub.s32 0, %v1934
  %v1936 = vrot.slane %v1839, %v1935
  %v1938 = vadd.f32 %v1846, %v1936
  %v1939 = vadd.f32 %v1847, %v1936
  %v1940 = vadd.f32 %v1848, %v1936
  %v1941 = vadd.f32 %v1849, %v1936
  %v1942 = vadd.f32 %v1850, %v1936
  %v1943 = vadd.f32 %v1851, %v1936
  %v1944 = vadd.f32 %v1852, %v1936
  %v1945 = vadd.f32 %v1853, %v1936
  %v1946 = vadd.f32 %v1854, %v1936
  %v1947 = vadd.f32 %v1855, %v1936
  %v1948 = vadd.f32 %v1856, %v1936
  %v1949 = vadd.f32 %v1857, %v1936
  %v1950 = vadd.f32 %v1858, %v1936
  %v1951 = vadd.f32 %v1859, %v1936
  %v1952 = vadd.f32 %v1860, %v1936
  %v1953 = vadd.f32 %v1861, %v1936
  %v1954 = vadd.f32 %v1862, %v1936
  %v1955 = vadd.f32 %v1863, %v1936
  %v1956 = vadd.f32 %v1864, %v1936
  %v1957 = vadd.f32 %v1865, %v1936
  %v1958 = vadd.f32 %v1866, %v1936
  %v1959 = vadd.f32 %v1867, %v1936
  %v1960 = vadd.f32 %v1868, %v1936
  %v1961 = vadd.f32 %v1869, %v1936
  %v1962 = vadd.f32 %v1870, %v1936
  %v1963 = vadd.f32 %v1871, %v1936
  %v1964 = vadd.f32 %v1872, %v1936
  %v1965 = vadd.f32 %v1873, %v1936
  %v1966 = vadd.f32 %v1874, %v1936
  %v1967 = vadd.f32 %v1875, %v1936
  %v1968 = vadd.f32 %v1876, %v1936
  %v1969 = vadd.f32 %v1877, %v1936
  %v1970 = vadd.f32 %v1878, %v1936
  %v1971 = vadd.f32 %v1879, %v1936
  %v1972 = vadd.f32 %v1880, %v1936
  %v1973 = vadd.f32 %v1881, %v1936
  %v1974 = vadd.f32 %v1882, %v1936
  %v1975 = vadd.f32 %v1883, %v1936
  %v1976 = vadd.f32 %v1884, %v1936
  %v1977 = vadd.f32 %v1885, %v1936
  %v1978 = vadd.f32 %v1886, %v1936
  %v1979 = vadd.f32 %v1887, %v1936
  %v1980 = vadd.f32 %v1888, %v1936
  %v1981 = vadd.f32 %v1889, %v1936
  %v1982 = vadd.f32 %v1890, %v1936
  %v1983 = vadd.f32 %v1891, %v1936
  %v1984 = vadd.f32 %v1892, %v1936
  %v1985 = vadd.f32 %v1893, %v1936
  %v1986 = vadd.f32 %v1894, %v1936
  %v1987 = vadd.f32 %v1895, %v1936
  %v1988 = vadd.f32 %v1896, %v1936
  %v1989 = vadd.f32 %v1897, %v1936
  %v1990 = vadd.f32 %v1898, %v1936
  %v1991 = vadd.f32 %v1899, %v1936
  %v1992 = vadd.f32 %v1900, %v1936
  %v1993 = vadd.f32 %v1901, %v1936
  %v1994 = vadd.f32 %v1902, %v1936
  %v1995 = vadd.f32 %v1903, %v1936
  %v1996 = vadd.f32 %v1904, %v1936
  %v1997 = vadd.f32 %v1905, %v1936
  %v1998 = vadd.f32 %v1906, %v1936
  %v1999 = vadd.f32 %v1907, %v1936
  %v2000 = vadd.f32 %v1908, %v1936
  %v2001 = vadd.f32 %v1909, %v1936
  %v2002 = vadd.f32 %v1910, %v1936
  %v2003 = vadd.f32 %v1911, %v1936
  %v2004 = vadd.f32 %v1912, %v1936
  %v2005 = vadd.f32 %v1913, %v1936
  %v2006 = vadd.f32 %v1914, %v1936
  %v2007 = vadd.f32 %v1915, %v1936
  %v2008 = vadd.f32 %v1916, %v1936
  %v2009 = vadd.f32 %v1917, %v1936
  %v2010 = vadd.f32 %v1918, %v1936
  %v2011 = vadd.f32 %v1919, %v1936
  %v2012 = vadd.f32 %v1920, %v1936
  %v2013 = vadd.f32 %v1921, %v1936
  %v2014 = vadd.f32 %v1922, %v1936
  %v2015 = vadd.f32 %v1923, %v1936
  %v2016 = vadd.f32 %v1924, %v1936
  %v2017 = vadd.f32 %v1925, %v1936
  %v2018 = vadd.f32 %v1926, %v1936
  %v2019 = vadd.f32 %v1927, %v1936
  %v2020 = vadd.f32 %v1928, %v1936
  %v2021 = vadd.f32 %v1929, %v1936
  %v2022 = vadd.f32 %v1930, %v1936
  %v2023 = vadd.f32 %v1931, %v1936
  %vm2024 = vcmp.gt.f32.partialorder %v1938, 0.0
  %vm2025 = vcmp.gt.f32.partialorder %v1939, 0.0
  %vm2026 = vcmp.gt.f32.partialorder %v1940, 0.0
  %vm2027 = vcmp.gt.f32.partialorder %v1941, 0.0
  %vm2028 = vcmp.gt.f32.partialorder %v1942, 0.0
  %vm2029 = vcmp.gt.f32.partialorder %v1943, 0.0
  %vm2030 = vcmp.gt.f32.partialorder %v1944, 0.0
  %vm2031 = vcmp.gt.f32.partialorder %v1945, 0.0
  %vm2032 = vcmp.gt.f32.partialorder %v1946, 0.0
  %vm2033 = vcmp.gt.f32.partialorder %v1947, 0.0
  %vm2034 = vcmp.gt.f32.partialorder %v1948, 0.0
  %vm2035 = vcmp.gt.f32.partialorder %v1949, 0.0
  %vm2036 = vcmp.gt.f32.partialorder %v1950, 0.0
  %vm2037 = vcmp.gt.f32.partialorder %v1951, 0.0
  %vm2038 = vcmp.gt.f32.partialorder %v1952, 0.0
  %vm2039 = vcmp.gt.f32.partialorder %v1953, 0.0
  %vm2040 = vcmp.gt.f32.partialorder %v1954, 0.0
  %vm2041 = vcmp.gt.f32.partialorder %v1955, 0.0
  %vm2042 = vcmp.gt.f32.partialorder %v1956, 0.0
  %vm2043 = vcmp.gt.f32.partialorder %v1957, 0.0
  %vm2044 = vcmp.gt.f32.partialorder %v1958, 0.0
  %vm2045 = vcmp.gt.f32.partialorder %v1959, 0.0
  %vm2046 = vcmp.gt.f32.partialorder %v1960, 0.0
  %vm2047 = vcmp.gt.f32.partialorder %v1961, 0.0
  %vm2048 = vcmp.gt.f32.partialorder %v1962, 0.0
  %vm2049 = vcmp.gt.f32.partialorder %v1963, 0.0
  %vm2050 = vcmp.gt.f32.partialorder %v1964, 0.0
  %vm2051 = vcmp.gt.f32.partialorder %v1965, 0.0
  %vm2052 = vcmp.gt.f32.partialorder %v1966, 0.0
  %vm2053 = vcmp.gt.f32.partialorder %v1967, 0.0
  %vm2054 = vcmp.gt.f32.partialorder %v1968, 0.0
  %vm2055 = vcmp.gt.f32.partialorder %v1969, 0.0
  %vm2056 = vcmp.gt.f32.partialorder %v1970, 0.0
  %vm2057 = vcmp.gt.f32.partialorder %v1971, 0.0
  %vm2058 = vcmp.gt.f32.partialorder %v1972, 0.0
  %vm2059 = vcmp.gt.f32.partialorder %v1973, 0.0
  %vm2060 = vcmp.gt.f32.partialorder %v1974, 0.0
  %vm2061 = vcmp.gt.f32.partialorder %v1975, 0.0
  %vm2062 = vcmp.gt.f32.partialorder %v1976, 0.0
  %vm2063 = vcmp.gt.f32.partialorder %v1977, 0.0
  %vm2064 = vcmp.gt.f32.partialorder %v1978, 0.0
  %vm2065 = vcmp.gt.f32.partialorder %v1979, 0.0
  %vm2066 = vcmp.gt.f32.partialorder %v1980, 0.0
  %vm2067 = vcmp.gt.f32.partialorder %v1981, 0.0
  %vm2068 = vcmp.gt.f32.partialorder %v1982, 0.0
  %vm2069 = vcmp.gt.f32.partialorder %v1983, 0.0
  %vm2070 = vcmp.gt.f32.partialorder %v1984, 0.0
  %vm2071 = vcmp.gt.f32.partialorder %v1985, 0.0
  %vm2072 = vcmp.gt.f32.partialorder %v1986, 0.0
  %vm2073 = vcmp.gt.f32.partialorder %v1987, 0.0
  %vm2074 = vcmp.gt.f32.partialorder %v1988, 0.0
  %vm2075 = vcmp.gt.f32.partialorder %v1989, 0.0
  %vm2076 = vcmp.gt.f32.partialorder %v1990, 0.0
  %vm2077 = vcmp.gt.f32.partialorder %v1991, 0.0
  %vm2078 = vcmp.gt.f32.partialorder %v1992, 0.0
  %vm2079 = vcmp.gt.f32.partialorder %v1993, 0.0
  %vm2080 = vcmp.gt.f32.partialorder %v1994, 0.0
  %vm2081 = vcmp.gt.f32.partialorder %v1995, 0.0
  %vm2082 = vcmp.gt.f32.partialorder %v1996, 0.0
  %vm2083 = vcmp.gt.f32.partialorder %v1997, 0.0
  %vm2084 = vcmp.gt.f32.partialorder %v1998, 0.0
  %vm2085 = vcmp.gt.f32.partialorder %v1999, 0.0
  %vm2086 = vcmp.gt.f32.partialorder %v2000, 0.0
  %vm2087 = vcmp.gt.f32.partialorder %v2001, 0.0
  %vm2088 = vcmp.gt.f32.partialorder %v2002, 0.0
  %vm2089 = vcmp.gt.f32.partialorder %v2003, 0.0
  %vm2090 = vcmp.gt.f32.partialorder %v2004, 0.0
  %vm2091 = vcmp.gt.f32.partialorder %v2005, 0.0
  %vm2092 = vcmp.gt.f32.partialorder %v2006, 0.0
  %vm2093 = vcmp.gt.f32.partialorder %v2007, 0.0
  %vm2094 = vcmp.gt.f32.partialorder %v2008, 0.0
  %vm2095 = vcmp.gt.f32.partialorder %v2009, 0.0
  %vm2096 = vcmp.gt.f32.partialorder %v2010, 0.0
  %vm2097 = vcmp.gt.f32.partialorder %v2011, 0.0
  %vm2098 = vcmp.gt.f32.partialorder %v2012, 0.0
  %vm2099 = vcmp.gt.f32.partialorder %v2013, 0.0
  %vm2100 = vcmp.gt.f32.partialorder %v2014, 0.0
  %vm2101 = vcmp.gt.f32.partialorder %v2015, 0.0
  %vm2102 = vcmp.gt.f32.partialorder %v2016, 0.0
  %vm2103 = vcmp.gt.f32.partialorder %v2017, 0.0
  %vm2104 = vcmp.gt.f32.partialorder %v2018, 0.0
  %vm2105 = vcmp.gt.f32.partialorder %v2019, 0.0
  %vm2106 = vcmp.gt.f32.partialorder %v2020, 0.0
  %vm2107 = vcmp.gt.f32.partialorder %v2021, 0.0
  %vm2108 = vcmp.gt.f32.partialorder %v2022, 0.0
  %vm2109 = vcmp.gt.f32.partialorder %v2023, 0.0
  %v2110 = vmin.f32 %v1938, 0.0
  %v2111 = vmin.f32 %v1939, 0.0
  %v2112 = vmin.f32 %v1940, 0.0
  %v2113 = vmin.f32 %v1941, 0.0
  %v2114 = vmin.f32 %v1942, 0.0
  %v2115 = vmin.f32 %v1943, 0.0
  %v2116 = vmin.f32 %v1944, 0.0
  %v2117 = vmin.f32 %v1945, 0.0
  %v2118 = vmin.f32 %v1946, 0.0
  %v2119 = vmin.f32 %v1947, 0.0
  %v2120 = vmin.f32 %v1948, 0.0
  %v2121 = vmin.f32 %v1949, 0.0
  %v2122 = vmin.f32 %v1950, 0.0
  %v2123 = vmin.f32 %v1951, 0.0
  %v2124 = vmin.f32 %v1952, 0.0
  %v2125 = vmin.f32 %v1953, 0.0
  %v2126 = vmin.f32 %v1954, 0.0
  %v2127 = vmin.f32 %v1955, 0.0
  %v2128 = vmin.f32 %v1956, 0.0
  %v2129 = vmin.f32 %v1957, 0.0
  %v2130 = vmin.f32 %v1958, 0.0
  %v2131 = vmin.f32 %v1959, 0.0
  %v2132 = vmin.f32 %v1960, 0.0
  %v2133 = vmin.f32 %v1961, 0.0
  %v2134 = vmin.f32 %v1962, 0.0
  %v2135 = vmin.f32 %v1963, 0.0
  %v2136 = vmin.f32 %v1964, 0.0
  %v2137 = vmin.f32 %v1965, 0.0
  %v2138 = vmin.f32 %v1966, 0.0
  %v2139 = vmin.f32 %v1967, 0.0
  %v2140 = vmin.f32 %v1968, 0.0
  %v2141 = vmin.f32 %v1969, 0.0
  %v2142 = vmin.f32 %v1970, 0.0
  %v2143 = vmin.f32 %v1971, 0.0
  %v2144 = vmin.f32 %v1972, 0.0
  %v2145 = vmin.f32 %v1973, 0.0
  %v2146 = vmin.f32 %v1974, 0.0
  %v2147 = vmin.f32 %v1975, 0.0
  %v2148 = vmin.f32 %v1976, 0.0
  %v2149 = vmin.f32 %v1977, 0.0
  %v2150 = vmin.f32 %v1978, 0.0
  %v2151 = vmin.f32 %v1979, 0.0
  %v2152 = vmin.f32 %v1980, 0.0
  %v2153 = vmin.f32 %v1981, 0.0
  %v2154 = vmin.f32 %v1982, 0.0
  %v2155 = vmin.f32 %v1983, 0.0
  %v2156 = vmin.f32 %v1984, 0.0
  %v2157 = vmin.f32 %v1985, 0.0
  %v2158 = vmin.f32 %v1986, 0.0
  %v2159 = vmin.f32 %v1987, 0.0
  %v2160 = vmin.f32 %v1988, 0.0
  %v2161 = vmin.f32 %v1989, 0.0
  %v2162 = vmin.f32 %v1990, 0.0
  %v2163 = vmin.f32 %v1991, 0.0
  %v2164 = vmin.f32 %v1992, 0.0
  %v2165 = vmin.f32 %v1993, 0.0
  %v2166 = vmin.f32 %v1994, 0.0
  %v2167 = vmin.f32 %v1995, 0.0
  %v2168 = vmin.f32 %v1996, 0.0
  %v2169 = vmin.f32 %v1997, 0.0
  %v2170 = vmin.f32 %v1998, 0.0
  %v2171 = vmin.f32 %v1999, 0.0
  %v2172 = vmin.f32 %v2000, 0.0
  %v2173 = vmin.f32 %v2001, 0.0
  %v2174 = vmin.f32 %v2002, 0.0
  %v2175 = vmin.f32 %v2003, 0.0
  %v2176 = vmin.f32 %v2004, 0.0
  %v2177 = vmin.f32 %v2005, 0.0
  %v2178 = vmin.f32 %v2006, 0.0
  %v2179 = vmin.f32 %v2007, 0.0
  %v2180 = vmin.f32 %v2008, 0.0
  %v2181 = vmin.f32 %v2009, 0.0
  %v2182 = vmin.f32 %v2010, 0.0
  %v2183 = vmin.f32 %v2011, 0.0
  %v2184 = vmin.f32 %v2012, 0.0
  %v2185 = vmin.f32 %v2013, 0.0
  %v2186 = vmin.f32 %v2014, 0.0
  %v2187 = vmin.f32 %v2015, 0.0
  %v2188 = vmin.f32 %v2016, 0.0
  %v2189 = vmin.f32 %v2017, 0.0
  %v2190 = vmin.f32 %v2018, 0.0
  %v2191 = vmin.f32 %v2019, 0.0
  %v2192 = vmin.f32 %v2020, 0.0
  %v2193 = vmin.f32 %v2021, 0.0
  %v2194 = vmin.f32 %v2022, 0.0
  %v2195 = vmin.f32 %v2023, 0.0
  %v2196 = vmul.f32 %v2110, 1.442695
  %v2197 = vpow.pop %v2196
  %v2198 = vmul.f32 %v2111, 1.442695
  %v2199 = vpow.pop %v2198
  %v2200 = vmul.f32 %v2112, 1.442695
  %v2201 = vpow.pop %v2200
  %v2202 = vmul.f32 %v2113, 1.442695
  %v2203 = vpow.pop %v2202
  %v2204 = vmul.f32 %v2114, 1.442695
  %v2205 = vpow.pop %v2204
  %v2206 = vmul.f32 %v2115, 1.442695
  %v2207 = vpow.pop %v2206
  %v2208 = vmul.f32 %v2116, 1.442695
  %v2209 = vpow.pop %v2208
  %v2210 = vmul.f32 %v2117, 1.442695
  %v2211 = vpow.pop %v2210
  %v2212 = vmul.f32 %v2118, 1.442695
  %v2213 = vpow.pop %v2212
  %v2214 = vmul.f32 %v2119, 1.442695
  %v2215 = vpow.pop %v2214
  %v2216 = vmul.f32 %v2120, 1.442695
  %v2217 = vpow.pop %v2216
  %v2218 = vmul.f32 %v2121, 1.442695
  %v2219 = vpow.pop %v2218
  %v2220 = vmul.f32 %v2122, 1.442695
  %v2221 = vpow.pop %v2220
  %v2222 = vmul.f32 %v2123, 1.442695
  %v2223 = vpow.pop %v2222
  %v2224 = vmul.f32 %v2124, 1.442695
  %v2225 = vpow.pop %v2224
  %v2226 = vmul.f32 %v2125, 1.442695
  %v2227 = vpow.pop %v2226
  %v2228 = vmul.f32 %v2126, 1.442695
  %v2229 = vpow.pop %v2228
  %v2230 = vmul.f32 %v2127, 1.442695
  %v2231 = vpow.pop %v2230
  %v2232 = vmul.f32 %v2128, 1.442695
  %v2233 = vpow.pop %v2232
  %v2234 = vmul.f32 %v2129, 1.442695
  %v2235 = vpow.pop %v2234
  %v2236 = vmul.f32 %v2130, 1.442695
  %v2237 = vpow.pop %v2236
  %v2238 = vmul.f32 %v2131, 1.442695
  %v2239 = vpow.pop %v2238
  %v2240 = vmul.f32 %v2132, 1.442695
  %v2241 = vpow.pop %v2240
  %v2242 = vmul.f32 %v2133, 1.442695
  %v2243 = vpow.pop %v2242
  %v2244 = vmul.f32 %v2134, 1.442695
  %v2245 = vpow.pop %v2244
  %v2246 = vmul.f32 %v2135, 1.442695
  %v2247 = vpow.pop %v2246
  %v2248 = vmul.f32 %v2136, 1.442695
  %v2249 = vpow.pop %v2248
  %v2250 = vmul.f32 %v2137, 1.442695
  %v2251 = vpow.pop %v2250
  %v2252 = vmul.f32 %v2138, 1.442695
  %v2253 = vpow.pop %v2252
  %v2254 = vmul.f32 %v2139, 1.442695
  %v2255 = vpow.pop %v2254
  %v2256 = vmul.f32 %v2140, 1.442695
  %v2257 = vpow.pop %v2256
  %v2258 = vmul.f32 %v2141, 1.442695
  %v2259 = vpow.pop %v2258
  %v2260 = vmul.f32 %v2142, 1.442695
  %v2261 = vpow.pop %v2260
  %v2262 = vmul.f32 %v2143, 1.442695
  %v2263 = vpow.pop %v2262
  %v2264 = vmul.f32 %v2144, 1.442695
  %v2265 = vpow.pop %v2264
  %v2266 = vmul.f32 %v2145, 1.442695
  %v2267 = vpow.pop %v2266
  %v2268 = vmul.f32 %v2146, 1.442695
  %v2269 = vpow.pop %v2268
  %v2270 = vmul.f32 %v2147, 1.442695
  %v2271 = vpow.pop %v2270
  %v2272 = vmul.f32 %v2148, 1.442695
  %v2273 = vpow.pop %v2272
  %v2274 = vmul.f32 %v2149, 1.442695
  %v2275 = vpow.pop %v2274
  %v2276 = vmul.f32 %v2150, 1.442695
  %v2277 = vpow.pop %v2276
  %v2278 = vmul.f32 %v2151, 1.442695
  %v2279 = vpow.pop %v2278
  %v2280 = vmul.f32 %v2152, 1.442695
  %v2281 = vpow.pop %v2280
  %v2282 = vmul.f32 %v2153, 1.442695
  %v2283 = vpow.pop %v2282
  %v2284 = vmul.f32 %v2154, 1.442695
  %v2285 = vpow.pop %v2284
  %v2286 = vmul.f32 %v2155, 1.442695
  %v2287 = vpow.pop %v2286
  %v2288 = vmul.f32 %v2156, 1.442695
  %v2289 = vpow.pop %v2288
  %v2290 = vmul.f32 %v2157, 1.442695
  %v2291 = vpow.pop %v2290
  %v2292 = vmul.f32 %v2158, 1.442695
  %v2293 = vpow.pop %v2292
  %v2294 = vmul.f32 %v2159, 1.442695
  %v2295 = vpow.pop %v2294
  %v2296 = vmul.f32 %v2160, 1.442695
  %v2297 = vpow.pop %v2296
  %v2298 = vmul.f32 %v2161, 1.442695
  %v2299 = vpow.pop %v2298
  %v2300 = vmul.f32 %v2162, 1.442695
  %v2301 = vpow.pop %v2300
  %v2302 = vmul.f32 %v2163, 1.442695
  %v2303 = vpow.pop %v2302
  %v2304 = vmul.f32 %v2164, 1.442695
  %v2305 = vpow.pop %v2304
  %v2306 = vmul.f32 %v2165, 1.442695
  %v2307 = vpow.pop %v2306
  %v2308 = vmul.f32 %v2166, 1.442695
  %v2309 = vpow.pop %v2308
  %v2310 = vmul.f32 %v2167, 1.442695
  %v2311 = vpow.pop %v2310
  %v2312 = vmul.f32 %v2168, 1.442695
  %v2313 = vpow.pop %v2312
  %v2314 = vmul.f32 %v2169, 1.442695
  %v2315 = vpow.pop %v2314
  %v2316 = vmul.f32 %v2170, 1.442695
  %v2317 = vpow.pop %v2316
  %v2318 = vmul.f32 %v2171, 1.442695
  %v2319 = vpow.pop %v2318
  %v2320 = vmul.f32 %v2172, 1.442695
  %v2321 = vpow.pop %v2320
  %v2322 = vmul.f32 %v2173, 1.442695
  %v2323 = vpow.pop %v2322
  %v2324 = vmul.f32 %v2174, 1.442695
  %v2325 = vpow.pop %v2324
  %v2326 = vmul.f32 %v2175, 1.442695
  %v2327 = vpow.pop %v2326
  %v2328 = vmul.f32 %v2176, 1.442695
  %v2329 = vpow.pop %v2328
  %v2330 = vmul.f32 %v2177, 1.442695
  %v2331 = vpow.pop %v2330
  %v2332 = vmul.f32 %v2178, 1.442695
  %v2333 = vpow.pop %v2332
  %v2334 = vmul.f32 %v2179, 1.442695
  %v2335 = vpow.pop %v2334
  %v2336 = vmul.f32 %v2180, 1.442695
  %v2337 = vpow.pop %v2336
  %v2338 = vmul.f32 %v2181, 1.442695
  %v2339 = vpow.pop %v2338
  %v2340 = vmul.f32 %v2182, 1.442695
  %v2341 = vpow.pop %v2340
  %v2342 = vmul.f32 %v2183, 1.442695
  %v2343 = vpow.pop %v2342
  %v2344 = vmul.f32 %v2184, 1.442695
  %v2345 = vpow.pop %v2344
  %v2346 = vmul.f32 %v2185, 1.442695
  %v2347 = vpow.pop %v2346
  %v2348 = vmul.f32 %v2186, 1.442695
  %v2349 = vpow.pop %v2348
  %v2350 = vmul.f32 %v2187, 1.442695
  %v2351 = vpow.pop %v2350
  %v2352 = vmul.f32 %v2188, 1.442695
  %v2353 = vpow.pop %v2352
  %v2354 = vmul.f32 %v2189, 1.442695
  %v2355 = vpow.pop %v2354
  %v2356 = vmul.f32 %v2190, 1.442695
  %v2357 = vpow.pop %v2356
  %v2358 = vmul.f32 %v2191, 1.442695
  %v2359 = vpow.pop %v2358
  %v2360 = vmul.f32 %v2192, 1.442695
  %v2361 = vpow.pop %v2360
  %v2362 = vmul.f32 %v2193, 1.442695
  %v2363 = vpow.pop %v2362
  %v2364 = vmul.f32 %v2194, 1.442695
  %v2365 = vpow.pop %v2364
  %v2366 = vmul.f32 %v2195, 1.442695
  %v2367 = vpow.pop %v2366
  %v2368 = vsub.f32 %v2197, 1.0
  %v2369 = vsub.f32 %v2199, 1.0
  %v2370 = vsub.f32 %v2201, 1.0
  %v2371 = vsub.f32 %v2203, 1.0
  %v2372 = vsub.f32 %v2205, 1.0
  %v2373 = vsub.f32 %v2207, 1.0
  %v2374 = vsub.f32 %v2209, 1.0
  %v2375 = vsub.f32 %v2211, 1.0
  %v2376 = vsub.f32 %v2213, 1.0
  %v2377 = vsub.f32 %v2215, 1.0
  %v2378 = vsub.f32 %v2217, 1.0
  %v2379 = vsub.f32 %v2219, 1.0
  %v2380 = vsub.f32 %v2221, 1.0
  %v2381 = vsub.f32 %v2223, 1.0
  %v2382 = vsub.f32 %v2225, 1.0
  %v2383 = vsub.f32 %v2227, 1.0
  %v2384 = vsub.f32 %v2229, 1.0
  %v2385 = vsub.f32 %v2231, 1.0
  %v2386 = vsub.f32 %v2233, 1.0
  %v2387 = vsub.f32 %v2235, 1.0
  %v2388 = vsub.f32 %v2237, 1.0
  %v2389 = vsub.f32 %v2239, 1.0
  %v2390 = vsub.f32 %v2241, 1.0
  %v2391 = vsub.f32 %v2243, 1.0
  %v2392 = vsub.f32 %v2245, 1.0
  %v2393 = vsub.f32 %v2247, 1.0
  %v2394 = vsub.f32 %v2249, 1.0
  %v2395 = vsub.f32 %v2251, 1.0
  %v2396 = vsub.f32 %v2253, 1.0
  %v2397 = vsub.f32 %v2255, 1.0
  %v2398 = vsub.f32 %v2257, 1.0
  %v2399 = vsub.f32 %v2259, 1.0
  %v2400 = vsub.f32 %v2261, 1.0
  %v2401 = vsub.f32 %v2263, 1.0
  %v2402 = vsub.f32 %v2265, 1.0
  %v2403 = vsub.f32 %v2267, 1.0
  %v2404 = vsub.f32 %v2269, 1.0
  %v2405 = vsub.f32 %v2271, 1.0
  %v2406 = vsub.f32 %v2273, 1.0
  %v2407 = vsub.f32 %v2275, 1.0
  %v2408 = vsub.f32 %v2277, 1.0
  %v2409 = vsub.f32 %v2279, 1.0
  %v2410 = vsub.f32 %v2281, 1.0
  %v2411 = vsub.f32 %v2283, 1.0
  %v2412 = vsub.f32 %v2285, 1.0
  %v2413 = vsub.f32 %v2287, 1.0
  %v2414 = vsub.f32 %v2289, 1.0
  %v2415 = vsub.f32 %v2291, 1.0
  %v2416 = vsub.f32 %v2293, 1.0
  %v2417 = vsub.f32 %v2295, 1.0
  %v2418 = vsub.f32 %v2297, 1.0
  %v2419 = vsub.f32 %v2299, 1.0
  %v2420 = vsub.f32 %v2301, 1.0
  %v2421 = vsub.f32 %v2303, 1.0
  %v2422 = vsub.f32 %v2305, 1.0
  %v2423 = vsub.f32 %v2307, 1.0
  %v2424 = vsub.f32 %v2309, 1.0
  %v2425 = vsub.f32 %v2311, 1.0
  %v2426 = vsub.f32 %v2313, 1.0
  %v2427 = vsub.f32 %v2315, 1.0
  %v2428 = vsub.f32 %v2317, 1.0
  %v2429 = vsub.f32 %v2319, 1.0
  %v2430 = vsub.f32 %v2321, 1.0
  %v2431 = vsub.f32 %v2323, 1.0
  %v2432 = vsub.f32 %v2325, 1.0
  %v2433 = vsub.f32 %v2327, 1.0
  %v2434 = vsub.f32 %v2329, 1.0
  %v2435 = vsub.f32 %v2331, 1.0
  %v2436 = vsub.f32 %v2333, 1.0
  %v2437 = vsub.f32 %v2335, 1.0
  %v2438 = vsub.f32 %v2337, 1.0
  %v2439 = vsub.f32 %v2339, 1.0
  %v2440 = vsub.f32 %v2341, 1.0
  %v2441 = vsub.f32 %v2343, 1.0
  %v2442 = vsub.f32 %v2345, 1.0
  %v2443 = vsub.f32 %v2347, 1.0
  %v2444 = vsub.f32 %v2349, 1.0
  %v2445 = vsub.f32 %v2351, 1.0
  %v2446 = vsub.f32 %v2353, 1.0
  %v2447 = vsub.f32 %v2355, 1.0
  %v2448 = vsub.f32 %v2357, 1.0
  %v2449 = vsub.f32 %v2359, 1.0
  %v2450 = vsub.f32 %v2361, 1.0
  %v2451 = vsub.f32 %v2363, 1.0
  %v2452 = vsub.f32 %v2365, 1.0
  %v2453 = vsub.f32 %v2367, 1.0
  %v2454 = vsel %vm2024, %v1938, %v2368
  %v2455 = vsel %vm2025, %v1939, %v2369
  %v2456 = vsel %vm2026, %v1940, %v2370
  %v2457 = vsel %vm2027, %v1941, %v2371
  %v2458 = vsel %vm2028, %v1942, %v2372
  %v2459 = vsel %vm2029, %v1943, %v2373
  %v2460 = vsel %vm2030, %v1944, %v2374
  %v2461 = vsel %vm2031, %v1945, %v2375
  %v2462 = vsel %vm2032, %v1946, %v2376
  %v2463 = vsel %vm2033, %v1947, %v2377
  %v2464 = vsel %vm2034, %v1948, %v2378
  %v2465 = vsel %vm2035, %v1949, %v2379
  %v2466 = vsel %vm2036, %v1950, %v2380
  %v2467 = vsel %vm2037, %v1951, %v2381
  %v2468 = vsel %vm2038, %v1952, %v2382
  %v2469 = vsel %vm2039, %v1953, %v2383
  %v2470 = vsel %vm2040, %v1954, %v2384
  %v2471 = vsel %vm2041, %v1955, %v2385
  %v2472 = vsel %vm2042, %v1956, %v2386
  %v2473 = vsel %vm2043, %v1957, %v2387
  %v2474 = vsel %vm2044, %v1958, %v2388
  %v2475 = vsel %vm2045, %v1959, %v2389
  %v2476 = vsel %vm2046, %v1960, %v2390
  %v2477 = vsel %vm2047, %v1961, %v2391
  %v2478 = vsel %vm2048, %v1962, %v2392
  %v2479 = vsel %vm2049, %v1963, %v2393
  %v2480 = vsel %vm2050, %v1964, %v2394
  %v2481 = vsel %vm2051, %v1965, %v2395
  %v2482 = vsel %vm2052, %v1966, %v2396
  %v2483 = vsel %vm2053, %v1967, %v2397
  %v2484 = vsel %vm2054, %v1968, %v2398
  %v2485 = vsel %vm2055, %v1969, %v2399
  %v2486 = vsel %vm2056, %v1970, %v2400
  %v2487 = vsel %vm2057, %v1971, %v2401
  %v2488 = vsel %vm2058, %v1972, %v2402
  %v2489 = vsel %vm2059, %v1973, %v2403
  %v2490 = vsel %vm2060, %v1974, %v2404
  %v2491 = vsel %vm2061, %v1975, %v2405
  %v2492 = vsel %vm2062, %v1976, %v2406
  %v2493 = vsel %vm2063, %v1977, %v2407
  %v2494 = vsel %vm2064, %v1978, %v2408
  %v2495 = vsel %vm2065, %v1979, %v2409
  %v2496 = vsel %vm2066, %v1980, %v2410
  %v2497 = vsel %vm2067, %v1981, %v2411
  %v2498 = vsel %vm2068, %v1982, %v2412
  %v2499 = vsel %vm2069, %v1983, %v2413
  %v2500 = vsel %vm2070, %v1984, %v2414
  %v2501 = vsel %vm2071, %v1985, %v2415
  %v2502 = vsel %vm2072, %v1986, %v2416
  %v2503 = vsel %vm2073, %v1987, %v2417
  %v2504 = vsel %vm2074, %v1988, %v2418
  %v2505 = vsel %vm2075, %v1989, %v2419
  %v2506 = vsel %vm2076, %v1990, %v2420
  %v2507 = vsel %vm2077, %v1991, %v2421
  %v2508 = vsel %vm2078, %v1992, %v2422
  %v2509 = vsel %vm2079, %v1993, %v2423
  %v2510 = vsel %vm2080, %v1994, %v2424
  %v2511 = vsel %vm2081, %v1995, %v2425
  %v2512 = vsel %vm2082, %v1996, %v2426
  %v2513 = vsel %vm2083, %v1997, %v2427
  %v2514 = vsel %vm2084, %v1998, %v2428
  %v2515 = vsel %vm2085, %v1999, %v2429
  %v2516 = vsel %vm2086, %v2000, %v2430
  %v2517 = vsel %vm2087, %v2001, %v2431
  %v2518 = vsel %vm2088, %v2002, %v2432
  %v2519 = vsel %vm2089, %v2003, %v2433
  %v2520 = vsel %vm2090, %v2004, %v2434
  %v2521 = vsel %vm2091, %v2005, %v2435
  %v2522 = vsel %vm2092, %v2006, %v2436
  %v2523 = vsel %vm2093, %v2007, %v2437
  %v2524 = vsel %vm2094, %v2008, %v2438
  %v2525 = vsel %vm2095, %v2009, %v2439
  %v2526 = vsel %vm2096, %v2010, %v2440
  %v2527 = vsel %vm2097, %v2011, %v2441
  %v2528 = vsel %vm2098, %v2012, %v2442
  %v2529 = vsel %vm2099, %v2013, %v2443
  %v2530 = vsel %vm2100, %v2014, %v2444
  %v2531 = vsel %vm2101, %v2015, %v2445
  %v2532 = vsel %vm2102, %v2016, %v2446
  %v2533 = vsel %vm2103, %v2017, %v2447
  %v2534 = vsel %vm2104, %v2018, %v2448
  %v2535 = vsel %vm2105, %v2019, %v2449
  %v2536 = vsel %vm2106, %v2020, %v2450
  %v2537 = vsel %vm2107, %v2021, %v2451
  %v2538 = vsel %vm2108, %v2022, %v2452
  %v2539 = vsel %vm2109, %v2023, %v2453
  %v2540 = vmul.f32 %v2454, %v877
  %v2541 = vmul.f32 %v2455, %v882
  %v2542 = vmul.f32 %v2456, %v887
  %v2543 = vmul.f32 %v2457, %v892
  %v2544 = vmul.f32 %v2458, %v897
  %v2545 = vmul.f32 %v2459, %v902
  %v2546 = vmul.f32 %v2460, %v907
  %v2547 = vmul.f32 %v2461, %v912
  %v2548 = vmul.f32 %v2462, %v917
  %v2549 = vmul.f32 %v2463, %v922
  %v2550 = vmul.f32 %v2464, %v927
  %v2551 = vmul.f32 %v2465, %v932
  %v2552 = vmul.f32 %v2466, %v937
  %v2553 = vmul.f32 %v2467, %v942
  %v2554 = vmul.f32 %v2468, %v947
  %v2555 = vmul.f32 %v2469, %v952
  %v2556 = vmul.f32 %v2470, %v957
  %v2557 = vmul.f32 %v2471, %v962
  %v2558 = vmul.f32 %v2472, %v967
  %v2559 = vmul.f32 %v2473, %v972
  %v2560 = vmul.f32 %v2474, %v977
  %v2561 = vmul.f32 %v2475, %v982
  %v2562 = vmul.f32 %v2476, %v987
  %v2563 = vmul.f32 %v2477, %v992
  %v2564 = vmul.f32 %v2478, %v997
  %v2565 = vmul.f32 %v2479, %v1002
  %v2566 = vmul.f32 %v2480, %v1007
  %v2567 = vmul.f32 %v2481, %v1012
  %v2568 = vmul.f32 %v2482, %v1017
  %v2569 = vmul.f32 %v2483, %v1022
  %v2570 = vmul.f32 %v2484, %v1027
  %v2571 = vmul.f32 %v2485, %v1032
  %v2572 = vmul.f32 %v2486, %v1037
  %v2573 = vmul.f32 %v2487, %v1042
  %v2574 = vmul.f32 %v2488, %v1047
  %v2575 = vmul.f32 %v2489, %v1052
  %v2576 = vmul.f32 %v2490, %v1057
  %v2577 = vmul.f32 %v2491, %v1062
  %v2578 = vmul.f32 %v2492, %v1067
  %v2579 = vmul.f32 %v2493, %v1072
  %v2580 = vmul.f32 %v2494, %v1077
  %v2581 = vmul.f32 %v2495, %v1082
  %v2582 = vmul.f32 %v2496, %v1087
  %v2583 = vmul.f32 %v2497, %v1092
  %v2584 = vmul.f32 %v2498, %v1097
  %v2585 = vmul.f32 %v2499, %v1102
  %v2586 = vmul.f32 %v2500, %v1107
  %v2587 = vmul.f32 %v2501, %v1112
  %v2588 = vmul.f32 %v2502, %v1117
  %v2589 = vmul.f32 %v2503, %v1122
  %v2590 = vmul.f32 %v2504, %v1127
  %v2591 = vmul.f32 %v2505, %v1132
  %v2592 = vmul.f32 %v2506, %v1137
  %v2593 = vmul.f32 %v2507, %v1142
  %v2594 = vmul.f32 %v2508, %v1147
  %v2595 = vmul.f32 %v2509, %v1152
  %v2596 = vmul.f32 %v2510, %v1157
  %v2597 = vmul.f32 %v2511, %v1162
  %v2598 = vmul.f32 %v2512, %v1167
  %v2599 = vmul.f32 %v2513, %v1172
  %v2600 = vmul.f32 %v2514, %v1177
  %v2601 = vmul.f32 %v2515, %v1182
  %v2602 = vmul.f32 %v2516, %v1187
  %v2603 = vmul.f32 %v2517, %v1192
  %v2604 = vmul.f32 %v2518, %v1197
  %v2605 = vmul.f32 %v2519, %v1202
  %v2606 = vmul.f32 %v2520, %v1207
  %v2607 = vmul.f32 %v2521, %v1212
  %v2608 = vmul.f32 %v2522, %v1217
  %v2609 = vmul.f32 %v2523, %v1222
  %v2610 = vmul.f32 %v2524, %v1227
  %v2611 = vmul.f32 %v2525, %v1232
  %v2612 = vmul.f32 %v2526, %v1237
  %v2613 = vmul.f32 %v2527, %v1242
  %v2614 = vmul.f32 %v2528, %v1247
  %v2615 = vmul.f32 %v2529, %v1252
  %v2616 = vmul.f32 %v2530, %v1257
  %v2617 = vmul.f32 %v2531, %v1262
  %v2618 = vmul.f32 %v2532, %v1267
  %v2619 = vmul.f32 %v2533, %v1272
  %v2620 = vmul.f32 %v2534, %v1277
  %v2621 = vmul.f32 %v2535, %v1282
  %v2622 = vmul.f32 %v2536, %v1287
  %v2623 = vmul.f32 %v2537, %v1292
  %v2624 = vmul.f32 %v2538, %v1297
  %v2625 = vmul.f32 %v2539, %v1302
  %2626 = vst.msk [vmem:[#allocation2] sm:$0xff] %vm361, %v2540
  %2627 = vst.msk [vmem:[#allocation2 + $0x8] sm:$0xff] %vm361, %v2541
  %2628 = vst.msk [vmem:[#allocation2 + $0x10] sm:$0xff] %vm361, %v2542
  %2629 = vst.msk [vmem:[#allocation2 + $0x18] sm:$0xff] %vm361, %v2543
  %2630 = vst.msk [vmem:[#allocation2 + $0x20] sm:$0xff] %vm361, %v2544
  %2631 = vst.msk [vmem:[#allocation2 + $0x28] sm:$0xff] %vm361, %v2545
  %2632 = vst.msk [vmem:[#allocation2 + $0x30] sm:$0xff] %vm361, %v2546
  %2633 = vst.msk [vmem:[#allocation2 + $0x38] sm:$0xff] %vm361, %v2547
  %2634 = vst.msk [vmem:[#allocation2 + $0x40] sm:$0xff] %vm361, %v2548
  %2635 = vst.msk [vmem:[#allocation2 + $0x48] sm:$0xff] %vm361, %v2549
  %2636 = vst.msk [vmem:[#allocation2 + $0x50] sm:$0xff] %vm361, %v2550
  %2637 = vst.msk [vmem:[#allocation2 + $0x58] sm:$0xff] %vm361, %v2551
  %2638 = vst.msk [vmem:[#allocation2 + $0x60] sm:$0xff] %vm361, %v2552
  %2639 = vst.msk [vmem:[#allocation2 + $0x68] sm:$0xff] %vm361, %v2553
  %2640 = vst.msk [vmem:[#allocation2 + $0x70] sm:$0xff] %vm361, %v2554
  %2641 = vst.msk [vmem:[#allocation2 + $0x78] sm:$0xff] %vm361, %v2555
  %2642 = vst.msk [vmem:[#allocation2 + $0x80] sm:$0xff] %vm361, %v2556
  %2643 = vst.msk [vmem:[#allocation2 + $0x88] sm:$0xff] %vm361, %v2557
  %2644 = vst.msk [vmem:[#allocation2 + $0x90] sm:$0xff] %vm361, %v2558
  %2645 = vst.msk [vmem:[#allocation2 + $0x98] sm:$0xff] %vm361, %v2559
  %2646 = vst.msk [vmem:[#allocation2 + $0xa0] sm:$0xff] %vm361, %v2560
  %2647 = vst.msk [vmem:[#allocation2 + $0xa8] sm:$0xff] %vm361, %v2561
  %2648 = vst.msk [vmem:[#allocation2 + $0xb0] sm:$0xff] %vm361, %v2562
  %2649 = vst.msk [vmem:[#allocation2 + $0xb8] sm:$0xff] %vm361, %v2563
  %2650 = vst.msk [vmem:[#allocation2 + $0xc0] sm:$0xff] %vm361, %v2564
  %2651 = vst.msk [vmem:[#allocation2 + $0xc8] sm:$0xff] %vm361, %v2565
  %2652 = vst.msk [vmem:[#allocation2 + $0xd0] sm:$0xff] %vm361, %v2566
  %2653 = vst.msk [vmem:[#allocation2 + $0xd8] sm:$0xff] %vm361, %v2567
  %2654 = vst.msk [vmem:[#allocation2 + $0xe0] sm:$0xff] %vm361, %v2568
  %2655 = vst.msk [vmem:[#allocation2 + $0xe8] sm:$0xff] %vm361, %v2569
  %2656 = vst.msk [vmem:[#allocation2 + $0xf0] sm:$0xff] %vm361, %v2570
  %2657 = vst.msk [vmem:[#allocation2 + $0xf8] sm:$0xff] %vm361, %v2571
  %2658 = vst.msk [vmem:[#allocation2 + $0x100] sm:$0xff] %vm361, %v2572
  %2659 = vst.msk [vmem:[#allocation2 + $0x108] sm:$0xff] %vm361, %v2573
  %2660 = vst.msk [vmem:[#allocation2 + $0x110] sm:$0xff] %vm361, %v2574
  %2661 = vst.msk [vmem:[#allocation2 + $0x118] sm:$0xff] %vm361, %v2575
  %2662 = vst.msk [vmem:[#allocation2 + $0x120] sm:$0xff] %vm361, %v2576
  %2663 = vst.msk [vmem:[#allocation2 + $0x128] sm:$0xff] %vm361, %v2577
  %2664 = vst.msk [vmem:[#allocation2 + $0x130] sm:$0xff] %vm361, %v2578
  %2665 = vst.msk [vmem:[#allocation2 + $0x138] sm:$0xff] %vm361, %v2579
  %2666 = vst.msk [vmem:[#allocation2 + $0x140] sm:$0xff] %vm361, %v2580
  %2667 = vst.msk [vmem:[#allocation2 + $0x148] sm:$0xff] %vm361, %v2581
  %2668 = vst.msk [vmem:[#allocation2 + $0x150] sm:$0xff] %vm361, %v2582
  %2669 = vst.msk [vmem:[#allocation2 + $0x158] sm:$0xff] %vm361, %v2583
  %2670 = vst.msk [vmem:[#allocation2 + $0x160] sm:$0xff] %vm361, %v2584
  %2671 = vst.msk [vmem:[#allocation2 + $0x168] sm:$0xff] %vm361, %v2585
  %2672 = vst.msk [vmem:[#allocation2 + $0x170] sm:$0xff] %vm361, %v2586
  %2673 = vst.msk [vmem:[#allocation2 + $0x178] sm:$0xff] %vm361, %v2587
  %2674 = vst.msk [vmem:[#allocation2 + $0x180] sm:$0xff] %vm361, %v2588
  %2675 = vst.msk [vmem:[#allocation2 + $0x188] sm:$0xff] %vm361, %v2589
  %2676 = vst.msk [vmem:[#allocation2 + $0x190] sm:$0xff] %vm361, %v2590
  %2677 = vst.msk [vmem:[#allocation2 + $0x198] sm:$0xff] %vm361, %v2591
  %2678 = vst.msk [vmem:[#allocation2 + $0x1a0] sm:$0xff] %vm361, %v2592
  %2679 = vst.msk [vmem:[#allocation2 + $0x1a8] sm:$0xff] %vm361, %v2593
  %2680 = vst.msk [vmem:[#allocation2 + $0x1b0] sm:$0xff] %vm361, %v2594
  %2681 = vst.msk [vmem:[#allocation2 + $0x1b8] sm:$0xff] %vm361, %v2595
  %2682 = vst.msk [vmem:[#allocation2 + $0x1c0] sm:$0xff] %vm361, %v2596
  %2683 = vst.msk [vmem:[#allocation2 + $0x1c8] sm:$0xff] %vm361, %v2597
  %2684 = vst.msk [vmem:[#allocation2 + $0x1d0] sm:$0xff] %vm361, %v2598
  %2685 = vst.msk [vmem:[#allocation2 + $0x1d8] sm:$0xff] %vm361, %v2599
  %2686 = vst.msk [vmem:[#allocation2 + $0x1e0] sm:$0xff] %vm361, %v2600
  %2687 = vst.msk [vmem:[#allocation2 + $0x1e8] sm:$0xff] %vm361, %v2601
  %2688 = vst.msk [vmem:[#allocation2 + $0x1f0] sm:$0xff] %vm361, %v2602
  %2689 = vst.msk [vmem:[#allocation2 + $0x1f8] sm:$0xff] %vm361, %v2603
  %2690 = vst.msk [vmem:[#allocation2 + $0x200] sm:$0xff] %vm361, %v2604
  %2691 = vst.msk [vmem:[#allocation2 + $0x208] sm:$0xff] %vm361, %v2605
  %2692 = vst.msk [vmem:[#allocation2 + $0x210] sm:$0xff] %vm361, %v2606
  %2693 = vst.msk [vmem:[#allocation2 + $0x218] sm:$0xff] %vm361, %v2607
  %2694 = vst.msk [vmem:[#allocation2 + $0x220] sm:$0xff] %vm361, %v2608
  %2695 = vst.msk [vmem:[#allocation2 + $0x228] sm:$0xff] %vm361, %v2609
  %2696 = vst.msk [vmem:[#allocation2 + $0x230] sm:$0xff] %vm361, %v2610
  %2697 = vst.msk [vmem:[#allocation2 + $0x238] sm:$0xff] %vm361, %v2611
  %2698 = vst.msk [vmem:[#allocation2 + $0x240] sm:$0xff] %vm361, %v2612
  %2699 = vst.msk [vmem:[#allocation2 + $0x248] sm:$0xff] %vm361, %v2613
  %2700 = vst.msk [vmem:[#allocation2 + $0x250] sm:$0xff] %vm361, %v2614
  %2701 = vst.msk [vmem:[#allocation2 + $0x258] sm:$0xff] %vm361, %v2615
  %2702 = vst.msk [vmem:[#allocation2 + $0x260] sm:$0xff] %vm361, %v2616
  %2703 = vst.msk [vmem:[#allocation2 + $0x268] sm:$0xff] %vm361, %v2617
  %2704 = vst.msk [vmem:[#allocation2 + $0x270] sm:$0xff] %vm361, %v2618
  %2705 = vst.msk [vmem:[#allocation2 + $0x278] sm:$0xff] %vm361, %v2619
  %2706 = vst.msk [vmem:[#allocation2 + $0x280] sm:$0xff] %vm361, %v2620
  %2707 = vst.msk [vmem:[#allocation2 + $0x288] sm:$0xff] %vm361, %v2621
  %2708 = vst.msk [vmem:[#allocation2 + $0x290] sm:$0xff] %vm361, %v2622
  %2709 = vst.msk [vmem:[#allocation2 + $0x298] sm:$0xff] %vm361, %v2623
  %2710 = vst.msk [vmem:[#allocation2 + $0x2a0] sm:$0xff] %vm361, %v2624
  %2711 = vst.msk [vmem:[#allocation2 + $0x2a8] sm:$0xff] %vm361, %v2625
  %v2712 = vld [vmem:[#allocation2] sm:$0xff]
  %v2713 = vld [vmem:[#allocation2 + $0x8] sm:$0xff]
  %v2714 = vld [vmem:[#allocation2 + $0x10] sm:$0xff]
  %v2715 = vld [vmem:[#allocation2 + $0x18] sm:$0xff]
  %v2716 = vld [vmem:[#allocation2 + $0x20] sm:$0xff]
  %v2717 = vld [vmem:[#allocation2 + $0x28] sm:$0xff]
  %v2718 = vld [vmem:[#allocation2 + $0x30] sm:$0xff]
  %v2719 = vld [vmem:[#allocation2 + $0x38] sm:$0xff]
  %v2720 = vld [vmem:[#allocation2 + $0x40] sm:$0xff]
  %v2721 = vld [vmem:[#allocation2 + $0x48] sm:$0xff]
  %v2722 = vld [vmem:[#allocation2 + $0x50] sm:$0xff]
  %v2723 = vld [vmem:[#allocation2 + $0x58] sm:$0xff]
  %v2724 = vld [vmem:[#allocation2 + $0x60] sm:$0xff]
  %v2725 = vld [vmem:[#allocation2 + $0x68] sm:$0xff]
  %v2726 = vld [vmem:[#allocation2 + $0x70] sm:$0xff]
  %v2727 = vld [vmem:[#allocation2 + $0x78] sm:$0xff]
  %v2728 = vld [vmem:[#allocation2 + $0x80] sm:$0xff]
  %v2729 = vld [vmem:[#allocation2 + $0x88] sm:$0xff]
  %v2730 = vld [vmem:[#allocation2 + $0x90] sm:$0xff]
  %v2731 = vld [vmem:[#allocation2 + $0x98] sm:$0xff]
  %v2732 = vld [vmem:[#allocation2 + $0xa0] sm:$0xff]
  %v2733 = vld [vmem:[#allocation2 + $0xa8] sm:$0xff]
  %v2734 = vld [vmem:[#allocation2 + $0xb0] sm:$0xff]
  %v2735 = vld [vmem:[#allocation2 + $0xb8] sm:$0xff]
  %v2736 = vld [vmem:[#allocation2 + $0xc0] sm:$0xff]
  %v2737 = vld [vmem:[#allocation2 + $0xc8] sm:$0xff]
  %v2738 = vld [vmem:[#allocation2 + $0xd0] sm:$0xff]
  %v2739 = vld [vmem:[#allocation2 + $0xd8] sm:$0xff]
  %v2740 = vld [vmem:[#allocation2 + $0xe0] sm:$0xff]
  %v2741 = vld [vmem:[#allocation2 + $0xe8] sm:$0xff]
  %v2742 = vld [vmem:[#allocation2 + $0xf0] sm:$0xff]
  %v2743 = vld [vmem:[#allocation2 + $0xf8] sm:$0xff]
  %v2744 = vld [vmem:[#allocation2 + $0x100] sm:$0xff]
  %v2745 = vld [vmem:[#allocation2 + $0x108] sm:$0xff]
  %v2746 = vld [vmem:[#allocation2 + $0x110] sm:$0xff]
  %v2747 = vld [vmem:[#allocation2 + $0x118] sm:$0xff]
  %v2748 = vld [vmem:[#allocation2 + $0x120] sm:$0xff]
  %v2749 = vld [vmem:[#allocation2 + $0x128] sm:$0xff]
  %v2750 = vld [vmem:[#allocation2 + $0x130] sm:$0xff]
  %v2751 = vld [vmem:[#allocation2 + $0x138] sm:$0xff]
  %v2752 = vld [vmem:[#allocation2 + $0x140] sm:$0xff]
  %v2753 = vld [vmem:[#allocation2 + $0x148] sm:$0xff]
  %v2754 = vld [vmem:[#allocation2 + $0x150] sm:$0xff]
  %v2755 = vld [vmem:[#allocation2 + $0x158] sm:$0xff]
  %v2756 = vld [vmem:[#allocation2 + $0x160] sm:$0xff]
  %v2757 = vld [vmem:[#allocation2 + $0x168] sm:$0xff]
  %v2758 = vld [vmem:[#allocation2 + $0x170] sm:$0xff]
  %v2759 = vld [vmem:[#allocation2 + $0x178] sm:$0xff]
  %v2760 = vld [vmem:[#allocation2 + $0x180] sm:$0xff]
  %v2761 = vld [vmem:[#allocation2 + $0x188] sm:$0xff]
  %v2762 = vld [vmem:[#allocation2 + $0x190] sm:$0xff]
  %v2763 = vld [vmem:[#allocation2 + $0x198] sm:$0xff]
  %v2764 = vld [vmem:[#allocation2 + $0x1a0] sm:$0xff]
  %v2765 = vld [vmem:[#allocation2 + $0x1a8] sm:$0xff]
  %v2766 = vld [vmem:[#allocation2 + $0x1b0] sm:$0xff]
  %v2767 = vld [vmem:[#allocation2 + $0x1b8] sm:$0xff]
  %v2768 = vld [vmem:[#allocation2 + $0x1c0] sm:$0xff]
  %v2769 = vld [vmem:[#allocation2 + $0x1c8] sm:$0xff]
  %v2770 = vld [vmem:[#allocation2 + $0x1d0] sm:$0xff]
  %v2771 = vld [vmem:[#allocation2 + $0x1d8] sm:$0xff]
  %v2772 = vld [vmem:[#allocation2 + $0x1e0] sm:$0xff]
  %v2773 = vld [vmem:[#allocation2 + $0x1e8] sm:$0xff]
  %v2774 = vld [vmem:[#allocation2 + $0x1f0] sm:$0xff]
  %v2775 = vld [vmem:[#allocation2 + $0x1f8] sm:$0xff]
  %v2776 = vld [vmem:[#allocation2 + $0x200] sm:$0xff]
  %v2777 = vld [vmem:[#allocation2 + $0x208] sm:$0xff]
  %v2778 = vld [vmem:[#allocation2 + $0x210] sm:$0xff]
  %v2779 = vld [vmem:[#allocation2 + $0x218] sm:$0xff]
  %v2780 = vld [vmem:[#allocation2 + $0x220] sm:$0xff]
  %v2781 = vld [vmem:[#allocation2 + $0x228] sm:$0xff]
  %v2782 = vld [vmem:[#allocation2 + $0x230] sm:$0xff]
  %v2783 = vld [vmem:[#allocation2 + $0x238] sm:$0xff]
  %v2784 = vld [vmem:[#allocation2 + $0x240] sm:$0xff]
  %v2785 = vld [vmem:[#allocation2 + $0x248] sm:$0xff]
  %v2786 = vld [vmem:[#allocation2 + $0x250] sm:$0xff]
  %v2787 = vld [vmem:[#allocation2 + $0x258] sm:$0xff]
  %v2788 = vld [vmem:[#allocation2 + $0x260] sm:$0xff]
  %v2789 = vld [vmem:[#allocation2 + $0x268] sm:$0xff]
  %v2790 = vld [vmem:[#allocation2 + $0x270] sm:$0xff]
  %v2791 = vld [vmem:[#allocation2 + $0x278] sm:$0xff]
  %v2792 = vld [vmem:[#allocation2 + $0x280] sm:$0xff]
  %v2793 = vpack.c.bf16 %v2713, %v2712
  %v2794 = vpack.c.bf16 %v2715, %v2714
  %v2795 = vpack.c.bf16 %v2717, %v2716
  %v2796 = vpack.c.bf16 %v2719, %v2718
  %v2797 = vpack.c.bf16 %v2721, %v2720
  %v2798 = vpack.c.bf16 %v2723, %v2722
  %v2799 = vpack.c.bf16 %v2725, %v2724
  %v2800 = vpack.c.bf16 %v2727, %v2726
  %v2801 = vpack.c.bf16 %v2729, %v2728
  %v2802 = vpack.c.bf16 %v2731, %v2730
  %v2803 = vpack.c.bf16 %v2733, %v2732
  %v2804 = vpack.c.bf16 %v2735, %v2734
  %v2805 = vpack.c.bf16 %v2737, %v2736
  %v2806 = vpack.c.bf16 %v2739, %v2738
  %v2807 = vpack.c.bf16 %v2741, %v2740
  %v2808 = vpack.c.bf16 %v2743, %v2742
  %v2809 = vpack.c.bf16 %v2745, %v2744
  %v2810 = vpack.c.bf16 %v2747, %v2746
  %v2811 = vpack.c.bf16 %v2749, %v2748
  %v2812 = vpack.c.bf16 %v2751, %v2750
  %v2813 = vpack.c.bf16 %v2753, %v2752
  %v2814 = vpack.c.bf16 %v2755, %v2754
  %v2815 = vpack.c.bf16 %v2757, %v2756
  %v2816 = vpack.c.bf16 %v2759, %v2758
  %v2817 = vpack.c.bf16 %v2761, %v2760
  %v2818 = vpack.c.bf16 %v2763, %v2762
  %v2819 = vpack.c.bf16 %v2765, %v2764
  %v2820 = vpack.c.bf16 %v2767, %v2766
  %v2821 = vpack.c.bf16 %v2769, %v2768
  %v2822 = vpack.c.bf16 %v2771, %v2770
  %v2823 = vpack.c.bf16 %v2773, %v2772
  %v2824 = vpack.c.bf16 %v2775, %v2774
  %v2825 = vpack.c.bf16 %v2777, %v2776
  %v2826 = vpack.c.bf16 %v2779, %v2778
  %v2827 = vpack.c.bf16 %v2781, %v2780
  %v2828 = vpack.c.bf16 %v2783, %v2782
  %v2829 = vpack.c.bf16 %v2785, %v2784
  %v2830 = vpack.c.bf16 %v2787, %v2786
  %v2831 = vpack.c.bf16 %v2789, %v2788
  %v2832 = vpack.c.bf16 %v2791, %v2790
  %v2833 = vpack.c.bf16 %v2792, %v2792
  %v2834 = vld [vmem:[%s7] sm:$0xf]
  %v2835 = vld [vmem:[#allocation2 + $0x1] sm:$0xff]
  %v2836 = vld [vmem:[#allocation2 + $0x9] sm:$0xff]
  %v2837 = vld [vmem:[#allocation2 + $0x11] sm:$0xff]
  %v2838 = vld [vmem:[#allocation2 + $0x19] sm:$0xff]
  %v2839 = vld [vmem:[#allocation2 + $0x21] sm:$0xff]
  %v2840 = vld [vmem:[#allocation2 + $0x29] sm:$0xff]
  %v2841 = vld [vmem:[#allocation2 + $0x31] sm:$0xff]
  %v2842 = vld [vmem:[#allocation2 + $0x39] sm:$0xff]
  %v2843 = vld [vmem:[#allocation2 + $0x41] sm:$0xff]
  %v2844 = vld [vmem:[#allocation2 + $0x49] sm:$0xff]
  %v2845 = vld [vmem:[#allocation2 + $0x51] sm:$0xff]
  %v2846 = vld [vmem:[#allocation2 + $0x59] sm:$0xff]
  %v2847 = vld [vmem:[#allocation2 + $0x61] sm:$0xff]
  %v2848 = vld [vmem:[#allocation2 + $0x69] sm:$0xff]
  %v2849 = vld [vmem:[#allocation2 + $0x71] sm:$0xff]
  %v2850 = vld [vmem:[#allocation2 + $0x79] sm:$0xff]
  %v2851 = vld [vmem:[#allocation2 + $0x81] sm:$0xff]
  %v2852 = vld [vmem:[#allocation2 + $0x89] sm:$0xff]
  %v2853 = vld [vmem:[#allocation2 + $0x91] sm:$0xff]
  %v2854 = vld [vmem:[#allocation2 + $0x99] sm:$0xff]
  %v2855 = vld [vmem:[#allocation2 + $0xa1] sm:$0xff]
  %v2856 = vld [vmem:[#allocation2 + $0xa9] sm:$0xff]
  %v2857 = vld [vmem:[#allocation2 + $0xb1] sm:$0xff]
  %v2858 = vld [vmem:[#allocation2 + $0xb9] sm:$0xff]
  %v2859 = vld [vmem:[#allocation2 + $0xc1] sm:$0xff]
  %v2860 = vld [vmem:[#allocation2 + $0xc9] sm:$0xff]
  %v2861 = vld [vmem:[#allocation2 + $0xd1] sm:$0xff]
  %v2862 = vld [vmem:[#allocation2 + $0xd9] sm:$0xff]
  %v2863 = vld [vmem:[#allocation2 + $0xe1] sm:$0xff]
  %v2864 = vld [vmem:[#allocation2 + $0xe9] sm:$0xff]
  %v2865 = vld [vmem:[#allocation2 + $0xf1] sm:$0xff]
  %v2866 = vld [vmem:[#allocation2 + $0xf9] sm:$0xff]
  %v2867 = vld [vmem:[#allocation2 + $0x101] sm:$0xff]
  %v2868 = vld [vmem:[#allocation2 + $0x109] sm:$0xff]
  %v2869 = vld [vmem:[#allocation2 + $0x111] sm:$0xff]
  %v2870 = vld [vmem:[#allocation2 + $0x119] sm:$0xff]
  %v2871 = vld [vmem:[#allocation2 + $0x121] sm:$0xff]
  %v2872 = vld [vmem:[#allocation2 + $0x129] sm:$0xff]
  %v2873 = vld [vmem:[#allocation2 + $0x131] sm:$0xff]
  %v2874 = vld [vmem:[#allocation2 + $0x139] sm:$0xff]
  %v2875 = vld [vmem:[#allocation2 + $0x141] sm:$0xff]
  %v2876 = vld [vmem:[#allocation2 + $0x149] sm:$0xff]
  %v2877 = vld [vmem:[#allocation2 + $0x151] sm:$0xff]
  %v2878 = vld [vmem:[#allocation2 + $0x159] sm:$0xff]
  %v2879 = vld [vmem:[#allocation2 + $0x161] sm:$0xff]
  %v2880 = vld [vmem:[#allocation2 + $0x169] sm:$0xff]
  %v2881 = vld [vmem:[#allocation2 + $0x171] sm:$0xff]
  %v2882 = vld [vmem:[#allocation2 + $0x179] sm:$0xff]
  %v2883 = vld [vmem:[#allocation2 + $0x181] sm:$0xff]
  %v2884 = vld [vmem:[#allocation2 + $0x189] sm:$0xff]
  %v2885 = vld [vmem:[#allocation2 + $0x191] sm:$0xff]
  %v2886 = vld [vmem:[#allocation2 + $0x199] sm:$0xff]
  %v2887 = vld [vmem:[#allocation2 + $0x1a1] sm:$0xff]
  %v2888 = vld [vmem:[#allocation2 + $0x1a9] sm:$0xff]
  %v2889 = vld [vmem:[#allocation2 + $0x1b1] sm:$0xff]
  %v2890 = vld [vmem:[#allocation2 + $0x1b9] sm:$0xff]
  %v2891 = vld [vmem:[#allocation2 + $0x1c1] sm:$0xff]
  %v2892 = vld [vmem:[#allocation2 + $0x1c9] sm:$0xff]
  %v2893 = vld [vmem:[#allocation2 + $0x1d1] sm:$0xff]
  %v2894 = vld [vmem:[#allocation2 + $0x1d9] sm:$0xff]
  %v2895 = vld [vmem:[#allocation2 + $0x1e1] sm:$0xff]
  %v2896 = vld [vmem:[#allocation2 + $0x1e9] sm:$0xff]
  %v2897 = vld [vmem:[#allocation2 + $0x1f1] sm:$0xff]
  %v2898 = vld [vmem:[#allocation2 + $0x1f9] sm:$0xff]
  %v2899 = vld [vmem:[#allocation2 + $0x201] sm:$0xff]
  %v2900 = vld [vmem:[#allocation2 + $0x209] sm:$0xff]
  %v2901 = vld [vmem:[#allocation2 + $0x211] sm:$0xff]
  %v2902 = vld [vmem:[#allocation2 + $0x219] sm:$0xff]
  %v2903 = vld [vmem:[#allocation2 + $0x221] sm:$0xff]
  %v2904 = vld [vmem:[#allocation2 + $0x229] sm:$0xff]
  %v2905 = vld [vmem:[#allocation2 + $0x231] sm:$0xff]
  %v2906 = vld [vmem:[#allocation2 + $0x239] sm:$0xff]
  %v2907 = vld [vmem:[#allocation2 + $0x241] sm:$0xff]
  %v2908 = vld [vmem:[#allocation2 + $0x249] sm:$0xff]
  %v2909 = vld [vmem:[#allocation2 + $0x251] sm:$0xff]
  %v2910 = vld [vmem:[#allocation2 + $0x259] sm:$0xff]
  %v2911 = vld [vmem:[#allocation2 + $0x261] sm:$0xff]
  %v2912 = vld [vmem:[#allocation2 + $0x269] sm:$0xff]
  %v2913 = vld [vmem:[#allocation2 + $0x271] sm:$0xff]
  %v2914 = vld [vmem:[#allocation2 + $0x279] sm:$0xff]
  %v2915 = vld [vmem:[#allocation2 + $0x281] sm:$0xff]
  %v2916 = vpack.c.bf16 %v2836, %v2835
  %v2917 = vpack.c.bf16 %v2838, %v2837
  %v2918 = vpack.c.bf16 %v2840, %v2839
  %v2919 = vpack.c.bf16 %v2842, %v2841
  %v2920 = vpack.c.bf16 %v2844, %v2843
  %v2921 = vpack.c.bf16 %v2846, %v2845
  %v2922 = vpack.c.bf16 %v2848, %v2847
  %v2923 = vpack.c.bf16 %v2850, %v2849
  %v2924 = vpack.c.bf16 %v2852, %v2851
  %v2925 = vpack.c.bf16 %v2854, %v2853
  %v2926 = vpack.c.bf16 %v2856, %v2855
  %v2927 = vpack.c.bf16 %v2858, %v2857
  %v2928 = vpack.c.bf16 %v2860, %v2859
  %v2929 = vpack.c.bf16 %v2862, %v2861
  %v2930 = vpack.c.bf16 %v2864, %v2863
  %v2931 = vpack.c.bf16 %v2866, %v2865
  %v2932 = vpack.c.bf16 %v2868, %v2867
  %v2933 = vpack.c.bf16 %v2870, %v2869
  %v2934 = vpack.c.bf16 %v2872, %v2871
  %v2935 = vpack.c.bf16 %v2874, %v2873
  %v2936 = vpack.c.bf16 %v2876, %v2875
  %v2937 = vpack.c.bf16 %v2878, %v2877
  %v2938 = vpack.c.bf16 %v2880, %v2879
  %v2939 = vpack.c.bf16 %v2882, %v2881
  %v2940 = vpack.c.bf16 %v2884, %v2883
  %v2941 = vpack.c.bf16 %v2886, %v2885
  %v2942 = vpack.c.bf16 %v2888, %v2887
  %v2943 = vpack.c.bf16 %v2890, %v2889
  %v2944 = vpack.c.bf16 %v2892, %v2891
  %v2945 = vpack.c.bf16 %v2894, %v2893
  %v2946 = vpack.c.bf16 %v2896, %v2895
  %v2947 = vpack.c.bf16 %v2898, %v2897
  %v2948 = vpack.c.bf16 %v2900, %v2899
  %v2949 = vpack.c.bf16 %v2902, %v2901
  %v2950 = vpack.c.bf16 %v2904, %v2903
  %v2951 = vpack.c.bf16 %v2906, %v2905
  %v2952 = vpack.c.bf16 %v2908, %v2907
  %v2953 = vpack.c.bf16 %v2910, %v2909
  %v2954 = vpack.c.bf16 %v2912, %v2911
  %v2955 = vpack.c.bf16 %v2914, %v2913
  %v2956 = vpack.c.bf16 %v2915, %v2915
  %s2957 = scalar_lea.vmem %s7, 4
  %v2958 = vld [vmem:[%s2957] sm:$0xf]
  %v2960 = vsel %vm361, %v2916, 0
  %v2963 = vsel %vm361, %v2917, 0
  %v2966 = vsel %vm361, %v2918, 0
  %v2969 = vsel %vm361, %v2919, 0
  %v2972 = vsel %vm361, %v2920, 0
  %v2975 = vsel %vm361, %v2921, 0
  %v2978 = vsel %vm361, %v2922, 0
  %v2981 = vsel %vm361, %v2923, 0
  %v2984 = vsel %vm361, %v2924, 0
  %v2987 = vsel %vm361, %v2925, 0
  %v2990 = vsel %vm361, %v2926, 0
  %v2993 = vsel %vm361, %v2927, 0
  %v2996 = vsel %vm361, %v2928, 0
  %v2999 = vsel %vm361, %v2929, 0
  %v3002 = vsel %vm361, %v2930, 0
  %v3005 = vsel %vm361, %v2931, 0
  %v3008 = vsel %vm361, %v2932, 0
  %v3011 = vsel %vm361, %v2933, 0
  %v3014 = vsel %vm361, %v2934, 0
  %v3017 = vsel %vm361, %v2935, 0
  %v3020 = vsel %vm361, %v2936, 0
  %v3023 = vsel %vm361, %v2937, 0
  %v3026 = vsel %vm361, %v2938, 0
  %v3029 = vsel %vm361, %v2939, 0
  %v3032 = vsel %vm361, %v2940, 0
  %v3035 = vsel %vm361, %v2941, 0
  %v3038 = vsel %vm361, %v2942, 0
  %v3041 = vsel %vm361, %v2943, 0
  %v3044 = vsel %vm361, %v2944, 0
  %v3047 = vsel %vm361, %v2945, 0
  %v3050 = vsel %vm361, %v2946, 0
  %v3053 = vsel %vm361, %v2947, 0
  %v3056 = vsel %vm361, %v2948, 0
  %v3059 = vsel %vm361, %v2949, 0
  %v3062 = vsel %vm361, %v2950, 0
  %v3065 = vsel %vm361, %v2951, 0
  %v3068 = vsel %vm361, %v2952, 0
  %v3071 = vsel %vm361, %v2953, 0
  %v3074 = vsel %vm361, %v2954, 0
  %v3077 = vsel %vm361, %v2955, 0
  %v3080 = vsel %vm361, %v2956, 0
  %v3083 = vsel %vm491, %v2958, 0
  %3085 = vmatprep.subr.bf16.mxu0 0
  %3086 = vmatpush1.bf16.msra.mxu0 0
  %3087 = vmatprep.subr.bf16.mxu0 0
  %3088 = vmatpush1.bf16.msra.mxu0 0
  %3089 = vmatprep.subr.bf16.mxu0 0
  %3090 = vmatpush1.bf16.msra.mxu0 0
  %3091 = vmatprep.subr.bf16.mxu0 0
  %3092 = vmatpush1.bf16.msra.mxu0 0
  %3093 = vmatprep.subr.bf16.mxu0 0
  %3094 = vmatpush1.bf16.msra.mxu0 0
  %3095 = vmatprep.subr.bf16.mxu0 0
  %3096 = vmatpush1.bf16.msra.mxu0 0
  %3097 = vmatprep.subr.bf16.mxu0 0
  %3098 = vmatpush1.bf16.msra.mxu0 0
  %3099 = vmatprep.subr.bf16.mxu0 0
  %3100 = vmatpush1.bf16.msra.mxu0 %v3083
  %3101 = vmatprep.subr.bf16.mxu0 0
  %3102 = vmatpush2.bf16.msra.mxu0 0
  %3103 = vmatprep.subr.bf16.mxu0 0
  %3104 = vmatpush2.bf16.msra.mxu0 0
  %3105 = vmatprep.subr.bf16.mxu0 0
  %3106 = vmatpush2.bf16.msra.mxu0 0
  %3107 = vmatprep.subr.bf16.mxu0 0
  %3108 = vmatpush2.bf16.msra.mxu0 0
  %3109 = vmatprep.subr.bf16.mxu0 0
  %3110 = vmatpush2.bf16.msra.mxu0 0
  %3111 = vmatprep.subr.bf16.mxu0 0
  %3112 = vmatpush2.bf16.msra.mxu0 0
  %3113 = vmatprep.subr.bf16.mxu0 0
  %3114 = vmatpush2.bf16.msra.mxu0 0
  %3115 = vmatprep.subr.bf16.mxu0 0
  %3116 = vmatpush2.bf16.msra.mxu0 0
  %3117 = vmatprep.mubr.bf16.mxu0 0
  %3118 = vmatmul.mubr.bf16.gmra.mxu0 %v2960
  %v3119 = vpop.f32.mrf.mxu0
  %v3120 = vadd.f32 0.0, %v3119
  %v3121 = vpop.f32.mrf.mxu0
  %v3122 = vpop.f32.mrf.mxu0
  %v3123 = vadd.f32 0.0, %v3122
  %v3124 = vpop.f32.mrf.mxu0
  %3125 = vmatprep.mubr.bf16.mxu0 0
  %3126 = vmatmul.mubr.bf16.gmra.mxu0 %v2963
  %v3127 = vpop.f32.mrf.mxu0
  %v3128 = vadd.f32 0.0, %v3127
  %v3129 = vpop.f32.mrf.mxu0
  %v3130 = vpop.f32.mrf.mxu0
  %v3131 = vadd.f32 0.0, %v3130
  %v3132 = vpop.f32.mrf.mxu0
  %3133 = vmatprep.mubr.bf16.mxu0 0
  %3134 = vmatmul.mubr.bf16.gmra.mxu0 %v2966
  %v3135 = vpop.f32.mrf.mxu0
  %v3136 = vadd.f32 0.0, %v3135
  %v3137 = vpop.f32.mrf.mxu0
  %v3138 = vpop.f32.mrf.mxu0
  %v3139 = vadd.f32 0.0, %v3138
  %v3140 = vpop.f32.mrf.mxu0
  %3141 = vmatprep.mubr.bf16.mxu0 0
  %3142 = vmatmul.mubr.bf16.gmra.mxu0 %v2969
  %v3143 = vpop.f32.mrf.mxu0
  %v3144 = vadd.f32 0.0, %v3143
  %v3145 = vpop.f32.mrf.mxu0
  %v3146 = vpop.f32.mrf.mxu0
  %v3147 = vadd.f32 0.0, %v3146
  %v3148 = vpop.f32.mrf.mxu0
  %3149 = vmatprep.mubr.bf16.mxu0 0
  %3150 = vmatmul.mubr.bf16.gmra.mxu0 %v2972
  %v3151 = vpop.f32.mrf.mxu0
  %v3152 = vadd.f32 0.0, %v3151
  %v3153 = vpop.f32.mrf.mxu0
  %v3154 = vpop.f32.mrf.mxu0
  %v3155 = vadd.f32 0.0, %v3154
  %v3156 = vpop.f32.mrf.mxu0
  %3157 = vmatprep.mubr.bf16.mxu0 0
  %3158 = vmatmul.mubr.bf16.gmra.mxu0 %v2975
  %v3159 = vpop.f32.mrf.mxu0
  %v3160 = vadd.f32 0.0, %v3159
  %v3161 = vpop.f32.mrf.mxu0
  %v3162 = vpop.f32.mrf.mxu0
  %v3163 = vadd.f32 0.0, %v3162
  %v3164 = vpop.f32.mrf.mxu0
  %3165 = vmatprep.mubr.bf16.mxu0 0
  %3166 = vmatmul.mubr.bf16.gmra.mxu0 %v2978
  %v3167 = vpop.f32.mrf.mxu0
  %v3168 = vadd.f32 0.0, %v3167
  %v3169 = vpop.f32.mrf.mxu0
  %v3170 = vpop.f32.mrf.mxu0
  %v3171 = vadd.f32 0.0, %v3170
  %v3172 = vpop.f32.mrf.mxu0
  %3173 = vmatprep.mubr.bf16.mxu0 0
  %3174 = vmatmul.mubr.bf16.gmra.mxu0 %v2981
  %v3175 = vpop.f32.mrf.mxu0
  %v3176 = vadd.f32 0.0, %v3175
  %v3177 = vpop.f32.mrf.mxu0
  %v3178 = vpop.f32.mrf.mxu0
  %v3179 = vadd.f32 0.0, %v3178
  %v3180 = vpop.f32.mrf.mxu0
  %3181 = vmatprep.mubr.bf16.mxu0 0
  %3182 = vmatmul.mubr.bf16.gmra.mxu0 %v2984
  %v3183 = vpop.f32.mrf.mxu0
  %v3184 = vadd.f32 0.0, %v3183
  %v3185 = vpop.f32.mrf.mxu0
  %v3186 = vpop.f32.mrf.mxu0
  %v3187 = vadd.f32 0.0, %v3186
  %v3188 = vpop.f32.mrf.mxu0
  %3189 = vmatprep.mubr.bf16.mxu0 0
  %3190 = vmatmul.mubr.bf16.gmra.mxu0 %v2987
  %v3191 = vpop.f32.mrf.mxu0
  %v3192 = vadd.f32 0.0, %v3191
  %v3193 = vpop.f32.mrf.mxu0
  %v3194 = vpop.f32.mrf.mxu0
  %v3195 = vadd.f32 0.0, %v3194
  %v3196 = vpop.f32.mrf.mxu0
  %3197 = vmatprep.mubr.bf16.mxu0 0
  %3198 = vmatmul.mubr.bf16.gmra.mxu0 %v2990
  %v3199 = vpop.f32.mrf.mxu0
  %v3200 = vadd.f32 0.0, %v3199
  %v3201 = vpop.f32.mrf.mxu0
  %v3202 = vpop.f32.mrf.mxu0
  %v3203 = vadd.f32 0.0, %v3202
  %v3204 = vpop.f32.mrf.mxu0
  %3205 = vmatprep.mubr.bf16.mxu0 0
  %3206 = vmatmul.mubr.bf16.gmra.mxu0 %v2993
  %v3207 = vpop.f32.mrf.mxu0
  %v3208 = vadd.f32 0.0, %v3207
  %v3209 = vpop.f32.mrf.mxu0
  %v3210 = vpop.f32.mrf.mxu0
  %v3211 = vadd.f32 0.0, %v3210
  %v3212 = vpop.f32.mrf.mxu0
  %3213 = vmatprep.mubr.bf16.mxu0 0
  %3214 = vmatmul.mubr.bf16.gmra.mxu0 %v2996
  %v3215 = vpop.f32.mrf.mxu0
  %v3216 = vadd.f32 0.0, %v3215
  %v3217 = vpop.f32.mrf.mxu0
  %v3218 = vpop.f32.mrf.mxu0
  %v3219 = vadd.f32 0.0, %v3218
  %v3220 = vpop.f32.mrf.mxu0
  %3221 = vmatprep.mubr.bf16.mxu0 0
  %3222 = vmatmul.mubr.bf16.gmra.mxu0 %v2999
  %v3223 = vpop.f32.mrf.mxu0
  %v3224 = vadd.f32 0.0, %v3223
  %v3225 = vpop.f32.mrf.mxu0
  %v3226 = vpop.f32.mrf.mxu0
  %v3227 = vadd.f32 0.0, %v3226
  %v3228 = vpop.f32.mrf.mxu0
  %3229 = vmatprep.mubr.bf16.mxu0 0
  %3230 = vmatmul.mubr.bf16.gmra.mxu0 %v3002
  %v3231 = vpop.f32.mrf.mxu0
  %v3232 = vadd.f32 0.0, %v3231
  %v3233 = vpop.f32.mrf.mxu0
  %v3234 = vpop.f32.mrf.mxu0
  %v3235 = vadd.f32 0.0, %v3234
  %v3236 = vpop.f32.mrf.mxu0
  %3237 = vmatprep.mubr.bf16.mxu0 0
  %3238 = vmatmul.mubr.bf16.gmra.mxu0 %v3005
  %v3239 = vpop.f32.mrf.mxu0
  %v3240 = vadd.f32 0.0, %v3239
  %v3241 = vpop.f32.mrf.mxu0
  %v3242 = vpop.f32.mrf.mxu0
  %v3243 = vadd.f32 0.0, %v3242
  %v3244 = vpop.f32.mrf.mxu0
  %3245 = vmatprep.mubr.bf16.mxu0 0
  %3246 = vmatmul.mubr.bf16.gmra.mxu0 %v3008
  %v3247 = vpop.f32.mrf.mxu0
  %v3248 = vadd.f32 0.0, %v3247
  %v3249 = vpop.f32.mrf.mxu0
  %v3250 = vpop.f32.mrf.mxu0
  %v3251 = vadd.f32 0.0, %v3250
  %v3252 = vpop.f32.mrf.mxu0
  %3253 = vmatprep.mubr.bf16.mxu0 0
  %3254 = vmatmul.mubr.bf16.gmra.mxu0 %v3011
  %v3255 = vpop.f32.mrf.mxu0
  %v3256 = vadd.f32 0.0, %v3255
  %v3257 = vpop.f32.mrf.mxu0
  %v3258 = vpop.f32.mrf.mxu0
  %v3259 = vadd.f32 0.0, %v3258
  %v3260 = vpop.f32.mrf.mxu0
  %3261 = vmatprep.mubr.bf16.mxu0 0
  %3262 = vmatmul.mubr.bf16.gmra.mxu0 %v3014
  %v3263 = vpop.f32.mrf.mxu0
  %v3264 = vadd.f32 0.0, %v3263
  %v3265 = vpop.f32.mrf.mxu0
  %v3266 = vpop.f32.mrf.mxu0
  %v3267 = vadd.f32 0.0, %v3266
  %v3268 = vpop.f32.mrf.mxu0
  %3269 = vmatprep.mubr.bf16.mxu0 0
  %3270 = vmatmul.mubr.bf16.gmra.mxu0 %v3017
  %v3271 = vpop.f32.mrf.mxu0
  %v3272 = vadd.f32 0.0, %v3271
  %v3273 = vpop.f32.mrf.mxu0
  %v3274 = vpop.f32.mrf.mxu0
  %v3275 = vadd.f32 0.0, %v3274
  %v3276 = vpop.f32.mrf.mxu0
  %3277 = vmatprep.mubr.bf16.mxu0 0
  %3278 = vmatmul.mubr.bf16.gmra.mxu0 %v3020
  %v3279 = vpop.f32.mrf.mxu0
  %v3280 = vadd.f32 0.0, %v3279
  %v3281 = vpop.f32.mrf.mxu0
  %v3282 = vpop.f32.mrf.mxu0
  %v3283 = vadd.f32 0.0, %v3282
  %v3284 = vpop.f32.mrf.mxu0
  %3285 = vmatprep.mubr.bf16.mxu0 0
  %3286 = vmatmul.mubr.bf16.gmra.mxu0 %v3023
  %v3287 = vpop.f32.mrf.mxu0
  %v3288 = vadd.f32 0.0, %v3287
  %v3289 = vpop.f32.mrf.mxu0
  %v3290 = vpop.f32.mrf.mxu0
  %v3291 = vadd.f32 0.0, %v3290
  %v3292 = vpop.f32.mrf.mxu0
  %3293 = vmatprep.mubr.bf16.mxu0 0
  %3294 = vmatmul.mubr.bf16.gmra.mxu0 %v3026
  %v3295 = vpop.f32.mrf.mxu0
  %v3296 = vadd.f32 0.0, %v3295
  %v3297 = vpop.f32.mrf.mxu0
  %v3298 = vpop.f32.mrf.mxu0
  %v3299 = vadd.f32 0.0, %v3298
  %v3300 = vpop.f32.mrf.mxu0
  %3301 = vmatprep.mubr.bf16.mxu0 0
  %3302 = vmatmul.mubr.bf16.gmra.mxu0 %v3029
  %v3303 = vpop.f32.mrf.mxu0
  %v3304 = vadd.f32 0.0, %v3303
  %v3305 = vpop.f32.mrf.mxu0
  %v3306 = vpop.f32.mrf.mxu0
  %v3307 = vadd.f32 0.0, %v3306
  %v3308 = vpop.f32.mrf.mxu0
  %3309 = vmatprep.mubr.bf16.mxu0 0
  %3310 = vmatmul.mubr.bf16.gmra.mxu0 %v3032
  %v3311 = vpop.f32.mrf.mxu0
  %v3312 = vadd.f32 0.0, %v3311
  %v3313 = vpop.f32.mrf.mxu0
  %v3314 = vpop.f32.mrf.mxu0
  %v3315 = vadd.f32 0.0, %v3314
  %v3316 = vpop.f32.mrf.mxu0
  %3317 = vmatprep.mubr.bf16.mxu0 0
  %3318 = vmatmul.mubr.bf16.gmra.mxu0 %v3035
  %v3319 = vpop.f32.mrf.mxu0
  %v3320 = vadd.f32 0.0, %v3319
  %v3321 = vpop.f32.mrf.mxu0
  %v3322 = vpop.f32.mrf.mxu0
  %v3323 = vadd.f32 0.0, %v3322
  %v3324 = vpop.f32.mrf.mxu0
  %3325 = vmatprep.mubr.bf16.mxu0 0
  %3326 = vmatmul.mubr.bf16.gmra.mxu0 %v3038
  %v3327 = vpop.f32.mrf.mxu0
  %v3328 = vadd.f32 0.0, %v3327
  %v3329 = vpop.f32.mrf.mxu0
  %v3330 = vpop.f32.mrf.mxu0
  %v3331 = vadd.f32 0.0, %v3330
  %v3332 = vpop.f32.mrf.mxu0
  %3333 = vmatprep.mubr.bf16.mxu0 0
  %3334 = vmatmul.mubr.bf16.gmra.mxu0 %v3041
  %v3335 = vpop.f32.mrf.mxu0
  %v3336 = vadd.f32 0.0, %v3335
  %v3337 = vpop.f32.mrf.mxu0
  %v3338 = vpop.f32.mrf.mxu0
  %v3339 = vadd.f32 0.0, %v3338
  %v3340 = vpop.f32.mrf.mxu0
  %3341 = vmatprep.mubr.bf16.mxu0 0
  %3342 = vmatmul.mubr.bf16.gmra.mxu0 %v3044
  %v3343 = vpop.f32.mrf.mxu0
  %v3344 = vadd.f32 0.0, %v3343
  %v3345 = vpop.f32.mrf.mxu0
  %v3346 = vpop.f32.mrf.mxu0
  %v3347 = vadd.f32 0.0, %v3346
  %v3348 = vpop.f32.mrf.mxu0
  %3349 = vmatprep.mubr.bf16.mxu0 0
  %3350 = vmatmul.mubr.bf16.gmra.mxu0 %v3047
  %v3351 = vpop.f32.mrf.mxu0
  %v3352 = vadd.f32 0.0, %v3351
  %v3353 = vpop.f32.mrf.mxu0
  %v3354 = vpop.f32.mrf.mxu0
  %v3355 = vadd.f32 0.0, %v3354
  %v3356 = vpop.f32.mrf.mxu0
  %3357 = vmatprep.mubr.bf16.mxu0 0
  %3358 = vmatmul.mubr.bf16.gmra.mxu0 %v3050
  %v3359 = vpop.f32.mrf.mxu0
  %v3360 = vadd.f32 0.0, %v3359
  %v3361 = vpop.f32.mrf.mxu0
  %v3362 = vpop.f32.mrf.mxu0
  %v3363 = vadd.f32 0.0, %v3362
  %v3364 = vpop.f32.mrf.mxu0
  %3365 = vmatprep.mubr.bf16.mxu0 0
  %3366 = vmatmul.mubr.bf16.gmra.mxu0 %v3053
  %v3367 = vpop.f32.mrf.mxu0
  %v3368 = vadd.f32 0.0, %v3367
  %v3369 = vpop.f32.mrf.mxu0
  %v3370 = vpop.f32.mrf.mxu0
  %v3371 = vadd.f32 0.0, %v3370
  %v3372 = vpop.f32.mrf.mxu0
  %3373 = vmatprep.mubr.bf16.mxu0 0
  %3374 = vmatmul.mubr.bf16.gmra.mxu0 %v3056
  %v3375 = vpop.f32.mrf.mxu0
  %v3376 = vadd.f32 0.0, %v3375
  %v3377 = vpop.f32.mrf.mxu0
  %v3378 = vpop.f32.mrf.mxu0
  %v3379 = vadd.f32 0.0, %v3378
  %v3380 = vpop.f32.mrf.mxu0
  %3381 = vmatprep.mubr.bf16.mxu0 0
  %3382 = vmatmul.mubr.bf16.gmra.mxu0 %v3059
  %v3383 = vpop.f32.mrf.mxu0
  %v3384 = vadd.f32 0.0, %v3383
  %v3385 = vpop.f32.mrf.mxu0
  %v3386 = vpop.f32.mrf.mxu0
  %v3387 = vadd.f32 0.0, %v3386
  %v3388 = vpop.f32.mrf.mxu0
  %3389 = vmatprep.mubr.bf16.mxu0 0
  %3390 = vmatmul.mubr.bf16.gmra.mxu0 %v3062
  %v3391 = vpop.f32.mrf.mxu0
  %v3392 = vadd.f32 0.0, %v3391
  %v3393 = vpop.f32.mrf.mxu0
  %v3394 = vpop.f32.mrf.mxu0
  %v3395 = vadd.f32 0.0, %v3394
  %v3396 = vpop.f32.mrf.mxu0
  %3397 = vmatprep.mubr.bf16.mxu0 0
  %3398 = vmatmul.mubr.bf16.gmra.mxu0 %v3065
  %v3399 = vpop.f32.mrf.mxu0
  %v3400 = vadd.f32 0.0, %v3399
  %v3401 = vpop.f32.mrf.mxu0
  %v3402 = vpop.f32.mrf.mxu0
  %v3403 = vadd.f32 0.0, %v3402
  %v3404 = vpop.f32.mrf.mxu0
  %3405 = vmatprep.mubr.bf16.mxu0 0
  %3406 = vmatmul.mubr.bf16.gmra.mxu0 %v3068
  %v3407 = vpop.f32.mrf.mxu0
  %v3408 = vadd.f32 0.0, %v3407
  %v3409 = vpop.f32.mrf.mxu0
  %v3410 = vpop.f32.mrf.mxu0
  %v3411 = vadd.f32 0.0, %v3410
  %v3412 = vpop.f32.mrf.mxu0
  %3413 = vmatprep.mubr.bf16.mxu0 0
  %3414 = vmatmul.mubr.bf16.gmra.mxu0 %v3071
  %v3415 = vpop.f32.mrf.mxu0
  %v3416 = vadd.f32 0.0, %v3415
  %v3417 = vpop.f32.mrf.mxu0
  %v3418 = vpop.f32.mrf.mxu0
  %v3419 = vadd.f32 0.0, %v3418
  %v3420 = vpop.f32.mrf.mxu0
  %3421 = vmatprep.mubr.bf16.mxu0 0
  %3422 = vmatmul.mubr.bf16.gmra.mxu0 %v3074
  %v3423 = vpop.f32.mrf.mxu0
  %v3424 = vadd.f32 0.0, %v3423
  %v3425 = vpop.f32.mrf.mxu0
  %v3426 = vpop.f32.mrf.mxu0
  %v3427 = vadd.f32 0.0, %v3426
  %v3428 = vpop.f32.mrf.mxu0
  %3429 = vmatprep.mubr.bf16.mxu0 0
  %3430 = vmatmul.mubr.bf16.gmra.mxu0 %v3077
  %v3431 = vpop.f32.mrf.mxu0
  %v3432 = vadd.f32 0.0, %v3431
  %v3433 = vpop.f32.mrf.mxu0
  %v3434 = vpop.f32.mrf.mxu0
  %v3435 = vadd.f32 0.0, %v3434
  %v3436 = vpop.f32.mrf.mxu0
  %3437 = vmatprep.mubr.bf16.mxu0 0
  %3438 = vmatmul.mubr.bf16.gmra.mxu0 %v3080
  %v3439 = vpop.f32.mrf.mxu0
  %v3440 = vadd.f32 0.0, %v3439
  %v3441 = vpop.f32.mrf.mxu0
  %v3442 = vpop.f32.mrf.mxu0
  %v3443 = vpop.f32.mrf.mxu0
  %3444 = vdwg.mxu0
  %v3446 = vsel %vm361, %v2793, 0
  %v3449 = vsel %vm361, %v2794, 0
  %v3452 = vsel %vm361, %v2795, 0
  %v3455 = vsel %vm361, %v2796, 0
  %v3458 = vsel %vm361, %v2797, 0
  %v3461 = vsel %vm361, %v2798, 0
  %v3464 = vsel %vm361, %v2799, 0
  %v3467 = vsel %vm361, %v2800, 0
  %v3470 = vsel %vm361, %v2801, 0
  %v3473 = vsel %vm361, %v2802, 0
  %v3476 = vsel %vm361, %v2803, 0
  %v3479 = vsel %vm361, %v2804, 0
  %v3482 = vsel %vm361, %v2805, 0
  %v3485 = vsel %vm361, %v2806, 0
  %v3488 = vsel %vm361, %v2807, 0
  %v3491 = vsel %vm361, %v2808, 0
  %v3494 = vsel %vm361, %v2809, 0
  %v3497 = vsel %vm361, %v2810, 0
  %v3500 = vsel %vm361, %v2811, 0
  %v3503 = vsel %vm361, %v2812, 0
  %v3506 = vsel %vm361, %v2813, 0
  %v3509 = vsel %vm361, %v2814, 0
  %v3512 = vsel %vm361, %v2815, 0
  %v3515 = vsel %vm361, %v2816, 0
  %v3518 = vsel %vm361, %v2817, 0
  %v3521 = vsel %vm361, %v2818, 0
  %v3524 = vsel %vm361, %v2819, 0
  %v3527 = vsel %vm361, %v2820, 0
  %v3530 = vsel %vm361, %v2821, 0
  %v3533 = vsel %vm361, %v2822, 0
  %v3536 = vsel %vm361, %v2823, 0
  %v3539 = vsel %vm361, %v2824, 0
  %v3542 = vsel %vm361, %v2825, 0
  %v3545 = vsel %vm361, %v2826, 0
  %v3548 = vsel %vm361, %v2827, 0
  %v3551 = vsel %vm361, %v2828, 0
  %v3554 = vsel %vm361, %v2829, 0
  %v3557 = vsel %vm361, %v2830, 0
  %v3560 = vsel %vm361, %v2831, 0
  %v3563 = vsel %vm361, %v2832, 0
  %v3566 = vsel %vm361, %v2833, 0
  %v3569 = vsel %vm491, %v2834, 0
  %3571 = vmatprep.subr.bf16.mxu0 0
  %3572 = vmatpush1.bf16.msra.mxu0 0
  %3573 = vmatprep.subr.bf16.mxu0 0
  %3574 = vmatpush1.bf16.msra.mxu0 0
  %3575 = vmatprep.subr.bf16.mxu0 0
  %3576 = vmatpush1.bf16.msra.mxu0 0
  %3577 = vmatprep.subr.bf16.mxu0 0
  %3578 = vmatpush1.bf16.msra.mxu0 0
  %3579 = vmatprep.subr.bf16.mxu0 0
  %3580 = vmatpush1.bf16.msra.mxu0 0
  %3581 = vmatprep.subr.bf16.mxu0 0
  %3582 = vmatpush1.bf16.msra.mxu0 0
  %3583 = vmatprep.subr.bf16.mxu0 0
  %3584 = vmatpush1.bf16.msra.mxu0 0
  %3585 = vmatprep.subr.bf16.mxu0 0
  %3586 = vmatpush1.bf16.msra.mxu0 %v3569
  %3587 = vmatprep.subr.bf16.mxu0 0
  %3588 = vmatpush2.bf16.msra.mxu0 0
  %3589 = vmatprep.subr.bf16.mxu0 0
  %3590 = vmatpush2.bf16.msra.mxu0 0
  %3591 = vmatprep.subr.bf16.mxu0 0
  %3592 = vmatpush2.bf16.msra.mxu0 0
  %3593 = vmatprep.subr.bf16.mxu0 0
  %3594 = vmatpush2.bf16.msra.mxu0 0
  %3595 = vmatprep.subr.bf16.mxu0 0
  %3596 = vmatpush2.bf16.msra.mxu0 0
  %3597 = vmatprep.subr.bf16.mxu0 0
  %3598 = vmatpush2.bf16.msra.mxu0 0
  %3599 = vmatprep.subr.bf16.mxu0 0
  %3600 = vmatpush2.bf16.msra.mxu0 0
  %3601 = vmatprep.subr.bf16.mxu0 0
  %3602 = vmatpush2.bf16.msra.mxu0 0
  %3603 = vmatprep.mubr.bf16.mxu0 0
  %3604 = vmatmul.mubr.bf16.gmra.mxu0 %v3446
  %v3605 = vpop.f32.mrf.mxu0
  %v3606 = vadd.f32 %v3120, %v3605
  %v3607 = vpop.f32.mrf.mxu0
  %v3608 = vpop.f32.mrf.mxu0
  %v3609 = vadd.f32 %v3123, %v3608
  %v3610 = vpop.f32.mrf.mxu0
  %3611 = vmatprep.mubr.bf16.mxu0 0
  %3612 = vmatmul.mubr.bf16.gmra.mxu0 %v3449
  %v3613 = vpop.f32.mrf.mxu0
  %v3614 = vadd.f32 %v3128, %v3613
  %v3615 = vpop.f32.mrf.mxu0
  %v3616 = vpop.f32.mrf.mxu0
  %v3617 = vadd.f32 %v3131, %v3616
  %v3618 = vpop.f32.mrf.mxu0
  %3619 = vmatprep.mubr.bf16.mxu0 0
  %3620 = vmatmul.mubr.bf16.gmra.mxu0 %v3452
  %v3621 = vpop.f32.mrf.mxu0
  %v3622 = vadd.f32 %v3136, %v3621
  %v3623 = vpop.f32.mrf.mxu0
  %v3624 = vpop.f32.mrf.mxu0
  %v3625 = vadd.f32 %v3139, %v3624
  %v3626 = vpop.f32.mrf.mxu0
  %3627 = vmatprep.mubr.bf16.mxu0 0
  %3628 = vmatmul.mubr.bf16.gmra.mxu0 %v3455
  %v3629 = vpop.f32.mrf.mxu0
  %v3630 = vadd.f32 %v3144, %v3629
  %v3631 = vpop.f32.mrf.mxu0
  %v3632 = vpop.f32.mrf.mxu0
  %v3633 = vadd.f32 %v3147, %v3632
  %v3634 = vpop.f32.mrf.mxu0
  %3635 = vmatprep.mubr.bf16.mxu0 0
  %3636 = vmatmul.mubr.bf16.gmra.mxu0 %v3458
  %v3637 = vpop.f32.mrf.mxu0
  %v3638 = vadd.f32 %v3152, %v3637
  %v3639 = vpop.f32.mrf.mxu0
  %v3640 = vpop.f32.mrf.mxu0
  %v3641 = vadd.f32 %v3155, %v3640
  %v3642 = vpop.f32.mrf.mxu0
  %3643 = vmatprep.mubr.bf16.mxu0 0
  %3644 = vmatmul.mubr.bf16.gmra.mxu0 %v3461
  %v3645 = vpop.f32.mrf.mxu0
  %v3646 = vadd.f32 %v3160, %v3645
  %v3647 = vpop.f32.mrf.mxu0
  %v3648 = vpop.f32.mrf.mxu0
  %v3649 = vadd.f32 %v3163, %v3648
  %v3650 = vpop.f32.mrf.mxu0
  %3651 = vmatprep.mubr.bf16.mxu0 0
  %3652 = vmatmul.mubr.bf16.gmra.mxu0 %v3464
  %v3653 = vpop.f32.mrf.mxu0
  %v3654 = vadd.f32 %v3168, %v3653
  %v3655 = vpop.f32.mrf.mxu0
  %v3656 = vpop.f32.mrf.mxu0
  %v3657 = vadd.f32 %v3171, %v3656
  %v3658 = vpop.f32.mrf.mxu0
  %3659 = vmatprep.mubr.bf16.mxu0 0
  %3660 = vmatmul.mubr.bf16.gmra.mxu0 %v3467
  %v3661 = vpop.f32.mrf.mxu0
  %v3662 = vadd.f32 %v3176, %v3661
  %v3663 = vpop.f32.mrf.mxu0
  %v3664 = vpop.f32.mrf.mxu0
  %v3665 = vadd.f32 %v3179, %v3664
  %v3666 = vpop.f32.mrf.mxu0
  %3667 = vmatprep.mubr.bf16.mxu0 0
  %3668 = vmatmul.mubr.bf16.gmra.mxu0 %v3470
  %v3669 = vpop.f32.mrf.mxu0
  %v3670 = vadd.f32 %v3184, %v3669
  %v3671 = vpop.f32.mrf.mxu0
  %v3672 = vpop.f32.mrf.mxu0
  %v3673 = vadd.f32 %v3187, %v3672
  %v3674 = vpop.f32.mrf.mxu0
  %3675 = vmatprep.mubr.bf16.mxu0 0
  %3676 = vmatmul.mubr.bf16.gmra.mxu0 %v3473
  %v3677 = vpop.f32.mrf.mxu0
  %v3678 = vadd.f32 %v3192, %v3677
  %v3679 = vpop.f32.mrf.mxu0
  %v3680 = vpop.f32.mrf.mxu0
  %v3681 = vadd.f32 %v3195, %v3680
  %v3682 = vpop.f32.mrf.mxu0
  %3683 = vmatprep.mubr.bf16.mxu0 0
  %3684 = vmatmul.mubr.bf16.gmra.mxu0 %v3476
  %v3685 = vpop.f32.mrf.mxu0
  %v3686 = vadd.f32 %v3200, %v3685
  %v3687 = vpop.f32.mrf.mxu0
  %v3688 = vpop.f32.mrf.mxu0
  %v3689 = vadd.f32 %v3203, %v3688
  %v3690 = vpop.f32.mrf.mxu0
  %3691 = vmatprep.mubr.bf16.mxu0 0
  %3692 = vmatmul.mubr.bf16.gmra.mxu0 %v3479
  %v3693 = vpop.f32.mrf.mxu0
  %v3694 = vadd.f32 %v3208, %v3693
  %v3695 = vpop.f32.mrf.mxu0
  %v3696 = vpop.f32.mrf.mxu0
  %v3697 = vadd.f32 %v3211, %v3696
  %v3698 = vpop.f32.mrf.mxu0
  %3699 = vmatprep.mubr.bf16.mxu0 0
  %3700 = vmatmul.mubr.bf16.gmra.mxu0 %v3482
  %v3701 = vpop.f32.mrf.mxu0
  %v3702 = vadd.f32 %v3216, %v3701
  %v3703 = vpop.f32.mrf.mxu0
  %v3704 = vpop.f32.mrf.mxu0
  %v3705 = vadd.f32 %v3219, %v3704
  %v3706 = vpop.f32.mrf.mxu0
  %3707 = vmatprep.mubr.bf16.mxu0 0
  %3708 = vmatmul.mubr.bf16.gmra.mxu0 %v3485
  %v3709 = vpop.f32.mrf.mxu0
  %v3710 = vadd.f32 %v3224, %v3709
  %v3711 = vpop.f32.mrf.mxu0
  %v3712 = vpop.f32.mrf.mxu0
  %v3713 = vadd.f32 %v3227, %v3712
  %v3714 = vpop.f32.mrf.mxu0
  %3715 = vmatprep.mubr.bf16.mxu0 0
  %3716 = vmatmul.mubr.bf16.gmra.mxu0 %v3488
  %v3717 = vpop.f32.mrf.mxu0
  %v3718 = vadd.f32 %v3232, %v3717
  %v3719 = vpop.f32.mrf.mxu0
  %v3720 = vpop.f32.mrf.mxu0
  %v3721 = vadd.f32 %v3235, %v3720
  %v3722 = vpop.f32.mrf.mxu0
  %3723 = vmatprep.mubr.bf16.mxu0 0
  %3724 = vmatmul.mubr.bf16.gmra.mxu0 %v3491
  %v3725 = vpop.f32.mrf.mxu0
  %v3726 = vadd.f32 %v3240, %v3725
  %v3727 = vpop.f32.mrf.mxu0
  %v3728 = vpop.f32.mrf.mxu0
  %v3729 = vadd.f32 %v3243, %v3728
  %v3730 = vpop.f32.mrf.mxu0
  %3731 = vmatprep.mubr.bf16.mxu0 0
  %3732 = vmatmul.mubr.bf16.gmra.mxu0 %v3494
  %v3733 = vpop.f32.mrf.mxu0
  %v3734 = vadd.f32 %v3248, %v3733
  %v3735 = vpop.f32.mrf.mxu0
  %v3736 = vpop.f32.mrf.mxu0
  %v3737 = vadd.f32 %v3251, %v3736
  %v3738 = vpop.f32.mrf.mxu0
  %3739 = vmatprep.mubr.bf16.mxu0 0
  %3740 = vmatmul.mubr.bf16.gmra.mxu0 %v3497
  %v3741 = vpop.f32.mrf.mxu0
  %v3742 = vadd.f32 %v3256, %v3741
  %v3743 = vpop.f32.mrf.mxu0
  %v3744 = vpop.f32.mrf.mxu0
  %v3745 = vadd.f32 %v3259, %v3744
  %v3746 = vpop.f32.mrf.mxu0
  %3747 = vmatprep.mubr.bf16.mxu0 0
  %3748 = vmatmul.mubr.bf16.gmra.mxu0 %v3500
  %v3749 = vpop.f32.mrf.mxu0
  %v3750 = vadd.f32 %v3264, %v3749
  %v3751 = vpop.f32.mrf.mxu0
  %v3752 = vpop.f32.mrf.mxu0
  %v3753 = vadd.f32 %v3267, %v3752
  %v3754 = vpop.f32.mrf.mxu0
  %3755 = vmatprep.mubr.bf16.mxu0 0
  %3756 = vmatmul.mubr.bf16.gmra.mxu0 %v3503
  %v3757 = vpop.f32.mrf.mxu0
  %v3758 = vadd.f32 %v3272, %v3757
  %v3759 = vpop.f32.mrf.mxu0
  %v3760 = vpop.f32.mrf.mxu0
  %v3761 = vadd.f32 %v3275, %v3760
  %v3762 = vpop.f32.mrf.mxu0
  %3763 = vmatprep.mubr.bf16.mxu0 0
  %3764 = vmatmul.mubr.bf16.gmra.mxu0 %v3506
  %v3765 = vpop.f32.mrf.mxu0
  %v3766 = vadd.f32 %v3280, %v3765
  %v3767 = vpop.f32.mrf.mxu0
  %v3768 = vpop.f32.mrf.mxu0
  %v3769 = vadd.f32 %v3283, %v3768
  %v3770 = vpop.f32.mrf.mxu0
  %3771 = vmatprep.mubr.bf16.mxu0 0
  %3772 = vmatmul.mubr.bf16.gmra.mxu0 %v3509
  %v3773 = vpop.f32.mrf.mxu0
  %v3774 = vadd.f32 %v3288, %v3773
  %v3775 = vpop.f32.mrf.mxu0
  %v3776 = vpop.f32.mrf.mxu0
  %v3777 = vadd.f32 %v3291, %v3776
  %v3778 = vpop.f32.mrf.mxu0
  %3779 = vmatprep.mubr.bf16.mxu0 0
  %3780 = vmatmul.mubr.bf16.gmra.mxu0 %v3512
  %v3781 = vpop.f32.mrf.mxu0
  %v3782 = vadd.f32 %v3296, %v3781
  %v3783 = vpop.f32.mrf.mxu0
  %v3784 = vpop.f32.mrf.mxu0
  %v3785 = vadd.f32 %v3299, %v3784
  %v3786 = vpop.f32.mrf.mxu0
  %3787 = vmatprep.mubr.bf16.mxu0 0
  %3788 = vmatmul.mubr.bf16.gmra.mxu0 %v3515
  %v3789 = vpop.f32.mrf.mxu0
  %v3790 = vadd.f32 %v3304, %v3789
  %v3791 = vpop.f32.mrf.mxu0
  %v3792 = vpop.f32.mrf.mxu0
  %v3793 = vadd.f32 %v3307, %v3792
  %v3794 = vpop.f32.mrf.mxu0
  %3795 = vmatprep.mubr.bf16.mxu0 0
  %3796 = vmatmul.mubr.bf16.gmra.mxu0 %v3518
  %v3797 = vpop.f32.mrf.mxu0
  %v3798 = vadd.f32 %v3312, %v3797
  %v3799 = vpop.f32.mrf.mxu0
  %v3800 = vpop.f32.mrf.mxu0
  %v3801 = vadd.f32 %v3315, %v3800
  %v3802 = vpop.f32.mrf.mxu0
  %3803 = vmatprep.mubr.bf16.mxu0 0
  %3804 = vmatmul.mubr.bf16.gmra.mxu0 %v3521
  %v3805 = vpop.f32.mrf.mxu0
  %v3806 = vadd.f32 %v3320, %v3805
  %v3807 = vpop.f32.mrf.mxu0
  %v3808 = vpop.f32.mrf.mxu0
  %v3809 = vadd.f32 %v3323, %v3808
  %v3810 = vpop.f32.mrf.mxu0
  %3811 = vmatprep.mubr.bf16.mxu0 0
  %3812 = vmatmul.mubr.bf16.gmra.mxu0 %v3524
  %v3813 = vpop.f32.mrf.mxu0
  %v3814 = vadd.f32 %v3328, %v3813
  %v3815 = vpop.f32.mrf.mxu0
  %v3816 = vpop.f32.mrf.mxu0
  %v3817 = vadd.f32 %v3331, %v3816
  %v3818 = vpop.f32.mrf.mxu0
  %3819 = vmatprep.mubr.bf16.mxu0 0
  %3820 = vmatmul.mubr.bf16.gmra.mxu0 %v3527
  %v3821 = vpop.f32.mrf.mxu0
  %v3822 = vadd.f32 %v3336, %v3821
  %v3823 = vpop.f32.mrf.mxu0
  %v3824 = vpop.f32.mrf.mxu0
  %v3825 = vadd.f32 %v3339, %v3824
  %v3826 = vpop.f32.mrf.mxu0
  %3827 = vmatprep.mubr.bf16.mxu0 0
  %3828 = vmatmul.mubr.bf16.gmra.mxu0 %v3530
  %v3829 = vpop.f32.mrf.mxu0
  %v3830 = vadd.f32 %v3344, %v3829
  %v3831 = vpop.f32.mrf.mxu0
  %v3832 = vpop.f32.mrf.mxu0
  %v3833 = vadd.f32 %v3347, %v3832
  %v3834 = vpop.f32.mrf.mxu0
  %3835 = vmatprep.mubr.bf16.mxu0 0
  %3836 = vmatmul.mubr.bf16.gmra.mxu0 %v3533
  %v3837 = vpop.f32.mrf.mxu0
  %v3838 = vadd.f32 %v3352, %v3837
  %v3839 = vpop.f32.mrf.mxu0
  %v3840 = vpop.f32.mrf.mxu0
  %v3841 = vadd.f32 %v3355, %v3840
  %v3842 = vpop.f32.mrf.mxu0
  %3843 = vmatprep.mubr.bf16.mxu0 0
  %3844 = vmatmul.mubr.bf16.gmra.mxu0 %v3536
  %v3845 = vpop.f32.mrf.mxu0
  %v3846 = vadd.f32 %v3360, %v3845
  %v3847 = vpop.f32.mrf.mxu0
  %v3848 = vpop.f32.mrf.mxu0
  %v3849 = vadd.f32 %v3363, %v3848
  %v3850 = vpop.f32.mrf.mxu0
  %3851 = vmatprep.mubr.bf16.mxu0 0
  %3852 = vmatmul.mubr.bf16.gmra.mxu0 %v3539
  %v3853 = vpop.f32.mrf.mxu0
  %v3854 = vadd.f32 %v3368, %v3853
  %v3855 = vpop.f32.mrf.mxu0
  %v3856 = vpop.f32.mrf.mxu0
  %v3857 = vadd.f32 %v3371, %v3856
  %v3858 = vpop.f32.mrf.mxu0
  %3859 = vmatprep.mubr.bf16.mxu0 0
  %3860 = vmatmul.mubr.bf16.gmra.mxu0 %v3542
  %v3861 = vpop.f32.mrf.mxu0
  %v3862 = vadd.f32 %v3376, %v3861
  %v3863 = vpop.f32.mrf.mxu0
  %v3864 = vpop.f32.mrf.mxu0
  %v3865 = vadd.f32 %v3379, %v3864
  %v3866 = vpop.f32.mrf.mxu0
  %3867 = vmatprep.mubr.bf16.mxu0 0
  %3868 = vmatmul.mubr.bf16.gmra.mxu0 %v3545
  %v3869 = vpop.f32.mrf.mxu0
  %v3870 = vadd.f32 %v3384, %v3869
  %v3871 = vpop.f32.mrf.mxu0
  %v3872 = vpop.f32.mrf.mxu0
  %v3873 = vadd.f32 %v3387, %v3872
  %v3874 = vpop.f32.mrf.mxu0
  %3875 = vmatprep.mubr.bf16.mxu0 0
  %3876 = vmatmul.mubr.bf16.gmra.mxu0 %v3548
  %v3877 = vpop.f32.mrf.mxu0
  %v3878 = vadd.f32 %v3392, %v3877
  %v3879 = vpop.f32.mrf.mxu0
  %v3880 = vpop.f32.mrf.mxu0
  %v3881 = vadd.f32 %v3395, %v3880
  %v3882 = vpop.f32.mrf.mxu0
  %3883 = vmatprep.mubr.bf16.mxu0 0
  %3884 = vmatmul.mubr.bf16.gmra.mxu0 %v3551
  %v3885 = vpop.f32.mrf.mxu0
  %v3886 = vadd.f32 %v3400, %v3885
  %v3887 = vpop.f32.mrf.mxu0
  %v3888 = vpop.f32.mrf.mxu0
  %v3889 = vadd.f32 %v3403, %v3888
  %v3890 = vpop.f32.mrf.mxu0
  %3891 = vmatprep.mubr.bf16.mxu0 0
  %3892 = vmatmul.mubr.bf16.gmra.mxu0 %v3554
  %v3893 = vpop.f32.mrf.mxu0
  %v3894 = vadd.f32 %v3408, %v3893
  %v3895 = vpop.f32.mrf.mxu0
  %v3896 = vpop.f32.mrf.mxu0
  %v3897 = vadd.f32 %v3411, %v3896
  %v3898 = vpop.f32.mrf.mxu0
  %3899 = vmatprep.mubr.bf16.mxu0 0
  %3900 = vmatmul.mubr.bf16.gmra.mxu0 %v3557
  %v3901 = vpop.f32.mrf.mxu0
  %v3902 = vadd.f32 %v3416, %v3901
  %v3903 = vpop.f32.mrf.mxu0
  %v3904 = vpop.f32.mrf.mxu0
  %v3905 = vadd.f32 %v3419, %v3904
  %v3906 = vpop.f32.mrf.mxu0
  %3907 = vmatprep.mubr.bf16.mxu0 0
  %3908 = vmatmul.mubr.bf16.gmra.mxu0 %v3560
  %v3909 = vpop.f32.mrf.mxu0
  %v3910 = vadd.f32 %v3424, %v3909
  %v3911 = vpop.f32.mrf.mxu0
  %v3912 = vpop.f32.mrf.mxu0
  %v3913 = vadd.f32 %v3427, %v3912
  %v3914 = vpop.f32.mrf.mxu0
  %3915 = vmatprep.mubr.bf16.mxu0 0
  %3916 = vmatmul.mubr.bf16.gmra.mxu0 %v3563
  %v3917 = vpop.f32.mrf.mxu0
  %v3918 = vadd.f32 %v3432, %v3917
  %v3919 = vpop.f32.mrf.mxu0
  %v3920 = vpop.f32.mrf.mxu0
  %v3921 = vadd.f32 %v3435, %v3920
  %v3922 = vpop.f32.mrf.mxu0
  %3923 = vmatprep.mubr.bf16.mxu0 0
  %3924 = vmatmul.mubr.bf16.gmra.mxu0 %v3566
  %v3925 = vpop.f32.mrf.mxu0
  %v3926 = vadd.f32 %v3440, %v3925
  %v3927 = vpop.f32.mrf.mxu0
  %v3928 = vpop.f32.mrf.mxu0
  %v3929 = vpop.f32.mrf.mxu0
  %3930 = vdwg.mxu0
  %v3931 = vld [vmem:[#allocation2 + $0x2] sm:$0xff]
  %v3932 = vld [vmem:[#allocation2 + $0xa] sm:$0xff]
  %v3933 = vld [vmem:[#allocation2 + $0x12] sm:$0xff]
  %v3934 = vld [vmem:[#allocation2 + $0x1a] sm:$0xff]
  %v3935 = vld [vmem:[#allocation2 + $0x22] sm:$0xff]
  %v3936 = vld [vmem:[#allocation2 + $0x2a] sm:$0xff]
  %v3937 = vld [vmem:[#allocation2 + $0x32] sm:$0xff]
  %v3938 = vld [vmem:[#allocation2 + $0x3a] sm:$0xff]
  %v3939 = vld [vmem:[#allocation2 + $0x42] sm:$0xff]
  %v3940 = vld [vmem:[#allocation2 + $0x4a] sm:$0xff]
  %v3941 = vld [vmem:[#allocation2 + $0x52] sm:$0xff]
  %v3942 = vld [vmem:[#allocation2 + $0x5a] sm:$0xff]
  %v3943 = vld [vmem:[#allocation2 + $0x62] sm:$0xff]
  %v3944 = vld [vmem:[#allocation2 + $0x6a] sm:$0xff]
  %v3945 = vld [vmem:[#allocation2 + $0x72] sm:$0xff]
  %v3946 = vld [vmem:[#allocation2 + $0x7a] sm:$0xff]
  %v3947 = vld [vmem:[#allocation2 + $0x82] sm:$0xff]
  %v3948 = vld [vmem:[#allocation2 + $0x8a] sm:$0xff]
  %v3949 = vld [vmem:[#allocation2 + $0x92] sm:$0xff]
  %v3950 = vld [vmem:[#allocation2 + $0x9a] sm:$0xff]
  %v3951 = vld [vmem:[#allocation2 + $0xa2] sm:$0xff]
  %v3952 = vld [vmem:[#allocation2 + $0xaa] sm:$0xff]
  %v3953 = vld [vmem:[#allocation2 + $0xb2] sm:$0xff]
  %v3954 = vld [vmem:[#allocation2 + $0xba] sm:$0xff]
  %v3955 = vld [vmem:[#allocation2 + $0xc2] sm:$0xff]
  %v3956 = vld [vmem:[#allocation2 + $0xca] sm:$0xff]
  %v3957 = vld [vmem:[#allocation2 + $0xd2] sm:$0xff]
  %v3958 = vld [vmem:[#allocation2 + $0xda] sm:$0xff]
  %v3959 = vld [vmem:[#allocation2 + $0xe2] sm:$0xff]
  %v3960 = vld [vmem:[#allocation2 + $0xea] sm:$0xff]
  %v3961 = vld [vmem:[#allocation2 + $0xf2] sm:$0xff]
  %v3962 = vld [vmem:[#allocation2 + $0xfa] sm:$0xff]
  %v3963 = vld [vmem:[#allocation2 + $0x102] sm:$0xff]
  %v3964 = vld [vmem:[#allocation2 + $0x10a] sm:$0xff]
  %v3965 = vld [vmem:[#allocation2 + $0x112] sm:$0xff]
  %v3966 = vld [vmem:[#allocation2 + $0x11a] sm:$0xff]
  %v3967 = vld [vmem:[#allocation2 + $0x122] sm:$0xff]
  %v3968 = vld [vmem:[#allocation2 + $0x12a] sm:$0xff]
  %v3969 = vld [vmem:[#allocation2 + $0x132] sm:$0xff]
  %v3970 = vld [vmem:[#allocation2 + $0x13a] sm:$0xff]
  %v3971 = vld [vmem:[#allocation2 + $0x142] sm:$0xff]
  %v3972 = vld [vmem:[#allocation2 + $0x14a] sm:$0xff]
  %v3973 = vld [vmem:[#allocation2 + $0x152] sm:$0xff]
  %v3974 = vld [vmem:[#allocation2 + $0x15a] sm:$0xff]
  %v3975 = vld [vmem:[#allocation2 + $0x162] sm:$0xff]
  %v3976 = vld [vmem:[#allocation2 + $0x16a] sm:$0xff]
  %v3977 = vld [vmem:[#allocation2 + $0x172] sm:$0xff]
  %v3978 = vld [vmem:[#allocation2 + $0x17a] sm:$0xff]
  %v3979 = vld [vmem:[#allocation2 + $0x182] sm:$0xff]
  %v3980 = vld [vmem:[#allocation2 + $0x18a] sm:$0xff]
  %v3981 = vld [vmem:[#allocation2 + $0x192] sm:$0xff]
  %v3982 = vld [vmem:[#allocation2 + $0x19a] sm:$0xff]
  %v3983 = vld [vmem:[#allocation2 + $0x1a2] sm:$0xff]
  %v3984 = vld [vmem:[#allocation2 + $0x1aa] sm:$0xff]
  %v3985 = vld [vmem:[#allocation2 + $0x1b2] sm:$0xff]
  %v3986 = vld [vmem:[#allocation2 + $0x1ba] sm:$0xff]
  %v3987 = vld [vmem:[#allocation2 + $0x1c2] sm:$0xff]
  %v3988 = vld [vmem:[#allocation2 + $0x1ca] sm:$0xff]
  %v3989 = vld [vmem:[#allocation2 + $0x1d2] sm:$0xff]
  %v3990 = vld [vmem:[#allocation2 + $0x1da] sm:$0xff]
  %v3991 = vld [vmem:[#allocation2 + $0x1e2] sm:$0xff]
  %v3992 = vld [vmem:[#allocation2 + $0x1ea] sm:$0xff]
  %v3993 = vld [vmem:[#allocation2 + $0x1f2] sm:$0xff]
  %v3994 = vld [vmem:[#allocation2 + $0x1fa] sm:$0xff]
  %v3995 = vld [vmem:[#allocation2 + $0x202] sm:$0xff]
  %v3996 = vld [vmem:[#allocation2 + $0x20a] sm:$0xff]
  %v3997 = vld [vmem:[#allocation2 + $0x212] sm:$0xff]
  %v3998 = vld [vmem:[#allocation2 + $0x21a] sm:$0xff]
  %v3999 = vld [vmem:[#allocation2 + $0x222] sm:$0xff]
  %v4000 = vld [vmem:[#allocation2 + $0x22a] sm:$0xff]
  %v4001 = vld [vmem:[#allocation2 + $0x232] sm:$0xff]
  %v4002 = vld [vmem:[#allocation2 + $0x23a] sm:$0xff]
  %v4003 = vld [vmem:[#allocation2 + $0x242] sm:$0xff]
  %v4004 = vld [vmem:[#allocation2 + $0x24a] sm:$0xff]
  %v4005 = vld [vmem:[#allocation2 + $0x252] sm:$0xff]
  %v4006 = vld [vmem:[#allocation2 + $0x25a] sm:$0xff]
  %v4007 = vld [vmem:[#allocation2 + $0x262] sm:$0xff]
  %v4008 = vld [vmem:[#allocation2 + $0x26a] sm:$0xff]
  %v4009 = vld [vmem:[#allocation2 + $0x272] sm:$0xff]
  %v4010 = vld [vmem:[#allocation2 + $0x27a] sm:$0xff]
  %v4011 = vld [vmem:[#allocation2 + $0x282] sm:$0xff]
  %v4012 = vpack.c.bf16 %v3932, %v3931
  %v4013 = vpack.c.bf16 %v3934, %v3933
  %v4014 = vpack.c.bf16 %v3936, %v3935
  %v4015 = vpack.c.bf16 %v3938, %v3937
  %v4016 = vpack.c.bf16 %v3940, %v3939
  %v4017 = vpack.c.bf16 %v3942, %v3941
  %v4018 = vpack.c.bf16 %v3944, %v3943
  %v4019 = vpack.c.bf16 %v3946, %v3945
  %v4020 = vpack.c.bf16 %v3948, %v3947
  %v4021 = vpack.c.bf16 %v3950, %v3949
  %v4022 = vpack.c.bf16 %v3952, %v3951
  %v4023 = vpack.c.bf16 %v3954, %v3953
  %v4024 = vpack.c.bf16 %v3956, %v3955
  %v4025 = vpack.c.bf16 %v3958, %v3957
  %v4026 = vpack.c.bf16 %v3960, %v3959
  %v4027 = vpack.c.bf16 %v3962, %v3961
  %v4028 = vpack.c.bf16 %v3964, %v3963
  %v4029 = vpack.c.bf16 %v3966, %v3965
  %v4030 = vpack.c.bf16 %v3968, %v3967
  %v4031 = vpack.c.bf16 %v3970, %v3969
  %v4032 = vpack.c.bf16 %v3972, %v3971
  %v4033 = vpack.c.bf16 %v3974, %v3973
  %v4034 = vpack.c.bf16 %v3976, %v3975
  %v4035 = vpack.c.bf16 %v3978, %v3977
  %v4036 = vpack.c.bf16 %v3980, %v3979
  %v4037 = vpack.c.bf16 %v3982, %v3981
  %v4038 = vpack.c.bf16 %v3984, %v3983
  %v4039 = vpack.c.bf16 %v3986, %v3985
  %v4040 = vpack.c.bf16 %v3988, %v3987
  %v4041 = vpack.c.bf16 %v3990, %v3989
  %v4042 = vpack.c.bf16 %v3992, %v3991
  %v4043 = vpack.c.bf16 %v3994, %v3993
  %v4044 = vpack.c.bf16 %v3996, %v3995
  %v4045 = vpack.c.bf16 %v3998, %v3997
  %v4046 = vpack.c.bf16 %v4000, %v3999
  %v4047 = vpack.c.bf16 %v4002, %v4001
  %v4048 = vpack.c.bf16 %v4004, %v4003
  %v4049 = vpack.c.bf16 %v4006, %v4005
  %v4050 = vpack.c.bf16 %v4008, %v4007
  %v4051 = vpack.c.bf16 %v4010, %v4009
  %v4052 = vpack.c.bf16 %v4011, %v4011
  %s4053 = scalar_lea.vmem %s7, 8
  %v4054 = vld [vmem:[%s4053] sm:$0xf]
  %v4056 = vsel %vm361, %v4012, 0
  %v4059 = vsel %vm361, %v4013, 0
  %v4062 = vsel %vm361, %v4014, 0
  %v4065 = vsel %vm361, %v4015, 0
  %v4068 = vsel %vm361, %v4016, 0
  %v4071 = vsel %vm361, %v4017, 0
  %v4074 = vsel %vm361, %v4018, 0
  %v4077 = vsel %vm361, %v4019, 0
  %v4080 = vsel %vm361, %v4020, 0
  %v4083 = vsel %vm361, %v4021, 0
  %v4086 = vsel %vm361, %v4022, 0
  %v4089 = vsel %vm361, %v4023, 0
  %v4092 = vsel %vm361, %v4024, 0
  %v4095 = vsel %vm361, %v4025, 0
  %v4098 = vsel %vm361, %v4026, 0
  %v4101 = vsel %vm361, %v4027, 0
  %v4104 = vsel %vm361, %v4028, 0
  %v4107 = vsel %vm361, %v4029, 0
  %v4110 = vsel %vm361, %v4030, 0
  %v4113 = vsel %vm361, %v4031, 0
  %v4116 = vsel %vm361, %v4032, 0
  %v4119 = vsel %vm361, %v4033, 0
  %v4122 = vsel %vm361, %v4034, 0
  %v4125 = vsel %vm361, %v4035, 0
  %v4128 = vsel %vm361, %v4036, 0
  %v4131 = vsel %vm361, %v4037, 0
  %v4134 = vsel %vm361, %v4038, 0
  %v4137 = vsel %vm361, %v4039, 0
  %v4140 = vsel %vm361, %v4040, 0
  %v4143 = vsel %vm361, %v4041, 0
  %v4146 = vsel %vm361, %v4042, 0
  %v4149 = vsel %vm361, %v4043, 0
  %v4152 = vsel %vm361, %v4044, 0
  %v4155 = vsel %vm361, %v4045, 0
  %v4158 = vsel %vm361, %v4046, 0
  %v4161 = vsel %vm361, %v4047, 0
  %v4164 = vsel %vm361, %v4048, 0
  %v4167 = vsel %vm361, %v4049, 0
  %v4170 = vsel %vm361, %v4050, 0
  %v4173 = vsel %vm361, %v4051, 0
  %v4176 = vsel %vm361, %v4052, 0
  %v4179 = vsel %vm491, %v4054, 0
  %4181 = vmatprep.subr.bf16.mxu0 0
  %4182 = vmatpush1.bf16.msra.mxu0 0
  %4183 = vmatprep.subr.bf16.mxu0 0
  %4184 = vmatpush1.bf16.msra.mxu0 0
  %4185 = vmatprep.subr.bf16.mxu0 0
  %4186 = vmatpush1.bf16.msra.mxu0 0
  %4187 = vmatprep.subr.bf16.mxu0 0
  %4188 = vmatpush1.bf16.msra.mxu0 0
  %4189 = vmatprep.subr.bf16.mxu0 0
  %4190 = vmatpush1.bf16.msra.mxu0 0
  %4191 = vmatprep.subr.bf16.mxu0 0
  %4192 = vmatpush1.bf16.msra.mxu0 0
  %4193 = vmatprep.subr.bf16.mxu0 0
  %4194 = vmatpush1.bf16.msra.mxu0 0
  %4195 = vmatprep.subr.bf16.mxu0 0
  %4196 = vmatpush1.bf16.msra.mxu0 %v4179
  %4197 = vmatprep.subr.bf16.mxu0 0
  %4198 = vmatpush2.bf16.msra.mxu0 0
  %4199 = vmatprep.subr.bf16.mxu0 0
  %4200 = vmatpush2.bf16.msra.mxu0 0
  %4201 = vmatprep.subr.bf16.mxu0 0
  %4202 = vmatpush2.bf16.msra.mxu0 0
  %4203 = vmatprep.subr.bf16.mxu0 0
  %4204 = vmatpush2.bf16.msra.mxu0 0
  %4205 = vmatprep.subr.bf16.mxu0 0
  %4206 = vmatpush2.bf16.msra.mxu0 0
  %4207 = vmatprep.subr.bf16.mxu0 0
  %4208 = vmatpush2.bf16.msra.mxu0 0
  %4209 = vmatprep.subr.bf16.mxu0 0
  %4210 = vmatpush2.bf16.msra.mxu0 0
  %4211 = vmatprep.subr.bf16.mxu0 0
  %4212 = vmatpush2.bf16.msra.mxu0 0
  %4213 = vmatprep.mubr.bf16.mxu0 0
  %4214 = vmatmul.mubr.bf16.gmra.mxu0 %v4056
  %v4215 = vpop.f32.mrf.mxu0
  %v4216 = vadd.f32 0.0, %v4215
  %v4217 = vpop.f32.mrf.mxu0
  %v4218 = vpop.f32.mrf.mxu0
  %v4219 = vadd.f32 0.0, %v4218
  %v4220 = vpop.f32.mrf.mxu0
  %4221 = vmatprep.mubr.bf16.mxu0 0
  %4222 = vmatmul.mubr.bf16.gmra.mxu0 %v4059
  %v4223 = vpop.f32.mrf.mxu0
  %v4224 = vadd.f32 0.0, %v4223
  %v4225 = vpop.f32.mrf.mxu0
  %v4226 = vpop.f32.mrf.mxu0
  %v4227 = vadd.f32 0.0, %v4226
  %v4228 = vpop.f32.mrf.mxu0
  %4229 = vmatprep.mubr.bf16.mxu0 0
  %4230 = vmatmul.mubr.bf16.gmra.mxu0 %v4062
  %v4231 = vpop.f32.mrf.mxu0
  %v4232 = vadd.f32 0.0, %v4231
  %v4233 = vpop.f32.mrf.mxu0
  %v4234 = vpop.f32.mrf.mxu0
  %v4235 = vadd.f32 0.0, %v4234
  %v4236 = vpop.f32.mrf.mxu0
  %4237 = vmatprep.mubr.bf16.mxu0 0
  %4238 = vmatmul.mubr.bf16.gmra.mxu0 %v4065
  %v4239 = vpop.f32.mrf.mxu0
  %v4240 = vadd.f32 0.0, %v4239
  %v4241 = vpop.f32.mrf.mxu0
  %v4242 = vpop.f32.mrf.mxu0
  %v4243 = vadd.f32 0.0, %v4242
  %v4244 = vpop.f32.mrf.mxu0
  %4245 = vmatprep.mubr.bf16.mxu0 0
  %4246 = vmatmul.mubr.bf16.gmra.mxu0 %v4068
  %v4247 = vpop.f32.mrf.mxu0
  %v4248 = vadd.f32 0.0, %v4247
  %v4249 = vpop.f32.mrf.mxu0
  %v4250 = vpop.f32.mrf.mxu0
  %v4251 = vadd.f32 0.0, %v4250
  %v4252 = vpop.f32.mrf.mxu0
  %4253 = vmatprep.mubr.bf16.mxu0 0
  %4254 = vmatmul.mubr.bf16.gmra.mxu0 %v4071
  %v4255 = vpop.f32.mrf.mxu0
  %v4256 = vadd.f32 0.0, %v4255
  %v4257 = vpop.f32.mrf.mxu0
  %v4258 = vpop.f32.mrf.mxu0
  %v4259 = vadd.f32 0.0, %v4258
  %v4260 = vpop.f32.mrf.mxu0
  %4261 = vmatprep.mubr.bf16.mxu0 0
  %4262 = vmatmul.mubr.bf16.gmra.mxu0 %v4074
  %v4263 = vpop.f32.mrf.mxu0
  %v4264 = vadd.f32 0.0, %v4263
  %v4265 = vpop.f32.mrf.mxu0
  %v4266 = vpop.f32.mrf.mxu0
  %v4267 = vadd.f32 0.0, %v4266
  %v4268 = vpop.f32.mrf.mxu0
  %4269 = vmatprep.mubr.bf16.mxu0 0
  %4270 = vmatmul.mubr.bf16.gmra.mxu0 %v4077
  %v4271 = vpop.f32.mrf.mxu0
  %v4272 = vadd.f32 0.0, %v4271
  %v4273 = vpop.f32.mrf.mxu0
  %v4274 = vpop.f32.mrf.mxu0
  %v4275 = vadd.f32 0.0, %v4274
  %v4276 = vpop.f32.mrf.mxu0
  %4277 = vmatprep.mubr.bf16.mxu0 0
  %4278 = vmatmul.mubr.bf16.gmra.mxu0 %v4080
  %v4279 = vpop.f32.mrf.mxu0
  %v4280 = vadd.f32 0.0, %v4279
  %v4281 = vpop.f32.mrf.mxu0
  %v4282 = vpop.f32.mrf.mxu0
  %v4283 = vadd.f32 0.0, %v4282
  %v4284 = vpop.f32.mrf.mxu0
  %4285 = vmatprep.mubr.bf16.mxu0 0
  %4286 = vmatmul.mubr.bf16.gmra.mxu0 %v4083
  %v4287 = vpop.f32.mrf.mxu0
  %v4288 = vadd.f32 0.0, %v4287
  %v4289 = vpop.f32.mrf.mxu0
  %v4290 = vpop.f32.mrf.mxu0
  %v4291 = vadd.f32 0.0, %v4290
  %v4292 = vpop.f32.mrf.mxu0
  %4293 = vmatprep.mubr.bf16.mxu0 0
  %4294 = vmatmul.mubr.bf16.gmra.mxu0 %v4086
  %v4295 = vpop.f32.mrf.mxu0
  %v4296 = vadd.f32 0.0, %v4295
  %v4297 = vpop.f32.mrf.mxu0
  %v4298 = vpop.f32.mrf.mxu0
  %v4299 = vadd.f32 0.0, %v4298
  %v4300 = vpop.f32.mrf.mxu0
  %4301 = vmatprep.mubr.bf16.mxu0 0
  %4302 = vmatmul.mubr.bf16.gmra.mxu0 %v4089
  %v4303 = vpop.f32.mrf.mxu0
  %v4304 = vadd.f32 0.0, %v4303
  %v4305 = vpop.f32.mrf.mxu0
  %v4306 = vpop.f32.mrf.mxu0
  %v4307 = vadd.f32 0.0, %v4306
  %v4308 = vpop.f32.mrf.mxu0
  %4309 = vmatprep.mubr.bf16.mxu0 0
  %4310 = vmatmul.mubr.bf16.gmra.mxu0 %v4092
  %v4311 = vpop.f32.mrf.mxu0
  %v4312 = vadd.f32 0.0, %v4311
  %v4313 = vpop.f32.mrf.mxu0
  %v4314 = vpop.f32.mrf.mxu0
  %v4315 = vadd.f32 0.0, %v4314
  %v4316 = vpop.f32.mrf.mxu0
  %4317 = vmatprep.mubr.bf16.mxu0 0
  %4318 = vmatmul.mubr.bf16.gmra.mxu0 %v4095
  %v4319 = vpop.f32.mrf.mxu0
  %v4320 = vadd.f32 0.0, %v4319
  %v4321 = vpop.f32.mrf.mxu0
  %v4322 = vpop.f32.mrf.mxu0
  %v4323 = vadd.f32 0.0, %v4322
  %v4324 = vpop.f32.mrf.mxu0
  %4325 = vmatprep.mubr.bf16.mxu0 0
  %4326 = vmatmul.mubr.bf16.gmra.mxu0 %v4098
  %v4327 = vpop.f32.mrf.mxu0
  %v4328 = vadd.f32 0.0, %v4327
  %v4329 = vpop.f32.mrf.mxu0
  %v4330 = vpop.f32.mrf.mxu0
  %v4331 = vadd.f32 0.0, %v4330
  %v4332 = vpop.f32.mrf.mxu0
  %4333 = vmatprep.mubr.bf16.mxu0 0
  %4334 = vmatmul.mubr.bf16.gmra.mxu0 %v4101
  %v4335 = vpop.f32.mrf.mxu0
  %v4336 = vadd.f32 0.0, %v4335
  %v4337 = vpop.f32.mrf.mxu0
  %v4338 = vpop.f32.mrf.mxu0
  %v4339 = vadd.f32 0.0, %v4338
  %v4340 = vpop.f32.mrf.mxu0
  %4341 = vmatprep.mubr.bf16.mxu0 0
  %4342 = vmatmul.mubr.bf16.gmra.mxu0 %v4104
  %v4343 = vpop.f32.mrf.mxu0
  %v4344 = vadd.f32 0.0, %v4343
  %v4345 = vpop.f32.mrf.mxu0
  %v4346 = vpop.f32.mrf.mxu0
  %v4347 = vadd.f32 0.0, %v4346
  %v4348 = vpop.f32.mrf.mxu0
  %4349 = vmatprep.mubr.bf16.mxu0 0
  %4350 = vmatmul.mubr.bf16.gmra.mxu0 %v4107
  %v4351 = vpop.f32.mrf.mxu0
  %v4352 = vadd.f32 0.0, %v4351
  %v4353 = vpop.f32.mrf.mxu0
  %v4354 = vpop.f32.mrf.mxu0
  %v4355 = vadd.f32 0.0, %v4354
  %v4356 = vpop.f32.mrf.mxu0
  %4357 = vmatprep.mubr.bf16.mxu0 0
  %4358 = vmatmul.mubr.bf16.gmra.mxu0 %v4110
  %v4359 = vpop.f32.mrf.mxu0
  %v4360 = vadd.f32 0.0, %v4359
  %v4361 = vpop.f32.mrf.mxu0
  %v4362 = vpop.f32.mrf.mxu0
  %v4363 = vadd.f32 0.0, %v4362
  %v4364 = vpop.f32.mrf.mxu0
  %4365 = vmatprep.mubr.bf16.mxu0 0
  %4366 = vmatmul.mubr.bf16.gmra.mxu0 %v4113
  %v4367 = vpop.f32.mrf.mxu0
  %v4368 = vadd.f32 0.0, %v4367
  %v4369 = vpop.f32.mrf.mxu0
  %v4370 = vpop.f32.mrf.mxu0
  %v4371 = vadd.f32 0.0, %v4370
  %v4372 = vpop.f32.mrf.mxu0
  %4373 = vmatprep.mubr.bf16.mxu0 0
  %4374 = vmatmul.mubr.bf16.gmra.mxu0 %v4116
  %v4375 = vpop.f32.mrf.mxu0
  %v4376 = vadd.f32 0.0, %v4375
  %v4377 = vpop.f32.mrf.mxu0
  %v4378 = vpop.f32.mrf.mxu0
  %v4379 = vadd.f32 0.0, %v4378
  %v4380 = vpop.f32.mrf.mxu0
  %4381 = vmatprep.mubr.bf16.mxu0 0
  %4382 = vmatmul.mubr.bf16.gmra.mxu0 %v4119
  %v4383 = vpop.f32.mrf.mxu0
  %v4384 = vadd.f32 0.0, %v4383
  %v4385 = vpop.f32.mrf.mxu0
  %v4386 = vpop.f32.mrf.mxu0
  %v4387 = vadd.f32 0.0, %v4386
  %v4388 = vpop.f32.mrf.mxu0
  %4389 = vmatprep.mubr.bf16.mxu0 0
  %4390 = vmatmul.mubr.bf16.gmra.mxu0 %v4122
  %v4391 = vpop.f32.mrf.mxu0
  %v4392 = vadd.f32 0.0, %v4391
  %v4393 = vpop.f32.mrf.mxu0
  %v4394 = vpop.f32.mrf.mxu0
  %v4395 = vadd.f32 0.0, %v4394
  %v4396 = vpop.f32.mrf.mxu0
  %4397 = vmatprep.mubr.bf16.mxu0 0
  %4398 = vmatmul.mubr.bf16.gmra.mxu0 %v4125
  %v4399 = vpop.f32.mrf.mxu0
  %v4400 = vadd.f32 0.0, %v4399
  %v4401 = vpop.f32.mrf.mxu0
  %v4402 = vpop.f32.mrf.mxu0
  %v4403 = vadd.f32 0.0, %v4402
  %v4404 = vpop.f32.mrf.mxu0
  %4405 = vmatprep.mubr.bf16.mxu0 0
  %4406 = vmatmul.mubr.bf16.gmra.mxu0 %v4128
  %v4407 = vpop.f32.mrf.mxu0
  %v4408 = vadd.f32 0.0, %v4407
  %v4409 = vpop.f32.mrf.mxu0
  %v4410 = vpop.f32.mrf.mxu0
  %v4411 = vadd.f32 0.0, %v4410
  %v4412 = vpop.f32.mrf.mxu0
  %4413 = vmatprep.mubr.bf16.mxu0 0
  %4414 = vmatmul.mubr.bf16.gmra.mxu0 %v4131
  %v4415 = vpop.f32.mrf.mxu0
  %v4416 = vadd.f32 0.0, %v4415
  %v4417 = vpop.f32.mrf.mxu0
  %v4418 = vpop.f32.mrf.mxu0
  %v4419 = vadd.f32 0.0, %v4418
  %v4420 = vpop.f32.mrf.mxu0
  %4421 = vmatprep.mubr.bf16.mxu0 0
  %4422 = vmatmul.mubr.bf16.gmra.mxu0 %v4134
  %v4423 = vpop.f32.mrf.mxu0
  %v4424 = vadd.f32 0.0, %v4423
  %v4425 = vpop.f32.mrf.mxu0
  %v4426 = vpop.f32.mrf.mxu0
  %v4427 = vadd.f32 0.0, %v4426
  %v4428 = vpop.f32.mrf.mxu0
  %4429 = vmatprep.mubr.bf16.mxu0 0
  %4430 = vmatmul.mubr.bf16.gmra.mxu0 %v4137
  %v4431 = vpop.f32.mrf.mxu0
  %v4432 = vadd.f32 0.0, %v4431
  %v4433 = vpop.f32.mrf.mxu0
  %v4434 = vpop.f32.mrf.mxu0
  %v4435 = vadd.f32 0.0, %v4434
  %v4436 = vpop.f32.mrf.mxu0
  %4437 = vmatprep.mubr.bf16.mxu0 0
  %4438 = vmatmul.mubr.bf16.gmra.mxu0 %v4140
  %v4439 = vpop.f32.mrf.mxu0
  %v4440 = vadd.f32 0.0, %v4439
  %v4441 = vpop.f32.mrf.mxu0
  %v4442 = vpop.f32.mrf.mxu0
  %v4443 = vadd.f32 0.0, %v4442
  %v4444 = vpop.f32.mrf.mxu0
  %4445 = vmatprep.mubr.bf16.mxu0 0
  %4446 = vmatmul.mubr.bf16.gmra.mxu0 %v4143
  %v4447 = vpop.f32.mrf.mxu0
  %v4448 = vadd.f32 0.0, %v4447
  %v4449 = vpop.f32.mrf.mxu0
  %v4450 = vpop.f32.mrf.mxu0
  %v4451 = vadd.f32 0.0, %v4450
  %v4452 = vpop.f32.mrf.mxu0
  %4453 = vmatprep.mubr.bf16.mxu0 0
  %4454 = vmatmul.mubr.bf16.gmra.mxu0 %v4146
  %v4455 = vpop.f32.mrf.mxu0
  %v4456 = vadd.f32 0.0, %v4455
  %v4457 = vpop.f32.mrf.mxu0
  %v4458 = vpop.f32.mrf.mxu0
  %v4459 = vadd.f32 0.0, %v4458
  %v4460 = vpop.f32.mrf.mxu0
  %4461 = vmatprep.mubr.bf16.mxu0 0
  %4462 = vmatmul.mubr.bf16.gmra.mxu0 %v4149
  %v4463 = vpop.f32.mrf.mxu0
  %v4464 = vadd.f32 0.0, %v4463
  %v4465 = vpop.f32.mrf.mxu0
  %v4466 = vpop.f32.mrf.mxu0
  %v4467 = vadd.f32 0.0, %v4466
  %v4468 = vpop.f32.mrf.mxu0
  %4469 = vmatprep.mubr.bf16.mxu0 0
  %4470 = vmatmul.mubr.bf16.gmra.mxu0 %v4152
  %v4471 = vpop.f32.mrf.mxu0
  %v4472 = vadd.f32 0.0, %v4471
  %v4473 = vpop.f32.mrf.mxu0
  %v4474 = vpop.f32.mrf.mxu0
  %v4475 = vadd.f32 0.0, %v4474
  %v4476 = vpop.f32.mrf.mxu0
  %4477 = vmatprep.mubr.bf16.mxu0 0
  %4478 = vmatmul.mubr.bf16.gmra.mxu0 %v4155
  %v4479 = vpop.f32.mrf.mxu0
  %v4480 = vadd.f32 0.0, %v4479
  %v4481 = vpop.f32.mrf.mxu0
  %v4482 = vpop.f32.mrf.mxu0
  %v4483 = vadd.f32 0.0, %v4482
  %v4484 = vpop.f32.mrf.mxu0
  %4485 = vmatprep.mubr.bf16.mxu0 0
  %4486 = vmatmul.mubr.bf16.gmra.mxu0 %v4158
  %v4487 = vpop.f32.mrf.mxu0
  %v4488 = vadd.f32 0.0, %v4487
  %v4489 = vpop.f32.mrf.mxu0
  %v4490 = vpop.f32.mrf.mxu0
  %v4491 = vadd.f32 0.0, %v4490
  %v4492 = vpop.f32.mrf.mxu0
  %4493 = vmatprep.mubr.bf16.mxu0 0
  %4494 = vmatmul.mubr.bf16.gmra.mxu0 %v4161
  %v4495 = vpop.f32.mrf.mxu0
  %v4496 = vadd.f32 0.0, %v4495
  %v4497 = vpop.f32.mrf.mxu0
  %v4498 = vpop.f32.mrf.mxu0
  %v4499 = vadd.f32 0.0, %v4498
  %v4500 = vpop.f32.mrf.mxu0
  %4501 = vmatprep.mubr.bf16.mxu0 0
  %4502 = vmatmul.mubr.bf16.gmra.mxu0 %v4164
  %v4503 = vpop.f32.mrf.mxu0
  %v4504 = vadd.f32 0.0, %v4503
  %v4505 = vpop.f32.mrf.mxu0
  %v4506 = vpop.f32.mrf.mxu0
  %v4507 = vadd.f32 0.0, %v4506
  %v4508 = vpop.f32.mrf.mxu0
  %4509 = vmatprep.mubr.bf16.mxu0 0
  %4510 = vmatmul.mubr.bf16.gmra.mxu0 %v4167
  %v4511 = vpop.f32.mrf.mxu0
  %v4512 = vadd.f32 0.0, %v4511
  %v4513 = vpop.f32.mrf.mxu0
  %v4514 = vpop.f32.mrf.mxu0
  %v4515 = vadd.f32 0.0, %v4514
  %v4516 = vpop.f32.mrf.mxu0
  %4517 = vmatprep.mubr.bf16.mxu0 0
  %4518 = vmatmul.mubr.bf16.gmra.mxu0 %v4170
  %v4519 = vpop.f32.mrf.mxu0
  %v4520 = vadd.f32 0.0, %v4519
  %v4521 = vpop.f32.mrf.mxu0
  %v4522 = vpop.f32.mrf.mxu0
  %v4523 = vadd.f32 0.0, %v4522
  %v4524 = vpop.f32.mrf.mxu0
  %4525 = vmatprep.mubr.bf16.mxu0 0
  %4526 = vmatmul.mubr.bf16.gmra.mxu0 %v4173
  %v4527 = vpop.f32.mrf.mxu0
  %v4528 = vadd.f32 0.0, %v4527
  %v4529 = vpop.f32.mrf.mxu0
  %v4530 = vpop.f32.mrf.mxu0
  %v4531 = vadd.f32 0.0, %v4530
  %v4532 = vpop.f32.mrf.mxu0
  %4533 = vmatprep.mubr.bf16.mxu0 0
  %4534 = vmatmul.mubr.bf16.gmra.mxu0 %v4176
  %v4535 = vpop.f32.mrf.mxu0
  %v4536 = vadd.f32 0.0, %v4535
  %v4537 = vpop.f32.mrf.mxu0
  %v4538 = vpop.f32.mrf.mxu0
  %v4539 = vpop.f32.mrf.mxu0
  %4540 = vdwg.mxu0
  %v4541 = vadd.f32 %v3606, %v4216
  %v4542 = vadd.f32 %v3609, %v4219
  %v4543 = vadd.f32 %v3614, %v4224
  %v4544 = vadd.f32 %v3617, %v4227
  %v4545 = vadd.f32 %v3622, %v4232
  %v4546 = vadd.f32 %v3625, %v4235
  %v4547 = vadd.f32 %v3630, %v4240
  %v4548 = vadd.f32 %v3633, %v4243
  %v4549 = vadd.f32 %v3638, %v4248
  %v4550 = vadd.f32 %v3641, %v4251
  %v4551 = vadd.f32 %v3646, %v4256
  %v4552 = vadd.f32 %v3649, %v4259
  %v4553 = vadd.f32 %v3654, %v4264
  %v4554 = vadd.f32 %v3657, %v4267
  %v4555 = vadd.f32 %v3662, %v4272
  %v4556 = vadd.f32 %v3665, %v4275
  %v4557 = vadd.f32 %v3670, %v4280
  %v4558 = vadd.f32 %v3673, %v4283
  %v4559 = vadd.f32 %v3678, %v4288
  %v4560 = vadd.f32 %v3681, %v4291
  %v4561 = vadd.f32 %v3686, %v4296
  %v4562 = vadd.f32 %v3689, %v4299
  %v4563 = vadd.f32 %v3694, %v4304
  %v4564 = vadd.f32 %v3697, %v4307
  %v4565 = vadd.f32 %v3702, %v4312
  %v4566 = vadd.f32 %v3705, %v4315
  %v4567 = vadd.f32 %v3710, %v4320
  %v4568 = vadd.f32 %v3713, %v4323
  %v4569 = vadd.f32 %v3718, %v4328
  %v4570 = vadd.f32 %v3721, %v4331
  %v4571 = vadd.f32 %v3726, %v4336
  %v4572 = vadd.f32 %v3729, %v4339
  %v4573 = vadd.f32 %v3734, %v4344
  %v4574 = vadd.f32 %v3737, %v4347
  %v4575 = vadd.f32 %v3742, %v4352
  %v4576 = vadd.f32 %v3745, %v4355
  %v4577 = vadd.f32 %v3750, %v4360
  %v4578 = vadd.f32 %v3753, %v4363
  %v4579 = vadd.f32 %v3758, %v4368
  %v4580 = vadd.f32 %v3761, %v4371
  %v4581 = vadd.f32 %v3766, %v4376
  %v4582 = vadd.f32 %v3769, %v4379
  %v4583 = vadd.f32 %v3774, %v4384
  %v4584 = vadd.f32 %v3777, %v4387
  %v4585 = vadd.f32 %v3782, %v4392
  %v4586 = vadd.f32 %v3785, %v4395
  %v4587 = vadd.f32 %v3790, %v4400
  %v4588 = vadd.f32 %v3793, %v4403
  %v4589 = vadd.f32 %v3798, %v4408
  %v4590 = vadd.f32 %v3801, %v4411
  %v4591 = vadd.f32 %v3806, %v4416
  %v4592 = vadd.f32 %v3809, %v4419
  %v4593 = vadd.f32 %v3814, %v4424
  %v4594 = vadd.f32 %v3817, %v4427
  %v4595 = vadd.f32 %v3822, %v4432
  %v4596 = vadd.f32 %v3825, %v4435
  %v4597 = vadd.f32 %v3830, %v4440
  %v4598 = vadd.f32 %v3833, %v4443
  %v4599 = vadd.f32 %v3838, %v4448
  %v4600 = vadd.f32 %v3841, %v4451
  %v4601 = vadd.f32 %v3846, %v4456
  %v4602 = vadd.f32 %v3849, %v4459
  %v4603 = vadd.f32 %v3854, %v4464
  %v4604 = vadd.f32 %v3857, %v4467
  %v4605 = vadd.f32 %v3862, %v4472
  %v4606 = vadd.f32 %v3865, %v4475
  %v4607 = vadd.f32 %v3870, %v4480
  %v4608 = vadd.f32 %v3873, %v4483
  %v4609 = vadd.f32 %v3878, %v4488
  %v4610 = vadd.f32 %v3881, %v4491
  %v4611 = vadd.f32 %v3886, %v4496
  %v4612 = vadd.f32 %v3889, %v4499
  %v4613 = vadd.f32 %v3894, %v4504
  %v4614 = vadd.f32 %v3897, %v4507
  %v4615 = vadd.f32 %v3902, %v4512
  %v4616 = vadd.f32 %v3905, %v4515
  %v4617 = vadd.f32 %v3910, %v4520
  %v4618 = vadd.f32 %v3913, %v4523
  %v4619 = vadd.f32 %v3918, %v4528
  %v4620 = vadd.f32 %v3921, %v4531
  %v4621 = vadd.f32 %v3926, %v4536
  %v4622 = vld [vmem:[#allocation2 + $0x12] sm:$0xff]
  %v4623 = vld [vmem:[#allocation2 + $0x1a] sm:$0xff]
  %v4624 = vld [vmem:[#allocation2 + $0x22] sm:$0xff]
  %v4625 = vld [vmem:[#allocation2 + $0x2a] sm:$0xff]
  %v4626 = vld [vmem:[#allocation2 + $0x32] sm:$0xff]
  %v4627 = vld [vmem:[#allocation2 + $0x3a] sm:$0xff]
  %v4628 = vld [vmem:[#allocation2 + $0x42] sm:$0xff]
  %v4629 = vld [vmem:[#allocation2 + $0x4a] sm:$0xff]
  %v4630 = vld [vmem:[#allocation2 + $0x52] sm:$0xff]
  %v4631 = vld [vmem:[#allocation2 + $0x5a] sm:$0xff]
  %v4632 = vld [vmem:[#allocation2 + $0x62] sm:$0xff]
  %v4633 = vld [vmem:[#allocation2 + $0x6a] sm:$0xff]
  %v4634 = vld [vmem:[#allocation2 + $0x72] sm:$0xff]
  %v4635 = vld [vmem:[#allocation2 + $0x7a] sm:$0xff]
  %v4636 = vld [vmem:[#allocation2 + $0x82] sm:$0xff]
  %v4637 = vld [vmem:[#allocation2 + $0x8a] sm:$0xff]
  %v4638 = vld [vmem:[#allocation2 + $0x92] sm:$0xff]
  %v4639 = vld [vmem:[#allocation2 + $0x9a] sm:$0xff]
  %v4640 = vld [vmem:[#allocation2 + $0xa2] sm:$0xff]
  %v4641 = vld [vmem:[#allocation2 + $0xaa] sm:$0xff]
  %v4642 = vld [vmem:[#allocation2 + $0xb2] sm:$0xff]
  %v4643 = vld [vmem:[#allocation2 + $0xba] sm:$0xff]
  %v4644 = vld [vmem:[#allocation2 + $0xc2] sm:$0xff]
  %v4645 = vld [vmem:[#allocation2 + $0xca] sm:$0xff]
  %v4646 = vld [vmem:[#allocation2 + $0xd2] sm:$0xff]
  %v4647 = vld [vmem:[#allocation2 + $0xda] sm:$0xff]
  %v4648 = vld [vmem:[#allocation2 + $0xe2] sm:$0xff]
  %v4649 = vld [vmem:[#allocation2 + $0xea] sm:$0xff]
  %v4650 = vld [vmem:[#allocation2 + $0xf2] sm:$0xff]
  %v4651 = vld [vmem:[#allocation2 + $0xfa] sm:$0xff]
  %v4652 = vld [vmem:[#allocation2 + $0x102] sm:$0xff]
  %v4653 = vld [vmem:[#allocation2 + $0x10a] sm:$0xff]
  %v4654 = vld [vmem:[#allocation2 + $0x112] sm:$0xff]
  %v4655 = vld [vmem:[#allocation2 + $0x11a] sm:$0xff]
  %v4656 = vld [vmem:[#allocation2 + $0x122] sm:$0xff]
  %v4657 = vld [vmem:[#allocation2 + $0x12a] sm:$0xff]
  %v4658 = vld [vmem:[#allocation2 + $0x132] sm:$0xff]
  %v4659 = vld [vmem:[#allocation2 + $0x13a] sm:$0xff]
  %v4660 = vld [vmem:[#allocation2 + $0x142] sm:$0xff]
  %v4661 = vld [vmem:[#allocation2 + $0x14a] sm:$0xff]
  %v4662 = vld [vmem:[#allocation2 + $0x152] sm:$0xff]
  %v4663 = vld [vmem:[#allocation2 + $0x15a] sm:$0xff]
  %v4664 = vld [vmem:[#allocation2 + $0x162] sm:$0xff]
  %v4665 = vld [vmem:[#allocation2 + $0x16a] sm:$0xff]
  %v4666 = vld [vmem:[#allocation2 + $0x172] sm:$0xff]
  %v4667 = vld [vmem:[#allocation2 + $0x17a] sm:$0xff]
  %v4668 = vld [vmem:[#allocation2 + $0x182] sm:$0xff]
  %v4669 = vld [vmem:[#allocation2 + $0x18a] sm:$0xff]
  %v4670 = vld [vmem:[#allocation2 + $0x192] sm:$0xff]
  %v4671 = vld [vmem:[#allocation2 + $0x19a] sm:$0xff]
  %v4672 = vld [vmem:[#allocation2 + $0x1a2] sm:$0xff]
  %v4673 = vld [vmem:[#allocation2 + $0x1aa] sm:$0xff]
  %v4674 = vld [vmem:[#allocation2 + $0x1b2] sm:$0xff]
  %v4675 = vld [vmem:[#allocation2 + $0x1ba] sm:$0xff]
  %v4676 = vld [vmem:[#allocation2 + $0x1c2] sm:$0xff]
  %v4677 = vld [vmem:[#allocation2 + $0x1ca] sm:$0xff]
  %v4678 = vld [vmem:[#allocation2 + $0x1d2] sm:$0xff]
  %v4679 = vld [vmem:[#allocation2 + $0x1da] sm:$0xff]
  %v4680 = vld [vmem:[#allocation2 + $0x1e2] sm:$0xff]
  %v4681 = vld [vmem:[#allocation2 + $0x1ea] sm:$0xff]
  %v4682 = vld [vmem:[#allocation2 + $0x1f2] sm:$0xff]
  %v4683 = vld [vmem:[#allocation2 + $0x1fa] sm:$0xff]
  %v4684 = vld [vmem:[#allocation2 + $0x202] sm:$0xff]
  %v4685 = vld [vmem:[#allocation2 + $0x20a] sm:$0xff]
  %v4686 = vld [vmem:[#allocation2 + $0x212] sm:$0xff]
  %v4687 = vld [vmem:[#allocation2 + $0x21a] sm:$0xff]
  %v4688 = vld [vmem:[#allocation2 + $0x222] sm:$0xff]
  %v4689 = vld [vmem:[#allocation2 + $0x22a] sm:$0xff]
  %v4690 = vld [vmem:[#allocation2 + $0x232] sm:$0xff]
  %v4691 = vld [vmem:[#allocation2 + $0x23a] sm:$0xff]
  %v4692 = vld [vmem:[#allocation2 + $0x242] sm:$0xff]
  %v4693 = vld [vmem:[#allocation2 + $0x24a] sm:$0xff]
  %v4694 = vld [vmem:[#allocation2 + $0x252] sm:$0xff]
  %v4695 = vld [vmem:[#allocation2 + $0x25a] sm:$0xff]
  %v4696 = vld [vmem:[#allocation2 + $0x262] sm:$0xff]
  %v4697 = vld [vmem:[#allocation2 + $0x26a] sm:$0xff]
  %v4698 = vld [vmem:[#allocation2 + $0x272] sm:$0xff]
  %v4699 = vld [vmem:[#allocation2 + $0x27a] sm:$0xff]
  %v4700 = vld [vmem:[#allocation2 + $0x282] sm:$0xff]
  %v4701 = vld [vmem:[#allocation2 + $0x28a] sm:$0xff]
  %v4702 = vld [vmem:[#allocation2 + $0x292] sm:$0xff]
  %v4703 = vpack.c.bf16 %v4623, %v4622
  %v4704 = vpack.c.bf16 %v4625, %v4624
  %v4705 = vpack.c.bf16 %v4627, %v4626
  %v4706 = vpack.c.bf16 %v4629, %v4628
  %v4707 = vpack.c.bf16 %v4631, %v4630
  %v4708 = vpack.c.bf16 %v4633, %v4632
  %v4709 = vpack.c.bf16 %v4635, %v4634
  %v4710 = vpack.c.bf16 %v4637, %v4636
  %v4711 = vpack.c.bf16 %v4639, %v4638
  %v4712 = vpack.c.bf16 %v4641, %v4640
  %v4713 = vpack.c.bf16 %v4643, %v4642
  %v4714 = vpack.c.bf16 %v4645, %v4644
  %v4715 = vpack.c.bf16 %v4647, %v4646
  %v4716 = vpack.c.bf16 %v4649, %v4648
  %v4717 = vpack.c.bf16 %v4651, %v4650
  %v4718 = vpack.c.bf16 %v4653, %v4652
  %v4719 = vpack.c.bf16 %v4655, %v4654
  %v4720 = vpack.c.bf16 %v4657, %v4656
  %v4721 = vpack.c.bf16 %v4659, %v4658
  %v4722 = vpack.c.bf16 %v4661, %v4660
  %v4723 = vpack.c.bf16 %v4663, %v4662
  %v4724 = vpack.c.bf16 %v4665, %v4664
  %v4725 = vpack.c.bf16 %v4667, %v4666
  %v4726 = vpack.c.bf16 %v4669, %v4668
  %v4727 = vpack.c.bf16 %v4671, %v4670
  %v4728 = vpack.c.bf16 %v4673, %v4672
  %v4729 = vpack.c.bf16 %v4675, %v4674
  %v4730 = vpack.c.bf16 %v4677, %v4676
  %v4731 = vpack.c.bf16 %v4679, %v4678
  %v4732 = vpack.c.bf16 %v4681, %v4680
  %v4733 = vpack.c.bf16 %v4683, %v4682
  %v4734 = vpack.c.bf16 %v4685, %v4684
  %v4735 = vpack.c.bf16 %v4687, %v4686
  %v4736 = vpack.c.bf16 %v4689, %v4688
  %v4737 = vpack.c.bf16 %v4691, %v4690
  %v4738 = vpack.c.bf16 %v4693, %v4692
  %v4739 = vpack.c.bf16 %v4695, %v4694
  %v4740 = vpack.c.bf16 %v4697, %v4696
  %v4741 = vpack.c.bf16 %v4699, %v4698
  %v4742 = vpack.c.bf16 %v4701, %v4700
  %v4743 = vpack.c.bf16 %v4702, %v4702
  %s4744 = scalar_lea.vmem %s7, 12
  %v4745 = vld [vmem:[%s4744] sm:$0xf]
  %v4747 = vsel %vm361, %v4703, 0
  %v4750 = vsel %vm361, %v4704, 0
  %v4753 = vsel %vm361, %v4705, 0
  %v4756 = vsel %vm361, %v4706, 0
  %v4759 = vsel %vm361, %v4707, 0
  %v4762 = vsel %vm361, %v4708, 0
  %v4765 = vsel %vm361, %v4709, 0
  %v4768 = vsel %vm361, %v4710, 0
  %v4771 = vsel %vm361, %v4711, 0
  %v4774 = vsel %vm361, %v4712, 0
  %v4777 = vsel %vm361, %v4713, 0
  %v4780 = vsel %vm361, %v4714, 0
  %v4783 = vsel %vm361, %v4715, 0
  %v4786 = vsel %vm361, %v4716, 0
  %v4789 = vsel %vm361, %v4717, 0
  %v4792 = vsel %vm361, %v4718, 0
  %v4795 = vsel %vm361, %v4719, 0
  %v4798 = vsel %vm361, %v4720, 0
  %v4801 = vsel %vm361, %v4721, 0
  %v4804 = vsel %vm361, %v4722, 0
  %v4807 = vsel %vm361, %v4723, 0
  %v4810 = vsel %vm361, %v4724, 0
  %v4813 = vsel %vm361, %v4725, 0
  %v4816 = vsel %vm361, %v4726, 0
  %v4819 = vsel %vm361, %v4727, 0
  %v4822 = vsel %vm361, %v4728, 0
  %v4825 = vsel %vm361, %v4729, 0
  %v4828 = vsel %vm361, %v4730, 0
  %v4831 = vsel %vm361, %v4731, 0
  %v4834 = vsel %vm361, %v4732, 0
  %v4837 = vsel %vm361, %v4733, 0
  %v4840 = vsel %vm361, %v4734, 0
  %v4843 = vsel %vm361, %v4735, 0
  %v4846 = vsel %vm361, %v4736, 0
  %v4849 = vsel %vm361, %v4737, 0
  %v4852 = vsel %vm361, %v4738, 0
  %v4855 = vsel %vm361, %v4739, 0
  %v4858 = vsel %vm361, %v4740, 0
  %v4861 = vsel %vm361, %v4741, 0
  %v4864 = vsel %vm361, %v4742, 0
  %v4867 = vsel %vm361, %v4743, 0
  %v4870 = vsel %vm491, %v4745, 0
  %4872 = vmatprep.subr.bf16.mxu0 0
  %4873 = vmatpush1.bf16.msra.mxu0 0
  %4874 = vmatprep.subr.bf16.mxu0 0
  %4875 = vmatpush1.bf16.msra.mxu0 0
  %4876 = vmatprep.subr.bf16.mxu0 0
  %4877 = vmatpush1.bf16.msra.mxu0 0
  %4878 = vmatprep.subr.bf16.mxu0 0
  %4879 = vmatpush1.bf16.msra.mxu0 0
  %4880 = vmatprep.subr.bf16.mxu0 0
  %4881 = vmatpush1.bf16.msra.mxu0 0
  %4882 = vmatprep.subr.bf16.mxu0 0
  %4883 = vmatpush1.bf16.msra.mxu0 0
  %4884 = vmatprep.subr.bf16.mxu0 0
  %4885 = vmatpush1.bf16.msra.mxu0 0
  %4886 = vmatprep.subr.bf16.mxu0 0
  %4887 = vmatpush1.bf16.msra.mxu0 %v4870
  %4888 = vmatprep.subr.bf16.mxu0 0
  %4889 = vmatpush2.bf16.msra.mxu0 0
  %4890 = vmatprep.subr.bf16.mxu0 0
  %4891 = vmatpush2.bf16.msra.mxu0 0
  %4892 = vmatprep.subr.bf16.mxu0 0
  %4893 = vmatpush2.bf16.msra.mxu0 0
  %4894 = vmatprep.subr.bf16.mxu0 0
  %4895 = vmatpush2.bf16.msra.mxu0 0
  %4896 = vmatprep.subr.bf16.mxu0 0
  %4897 = vmatpush2.bf16.msra.mxu0 0
  %4898 = vmatprep.subr.bf16.mxu0 0
  %4899 = vmatpush2.bf16.msra.mxu0 0
  %4900 = vmatprep.subr.bf16.mxu0 0
  %4901 = vmatpush2.bf16.msra.mxu0 0
  %4902 = vmatprep.subr.bf16.mxu0 0
  %4903 = vmatpush2.bf16.msra.mxu0 0
  %4904 = vmatprep.mubr.bf16.mxu0 0
  %4905 = vmatmul.mubr.bf16.gmra.mxu0 %v4747
  %v4906 = vpop.f32.mrf.mxu0
  %v4907 = vadd.f32 0.0, %v4906
  %v4908 = vpop.f32.mrf.mxu0
  %v4909 = vpop.f32.mrf.mxu0
  %v4910 = vadd.f32 0.0, %v4909
  %v4911 = vpop.f32.mrf.mxu0
  %4912 = vmatprep.mubr.bf16.mxu0 0
  %4913 = vmatmul.mubr.bf16.gmra.mxu0 %v4750
  %v4914 = vpop.f32.mrf.mxu0
  %v4915 = vadd.f32 0.0, %v4914
  %v4916 = vpop.f32.mrf.mxu0
  %v4917 = vpop.f32.mrf.mxu0
  %v4918 = vadd.f32 0.0, %v4917
  %v4919 = vpop.f32.mrf.mxu0
  %4920 = vmatprep.mubr.bf16.mxu0 0
  %4921 = vmatmul.mubr.bf16.gmra.mxu0 %v4753
  %v4922 = vpop.f32.mrf.mxu0
  %v4923 = vadd.f32 0.0, %v4922
  %v4924 = vpop.f32.mrf.mxu0
  %v4925 = vpop.f32.mrf.mxu0
  %v4926 = vadd.f32 0.0, %v4925
  %v4927 = vpop.f32.mrf.mxu0
  %4928 = vmatprep.mubr.bf16.mxu0 0
  %4929 = vmatmul.mubr.bf16.gmra.mxu0 %v4756
  %v4930 = vpop.f32.mrf.mxu0
  %v4931 = vadd.f32 0.0, %v4930
  %v4932 = vpop.f32.mrf.mxu0
  %v4933 = vpop.f32.mrf.mxu0
  %v4934 = vadd.f32 0.0, %v4933
  %v4935 = vpop.f32.mrf.mxu0
  %4936 = vmatprep.mubr.bf16.mxu0 0
  %4937 = vmatmul.mubr.bf16.gmra.mxu0 %v4759
  %v4938 = vpop.f32.mrf.mxu0
  %v4939 = vadd.f32 0.0, %v4938
  %v4940 = vpop.f32.mrf.mxu0
  %v4941 = vpop.f32.mrf.mxu0
  %v4942 = vadd.f32 0.0, %v4941
  %v4943 = vpop.f32.mrf.mxu0
  %4944 = vmatprep.mubr.bf16.mxu0 0
  %4945 = vmatmul.mubr.bf16.gmra.mxu0 %v4762
  %v4946 = vpop.f32.mrf.mxu0
  %v4947 = vadd.f32 0.0, %v4946
  %v4948 = vpop.f32.mrf.mxu0
  %v4949 = vpop.f32.mrf.mxu0
  %v4950 = vadd.f32 0.0, %v4949
  %v4951 = vpop.f32.mrf.mxu0
  %4952 = vmatprep.mubr.bf16.mxu0 0
  %4953 = vmatmul.mubr.bf16.gmra.mxu0 %v4765
  %v4954 = vpop.f32.mrf.mxu0
  %v4955 = vadd.f32 0.0, %v4954
  %v4956 = vpop.f32.mrf.mxu0
  %v4957 = vpop.f32.mrf.mxu0
  %v4958 = vadd.f32 0.0, %v4957
  %v4959 = vpop.f32.mrf.mxu0
  %4960 = vmatprep.mubr.bf16.mxu0 0
  %4961 = vmatmul.mubr.bf16.gmra.mxu0 %v4768
  %v4962 = vpop.f32.mrf.mxu0
  %v4963 = vadd.f32 0.0, %v4962
  %v4964 = vpop.f32.mrf.mxu0
  %v4965 = vpop.f32.mrf.mxu0
  %v4966 = vadd.f32 0.0, %v4965
  %v4967 = vpop.f32.mrf.mxu0
  %4968 = vmatprep.mubr.bf16.mxu0 0
  %4969 = vmatmul.mubr.bf16.gmra.mxu0 %v4771
  %v4970 = vpop.f32.mrf.mxu0
  %v4971 = vadd.f32 0.0, %v4970
  %v4972 = vpop.f32.mrf.mxu0
  %v4973 = vpop.f32.mrf.mxu0
  %v4974 = vadd.f32 0.0, %v4973
  %v4975 = vpop.f32.mrf.mxu0
  %4976 = vmatprep.mubr.bf16.mxu0 0
  %4977 = vmatmul.mubr.bf16.gmra.mxu0 %v4774
  %v4978 = vpop.f32.mrf.mxu0
  %v4979 = vadd.f32 0.0, %v4978
  %v4980 = vpop.f32.mrf.mxu0
  %v4981 = vpop.f32.mrf.mxu0
  %v4982 = vadd.f32 0.0, %v4981
  %v4983 = vpop.f32.mrf.mxu0
  %4984 = vmatprep.mubr.bf16.mxu0 0
  %4985 = vmatmul.mubr.bf16.gmra.mxu0 %v4777
  %v4986 = vpop.f32.mrf.mxu0
  %v4987 = vadd.f32 0.0, %v4986
  %v4988 = vpop.f32.mrf.mxu0
  %v4989 = vpop.f32.mrf.mxu0
  %v4990 = vadd.f32 0.0, %v4989
  %v4991 = vpop.f32.mrf.mxu0
  %4992 = vmatprep.mubr.bf16.mxu0 0
  %4993 = vmatmul.mubr.bf16.gmra.mxu0 %v4780
  %v4994 = vpop.f32.mrf.mxu0
  %v4995 = vadd.f32 0.0, %v4994
  %v4996 = vpop.f32.mrf.mxu0
  %v4997 = vpop.f32.mrf.mxu0
  %v4998 = vadd.f32 0.0, %v4997
  %v4999 = vpop.f32.mrf.mxu0
  %5000 = vmatprep.mubr.bf16.mxu0 0
  %5001 = vmatmul.mubr.bf16.gmra.mxu0 %v4783
  %v5002 = vpop.f32.mrf.mxu0
  %v5003 = vadd.f32 0.0, %v5002
  %v5004 = vpop.f32.mrf.mxu0
  %v5005 = vpop.f32.mrf.mxu0
  %v5006 = vadd.f32 0.0, %v5005
  %v5007 = vpop.f32.mrf.mxu0
  %5008 = vmatprep.mubr.bf16.mxu0 0
  %5009 = vmatmul.mubr.bf16.gmra.mxu0 %v4786
  %v5010 = vpop.f32.mrf.mxu0
  %v5011 = vadd.f32 0.0, %v5010
  %v5012 = vpop.f32.mrf.mxu0
  %v5013 = vpop.f32.mrf.mxu0
  %v5014 = vadd.f32 0.0, %v5013
  %v5015 = vpop.f32.mrf.mxu0
  %5016 = vmatprep.mubr.bf16.mxu0 0
  %5017 = vmatmul.mubr.bf16.gmra.mxu0 %v4789
  %v5018 = vpop.f32.mrf.mxu0
  %v5019 = vadd.f32 0.0, %v5018
  %v5020 = vpop.f32.mrf.mxu0
  %v5021 = vpop.f32.mrf.mxu0
  %v5022 = vadd.f32 0.0, %v5021
  %v5023 = vpop.f32.mrf.mxu0
  %5024 = vmatprep.mubr.bf16.mxu0 0
  %5025 = vmatmul.mubr.bf16.gmra.mxu0 %v4792
  %v5026 = vpop.f32.mrf.mxu0
  %v5027 = vadd.f32 0.0, %v5026
  %v5028 = vpop.f32.mrf.mxu0
  %v5029 = vpop.f32.mrf.mxu0
  %v5030 = vadd.f32 0.0, %v5029
  %v5031 = vpop.f32.mrf.mxu0
  %5032 = vmatprep.mubr.bf16.mxu0 0
  %5033 = vmatmul.mubr.bf16.gmra.mxu0 %v4795
  %v5034 = vpop.f32.mrf.mxu0
  %v5035 = vadd.f32 0.0, %v5034
  %v5036 = vpop.f32.mrf.mxu0
  %v5037 = vpop.f32.mrf.mxu0
  %v5038 = vadd.f32 0.0, %v5037
  %v5039 = vpop.f32.mrf.mxu0
  %5040 = vmatprep.mubr.bf16.mxu0 0
  %5041 = vmatmul.mubr.bf16.gmra.mxu0 %v4798
  %v5042 = vpop.f32.mrf.mxu0
  %v5043 = vadd.f32 0.0, %v5042
  %v5044 = vpop.f32.mrf.mxu0
  %v5045 = vpop.f32.mrf.mxu0
  %v5046 = vadd.f32 0.0, %v5045
  %v5047 = vpop.f32.mrf.mxu0
  %5048 = vmatprep.mubr.bf16.mxu0 0
  %5049 = vmatmul.mubr.bf16.gmra.mxu0 %v4801
  %v5050 = vpop.f32.mrf.mxu0
  %v5051 = vadd.f32 0.0, %v5050
  %v5052 = vpop.f32.mrf.mxu0
  %v5053 = vpop.f32.mrf.mxu0
  %v5054 = vadd.f32 0.0, %v5053
  %v5055 = vpop.f32.mrf.mxu0
  %5056 = vmatprep.mubr.bf16.mxu0 0
  %5057 = vmatmul.mubr.bf16.gmra.mxu0 %v4804
  %v5058 = vpop.f32.mrf.mxu0
  %v5059 = vadd.f32 0.0, %v5058
  %v5060 = vpop.f32.mrf.mxu0
  %v5061 = vpop.f32.mrf.mxu0
  %v5062 = vadd.f32 0.0, %v5061
  %v5063 = vpop.f32.mrf.mxu0
  %5064 = vmatprep.mubr.bf16.mxu0 0
  %5065 = vmatmul.mubr.bf16.gmra.mxu0 %v4807
  %v5066 = vpop.f32.mrf.mxu0
  %v5067 = vadd.f32 0.0, %v5066
  %v5068 = vpop.f32.mrf.mxu0
  %v5069 = vpop.f32.mrf.mxu0
  %v5070 = vadd.f32 0.0, %v5069
  %v5071 = vpop.f32.mrf.mxu0
  %5072 = vmatprep.mubr.bf16.mxu0 0
  %5073 = vmatmul.mubr.bf16.gmra.mxu0 %v4810
  %v5074 = vpop.f32.mrf.mxu0
  %v5075 = vadd.f32 0.0, %v5074
  %v5076 = vpop.f32.mrf.mxu0
  %v5077 = vpop.f32.mrf.mxu0
  %v5078 = vadd.f32 0.0, %v5077
  %v5079 = vpop.f32.mrf.mxu0
  %5080 = vmatprep.mubr.bf16.mxu0 0
  %5081 = vmatmul.mubr.bf16.gmra.mxu0 %v4813
  %v5082 = vpop.f32.mrf.mxu0
  %v5083 = vadd.f32 0.0, %v5082
  %v5084 = vpop.f32.mrf.mxu0
  %v5085 = vpop.f32.mrf.mxu0
  %v5086 = vadd.f32 0.0, %v5085
  %v5087 = vpop.f32.mrf.mxu0
  %5088 = vmatprep.mubr.bf16.mxu0 0
  %5089 = vmatmul.mubr.bf16.gmra.mxu0 %v4816
  %v5090 = vpop.f32.mrf.mxu0
  %v5091 = vadd.f32 0.0, %v5090
  %v5092 = vpop.f32.mrf.mxu0
  %v5093 = vpop.f32.mrf.mxu0
  %v5094 = vadd.f32 0.0, %v5093
  %v5095 = vpop.f32.mrf.mxu0
  %5096 = vmatprep.mubr.bf16.mxu0 0
  %5097 = vmatmul.mubr.bf16.gmra.mxu0 %v4819
  %v5098 = vpop.f32.mrf.mxu0
  %v5099 = vadd.f32 0.0, %v5098
  %v5100 = vpop.f32.mrf.mxu0
  %v5101 = vpop.f32.mrf.mxu0
  %v5102 = vadd.f32 0.0, %v5101
  %v5103 = vpop.f32.mrf.mxu0
  %5104 = vmatprep.mubr.bf16.mxu0 0
  %5105 = vmatmul.mubr.bf16.gmra.mxu0 %v4822
  %v5106 = vpop.f32.mrf.mxu0
  %v5107 = vadd.f32 0.0, %v5106
  %v5108 = vpop.f32.mrf.mxu0
  %v5109 = vpop.f32.mrf.mxu0
  %v5110 = vadd.f32 0.0, %v5109
  %v5111 = vpop.f32.mrf.mxu0
  %5112 = vmatprep.mubr.bf16.mxu0 0
  %5113 = vmatmul.mubr.bf16.gmra.mxu0 %v4825
  %v5114 = vpop.f32.mrf.mxu0
  %v5115 = vadd.f32 0.0, %v5114
  %v5116 = vpop.f32.mrf.mxu0
  %v5117 = vpop.f32.mrf.mxu0
  %v5118 = vadd.f32 0.0, %v5117
  %v5119 = vpop.f32.mrf.mxu0
  %5120 = vmatprep.mubr.bf16.mxu0 0
  %5121 = vmatmul.mubr.bf16.gmra.mxu0 %v4828
  %v5122 = vpop.f32.mrf.mxu0
  %v5123 = vadd.f32 0.0, %v5122
  %v5124 = vpop.f32.mrf.mxu0
  %v5125 = vpop.f32.mrf.mxu0
  %v5126 = vadd.f32 0.0, %v5125
  %v5127 = vpop.f32.mrf.mxu0
  %5128 = vmatprep.mubr.bf16.mxu0 0
  %5129 = vmatmul.mubr.bf16.gmra.mxu0 %v4831
  %v5130 = vpop.f32.mrf.mxu0
  %v5131 = vadd.f32 0.0, %v5130
  %v5132 = vpop.f32.mrf.mxu0
  %v5133 = vpop.f32.mrf.mxu0
  %v5134 = vadd.f32 0.0, %v5133
  %v5135 = vpop.f32.mrf.mxu0
  %5136 = vmatprep.mubr.bf16.mxu0 0
  %5137 = vmatmul.mubr.bf16.gmra.mxu0 %v4834
  %v5138 = vpop.f32.mrf.mxu0
  %v5139 = vadd.f32 0.0, %v5138
  %v5140 = vpop.f32.mrf.mxu0
  %v5141 = vpop.f32.mrf.mxu0
  %v5142 = vadd.f32 0.0, %v5141
  %v5143 = vpop.f32.mrf.mxu0
  %5144 = vmatprep.mubr.bf16.mxu0 0
  %5145 = vmatmul.mubr.bf16.gmra.mxu0 %v4837
  %v5146 = vpop.f32.mrf.mxu0
  %v5147 = vadd.f32 0.0, %v5146
  %v5148 = vpop.f32.mrf.mxu0
  %v5149 = vpop.f32.mrf.mxu0
  %v5150 = vadd.f32 0.0, %v5149
  %v5151 = vpop.f32.mrf.mxu0
  %5152 = vmatprep.mubr.bf16.mxu0 0
  %5153 = vmatmul.mubr.bf16.gmra.mxu0 %v4840
  %v5154 = vpop.f32.mrf.mxu0
  %v5155 = vadd.f32 0.0, %v5154
  %v5156 = vpop.f32.mrf.mxu0
  %v5157 = vpop.f32.mrf.mxu0
  %v5158 = vadd.f32 0.0, %v5157
  %v5159 = vpop.f32.mrf.mxu0
  %5160 = vmatprep.mubr.bf16.mxu0 0
  %5161 = vmatmul.mubr.bf16.gmra.mxu0 %v4843
  %v5162 = vpop.f32.mrf.mxu0
  %v5163 = vadd.f32 0.0, %v5162
  %v5164 = vpop.f32.mrf.mxu0
  %v5165 = vpop.f32.mrf.mxu0
  %v5166 = vadd.f32 0.0, %v5165
  %v5167 = vpop.f32.mrf.mxu0
  %5168 = vmatprep.mubr.bf16.mxu0 0
  %5169 = vmatmul.mubr.bf16.gmra.mxu0 %v4846
  %v5170 = vpop.f32.mrf.mxu0
  %v5171 = vadd.f32 0.0, %v5170
  %v5172 = vpop.f32.mrf.mxu0
  %v5173 = vpop.f32.mrf.mxu0
  %v5174 = vadd.f32 0.0, %v5173
  %v5175 = vpop.f32.mrf.mxu0
  %5176 = vmatprep.mubr.bf16.mxu0 0
  %5177 = vmatmul.mubr.bf16.gmra.mxu0 %v4849
  %v5178 = vpop.f32.mrf.mxu0
  %v5179 = vadd.f32 0.0, %v5178
  %v5180 = vpop.f32.mrf.mxu0
  %v5181 = vpop.f32.mrf.mxu0
  %v5182 = vadd.f32 0.0, %v5181
  %v5183 = vpop.f32.mrf.mxu0
  %5184 = vmatprep.mubr.bf16.mxu0 0
  %5185 = vmatmul.mubr.bf16.gmra.mxu0 %v4852
  %v5186 = vpop.f32.mrf.mxu0
  %v5187 = vadd.f32 0.0, %v5186
  %v5188 = vpop.f32.mrf.mxu0
  %v5189 = vpop.f32.mrf.mxu0
  %v5190 = vadd.f32 0.0, %v5189
  %v5191 = vpop.f32.mrf.mxu0
  %5192 = vmatprep.mubr.bf16.mxu0 0
  %5193 = vmatmul.mubr.bf16.gmra.mxu0 %v4855
  %v5194 = vpop.f32.mrf.mxu0
  %v5195 = vadd.f32 0.0, %v5194
  %v5196 = vpop.f32.mrf.mxu0
  %v5197 = vpop.f32.mrf.mxu0
  %v5198 = vadd.f32 0.0, %v5197
  %v5199 = vpop.f32.mrf.mxu0
  %5200 = vmatprep.mubr.bf16.mxu0 0
  %5201 = vmatmul.mubr.bf16.gmra.mxu0 %v4858
  %v5202 = vpop.f32.mrf.mxu0
  %v5203 = vadd.f32 0.0, %v5202
  %v5204 = vpop.f32.mrf.mxu0
  %v5205 = vpop.f32.mrf.mxu0
  %v5206 = vadd.f32 0.0, %v5205
  %v5207 = vpop.f32.mrf.mxu0
  %5208 = vmatprep.mubr.bf16.mxu0 0
  %5209 = vmatmul.mubr.bf16.gmra.mxu0 %v4861
  %v5210 = vpop.f32.mrf.mxu0
  %v5211 = vadd.f32 0.0, %v5210
  %v5212 = vpop.f32.mrf.mxu0
  %v5213 = vpop.f32.mrf.mxu0
  %v5214 = vadd.f32 0.0, %v5213
  %v5215 = vpop.f32.mrf.mxu0
  %5216 = vmatprep.mubr.bf16.mxu0 0
  %5217 = vmatmul.mubr.bf16.gmra.mxu0 %v4864
  %v5218 = vpop.f32.mrf.mxu0
  %v5219 = vadd.f32 0.0, %v5218
  %v5220 = vpop.f32.mrf.mxu0
  %v5221 = vpop.f32.mrf.mxu0
  %v5222 = vadd.f32 0.0, %v5221
  %v5223 = vpop.f32.mrf.mxu0
  %5224 = vmatprep.mubr.bf16.mxu0 0
  %5225 = vmatmul.mubr.bf16.gmra.mxu0 %v4867
  %v5226 = vpop.f32.mrf.mxu0
  %v5227 = vadd.f32 0.0, %v5226
  %v5228 = vpop.f32.mrf.mxu0
  %v5229 = vpop.f32.mrf.mxu0
  %v5230 = vpop.f32.mrf.mxu0
  %5231 = vdwg.mxu0
  %v5232 = vadd.f32 %v4541, %v4907
  %v5233 = vadd.f32 %v4542, %v4910
  %v5234 = vadd.f32 %v4543, %v4915
  %v5235 = vadd.f32 %v4544, %v4918
  %v5236 = vadd.f32 %v4545, %v4923
  %v5237 = vadd.f32 %v4546, %v4926
  %v5238 = vadd.f32 %v4547, %v4931
  %v5239 = vadd.f32 %v4548, %v4934
  %v5240 = vadd.f32 %v4549, %v4939
  %v5241 = vadd.f32 %v4550, %v4942
  %v5242 = vadd.f32 %v4551, %v4947
  %v5243 = vadd.f32 %v4552, %v4950
  %v5244 = vadd.f32 %v4553, %v4955
  %v5245 = vadd.f32 %v4554, %v4958
  %v5246 = vadd.f32 %v4555, %v4963
  %v5247 = vadd.f32 %v4556, %v4966
  %v5248 = vadd.f32 %v4557, %v4971
  %v5249 = vadd.f32 %v4558, %v4974
  %v5250 = vadd.f32 %v4559, %v4979
  %v5251 = vadd.f32 %v4560, %v4982
  %v5252 = vadd.f32 %v4561, %v4987
  %v5253 = vadd.f32 %v4562, %v4990
  %v5254 = vadd.f32 %v4563, %v4995
  %v5255 = vadd.f32 %v4564, %v4998
  %v5256 = vadd.f32 %v4565, %v5003
  %v5257 = vadd.f32 %v4566, %v5006
  %v5258 = vadd.f32 %v4567, %v5011
  %v5259 = vadd.f32 %v4568, %v5014
  %v5260 = vadd.f32 %v4569, %v5019
  %v5261 = vadd.f32 %v4570, %v5022
  %v5262 = vadd.f32 %v4571, %v5027
  %v5263 = vadd.f32 %v4572, %v5030
  %v5264 = vadd.f32 %v4573, %v5035
  %v5265 = vadd.f32 %v4574, %v5038
  %v5266 = vadd.f32 %v4575, %v5043
  %v5267 = vadd.f32 %v4576, %v5046
  %v5268 = vadd.f32 %v4577, %v5051
  %v5269 = vadd.f32 %v4578, %v5054
  %v5270 = vadd.f32 %v4579, %v5059
  %v5271 = vadd.f32 %v4580, %v5062
  %v5272 = vadd.f32 %v4581, %v5067
  %v5273 = vadd.f32 %v4582, %v5070
  %v5274 = vadd.f32 %v4583, %v5075
  %v5275 = vadd.f32 %v4584, %v5078
  %v5276 = vadd.f32 %v4585, %v5083
  %v5277 = vadd.f32 %v4586, %v5086
  %v5278 = vadd.f32 %v4587, %v5091
  %v5279 = vadd.f32 %v4588, %v5094
  %v5280 = vadd.f32 %v4589, %v5099
  %v5281 = vadd.f32 %v4590, %v5102
  %v5282 = vadd.f32 %v4591, %v5107
  %v5283 = vadd.f32 %v4592, %v5110
  %v5284 = vadd.f32 %v4593, %v5115
  %v5285 = vadd.f32 %v4594, %v5118
  %v5286 = vadd.f32 %v4595, %v5123
  %v5287 = vadd.f32 %v4596, %v5126
  %v5288 = vadd.f32 %v4597, %v5131
  %v5289 = vadd.f32 %v4598, %v5134
  %v5290 = vadd.f32 %v4599, %v5139
  %v5291 = vadd.f32 %v4600, %v5142
  %v5292 = vadd.f32 %v4601, %v5147
  %v5293 = vadd.f32 %v4602, %v5150
  %v5294 = vadd.f32 %v4603, %v5155
  %v5295 = vadd.f32 %v4604, %v5158
  %v5296 = vadd.f32 %v4605, %v5163
  %v5297 = vadd.f32 %v4606, %v5166
  %v5298 = vadd.f32 %v4607, %v5171
  %v5299 = vadd.f32 %v4608, %v5174
  %v5300 = vadd.f32 %v4609, %v5179
  %v5301 = vadd.f32 %v4610, %v5182
  %v5302 = vadd.f32 %v4611, %v5187
  %v5303 = vadd.f32 %v4612, %v5190
  %v5304 = vadd.f32 %v4613, %v5195
  %v5305 = vadd.f32 %v4614, %v5198
  %v5306 = vadd.f32 %v4615, %v5203
  %v5307 = vadd.f32 %v4616, %v5206
  %v5308 = vadd.f32 %v4617, %v5211
  %v5309 = vadd.f32 %v4618, %v5214
  %v5310 = vadd.f32 %v4619, %v5219
  %v5311 = vadd.f32 %v4620, %v5222
  %v5312 = vadd.f32 %v4621, %v5227
  %v5313 = vld [vmem:[#allocation2 + $0x13] sm:$0xff]
  %v5314 = vld [vmem:[#allocation2 + $0x1b] sm:$0xff]
  %v5315 = vld [vmem:[#allocation2 + $0x23] sm:$0xff]
  %v5316 = vld [vmem:[#allocation2 + $0x2b] sm:$0xff]
  %v5317 = vld [vmem:[#allocation2 + $0x33] sm:$0xff]
  %v5318 = vld [vmem:[#allocation2 + $0x3b] sm:$0xff]
  %v5319 = vld [vmem:[#allocation2 + $0x43] sm:$0xff]
  %v5320 = vld [vmem:[#allocation2 + $0x4b] sm:$0xff]
  %v5321 = vld [vmem:[#allocation2 + $0x53] sm:$0xff]
  %v5322 = vld [vmem:[#allocation2 + $0x5b] sm:$0xff]
  %v5323 = vld [vmem:[#allocation2 + $0x63] sm:$0xff]
  %v5324 = vld [vmem:[#allocation2 + $0x6b] sm:$0xff]
  %v5325 = vld [vmem:[#allocation2 + $0x73] sm:$0xff]
  %v5326 = vld [vmem:[#allocation2 + $0x7b] sm:$0xff]
  %v5327 = vld [vmem:[#allocation2 + $0x83] sm:$0xff]
  %v5328 = vld [vmem:[#allocation2 + $0x8b] sm:$0xff]
  %v5329 = vld [vmem:[#allocation2 + $0x93] sm:$0xff]
  %v5330 = vld [vmem:[#allocation2 + $0x9b] sm:$0xff]
  %v5331 = vld [vmem:[#allocation2 + $0xa3] sm:$0xff]
  %v5332 = vld [vmem:[#allocation2 + $0xab] sm:$0xff]
  %v5333 = vld [vmem:[#allocation2 + $0xb3] sm:$0xff]
  %v5334 = vld [vmem:[#allocation2 + $0xbb] sm:$0xff]
  %v5335 = vld [vmem:[#allocation2 + $0xc3] sm:$0xff]
  %v5336 = vld [vmem:[#allocation2 + $0xcb] sm:$0xff]
  %v5337 = vld [vmem:[#allocation2 + $0xd3] sm:$0xff]
  %v5338 = vld [vmem:[#allocation2 + $0xdb] sm:$0xff]
  %v5339 = vld [vmem:[#allocation2 + $0xe3] sm:$0xff]
  %v5340 = vld [vmem:[#allocation2 + $0xeb] sm:$0xff]
  %v5341 = vld [vmem:[#allocation2 + $0xf3] sm:$0xff]
  %v5342 = vld [vmem:[#allocation2 + $0xfb] sm:$0xff]
  %v5343 = vld [vmem:[#allocation2 + $0x103] sm:$0xff]
  %v5344 = vld [vmem:[#allocation2 + $0x10b] sm:$0xff]
  %v5345 = vld [vmem:[#allocation2 + $0x113] sm:$0xff]
  %v5346 = vld [vmem:[#allocation2 + $0x11b] sm:$0xff]
  %v5347 = vld [vmem:[#allocation2 + $0x123] sm:$0xff]
  %v5348 = vld [vmem:[#allocation2 + $0x12b] sm:$0xff]
  %v5349 = vld [vmem:[#allocation2 + $0x133] sm:$0xff]
  %v5350 = vld [vmem:[#allocation2 + $0x13b] sm:$0xff]
  %v5351 = vld [vmem:[#allocation2 + $0x143] sm:$0xff]
  %v5352 = vld [vmem:[#allocation2 + $0x14b] sm:$0xff]
  %v5353 = vld [vmem:[#allocation2 + $0x153] sm:$0xff]
  %v5354 = vld [vmem:[#allocation2 + $0x15b] sm:$0xff]
  %v5355 = vld [vmem:[#allocation2 + $0x163] sm:$0xff]
  %v5356 = vld [vmem:[#allocation2 + $0x16b] sm:$0xff]
  %v5357 = vld [vmem:[#allocation2 + $0x173] sm:$0xff]
  %v5358 = vld [vmem:[#allocation2 + $0x17b] sm:$0xff]
  %v5359 = vld [vmem:[#allocation2 + $0x183] sm:$0xff]
  %v5360 = vld [vmem:[#allocation2 + $0x18b] sm:$0xff]
  %v5361 = vld [vmem:[#allocation2 + $0x193] sm:$0xff]
  %v5362 = vld [vmem:[#allocation2 + $0x19b] sm:$0xff]
  %v5363 = vld [vmem:[#allocation2 + $0x1a3] sm:$0xff]
  %v5364 = vld [vmem:[#allocation2 + $0x1ab] sm:$0xff]
  %v5365 = vld [vmem:[#allocation2 + $0x1b3] sm:$0xff]
  %v5366 = vld [vmem:[#allocation2 + $0x1bb] sm:$0xff]
  %v5367 = vld [vmem:[#allocation2 + $0x1c3] sm:$0xff]
  %v5368 = vld [vmem:[#allocation2 + $0x1cb] sm:$0xff]
  %v5369 = vld [vmem:[#allocation2 + $0x1d3] sm:$0xff]
  %v5370 = vld [vmem:[#allocation2 + $0x1db] sm:$0xff]
  %v5371 = vld [vmem:[#allocation2 + $0x1e3] sm:$0xff]
  %v5372 = vld [vmem:[#allocation2 + $0x1eb] sm:$0xff]
  %v5373 = vld [vmem:[#allocation2 + $0x1f3] sm:$0xff]
  %v5374 = vld [vmem:[#allocation2 + $0x1fb] sm:$0xff]
  %v5375 = vld [vmem:[#allocation2 + $0x203] sm:$0xff]
  %v5376 = vld [vmem:[#allocation2 + $0x20b] sm:$0xff]
  %v5377 = vld [vmem:[#allocation2 + $0x213] sm:$0xff]
  %v5378 = vld [vmem:[#allocation2 + $0x21b] sm:$0xff]
  %v5379 = vld [vmem:[#allocation2 + $0x223] sm:$0xff]
  %v5380 = vld [vmem:[#allocation2 + $0x22b] sm:$0xff]
  %v5381 = vld [vmem:[#allocation2 + $0x233] sm:$0xff]
  %v5382 = vld [vmem:[#allocation2 + $0x23b] sm:$0xff]
  %v5383 = vld [vmem:[#allocation2 + $0x243] sm:$0xff]
  %v5384 = vld [vmem:[#allocation2 + $0x24b] sm:$0xff]
  %v5385 = vld [vmem:[#allocation2 + $0x253] sm:$0xff]
  %v5386 = vld [vmem:[#allocation2 + $0x25b] sm:$0xff]
  %v5387 = vld [vmem:[#allocation2 + $0x263] sm:$0xff]
  %v5388 = vld [vmem:[#allocation2 + $0x26b] sm:$0xff]
  %v5389 = vld [vmem:[#allocation2 + $0x273] sm:$0xff]
  %v5390 = vld [vmem:[#allocation2 + $0x27b] sm:$0xff]
  %v5391 = vld [vmem:[#allocation2 + $0x283] sm:$0xff]
  %v5392 = vld [vmem:[#allocation2 + $0x28b] sm:$0xff]
  %v5393 = vld [vmem:[#allocation2 + $0x293] sm:$0xff]
  %v5394 = vpack.c.bf16 %v5314, %v5313
  %v5395 = vpack.c.bf16 %v5316, %v5315
  %v5396 = vpack.c.bf16 %v5318, %v5317
  %v5397 = vpack.c.bf16 %v5320, %v5319
  %v5398 = vpack.c.bf16 %v5322, %v5321
  %v5399 = vpack.c.bf16 %v5324, %v5323
  %v5400 = vpack.c.bf16 %v5326, %v5325
  %v5401 = vpack.c.bf16 %v5328, %v5327
  %v5402 = vpack.c.bf16 %v5330, %v5329
  %v5403 = vpack.c.bf16 %v5332, %v5331
  %v5404 = vpack.c.bf16 %v5334, %v5333
  %v5405 = vpack.c.bf16 %v5336, %v5335
  %v5406 = vpack.c.bf16 %v5338, %v5337
  %v5407 = vpack.c.bf16 %v5340, %v5339
  %v5408 = vpack.c.bf16 %v5342, %v5341
  %v5409 = vpack.c.bf16 %v5344, %v5343
  %v5410 = vpack.c.bf16 %v5346, %v5345
  %v5411 = vpack.c.bf16 %v5348, %v5347
  %v5412 = vpack.c.bf16 %v5350, %v5349
  %v5413 = vpack.c.bf16 %v5352, %v5351
  %v5414 = vpack.c.bf16 %v5354, %v5353
  %v5415 = vpack.c.bf16 %v5356, %v5355
  %v5416 = vpack.c.bf16 %v5358, %v5357
  %v5417 = vpack.c.bf16 %v5360, %v5359
  %v5418 = vpack.c.bf16 %v5362, %v5361
  %v5419 = vpack.c.bf16 %v5364, %v5363
  %v5420 = vpack.c.bf16 %v5366, %v5365
  %v5421 = vpack.c.bf16 %v5368, %v5367
  %v5422 = vpack.c.bf16 %v5370, %v5369
  %v5423 = vpack.c.bf16 %v5372, %v5371
  %v5424 = vpack.c.bf16 %v5374, %v5373
  %v5425 = vpack.c.bf16 %v5376, %v5375
  %v5426 = vpack.c.bf16 %v5378, %v5377
  %v5427 = vpack.c.bf16 %v5380, %v5379
  %v5428 = vpack.c.bf16 %v5382, %v5381
  %v5429 = vpack.c.bf16 %v5384, %v5383
  %v5430 = vpack.c.bf16 %v5386, %v5385
  %v5431 = vpack.c.bf16 %v5388, %v5387
  %v5432 = vpack.c.bf16 %v5390, %v5389
  %v5433 = vpack.c.bf16 %v5392, %v5391
  %v5434 = vpack.c.bf16 %v5393, %v5393
  %s5435 = scalar_lea.vmem %s7, 16
  %v5436 = vld [vmem:[%s5435] sm:$0xf]
  %v5438 = vsel %vm361, %v5394, 0
  %v5441 = vsel %vm361, %v5395, 0
  %v5444 = vsel %vm361, %v5396, 0
  %v5447 = vsel %vm361, %v5397, 0
  %v5450 = vsel %vm361, %v5398, 0
  %v5453 = vsel %vm361, %v5399, 0
  %v5456 = vsel %vm361, %v5400, 0
  %v5459 = vsel %vm361, %v5401, 0
  %v5462 = vsel %vm361, %v5402, 0
  %v5465 = vsel %vm361, %v5403, 0
  %v5468 = vsel %vm361, %v5404, 0
  %v5471 = vsel %vm361, %v5405, 0
  %v5474 = vsel %vm361, %v5406, 0
  %v5477 = vsel %vm361, %v5407, 0
  %v5480 = vsel %vm361, %v5408, 0
  %v5483 = vsel %vm361, %v5409, 0
  %v5486 = vsel %vm361, %v5410, 0
  %v5489 = vsel %vm361, %v5411, 0
  %v5492 = vsel %vm361, %v5412, 0
  %v5495 = vsel %vm361, %v5413, 0
  %v5498 = vsel %vm361, %v5414, 0
  %v5501 = vsel %vm361, %v5415, 0
  %v5504 = vsel %vm361, %v5416, 0
  %v5507 = vsel %vm361, %v5417, 0
  %v5510 = vsel %vm361, %v5418, 0
  %v5513 = vsel %vm361, %v5419, 0
  %v5516 = vsel %vm361, %v5420, 0
  %v5519 = vsel %vm361, %v5421, 0
  %v5522 = vsel %vm361, %v5422, 0
  %v5525 = vsel %vm361, %v5423, 0
  %v5528 = vsel %vm361, %v5424, 0
  %v5531 = vsel %vm361, %v5425, 0
  %v5534 = vsel %vm361, %v5426, 0
  %v5537 = vsel %vm361, %v5427, 0
  %v5540 = vsel %vm361, %v5428, 0
  %v5543 = vsel %vm361, %v5429, 0
  %v5546 = vsel %vm361, %v5430, 0
  %v5549 = vsel %vm361, %v5431, 0
  %v5552 = vsel %vm361, %v5432, 0
  %v5555 = vsel %vm361, %v5433, 0
  %v5558 = vsel %vm361, %v5434, 0
  %v5561 = vsel %vm491, %v5436, 0
  %5563 = vmatprep.subr.bf16.mxu0 0
  %5564 = vmatpush1.bf16.msra.mxu0 0
  %5565 = vmatprep.subr.bf16.mxu0 0
  %5566 = vmatpush1.bf16.msra.mxu0 0
  %5567 = vmatprep.subr.bf16.mxu0 0
  %5568 = vmatpush1.bf16.msra.mxu0 0
  %5569 = vmatprep.subr.bf16.mxu0 0
  %5570 = vmatpush1.bf16.msra.mxu0 0
  %5571 = vmatprep.subr.bf16.mxu0 0
  %5572 = vmatpush1.bf16.msra.mxu0 0
  %5573 = vmatprep.subr.bf16.mxu0 0
  %5574 = vmatpush1.bf16.msra.mxu0 0
  %5575 = vmatprep.subr.bf16.mxu0 0
  %5576 = vmatpush1.bf16.msra.mxu0 0
  %5577 = vmatprep.subr.bf16.mxu0 0
  %5578 = vmatpush1.bf16.msra.mxu0 %v5561
  %5579 = vmatprep.subr.bf16.mxu0 0
  %5580 = vmatpush2.bf16.msra.mxu0 0
  %5581 = vmatprep.subr.bf16.mxu0 0
  %5582 = vmatpush2.bf16.msra.mxu0 0
  %5583 = vmatprep.subr.bf16.mxu0 0
  %5584 = vmatpush2.bf16.msra.mxu0 0
  %5585 = vmatprep.subr.bf16.mxu0 0
  %5586 = vmatpush2.bf16.msra.mxu0 0
  %5587 = vmatprep.subr.bf16.mxu0 0
  %5588 = vmatpush2.bf16.msra.mxu0 0
  %5589 = vmatprep.subr.bf16.mxu0 0
  %5590 = vmatpush2.bf16.msra.mxu0 0
  %5591 = vmatprep.subr.bf16.mxu0 0
  %5592 = vmatpush2.bf16.msra.mxu0 0
  %5593 = vmatprep.subr.bf16.mxu0 0
  %5594 = vmatpush2.bf16.msra.mxu0 0
  %5595 = vmatprep.mubr.bf16.mxu0 0
  %5596 = vmatmul.mubr.bf16.gmra.mxu0 %v5438
  %v5597 = vpop.f32.mrf.mxu0
  %v5598 = vadd.f32 0.0, %v5597
  %v5599 = vpop.f32.mrf.mxu0
  %v5600 = vpop.f32.mrf.mxu0
  %v5601 = vadd.f32 0.0, %v5600
  %v5602 = vpop.f32.mrf.mxu0
  %5603 = vmatprep.mubr.bf16.mxu0 0
  %5604 = vmatmul.mubr.bf16.gmra.mxu0 %v5441
  %v5605 = vpop.f32.mrf.mxu0
  %v5606 = vadd.f32 0.0, %v5605
  %v5607 = vpop.f32.mrf.mxu0
  %v5608 = vpop.f32.mrf.mxu0
  %v5609 = vadd.f32 0.0, %v5608
  %v5610 = vpop.f32.mrf.mxu0
  %5611 = vmatprep.mubr.bf16.mxu0 0
  %5612 = vmatmul.mubr.bf16.gmra.mxu0 %v5444
  %v5613 = vpop.f32.mrf.mxu0
  %v5614 = vadd.f32 0.0, %v5613
  %v5615 = vpop.f32.mrf.mxu0
  %v5616 = vpop.f32.mrf.mxu0
  %v5617 = vadd.f32 0.0, %v5616
  %v5618 = vpop.f32.mrf.mxu0
  %5619 = vmatprep.mubr.bf16.mxu0 0
  %5620 = vmatmul.mubr.bf16.gmra.mxu0 %v5447
  %v5621 = vpop.f32.mrf.mxu0
  %v5622 = vadd.f32 0.0, %v5621
  %v5623 = vpop.f32.mrf.mxu0
  %v5624 = vpop.f32.mrf.mxu0
  %v5625 = vadd.f32 0.0, %v5624
  %v5626 = vpop.f32.mrf.mxu0
  %5627 = vmatprep.mubr.bf16.mxu0 0
  %5628 = vmatmul.mubr.bf16.gmra.mxu0 %v5450
  %v5629 = vpop.f32.mrf.mxu0
  %v5630 = vadd.f32 0.0, %v5629
  %v5631 = vpop.f32.mrf.mxu0
  %v5632 = vpop.f32.mrf.mxu0
  %v5633 = vadd.f32 0.0, %v5632
  %v5634 = vpop.f32.mrf.mxu0
  %5635 = vmatprep.mubr.bf16.mxu0 0
  %5636 = vmatmul.mubr.bf16.gmra.mxu0 %v5453
  %v5637 = vpop.f32.mrf.mxu0
  %v5638 = vadd.f32 0.0, %v5637
  %v5639 = vpop.f32.mrf.mxu0
  %v5640 = vpop.f32.mrf.mxu0
  %v5641 = vadd.f32 0.0, %v5640
  %v5642 = vpop.f32.mrf.mxu0
  %5643 = vmatprep.mubr.bf16.mxu0 0
  %5644 = vmatmul.mubr.bf16.gmra.mxu0 %v5456
  %v5645 = vpop.f32.mrf.mxu0
  %v5646 = vadd.f32 0.0, %v5645
  %v5647 = vpop.f32.mrf.mxu0
  %v5648 = vpop.f32.mrf.mxu0
  %v5649 = vadd.f32 0.0, %v5648
  %v5650 = vpop.f32.mrf.mxu0
  %5651 = vmatprep.mubr.bf16.mxu0 0
  %5652 = vmatmul.mubr.bf16.gmra.mxu0 %v5459
  %v5653 = vpop.f32.mrf.mxu0
  %v5654 = vadd.f32 0.0, %v5653
  %v5655 = vpop.f32.mrf.mxu0
  %v5656 = vpop.f32.mrf.mxu0
  %v5657 = vadd.f32 0.0, %v5656
  %v5658 = vpop.f32.mrf.mxu0
  %5659 = vmatprep.mubr.bf16.mxu0 0
  %5660 = vmatmul.mubr.bf16.gmra.mxu0 %v5462
  %v5661 = vpop.f32.mrf.mxu0
  %v5662 = vadd.f32 0.0, %v5661
  %v5663 = vpop.f32.mrf.mxu0
  %v5664 = vpop.f32.mrf.mxu0
  %v5665 = vadd.f32 0.0, %v5664
  %v5666 = vpop.f32.mrf.mxu0
  %5667 = vmatprep.mubr.bf16.mxu0 0
  %5668 = vmatmul.mubr.bf16.gmra.mxu0 %v5465
  %v5669 = vpop.f32.mrf.mxu0
  %v5670 = vadd.f32 0.0, %v5669
  %v5671 = vpop.f32.mrf.mxu0
  %v5672 = vpop.f32.mrf.mxu0
  %v5673 = vadd.f32 0.0, %v5672
  %v5674 = vpop.f32.mrf.mxu0
  %5675 = vmatprep.mubr.bf16.mxu0 0
  %5676 = vmatmul.mubr.bf16.gmra.mxu0 %v5468
  %v5677 = vpop.f32.mrf.mxu0
  %v5678 = vadd.f32 0.0, %v5677
  %v5679 = vpop.f32.mrf.mxu0
  %v5680 = vpop.f32.mrf.mxu0
  %v5681 = vadd.f32 0.0, %v5680
  %v5682 = vpop.f32.mrf.mxu0
  %5683 = vmatprep.mubr.bf16.mxu0 0
  %5684 = vmatmul.mubr.bf16.gmra.mxu0 %v5471
  %v5685 = vpop.f32.mrf.mxu0
  %v5686 = vadd.f32 0.0, %v5685
  %v5687 = vpop.f32.mrf.mxu0
  %v5688 = vpop.f32.mrf.mxu0
  %v5689 = vadd.f32 0.0, %v5688
  %v5690 = vpop.f32.mrf.mxu0
  %5691 = vmatprep.mubr.bf16.mxu0 0
  %5692 = vmatmul.mubr.bf16.gmra.mxu0 %v5474
  %v5693 = vpop.f32.mrf.mxu0
  %v5694 = vadd.f32 0.0, %v5693
  %v5695 = vpop.f32.mrf.mxu0
  %v5696 = vpop.f32.mrf.mxu0
  %v5697 = vadd.f32 0.0, %v5696
  %v5698 = vpop.f32.mrf.mxu0
  %5699 = vmatprep.mubr.bf16.mxu0 0
  %5700 = vmatmul.mubr.bf16.gmra.mxu0 %v5477
  %v5701 = vpop.f32.mrf.mxu0
  %v5702 = vadd.f32 0.0, %v5701
  %v5703 = vpop.f32.mrf.mxu0
  %v5704 = vpop.f32.mrf.mxu0
  %v5705 = vadd.f32 0.0, %v5704
  %v5706 = vpop.f32.mrf.mxu0
  %5707 = vmatprep.mubr.bf16.mxu0 0
  %5708 = vmatmul.mubr.bf16.gmra.mxu0 %v5480
  %v5709 = vpop.f32.mrf.mxu0
  %v5710 = vadd.f32 0.0, %v5709
  %v5711 = vpop.f32.mrf.mxu0
  %v5712 = vpop.f32.mrf.mxu0
  %v5713 = vadd.f32 0.0, %v5712
  %v5714 = vpop.f32.mrf.mxu0
  %5715 = vmatprep.mubr.bf16.mxu0 0
  %5716 = vmatmul.mubr.bf16.gmra.mxu0 %v5483
  %v5717 = vpop.f32.mrf.mxu0
  %v5718 = vadd.f32 0.0, %v5717
  %v5719 = vpop.f32.mrf.mxu0
  %v5720 = vpop.f32.mrf.mxu0
  %v5721 = vadd.f32 0.0, %v5720
  %v5722 = vpop.f32.mrf.mxu0
  %5723 = vmatprep.mubr.bf16.mxu0 0
  %5724 = vmatmul.mubr.bf16.gmra.mxu0 %v5486
  %v5725 = vpop.f32.mrf.mxu0
  %v5726 = vadd.f32 0.0, %v5725
  %v5727 = vpop.f32.mrf.mxu0
  %v5728 = vpop.f32.mrf.mxu0
  %v5729 = vadd.f32 0.0, %v5728
  %v5730 = vpop.f32.mrf.mxu0
  %5731 = vmatprep.mubr.bf16.mxu0 0
  %5732 = vmatmul.mubr.bf16.gmra.mxu0 %v5489
  %v5733 = vpop.f32.mrf.mxu0
  %v5734 = vadd.f32 0.0, %v5733
  %v5735 = vpop.f32.mrf.mxu0
  %v5736 = vpop.f32.mrf.mxu0
  %v5737 = vadd.f32 0.0, %v5736
  %v5738 = vpop.f32.mrf.mxu0
  %5739 = vmatprep.mubr.bf16.mxu0 0
  %5740 = vmatmul.mubr.bf16.gmra.mxu0 %v5492
  %v5741 = vpop.f32.mrf.mxu0
  %v5742 = vadd.f32 0.0, %v5741
  %v5743 = vpop.f32.mrf.mxu0
  %v5744 = vpop.f32.mrf.mxu0
  %v5745 = vadd.f32 0.0, %v5744
  %v5746 = vpop.f32.mrf.mxu0
  %5747 = vmatprep.mubr.bf16.mxu0 0
  %5748 = vmatmul.mubr.bf16.gmra.mxu0 %v5495
  %v5749 = vpop.f32.mrf.mxu0
  %v5750 = vadd.f32 0.0, %v5749
  %v5751 = vpop.f32.mrf.mxu0
  %v5752 = vpop.f32.mrf.mxu0
  %v5753 = vadd.f32 0.0, %v5752
  %v5754 = vpop.f32.mrf.mxu0
  %5755 = vmatprep.mubr.bf16.mxu0 0
  %5756 = vmatmul.mubr.bf16.gmra.mxu0 %v5498
  %v5757 = vpop.f32.mrf.mxu0
  %v5758 = vadd.f32 0.0, %v5757
  %v5759 = vpop.f32.mrf.mxu0
  %v5760 = vpop.f32.mrf.mxu0
  %v5761 = vadd.f32 0.0, %v5760
  %v5762 = vpop.f32.mrf.mxu0
  %5763 = vmatprep.mubr.bf16.mxu0 0
  %5764 = vmatmul.mubr.bf16.gmra.mxu0 %v5501
  %v5765 = vpop.f32.mrf.mxu0
  %v5766 = vadd.f32 0.0, %v5765
  %v5767 = vpop.f32.mrf.mxu0
  %v5768 = vpop.f32.mrf.mxu0
  %v5769 = vadd.f32 0.0, %v5768
  %v5770 = vpop.f32.mrf.mxu0
  %5771 = vmatprep.mubr.bf16.mxu0 0
  %5772 = vmatmul.mubr.bf16.gmra.mxu0 %v5504
  %v5773 = vpop.f32.mrf.mxu0
  %v5774 = vadd.f32 0.0, %v5773
  %v5775 = vpop.f32.mrf.mxu0
  %v5776 = vpop.f32.mrf.mxu0
  %v5777 = vadd.f32 0.0, %v5776
  %v5778 = vpop.f32.mrf.mxu0
  %5779 = vmatprep.mubr.bf16.mxu0 0
  %5780 = vmatmul.mubr.bf16.gmra.mxu0 %v5507
  %v5781 = vpop.f32.mrf.mxu0
  %v5782 = vadd.f32 0.0, %v5781
  %v5783 = vpop.f32.mrf.mxu0
  %v5784 = vpop.f32.mrf.mxu0
  %v5785 = vadd.f32 0.0, %v5784
  %v5786 = vpop.f32.mrf.mxu0
  %5787 = vmatprep.mubr.bf16.mxu0 0
  %5788 = vmatmul.mubr.bf16.gmra.mxu0 %v5510
  %v5789 = vpop.f32.mrf.mxu0
  %v5790 = vadd.f32 0.0, %v5789
  %v5791 = vpop.f32.mrf.mxu0
  %v5792 = vpop.f32.mrf.mxu0
  %v5793 = vadd.f32 0.0, %v5792
  %v5794 = vpop.f32.mrf.mxu0
  %5795 = vmatprep.mubr.bf16.mxu0 0
  %5796 = vmatmul.mubr.bf16.gmra.mxu0 %v5513
  %v5797 = vpop.f32.mrf.mxu0
  %v5798 = vadd.f32 0.0, %v5797
  %v5799 = vpop.f32.mrf.mxu0
  %v5800 = vpop.f32.mrf.mxu0
  %v5801 = vadd.f32 0.0, %v5800
  %v5802 = vpop.f32.mrf.mxu0
  %5803 = vmatprep.mubr.bf16.mxu0 0
  %5804 = vmatmul.mubr.bf16.gmra.mxu0 %v5516
  %v5805 = vpop.f32.mrf.mxu0
  %v5806 = vadd.f32 0.0, %v5805
  %v5807 = vpop.f32.mrf.mxu0
  %v5808 = vpop.f32.mrf.mxu0
  %v5809 = vadd.f32 0.0, %v5808
  %v5810 = vpop.f32.mrf.mxu0
  %5811 = vmatprep.mubr.bf16.mxu0 0
  %5812 = vmatmul.mubr.bf16.gmra.mxu0 %v5519
  %v5813 = vpop.f32.mrf.mxu0
  %v5814 = vadd.f32 0.0, %v5813
  %v5815 = vpop.f32.mrf.mxu0
  %v5816 = vpop.f32.mrf.mxu0
  %v5817 = vadd.f32 0.0, %v5816
  %v5818 = vpop.f32.mrf.mxu0
  %5819 = vmatprep.mubr.bf16.mxu0 0
  %5820 = vmatmul.mubr.bf16.gmra.mxu0 %v5522
  %v5821 = vpop.f32.mrf.mxu0
  %v5822 = vadd.f32 0.0, %v5821
  %v5823 = vpop.f32.mrf.mxu0
  %v5824 = vpop.f32.mrf.mxu0
  %v5825 = vadd.f32 0.0, %v5824
  %v5826 = vpop.f32.mrf.mxu0
  %5827 = vmatprep.mubr.bf16.mxu0 0
  %5828 = vmatmul.mubr.bf16.gmra.mxu0 %v5525
  %v5829 = vpop.f32.mrf.mxu0
  %v5830 = vadd.f32 0.0, %v5829
  %v5831 = vpop.f32.mrf.mxu0
  %v5832 = vpop.f32.mrf.mxu0
  %v5833 = vadd.f32 0.0, %v5832
  %v5834 = vpop.f32.mrf.mxu0
  %5835 = vmatprep.mubr.bf16.mxu0 0
  %5836 = vmatmul.mubr.bf16.gmra.mxu0 %v5528
  %v5837 = vpop.f32.mrf.mxu0
  %v5838 = vadd.f32 0.0, %v5837
  %v5839 = vpop.f32.mrf.mxu0
  %v5840 = vpop.f32.mrf.mxu0
  %v5841 = vadd.f32 0.0, %v5840
  %v5842 = vpop.f32.mrf.mxu0
  %5843 = vmatprep.mubr.bf16.mxu0 0
  %5844 = vmatmul.mubr.bf16.gmra.mxu0 %v5531
  %v5845 = vpop.f32.mrf.mxu0
  %v5846 = vadd.f32 0.0, %v5845
  %v5847 = vpop.f32.mrf.mxu0
  %v5848 = vpop.f32.mrf.mxu0
  %v5849 = vadd.f32 0.0, %v5848
  %v5850 = vpop.f32.mrf.mxu0
  %5851 = vmatprep.mubr.bf16.mxu0 0
  %5852 = vmatmul.mubr.bf16.gmra.mxu0 %v5534
  %v5853 = vpop.f32.mrf.mxu0
  %v5854 = vadd.f32 0.0, %v5853
  %v5855 = vpop.f32.mrf.mxu0
  %v5856 = vpop.f32.mrf.mxu0
  %v5857 = vadd.f32 0.0, %v5856
  %v5858 = vpop.f32.mrf.mxu0
  %5859 = vmatprep.mubr.bf16.mxu0 0
  %5860 = vmatmul.mubr.bf16.gmra.mxu0 %v5537
  %v5861 = vpop.f32.mrf.mxu0
  %v5862 = vadd.f32 0.0, %v5861
  %v5863 = vpop.f32.mrf.mxu0
  %v5864 = vpop.f32.mrf.mxu0
  %v5865 = vadd.f32 0.0, %v5864
  %v5866 = vpop.f32.mrf.mxu0
  %5867 = vmatprep.mubr.bf16.mxu0 0
  %5868 = vmatmul.mubr.bf16.gmra.mxu0 %v5540
  %v5869 = vpop.f32.mrf.mxu0
  %v5870 = vadd.f32 0.0, %v5869
  %v5871 = vpop.f32.mrf.mxu0
  %v5872 = vpop.f32.mrf.mxu0
  %v5873 = vadd.f32 0.0, %v5872
  %v5874 = vpop.f32.mrf.mxu0
  %5875 = vmatprep.mubr.bf16.mxu0 0
  %5876 = vmatmul.mubr.bf16.gmra.mxu0 %v5543
  %v5877 = vpop.f32.mrf.mxu0
  %v5878 = vadd.f32 0.0, %v5877
  %v5879 = vpop.f32.mrf.mxu0
  %v5880 = vpop.f32.mrf.mxu0
  %v5881 = vadd.f32 0.0, %v5880
  %v5882 = vpop.f32.mrf.mxu0
  %5883 = vmatprep.mubr.bf16.mxu0 0
  %5884 = vmatmul.mubr.bf16.gmra.mxu0 %v5546
  %v5885 = vpop.f32.mrf.mxu0
  %v5886 = vadd.f32 0.0, %v5885
  %v5887 = vpop.f32.mrf.mxu0
  %v5888 = vpop.f32.mrf.mxu0
  %v5889 = vadd.f32 0.0, %v5888
  %v5890 = vpop.f32.mrf.mxu0
  %5891 = vmatprep.mubr.bf16.mxu0 0
  %5892 = vmatmul.mubr.bf16.gmra.mxu0 %v5549
  %v5893 = vpop.f32.mrf.mxu0
  %v5894 = vadd.f32 0.0, %v5893
  %v5895 = vpop.f32.mrf.mxu0
  %v5896 = vpop.f32.mrf.mxu0
  %v5897 = vadd.f32 0.0, %v5896
  %v5898 = vpop.f32.mrf.mxu0
  %5899 = vmatprep.mubr.bf16.mxu0 0
  %5900 = vmatmul.mubr.bf16.gmra.mxu0 %v5552
  %v5901 = vpop.f32.mrf.mxu0
  %v5902 = vadd.f32 0.0, %v5901
  %v5903 = vpop.f32.mrf.mxu0
  %v5904 = vpop.f32.mrf.mxu0
  %v5905 = vadd.f32 0.0, %v5904
  %v5906 = vpop.f32.mrf.mxu0
  %5907 = vmatprep.mubr.bf16.mxu0 0
  %5908 = vmatmul.mubr.bf16.gmra.mxu0 %v5555
  %v5909 = vpop.f32.mrf.mxu0
  %v5910 = vadd.f32 0.0, %v5909
  %v5911 = vpop.f32.mrf.mxu0
  %v5912 = vpop.f32.mrf.mxu0
  %v5913 = vadd.f32 0.0, %v5912
  %v5914 = vpop.f32.mrf.mxu0
  %5915 = vmatprep.mubr.bf16.mxu0 0
  %5916 = vmatmul.mubr.bf16.gmra.mxu0 %v5558
  %v5917 = vpop.f32.mrf.mxu0
  %v5918 = vadd.f32 0.0, %v5917
  %v5919 = vpop.f32.mrf.mxu0
  %v5920 = vpop.f32.mrf.mxu0
  %v5921 = vpop.f32.mrf.mxu0
  %5922 = vdwg.mxu0
  %v5923 = vadd.f32 %v5232, %v5598
  %v5924 = vadd.f32 %v5233, %v5601
  %v5925 = vadd.f32 %v5234, %v5606
  %v5926 = vadd.f32 %v5235, %v5609
  %v5927 = vadd.f32 %v5236, %v5614
  %v5928 = vadd.f32 %v5237, %v5617
  %v5929 = vadd.f32 %v5238, %v5622
  %v5930 = vadd.f32 %v5239, %v5625
  %v5931 = vadd.f32 %v5240, %v5630
  %v5932 = vadd.f32 %v5241, %v5633
  %v5933 = vadd.f32 %v5242, %v5638
  %v5934 = vadd.f32 %v5243, %v5641
  %v5935 = vadd.f32 %v5244, %v5646
  %v5936 = vadd.f32 %v5245, %v5649
  %v5937 = vadd.f32 %v5246, %v5654
  %v5938 = vadd.f32 %v5247, %v5657
  %v5939 = vadd.f32 %v5248, %v5662
  %v5940 = vadd.f32 %v5249, %v5665
  %v5941 = vadd.f32 %v5250, %v5670
  %v5942 = vadd.f32 %v5251, %v5673
  %v5943 = vadd.f32 %v5252, %v5678
  %v5944 = vadd.f32 %v5253, %v5681
  %v5945 = vadd.f32 %v5254, %v5686
  %v5946 = vadd.f32 %v5255, %v5689
  %v5947 = vadd.f32 %v5256, %v5694
  %v5948 = vadd.f32 %v5257, %v5697
  %v5949 = vadd.f32 %v5258, %v5702
  %v5950 = vadd.f32 %v5259, %v5705
  %v5951 = vadd.f32 %v5260, %v5710
  %v5952 = vadd.f32 %v5261, %v5713
  %v5953 = vadd.f32 %v5262, %v5718
  %v5954 = vadd.f32 %v5263, %v5721
  %v5955 = vadd.f32 %v5264, %v5726
  %v5956 = vadd.f32 %v5265, %v5729
  %v5957 = vadd.f32 %v5266, %v5734
  %v5958 = vadd.f32 %v5267, %v5737
  %v5959 = vadd.f32 %v5268, %v5742
  %v5960 = vadd.f32 %v5269, %v5745
  %v5961 = vadd.f32 %v5270, %v5750
  %v5962 = vadd.f32 %v5271, %v5753
  %v5963 = vadd.f32 %v5272, %v5758
  %v5964 = vadd.f32 %v5273, %v5761
  %v5965 = vadd.f32 %v5274, %v5766
  %v5966 = vadd.f32 %v5275, %v5769
  %v5967 = vadd.f32 %v5276, %v5774
  %v5968 = vadd.f32 %v5277, %v5777
  %v5969 = vadd.f32 %v5278, %v5782
  %v5970 = vadd.f32 %v5279, %v5785
  %v5971 = vadd.f32 %v5280, %v5790
  %v5972 = vadd.f32 %v5281, %v5793
  %v5973 = vadd.f32 %v5282, %v5798
  %v5974 = vadd.f32 %v5283, %v5801
  %v5975 = vadd.f32 %v5284, %v5806
  %v5976 = vadd.f32 %v5285, %v5809
  %v5977 = vadd.f32 %v5286, %v5814
  %v5978 = vadd.f32 %v5287, %v5817
  %v5979 = vadd.f32 %v5288, %v5822
  %v5980 = vadd.f32 %v5289, %v5825
  %v5981 = vadd.f32 %v5290, %v5830
  %v5982 = vadd.f32 %v5291, %v5833
  %v5983 = vadd.f32 %v5292, %v5838
  %v5984 = vadd.f32 %v5293, %v5841
  %v5985 = vadd.f32 %v5294, %v5846
  %v5986 = vadd.f32 %v5295, %v5849
  %v5987 = vadd.f32 %v5296, %v5854
  %v5988 = vadd.f32 %v5297, %v5857
  %v5989 = vadd.f32 %v5298, %v5862
  %v5990 = vadd.f32 %v5299, %v5865
  %v5991 = vadd.f32 %v5300, %v5870
  %v5992 = vadd.f32 %v5301, %v5873
  %v5993 = vadd.f32 %v5302, %v5878
  %v5994 = vadd.f32 %v5303, %v5881
  %v5995 = vadd.f32 %v5304, %v5886
  %v5996 = vadd.f32 %v5305, %v5889
  %v5997 = vadd.f32 %v5306, %v5894
  %v5998 = vadd.f32 %v5307, %v5897
  %v5999 = vadd.f32 %v5308, %v5902
  %v6000 = vadd.f32 %v5309, %v5905
  %v6001 = vadd.f32 %v5310, %v5910
  %v6002 = vadd.f32 %v5311, %v5913
  %v6003 = vadd.f32 %v5312, %v5918
  %v6004 = vld [vmem:[#allocation2 + $0x14] sm:$0xff]
  %v6005 = vld [vmem:[#allocation2 + $0x1c] sm:$0xff]
  %v6006 = vld [vmem:[#allocation2 + $0x24] sm:$0xff]
  %v6007 = vld [vmem:[#allocation2 + $0x2c] sm:$0xff]
  %v6008 = vld [vmem:[#allocation2 + $0x34] sm:$0xff]
  %v6009 = vld [vmem:[#allocation2 + $0x3c] sm:$0xff]
  %v6010 = vld [vmem:[#allocation2 + $0x44] sm:$0xff]
  %v6011 = vld [vmem:[#allocation2 + $0x4c] sm:$0xff]
  %v6012 = vld [vmem:[#allocation2 + $0x54] sm:$0xff]
  %v6013 = vld [vmem:[#allocation2 + $0x5c] sm:$0xff]
  %v6014 = vld [vmem:[#allocation2 + $0x64] sm:$0xff]
  %v6015 = vld [vmem:[#allocation2 + $0x6c] sm:$0xff]
  %v6016 = vld [vmem:[#allocation2 + $0x74] sm:$0xff]
  %v6017 = vld [vmem:[#allocation2 + $0x7c] sm:$0xff]
  %v6018 = vld [vmem:[#allocation2 + $0x84] sm:$0xff]
  %v6019 = vld [vmem:[#allocation2 + $0x8c] sm:$0xff]
  %v6020 = vld [vmem:[#allocation2 + $0x94] sm:$0xff]
  %v6021 = vld [vmem:[#allocation2 + $0x9c] sm:$0xff]
  %v6022 = vld [vmem:[#allocation2 + $0xa4] sm:$0xff]
  %v6023 = vld [vmem:[#allocation2 + $0xac] sm:$0xff]
  %v6024 = vld [vmem:[#allocation2 + $0xb4] sm:$0xff]
  %v6025 = vld [vmem:[#allocation2 + $0xbc] sm:$0xff]
  %v6026 = vld [vmem:[#allocation2 + $0xc4] sm:$0xff]
  %v6027 = vld [vmem:[#allocation2 + $0xcc] sm:$0xff]
  %v6028 = vld [vmem:[#allocation2 + $0xd4] sm:$0xff]
  %v6029 = vld [vmem:[#allocation2 + $0xdc] sm:$0xff]
  %v6030 = vld [vmem:[#allocation2 + $0xe4] sm:$0xff]
  %v6031 = vld [vmem:[#allocation2 + $0xec] sm:$0xff]
  %v6032 = vld [vmem:[#allocation2 + $0xf4] sm:$0xff]
  %v6033 = vld [vmem:[#allocation2 + $0xfc] sm:$0xff]
  %v6034 = vld [vmem:[#allocation2 + $0x104] sm:$0xff]
  %v6035 = vld [vmem:[#allocation2 + $0x10c] sm:$0xff]
  %v6036 = vld [vmem:[#allocation2 + $0x114] sm:$0xff]
  %v6037 = vld [vmem:[#allocation2 + $0x11c] sm:$0xff]
  %v6038 = vld [vmem:[#allocation2 + $0x124] sm:$0xff]
  %v6039 = vld [vmem:[#allocation2 + $0x12c] sm:$0xff]
  %v6040 = vld [vmem:[#allocation2 + $0x134] sm:$0xff]
  %v6041 = vld [vmem:[#allocation2 + $0x13c] sm:$0xff]
  %v6042 = vld [vmem:[#allocation2 + $0x144] sm:$0xff]
  %v6043 = vld [vmem:[#allocation2 + $0x14c] sm:$0xff]
  %v6044 = vld [vmem:[#allocation2 + $0x154] sm:$0xff]
  %v6045 = vld [vmem:[#allocation2 + $0x15c] sm:$0xff]
  %v6046 = vld [vmem:[#allocation2 + $0x164] sm:$0xff]
  %v6047 = vld [vmem:[#allocation2 + $0x16c] sm:$0xff]
  %v6048 = vld [vmem:[#allocation2 + $0x174] sm:$0xff]
  %v6049 = vld [vmem:[#allocation2 + $0x17c] sm:$0xff]
  %v6050 = vld [vmem:[#allocation2 + $0x184] sm:$0xff]
  %v6051 = vld [vmem:[#allocation2 + $0x18c] sm:$0xff]
  %v6052 = vld [vmem:[#allocation2 + $0x194] sm:$0xff]
  %v6053 = vld [vmem:[#allocation2 + $0x19c] sm:$0xff]
  %v6054 = vld [vmem:[#allocation2 + $0x1a4] sm:$0xff]
  %v6055 = vld [vmem:[#allocation2 + $0x1ac] sm:$0xff]
  %v6056 = vld [vmem:[#allocation2 + $0x1b4] sm:$0xff]
  %v6057 = vld [vmem:[#allocation2 + $0x1bc] sm:$0xff]
  %v6058 = vld [vmem:[#allocation2 + $0x1c4] sm:$0xff]
  %v6059 = vld [vmem:[#allocation2 + $0x1cc] sm:$0xff]
  %v6060 = vld [vmem:[#allocation2 + $0x1d4] sm:$0xff]
  %v6061 = vld [vmem:[#allocation2 + $0x1dc] sm:$0xff]
  %v6062 = vld [vmem:[#allocation2 + $0x1e4] sm:$0xff]
  %v6063 = vld [vmem:[#allocation2 + $0x1ec] sm:$0xff]
  %v6064 = vld [vmem:[#allocation2 + $0x1f4] sm:$0xff]
  %v6065 = vld [vmem:[#allocation2 + $0x1fc] sm:$0xff]
  %v6066 = vld [vmem:[#allocation2 + $0x204] sm:$0xff]
  %v6067 = vld [vmem:[#allocation2 + $0x20c] sm:$0xff]
  %v6068 = vld [vmem:[#allocation2 + $0x214] sm:$0xff]
  %v6069 = vld [vmem:[#allocation2 + $0x21c] sm:$0xff]
  %v6070 = vld [vmem:[#allocation2 + $0x224] sm:$0xff]
  %v6071 = vld [vmem:[#allocation2 + $0x22c] sm:$0xff]
  %v6072 = vld [vmem:[#allocation2 + $0x234] sm:$0xff]
  %v6073 = vld [vmem:[#allocation2 + $0x23c] sm:$0xff]
  %v6074 = vld [vmem:[#allocation2 + $0x244] sm:$0xff]
  %v6075 = vld [vmem:[#allocation2 + $0x24c] sm:$0xff]
  %v6076 = vld [vmem:[#allocation2 + $0x254] sm:$0xff]
  %v6077 = vld [vmem:[#allocation2 + $0x25c] sm:$0xff]
  %v6078 = vld [vmem:[#allocation2 + $0x264] sm:$0xff]
  %v6079 = vld [vmem:[#allocation2 + $0x26c] sm:$0xff]
  %v6080 = vld [vmem:[#allocation2 + $0x274] sm:$0xff]
  %v6081 = vld [vmem:[#allocation2 + $0x27c] sm:$0xff]
  %v6082 = vld [vmem:[#allocation2 + $0x284] sm:$0xff]
  %v6083 = vld [vmem:[#allocation2 + $0x28c] sm:$0xff]
  %v6084 = vld [vmem:[#allocation2 + $0x294] sm:$0xff]
  %v6085 = vpack.c.bf16 %v6005, %v6004
  %v6086 = vpack.c.bf16 %v6007, %v6006
  %v6087 = vpack.c.bf16 %v6009, %v6008
  %v6088 = vpack.c.bf16 %v6011, %v6010
  %v6089 = vpack.c.bf16 %v6013, %v6012
  %v6090 = vpack.c.bf16 %v6015, %v6014
  %v6091 = vpack.c.bf16 %v6017, %v6016
  %v6092 = vpack.c.bf16 %v6019, %v6018
  %v6093 = vpack.c.bf16 %v6021, %v6020
  %v6094 = vpack.c.bf16 %v6023, %v6022
  %v6095 = vpack.c.bf16 %v6025, %v6024
  %v6096 = vpack.c.bf16 %v6027, %v6026
  %v6097 = vpack.c.bf16 %v6029, %v6028
  %v6098 = vpack.c.bf16 %v6031, %v6030
  %v6099 = vpack.c.bf16 %v6033, %v6032
  %v6100 = vpack.c.bf16 %v6035, %v6034
  %v6101 = vpack.c.bf16 %v6037, %v6036
  %v6102 = vpack.c.bf16 %v6039, %v6038
  %v6103 = vpack.c.bf16 %v6041, %v6040
  %v6104 = vpack.c.bf16 %v6043, %v6042
  %v6105 = vpack.c.bf16 %v6045, %v6044
  %v6106 = vpack.c.bf16 %v6047, %v6046
  %v6107 = vpack.c.bf16 %v6049, %v6048
  %v6108 = vpack.c.bf16 %v6051, %v6050
  %v6109 = vpack.c.bf16 %v6053, %v6052
  %v6110 = vpack.c.bf16 %v6055, %v6054
  %v6111 = vpack.c.bf16 %v6057, %v6056
  %v6112 = vpack.c.bf16 %v6059, %v6058
  %v6113 = vpack.c.bf16 %v6061, %v6060
  %v6114 = vpack.c.bf16 %v6063, %v6062
  %v6115 = vpack.c.bf16 %v6065, %v6064
  %v6116 = vpack.c.bf16 %v6067, %v6066
  %v6117 = vpack.c.bf16 %v6069, %v6068
  %v6118 = vpack.c.bf16 %v6071, %v6070
  %v6119 = vpack.c.bf16 %v6073, %v6072
  %v6120 = vpack.c.bf16 %v6075, %v6074
  %v6121 = vpack.c.bf16 %v6077, %v6076
  %v6122 = vpack.c.bf16 %v6079, %v6078
  %v6123 = vpack.c.bf16 %v6081, %v6080
  %v6124 = vpack.c.bf16 %v6083, %v6082
  %v6125 = vpack.c.bf16 %v6084, %v6084
  %s6126 = scalar_lea.vmem %s7, 20
  %v6127 = vld [vmem:[%s6126] sm:$0xf]
  %v6129 = vsel %vm361, %v6085, 0
  %v6132 = vsel %vm361, %v6086, 0
  %v6135 = vsel %vm361, %v6087, 0
  %v6138 = vsel %vm361, %v6088, 0
  %v6141 = vsel %vm361, %v6089, 0
  %v6144 = vsel %vm361, %v6090, 0
  %v6147 = vsel %vm361, %v6091, 0
  %v6150 = vsel %vm361, %v6092, 0
  %v6153 = vsel %vm361, %v6093, 0
  %v6156 = vsel %vm361, %v6094, 0
  %v6159 = vsel %vm361, %v6095, 0
  %v6162 = vsel %vm361, %v6096, 0
  %v6165 = vsel %vm361, %v6097, 0
  %v6168 = vsel %vm361, %v6098, 0
  %v6171 = vsel %vm361, %v6099, 0
  %v6174 = vsel %vm361, %v6100, 0
  %v6177 = vsel %vm361, %v6101, 0
  %v6180 = vsel %vm361, %v6102, 0
  %v6183 = vsel %vm361, %v6103, 0
  %v6186 = vsel %vm361, %v6104, 0
  %v6189 = vsel %vm361, %v6105, 0
  %v6192 = vsel %vm361, %v6106, 0
  %v6195 = vsel %vm361, %v6107, 0
  %v6198 = vsel %vm361, %v6108, 0
  %v6201 = vsel %vm361, %v6109, 0
  %v6204 = vsel %vm361, %v6110, 0
  %v6207 = vsel %vm361, %v6111, 0
  %v6210 = vsel %vm361, %v6112, 0
  %v6213 = vsel %vm361, %v6113, 0
  %v6216 = vsel %vm361, %v6114, 0
  %v6219 = vsel %vm361, %v6115, 0
  %v6222 = vsel %vm361, %v6116, 0
  %v6225 = vsel %vm361, %v6117, 0
  %v6228 = vsel %vm361, %v6118, 0
  %v6231 = vsel %vm361, %v6119, 0
  %v6234 = vsel %vm361, %v6120, 0
  %v6237 = vsel %vm361, %v6121, 0
  %v6240 = vsel %vm361, %v6122, 0
  %v6243 = vsel %vm361, %v6123, 0
  %v6246 = vsel %vm361, %v6124, 0
  %v6249 = vsel %vm361, %v6125, 0
  %v6252 = vsel %vm491, %v6127, 0
  %6254 = vmatprep.subr.bf16.mxu0 0
  %6255 = vmatpush1.bf16.msra.mxu0 0
  %6256 = vmatprep.subr.bf16.mxu0 0
  %6257 = vmatpush1.bf16.msra.mxu0 0
  %6258 = vmatprep.subr.bf16.mxu0 0
  %6259 = vmatpush1.bf16.msra.mxu0 0
  %6260 = vmatprep.subr.bf16.mxu0 0
  %6261 = vmatpush1.bf16.msra.mxu0 0
  %6262 = vmatprep.subr.bf16.mxu0 0
  %6263 = vmatpush1.bf16.msra.mxu0 0
  %6264 = vmatprep.subr.bf16.mxu0 0
  %6265 = vmatpush1.bf16.msra.mxu0 0
  %6266 = vmatprep.subr.bf16.mxu0 0
  %6267 = vmatpush1.bf16.msra.mxu0 0
  %6268 = vmatprep.subr.bf16.mxu0 0
  %6269 = vmatpush1.bf16.msra.mxu0 %v6252
  %6270 = vmatprep.subr.bf16.mxu0 0
  %6271 = vmatpush2.bf16.msra.mxu0 0
  %6272 = vmatprep.subr.bf16.mxu0 0
  %6273 = vmatpush2.bf16.msra.mxu0 0
  %6274 = vmatprep.subr.bf16.mxu0 0
  %6275 = vmatpush2.bf16.msra.mxu0 0
  %6276 = vmatprep.subr.bf16.mxu0 0
  %6277 = vmatpush2.bf16.msra.mxu0 0
  %6278 = vmatprep.subr.bf16.mxu0 0
  %6279 = vmatpush2.bf16.msra.mxu0 0
  %6280 = vmatprep.subr.bf16.mxu0 0
  %6281 = vmatpush2.bf16.msra.mxu0 0
  %6282 = vmatprep.subr.bf16.mxu0 0
  %6283 = vmatpush2.bf16.msra.mxu0 0
  %6284 = vmatprep.subr.bf16.mxu0 0
  %6285 = vmatpush2.bf16.msra.mxu0 0
  %6286 = vmatprep.mubr.bf16.mxu0 0
  %6287 = vmatmul.mubr.bf16.gmra.mxu0 %v6129
  %v6288 = vpop.f32.mrf.mxu0
  %v6289 = vadd.f32 0.0, %v6288
  %v6290 = vpop.f32.mrf.mxu0
  %v6291 = vpop.f32.mrf.mxu0
  %v6292 = vadd.f32 0.0, %v6291
  %v6293 = vpop.f32.mrf.mxu0
  %6294 = vmatprep.mubr.bf16.mxu0 0
  %6295 = vmatmul.mubr.bf16.gmra.mxu0 %v6132
  %v6296 = vpop.f32.mrf.mxu0
  %v6297 = vadd.f32 0.0, %v6296
  %v6298 = vpop.f32.mrf.mxu0
  %v6299 = vpop.f32.mrf.mxu0
  %v6300 = vadd.f32 0.0, %v6299
  %v6301 = vpop.f32.mrf.mxu0
  %6302 = vmatprep.mubr.bf16.mxu0 0
  %6303 = vmatmul.mubr.bf16.gmra.mxu0 %v6135
  %v6304 = vpop.f32.mrf.mxu0
  %v6305 = vadd.f32 0.0, %v6304
  %v6306 = vpop.f32.mrf.mxu0
  %v6307 = vpop.f32.mrf.mxu0
  %v6308 = vadd.f32 0.0, %v6307
  %v6309 = vpop.f32.mrf.mxu0
  %6310 = vmatprep.mubr.bf16.mxu0 0
  %6311 = vmatmul.mubr.bf16.gmra.mxu0 %v6138
  %v6312 = vpop.f32.mrf.mxu0
  %v6313 = vadd.f32 0.0, %v6312
  %v6314 = vpop.f32.mrf.mxu0
  %v6315 = vpop.f32.mrf.mxu0
  %v6316 = vadd.f32 0.0, %v6315
  %v6317 = vpop.f32.mrf.mxu0
  %6318 = vmatprep.mubr.bf16.mxu0 0
  %6319 = vmatmul.mubr.bf16.gmra.mxu0 %v6141
  %v6320 = vpop.f32.mrf.mxu0
  %v6321 = vadd.f32 0.0, %v6320
  %v6322 = vpop.f32.mrf.mxu0
  %v6323 = vpop.f32.mrf.mxu0
  %v6324 = vadd.f32 0.0, %v6323
  %v6325 = vpop.f32.mrf.mxu0
  %6326 = vmatprep.mubr.bf16.mxu0 0
  %6327 = vmatmul.mubr.bf16.gmra.mxu0 %v6144
  %v6328 = vpop.f32.mrf.mxu0
  %v6329 = vadd.f32 0.0, %v6328
  %v6330 = vpop.f32.mrf.mxu0
  %v6331 = vpop.f32.mrf.mxu0
  %v6332 = vadd.f32 0.0, %v6331
  %v6333 = vpop.f32.mrf.mxu0
  %6334 = vmatprep.mubr.bf16.mxu0 0
  %6335 = vmatmul.mubr.bf16.gmra.mxu0 %v6147
  %v6336 = vpop.f32.mrf.mxu0
  %v6337 = vadd.f32 0.0, %v6336
  %v6338 = vpop.f32.mrf.mxu0
  %v6339 = vpop.f32.mrf.mxu0
  %v6340 = vadd.f32 0.0, %v6339
  %v6341 = vpop.f32.mrf.mxu0
  %6342 = vmatprep.mubr.bf16.mxu0 0
  %6343 = vmatmul.mubr.bf16.gmra.mxu0 %v6150
  %v6344 = vpop.f32.mrf.mxu0
  %v6345 = vadd.f32 0.0, %v6344
  %v6346 = vpop.f32.mrf.mxu0
  %v6347 = vpop.f32.mrf.mxu0
  %v6348 = vadd.f32 0.0, %v6347
  %v6349 = vpop.f32.mrf.mxu0
  %6350 = vmatprep.mubr.bf16.mxu0 0
  %6351 = vmatmul.mubr.bf16.gmra.mxu0 %v6153
  %v6352 = vpop.f32.mrf.mxu0
  %v6353 = vadd.f32 0.0, %v6352
  %v6354 = vpop.f32.mrf.mxu0
  %v6355 = vpop.f32.mrf.mxu0
  %v6356 = vadd.f32 0.0, %v6355
  %v6357 = vpop.f32.mrf.mxu0
  %6358 = vmatprep.mubr.bf16.mxu0 0
  %6359 = vmatmul.mubr.bf16.gmra.mxu0 %v6156
  %v6360 = vpop.f32.mrf.mxu0
  %v6361 = vadd.f32 0.0, %v6360
  %v6362 = vpop.f32.mrf.mxu0
  %v6363 = vpop.f32.mrf.mxu0
  %v6364 = vadd.f32 0.0, %v6363
  %v6365 = vpop.f32.mrf.mxu0
  %6366 = vmatprep.mubr.bf16.mxu0 0
  %6367 = vmatmul.mubr.bf16.gmra.mxu0 %v6159
  %v6368 = vpop.f32.mrf.mxu0
  %v6369 = vadd.f32 0.0, %v6368
  %v6370 = vpop.f32.mrf.mxu0
  %v6371 = vpop.f32.mrf.mxu0
  %v6372 = vadd.f32 0.0, %v6371
  %v6373 = vpop.f32.mrf.mxu0
  %6374 = vmatprep.mubr.bf16.mxu0 0
  %6375 = vmatmul.mubr.bf16.gmra.mxu0 %v6162
  %v6376 = vpop.f32.mrf.mxu0
  %v6377 = vadd.f32 0.0, %v6376
  %v6378 = vpop.f32.mrf.mxu0
  %v6379 = vpop.f32.mrf.mxu0
  %v6380 = vadd.f32 0.0, %v6379
  %v6381 = vpop.f32.mrf.mxu0
  %6382 = vmatprep.mubr.bf16.mxu0 0
  %6383 = vmatmul.mubr.bf16.gmra.mxu0 %v6165
  %v6384 = vpop.f32.mrf.mxu0
  %v6385 = vadd.f32 0.0, %v6384
  %v6386 = vpop.f32.mrf.mxu0
  %v6387 = vpop.f32.mrf.mxu0
  %v6388 = vadd.f32 0.0, %v6387
  %v6389 = vpop.f32.mrf.mxu0
  %6390 = vmatprep.mubr.bf16.mxu0 0
  %6391 = vmatmul.mubr.bf16.gmra.mxu0 %v6168
  %v6392 = vpop.f32.mrf.mxu0
  %v6393 = vadd.f32 0.0, %v6392
  %v6394 = vpop.f32.mrf.mxu0
  %v6395 = vpop.f32.mrf.mxu0
  %v6396 = vadd.f32 0.0, %v6395
  %v6397 = vpop.f32.mrf.mxu0
  %6398 = vmatprep.mubr.bf16.mxu0 0
  %6399 = vmatmul.mubr.bf16.gmra.mxu0 %v6171
  %v6400 = vpop.f32.mrf.mxu0
  %v6401 = vadd.f32 0.0, %v6400
  %v6402 = vpop.f32.mrf.mxu0
  %v6403 = vpop.f32.mrf.mxu0
  %v6404 = vadd.f32 0.0, %v6403
  %v6405 = vpop.f32.mrf.mxu0
  %6406 = vmatprep.mubr.bf16.mxu0 0
  %6407 = vmatmul.mubr.bf16.gmra.mxu0 %v6174
  %v6408 = vpop.f32.mrf.mxu0
  %v6409 = vadd.f32 0.0, %v6408
  %v6410 = vpop.f32.mrf.mxu0
  %v6411 = vpop.f32.mrf.mxu0
  %v6412 = vadd.f32 0.0, %v6411
  %v6413 = vpop.f32.mrf.mxu0
  %6414 = vmatprep.mubr.bf16.mxu0 0
  %6415 = vmatmul.mubr.bf16.gmra.mxu0 %v6177
  %v6416 = vpop.f32.mrf.mxu0
  %v6417 = vadd.f32 0.0, %v6416
  %v6418 = vpop.f32.mrf.mxu0
  %v6419 = vpop.f32.mrf.mxu0
  %v6420 = vadd.f32 0.0, %v6419
  %v6421 = vpop.f32.mrf.mxu0
  %6422 = vmatprep.mubr.bf16.mxu0 0
  %6423 = vmatmul.mubr.bf16.gmra.mxu0 %v6180
  %v6424 = vpop.f32.mrf.mxu0
  %v6425 = vadd.f32 0.0, %v6424
  %v6426 = vpop.f32.mrf.mxu0
  %v6427 = vpop.f32.mrf.mxu0
  %v6428 = vadd.f32 0.0, %v6427
  %v6429 = vpop.f32.mrf.mxu0
  %6430 = vmatprep.mubr.bf16.mxu0 0
  %6431 = vmatmul.mubr.bf16.gmra.mxu0 %v6183
  %v6432 = vpop.f32.mrf.mxu0
  %v6433 = vadd.f32 0.0, %v6432
  %v6434 = vpop.f32.mrf.mxu0
  %v6435 = vpop.f32.mrf.mxu0
  %v6436 = vadd.f32 0.0, %v6435
  %v6437 = vpop.f32.mrf.mxu0
  %6438 = vmatprep.mubr.bf16.mxu0 0
  %6439 = vmatmul.mubr.bf16.gmra.mxu0 %v6186
  %v6440 = vpop.f32.mrf.mxu0
  %v6441 = vadd.f32 0.0, %v6440
  %v6442 = vpop.f32.mrf.mxu0
  %v6443 = vpop.f32.mrf.mxu0
  %v6444 = vadd.f32 0.0, %v6443
  %v6445 = vpop.f32.mrf.mxu0
  %6446 = vmatprep.mubr.bf16.mxu0 0
  %6447 = vmatmul.mubr.bf16.gmra.mxu0 %v6189
  %v6448 = vpop.f32.mrf.mxu0
  %v6449 = vadd.f32 0.0, %v6448
  %v6450 = vpop.f32.mrf.mxu0
  %v6451 = vpop.f32.mrf.mxu0
  %v6452 = vadd.f32 0.0, %v6451
  %v6453 = vpop.f32.mrf.mxu0
  %6454 = vmatprep.mubr.bf16.mxu0 0
  %6455 = vmatmul.mubr.bf16.gmra.mxu0 %v6192
  %v6456 = vpop.f32.mrf.mxu0
  %v6457 = vadd.f32 0.0, %v6456
  %v6458 = vpop.f32.mrf.mxu0
  %v6459 = vpop.f32.mrf.mxu0
  %v6460 = vadd.f32 0.0, %v6459
  %v6461 = vpop.f32.mrf.mxu0
  %6462 = vmatprep.mubr.bf16.mxu0 0
  %6463 = vmatmul.mubr.bf16.gmra.mxu0 %v6195
  %v6464 = vpop.f32.mrf.mxu0
  %v6465 = vadd.f32 0.0, %v6464
  %v6466 = vpop.f32.mrf.mxu0
  %v6467 = vpop.f32.mrf.mxu0
  %v6468 = vadd.f32 0.0, %v6467
  %v6469 = vpop.f32.mrf.mxu0
  %6470 = vmatprep.mubr.bf16.mxu0 0
  %6471 = vmatmul.mubr.bf16.gmra.mxu0 %v6198
  %v6472 = vpop.f32.mrf.mxu0
  %v6473 = vadd.f32 0.0, %v6472
  %v6474 = vpop.f32.mrf.mxu0
  %v6475 = vpop.f32.mrf.mxu0
  %v6476 = vadd.f32 0.0, %v6475
  %v6477 = vpop.f32.mrf.mxu0
  %6478 = vmatprep.mubr.bf16.mxu0 0
  %6479 = vmatmul.mubr.bf16.gmra.mxu0 %v6201
  %v6480 = vpop.f32.mrf.mxu0
  %v6481 = vadd.f32 0.0, %v6480
  %v6482 = vpop.f32.mrf.mxu0
  %v6483 = vpop.f32.mrf.mxu0
  %v6484 = vadd.f32 0.0, %v6483
  %v6485 = vpop.f32.mrf.mxu0
  %6486 = vmatprep.mubr.bf16.mxu0 0
  %6487 = vmatmul.mubr.bf16.gmra.mxu0 %v6204
  %v6488 = vpop.f32.mrf.mxu0
  %v6489 = vadd.f32 0.0, %v6488
  %v6490 = vpop.f32.mrf.mxu0
  %v6491 = vpop.f32.mrf.mxu0
  %v6492 = vadd.f32 0.0, %v6491
  %v6493 = vpop.f32.mrf.mxu0
  %6494 = vmatprep.mubr.bf16.mxu0 0
  %6495 = vmatmul.mubr.bf16.gmra.mxu0 %v6207
  %v6496 = vpop.f32.mrf.mxu0
  %v6497 = vadd.f32 0.0, %v6496
  %v6498 = vpop.f32.mrf.mxu0
  %v6499 = vpop.f32.mrf.mxu0
  %v6500 = vadd.f32 0.0, %v6499
  %v6501 = vpop.f32.mrf.mxu0
  %6502 = vmatprep.mubr.bf16.mxu0 0
  %6503 = vmatmul.mubr.bf16.gmra.mxu0 %v6210
  %v6504 = vpop.f32.mrf.mxu0
  %v6505 = vadd.f32 0.0, %v6504
  %v6506 = vpop.f32.mrf.mxu0
  %v6507 = vpop.f32.mrf.mxu0
  %v6508 = vadd.f32 0.0, %v6507
  %v6509 = vpop.f32.mrf.mxu0
  %6510 = vmatprep.mubr.bf16.mxu0 0
  %6511 = vmatmul.mubr.bf16.gmra.mxu0 %v6213
  %v6512 = vpop.f32.mrf.mxu0
  %v6513 = vadd.f32 0.0, %v6512
  %v6514 = vpop.f32.mrf.mxu0
  %v6515 = vpop.f32.mrf.mxu0
  %v6516 = vadd.f32 0.0, %v6515
  %v6517 = vpop.f32.mrf.mxu0
  %6518 = vmatprep.mubr.bf16.mxu0 0
  %6519 = vmatmul.mubr.bf16.gmra.mxu0 %v6216
  %v6520 = vpop.f32.mrf.mxu0
  %v6521 = vadd.f32 0.0, %v6520
  %v6522 = vpop.f32.mrf.mxu0
  %v6523 = vpop.f32.mrf.mxu0
  %v6524 = vadd.f32 0.0, %v6523
  %v6525 = vpop.f32.mrf.mxu0
  %6526 = vmatprep.mubr.bf16.mxu0 0
  %6527 = vmatmul.mubr.bf16.gmra.mxu0 %v6219
  %v6528 = vpop.f32.mrf.mxu0
  %v6529 = vadd.f32 0.0, %v6528
  %v6530 = vpop.f32.mrf.mxu0
  %v6531 = vpop.f32.mrf.mxu0
  %v6532 = vadd.f32 0.0, %v6531
  %v6533 = vpop.f32.mrf.mxu0
  %6534 = vmatprep.mubr.bf16.mxu0 0
  %6535 = vmatmul.mubr.bf16.gmra.mxu0 %v6222
  %v6536 = vpop.f32.mrf.mxu0
  %v6537 = vadd.f32 0.0, %v6536
  %v6538 = vpop.f32.mrf.mxu0
  %v6539 = vpop.f32.mrf.mxu0
  %v6540 = vadd.f32 0.0, %v6539
  %v6541 = vpop.f32.mrf.mxu0
  %6542 = vmatprep.mubr.bf16.mxu0 0
  %6543 = vmatmul.mubr.bf16.gmra.mxu0 %v6225
  %v6544 = vpop.f32.mrf.mxu0
  %v6545 = vadd.f32 0.0, %v6544
  %v6546 = vpop.f32.mrf.mxu0
  %v6547 = vpop.f32.mrf.mxu0
  %v6548 = vadd.f32 0.0, %v6547
  %v6549 = vpop.f32.mrf.mxu0
  %6550 = vmatprep.mubr.bf16.mxu0 0
  %6551 = vmatmul.mubr.bf16.gmra.mxu0 %v6228
  %v6552 = vpop.f32.mrf.mxu0
  %v6553 = vadd.f32 0.0, %v6552
  %v6554 = vpop.f32.mrf.mxu0
  %v6555 = vpop.f32.mrf.mxu0
  %v6556 = vadd.f32 0.0, %v6555
  %v6557 = vpop.f32.mrf.mxu0
  %6558 = vmatprep.mubr.bf16.mxu0 0
  %6559 = vmatmul.mubr.bf16.gmra.mxu0 %v6231
  %v6560 = vpop.f32.mrf.mxu0
  %v6561 = vadd.f32 0.0, %v6560
  %v6562 = vpop.f32.mrf.mxu0
  %v6563 = vpop.f32.mrf.mxu0
  %v6564 = vadd.f32 0.0, %v6563
  %v6565 = vpop.f32.mrf.mxu0
  %6566 = vmatprep.mubr.bf16.mxu0 0
  %6567 = vmatmul.mubr.bf16.gmra.mxu0 %v6234
  %v6568 = vpop.f32.mrf.mxu0
  %v6569 = vadd.f32 0.0, %v6568
  %v6570 = vpop.f32.mrf.mxu0
  %v6571 = vpop.f32.mrf.mxu0
  %v6572 = vadd.f32 0.0, %v6571
  %v6573 = vpop.f32.mrf.mxu0
  %6574 = vmatprep.mubr.bf16.mxu0 0
  %6575 = vmatmul.mubr.bf16.gmra.mxu0 %v6237
  %v6576 = vpop.f32.mrf.mxu0
  %v6577 = vadd.f32 0.0, %v6576
  %v6578 = vpop.f32.mrf.mxu0
  %v6579 = vpop.f32.mrf.mxu0
  %v6580 = vadd.f32 0.0, %v6579
  %v6581 = vpop.f32.mrf.mxu0
  %6582 = vmatprep.mubr.bf16.mxu0 0
  %6583 = vmatmul.mubr.bf16.gmra.mxu0 %v6240
  %v6584 = vpop.f32.mrf.mxu0
  %v6585 = vadd.f32 0.0, %v6584
  %v6586 = vpop.f32.mrf.mxu0
  %v6587 = vpop.f32.mrf.mxu0
  %v6588 = vadd.f32 0.0, %v6587
  %v6589 = vpop.f32.mrf.mxu0
  %6590 = vmatprep.mubr.bf16.mxu0 0
  %6591 = vmatmul.mubr.bf16.gmra.mxu0 %v6243
  %v6592 = vpop.f32.mrf.mxu0
  %v6593 = vadd.f32 0.0, %v6592
  %v6594 = vpop.f32.mrf.mxu0
  %v6595 = vpop.f32.mrf.mxu0
  %v6596 = vadd.f32 0.0, %v6595
  %v6597 = vpop.f32.mrf.mxu0
  %6598 = vmatprep.mubr.bf16.mxu0 0
  %6599 = vmatmul.mubr.bf16.gmra.mxu0 %v6246
  %v6600 = vpop.f32.mrf.mxu0
  %v6601 = vadd.f32 0.0, %v6600
  %v6602 = vpop.f32.mrf.mxu0
  %v6603 = vpop.f32.mrf.mxu0
  %v6604 = vadd.f32 0.0, %v6603
  %v6605 = vpop.f32.mrf.mxu0
  %6606 = vmatprep.mubr.bf16.mxu0 0
  %6607 = vmatmul.mubr.bf16.gmra.mxu0 %v6249
  %v6608 = vpop.f32.mrf.mxu0
  %v6609 = vadd.f32 0.0, %v6608
  %v6610 = vpop.f32.mrf.mxu0
  %v6611 = vpop.f32.mrf.mxu0
  %v6612 = vpop.f32.mrf.mxu0
  %6613 = vdwg.mxu0
  %v6614 = vadd.f32 %v5923, %v6289
  %v6615 = vadd.f32 %v5924, %v6292
  %v6616 = vadd.f32 %v5925, %v6297
  %v6617 = vadd.f32 %v5926, %v6300
  %v6618 = vadd.f32 %v5927, %v6305
  %v6619 = vadd.f32 %v5928, %v6308
  %v6620 = vadd.f32 %v5929, %v6313
  %v6621 = vadd.f32 %v5930, %v6316
  %v6622 = vadd.f32 %v5931, %v6321
  %v6623 = vadd.f32 %v5932, %v6324
  %v6624 = vadd.f32 %v5933, %v6329
  %v6625 = vadd.f32 %v5934, %v6332
  %v6626 = vadd.f32 %v5935, %v6337
  %v6627 = vadd.f32 %v5936, %v6340
  %v6628 = vadd.f32 %v5937, %v6345
  %v6629 = vadd.f32 %v5938, %v6348
  %v6630 = vadd.f32 %v5939, %v6353
  %v6631 = vadd.f32 %v5940, %v6356
  %v6632 = vadd.f32 %v5941, %v6361
  %v6633 = vadd.f32 %v5942, %v6364
  %v6634 = vadd.f32 %v5943, %v6369
  %v6635 = vadd.f32 %v5944, %v6372
  %v6636 = vadd.f32 %v5945, %v6377
  %v6637 = vadd.f32 %v5946, %v6380
  %v6638 = vadd.f32 %v5947, %v6385
  %v6639 = vadd.f32 %v5948, %v6388
  %v6640 = vadd.f32 %v5949, %v6393
  %v6641 = vadd.f32 %v5950, %v6396
  %v6642 = vadd.f32 %v5951, %v6401
  %v6643 = vadd.f32 %v5952, %v6404
  %v6644 = vadd.f32 %v5953, %v6409
  %v6645 = vadd.f32 %v5954, %v6412
  %v6646 = vadd.f32 %v5955, %v6417
  %v6647 = vadd.f32 %v5956, %v6420
  %v6648 = vadd.f32 %v5957, %v6425
  %v6649 = vadd.f32 %v5958, %v6428
  %v6650 = vadd.f32 %v5959, %v6433
  %v6651 = vadd.f32 %v5960, %v6436
  %v6652 = vadd.f32 %v5961, %v6441
  %v6653 = vadd.f32 %v5962, %v6444
  %v6654 = vadd.f32 %v5963, %v6449
  %v6655 = vadd.f32 %v5964, %v6452
  %v6656 = vadd.f32 %v5965, %v6457
  %v6657 = vadd.f32 %v5966, %v6460
  %v6658 = vadd.f32 %v5967, %v6465
  %v6659 = vadd.f32 %v5968, %v6468
  %v6660 = vadd.f32 %v5969, %v6473
  %v6661 = vadd.f32 %v5970, %v6476
  %v6662 = vadd.f32 %v5971, %v6481
  %v6663 = vadd.f32 %v5972, %v6484
  %v6664 = vadd.f32 %v5973, %v6489
  %v6665 = vadd.f32 %v5974, %v6492
  %v6666 = vadd.f32 %v5975, %v6497
  %v6667 = vadd.f32 %v5976, %v6500
  %v6668 = vadd.f32 %v5977, %v6505
  %v6669 = vadd.f32 %v5978, %v6508
  %v6670 = vadd.f32 %v5979, %v6513
  %v6671 = vadd.f32 %v5980, %v6516
  %v6672 = vadd.f32 %v5981, %v6521
  %v6673 = vadd.f32 %v5982, %v6524
  %v6674 = vadd.f32 %v5983, %v6529
  %v6675 = vadd.f32 %v5984, %v6532
  %v6676 = vadd.f32 %v5985, %v6537
  %v6677 = vadd.f32 %v5986, %v6540
  %v6678 = vadd.f32 %v5987, %v6545
  %v6679 = vadd.f32 %v5988, %v6548
  %v6680 = vadd.f32 %v5989, %v6553
  %v6681 = vadd.f32 %v5990, %v6556
  %v6682 = vadd.f32 %v5991, %v6561
  %v6683 = vadd.f32 %v5992, %v6564
  %v6684 = vadd.f32 %v5993, %v6569
  %v6685 = vadd.f32 %v5994, %v6572
  %v6686 = vadd.f32 %v5995, %v6577
  %v6687 = vadd.f32 %v5996, %v6580
  %v6688 = vadd.f32 %v5997, %v6585
  %v6689 = vadd.f32 %v5998, %v6588
  %v6690 = vadd.f32 %v5999, %v6593
  %v6691 = vadd.f32 %v6000, %v6596
  %v6692 = vadd.f32 %v6001, %v6601
  %v6693 = vadd.f32 %v6002, %v6604
  %v6694 = vadd.f32 %v6003, %v6609
  %v6695 = vld [vmem:[#allocation2 + $0x24] sm:$0xff]
  %v6696 = vld [vmem:[#allocation2 + $0x2c] sm:$0xff]
  %v6697 = vld [vmem:[#allocation2 + $0x34] sm:$0xff]
  %v6698 = vld [vmem:[#allocation2 + $0x3c] sm:$0xff]
  %v6699 = vld [vmem:[#allocation2 + $0x44] sm:$0xff]
  %v6700 = vld [vmem:[#allocation2 + $0x4c] sm:$0xff]
  %v6701 = vld [vmem:[#allocation2 + $0x54] sm:$0xff]
  %v6702 = vld [vmem:[#allocation2 + $0x5c] sm:$0xff]
  %v6703 = vld [vmem:[#allocation2 + $0x64] sm:$0xff]
  %v6704 = vld [vmem:[#allocation2 + $0x6c] sm:$0xff]
  %v6705 = vld [vmem:[#allocation2 + $0x74] sm:$0xff]
  %v6706 = vld [vmem:[#allocation2 + $0x7c] sm:$0xff]
  %v6707 = vld [vmem:[#allocation2 + $0x84] sm:$0xff]
  %v6708 = vld [vmem:[#allocation2 + $0x8c] sm:$0xff]
  %v6709 = vld [vmem:[#allocation2 + $0x94] sm:$0xff]
  %v6710 = vld [vmem:[#allocation2 + $0x9c] sm:$0xff]
  %v6711 = vld [vmem:[#allocation2 + $0xa4] sm:$0xff]
  %v6712 = vld [vmem:[#allocation2 + $0xac] sm:$0xff]
  %v6713 = vld [vmem:[#allocation2 + $0xb4] sm:$0xff]
  %v6714 = vld [vmem:[#allocation2 + $0xbc] sm:$0xff]
  %v6715 = vld [vmem:[#allocation2 + $0xc4] sm:$0xff]
  %v6716 = vld [vmem:[#allocation2 + $0xcc] sm:$0xff]
  %v6717 = vld [vmem:[#allocation2 + $0xd4] sm:$0xff]
  %v6718 = vld [vmem:[#allocation2 + $0xdc] sm:$0xff]
  %v6719 = vld [vmem:[#allocation2 + $0xe4] sm:$0xff]
  %v6720 = vld [vmem:[#allocation2 + $0xec] sm:$0xff]
  %v6721 = vld [vmem:[#allocation2 + $0xf4] sm:$0xff]
  %v6722 = vld [vmem:[#allocation2 + $0xfc] sm:$0xff]
  %v6723 = vld [vmem:[#allocation2 + $0x104] sm:$0xff]
  %v6724 = vld [vmem:[#allocation2 + $0x10c] sm:$0xff]
  %v6725 = vld [vmem:[#allocation2 + $0x114] sm:$0xff]
  %v6726 = vld [vmem:[#allocation2 + $0x11c] sm:$0xff]
  %v6727 = vld [vmem:[#allocation2 + $0x124] sm:$0xff]
  %v6728 = vld [vmem:[#allocation2 + $0x12c] sm:$0xff]
  %v6729 = vld [vmem:[#allocation2 + $0x134] sm:$0xff]
  %v6730 = vld [vmem:[#allocation2 + $0x13c] sm:$0xff]
  %v6731 = vld [vmem:[#allocation2 + $0x144] sm:$0xff]
  %v6732 = vld [vmem:[#allocation2 + $0x14c] sm:$0xff]
  %v6733 = vld [vmem:[#allocation2 + $0x154] sm:$0xff]
  %v6734 = vld [vmem:[#allocation2 + $0x15c] sm:$0xff]
  %v6735 = vld [vmem:[#allocation2 + $0x164] sm:$0xff]
  %v6736 = vld [vmem:[#allocation2 + $0x16c] sm:$0xff]
  %v6737 = vld [vmem:[#allocation2 + $0x174] sm:$0xff]
  %v6738 = vld [vmem:[#allocation2 + $0x17c] sm:$0xff]
  %v6739 = vld [vmem:[#allocation2 + $0x184] sm:$0xff]
  %v6740 = vld [vmem:[#allocation2 + $0x18c] sm:$0xff]
  %v6741 = vld [vmem:[#allocation2 + $0x194] sm:$0xff]
  %v6742 = vld [vmem:[#allocation2 + $0x19c] sm:$0xff]
  %v6743 = vld [vmem:[#allocation2 + $0x1a4] sm:$0xff]
  %v6744 = vld [vmem:[#allocation2 + $0x1ac] sm:$0xff]
  %v6745 = vld [vmem:[#allocation2 + $0x1b4] sm:$0xff]
  %v6746 = vld [vmem:[#allocation2 + $0x1bc] sm:$0xff]
  %v6747 = vld [vmem:[#allocation2 + $0x1c4] sm:$0xff]
  %v6748 = vld [vmem:[#allocation2 + $0x1cc] sm:$0xff]
  %v6749 = vld [vmem:[#allocation2 + $0x1d4] sm:$0xff]
  %v6750 = vld [vmem:[#allocation2 + $0x1dc] sm:$0xff]
  %v6751 = vld [vmem:[#allocation2 + $0x1e4] sm:$0xff]
  %v6752 = vld [vmem:[#allocation2 + $0x1ec] sm:$0xff]
  %v6753 = vld [vmem:[#allocation2 + $0x1f4] sm:$0xff]
  %v6754 = vld [vmem:[#allocation2 + $0x1fc] sm:$0xff]
  %v6755 = vld [vmem:[#allocation2 + $0x204] sm:$0xff]
  %v6756 = vld [vmem:[#allocation2 + $0x20c] sm:$0xff]
  %v6757 = vld [vmem:[#allocation2 + $0x214] sm:$0xff]
  %v6758 = vld [vmem:[#allocation2 + $0x21c] sm:$0xff]
  %v6759 = vld [vmem:[#allocation2 + $0x224] sm:$0xff]
  %v6760 = vld [vmem:[#allocation2 + $0x22c] sm:$0xff]
  %v6761 = vld [vmem:[#allocation2 + $0x234] sm:$0xff]
  %v6762 = vld [vmem:[#allocation2 + $0x23c] sm:$0xff]
  %v6763 = vld [vmem:[#allocation2 + $0x244] sm:$0xff]
  %v6764 = vld [vmem:[#allocation2 + $0x24c] sm:$0xff]
  %v6765 = vld [vmem:[#allocation2 + $0x254] sm:$0xff]
  %v6766 = vld [vmem:[#allocation2 + $0x25c] sm:$0xff]
  %v6767 = vld [vmem:[#allocation2 + $0x264] sm:$0xff]
  %v6768 = vld [vmem:[#allocation2 + $0x26c] sm:$0xff]
  %v6769 = vld [vmem:[#allocation2 + $0x274] sm:$0xff]
  %v6770 = vld [vmem:[#allocation2 + $0x27c] sm:$0xff]
  %v6771 = vld [vmem:[#allocation2 + $0x284] sm:$0xff]
  %v6772 = vld [vmem:[#allocation2 + $0x28c] sm:$0xff]
  %v6773 = vld [vmem:[#allocation2 + $0x294] sm:$0xff]
  %v6774 = vld [vmem:[#allocation2 + $0x29c] sm:$0xff]
  %v6775 = vld [vmem:[#allocation2 + $0x2a4] sm:$0xff]
  %v6776 = vpack.c.bf16 %v6696, %v6695
  %v6777 = vpack.c.bf16 %v6698, %v6697
  %v6778 = vpack.c.bf16 %v6700, %v6699
  %v6779 = vpack.c.bf16 %v6702, %v6701
  %v6780 = vpack.c.bf16 %v6704, %v6703
  %v6781 = vpack.c.bf16 %v6706, %v6705
  %v6782 = vpack.c.bf16 %v6708, %v6707
  %v6783 = vpack.c.bf16 %v6710, %v6709
  %v6784 = vpack.c.bf16 %v6712, %v6711
  %v6785 = vpack.c.bf16 %v6714, %v6713
  %v6786 = vpack.c.bf16 %v6716, %v6715
  %v6787 = vpack.c.bf16 %v6718, %v6717
  %v6788 = vpack.c.bf16 %v6720, %v6719
  %v6789 = vpack.c.bf16 %v6722, %v6721
  %v6790 = vpack.c.bf16 %v6724, %v6723
  %v6791 = vpack.c.bf16 %v6726, %v6725
  %v6792 = vpack.c.bf16 %v6728, %v6727
  %v6793 = vpack.c.bf16 %v6730, %v6729
  %v6794 = vpack.c.bf16 %v6732, %v6731
  %v6795 = vpack.c.bf16 %v6734, %v6733
  %v6796 = vpack.c.bf16 %v6736, %v6735
  %v6797 = vpack.c.bf16 %v6738, %v6737
  %v6798 = vpack.c.bf16 %v6740, %v6739
  %v6799 = vpack.c.bf16 %v6742, %v6741
  %v6800 = vpack.c.bf16 %v6744, %v6743
  %v6801 = vpack.c.bf16 %v6746, %v6745
  %v6802 = vpack.c.bf16 %v6748, %v6747
  %v6803 = vpack.c.bf16 %v6750, %v6749
  %v6804 = vpack.c.bf16 %v6752, %v6751
  %v6805 = vpack.c.bf16 %v6754, %v6753
  %v6806 = vpack.c.bf16 %v6756, %v6755
  %v6807 = vpack.c.bf16 %v6758, %v6757
  %v6808 = vpack.c.bf16 %v6760, %v6759
  %v6809 = vpack.c.bf16 %v6762, %v6761
  %v6810 = vpack.c.bf16 %v6764, %v6763
  %v6811 = vpack.c.bf16 %v6766, %v6765
  %v6812 = vpack.c.bf16 %v6768, %v6767
  %v6813 = vpack.c.bf16 %v6770, %v6769
  %v6814 = vpack.c.bf16 %v6772, %v6771
  %v6815 = vpack.c.bf16 %v6774, %v6773
  %v6816 = vpack.c.bf16 %v6775, %v6775
  %s6817 = scalar_lea.vmem %s7, 24
  %v6818 = vld [vmem:[%s6817] sm:$0xf]
  %v6820 = vsel %vm361, %v6776, 0
  %v6823 = vsel %vm361, %v6777, 0
  %v6826 = vsel %vm361, %v6778, 0
  %v6829 = vsel %vm361, %v6779, 0
  %v6832 = vsel %vm361, %v6780, 0
  %v6835 = vsel %vm361, %v6781, 0
  %v6838 = vsel %vm361, %v6782, 0
  %v6841 = vsel %vm361, %v6783, 0
  %v6844 = vsel %vm361, %v6784, 0
  %v6847 = vsel %vm361, %v6785, 0
  %v6850 = vsel %vm361, %v6786, 0
  %v6853 = vsel %vm361, %v6787, 0
  %v6856 = vsel %vm361, %v6788, 0
  %v6859 = vsel %vm361, %v6789, 0
  %v6862 = vsel %vm361, %v6790, 0
  %v6865 = vsel %vm361, %v6791, 0
  %v6868 = vsel %vm361, %v6792, 0
  %v6871 = vsel %vm361, %v6793, 0
  %v6874 = vsel %vm361, %v6794, 0
  %v6877 = vsel %vm361, %v6795, 0
  %v6880 = vsel %vm361, %v6796, 0
  %v6883 = vsel %vm361, %v6797, 0
  %v6886 = vsel %vm361, %v6798, 0
  %v6889 = vsel %vm361, %v6799, 0
  %v6892 = vsel %vm361, %v6800, 0
  %v6895 = vsel %vm361, %v6801, 0
  %v6898 = vsel %vm361, %v6802, 0
  %v6901 = vsel %vm361, %v6803, 0
  %v6904 = vsel %vm361, %v6804, 0
  %v6907 = vsel %vm361, %v6805, 0
  %v6910 = vsel %vm361, %v6806, 0
  %v6913 = vsel %vm361, %v6807, 0
  %v6916 = vsel %vm361, %v6808, 0
  %v6919 = vsel %vm361, %v6809, 0
  %v6922 = vsel %vm361, %v6810, 0
  %v6925 = vsel %vm361, %v6811, 0
  %v6928 = vsel %vm361, %v6812, 0
  %v6931 = vsel %vm361, %v6813, 0
  %v6934 = vsel %vm361, %v6814, 0
  %v6937 = vsel %vm361, %v6815, 0
  %v6940 = vsel %vm361, %v6816, 0
  %v6943 = vsel %vm491, %v6818, 0
  %6945 = vmatprep.subr.bf16.mxu0 0
  %6946 = vmatpush1.bf16.msra.mxu0 0
  %6947 = vmatprep.subr.bf16.mxu0 0
  %6948 = vmatpush1.bf16.msra.mxu0 0
  %6949 = vmatprep.subr.bf16.mxu0 0
  %6950 = vmatpush1.bf16.msra.mxu0 0
  %6951 = vmatprep.subr.bf16.mxu0 0
  %6952 = vmatpush1.bf16.msra.mxu0 0
  %6953 = vmatprep.subr.bf16.mxu0 0
  %6954 = vmatpush1.bf16.msra.mxu0 0
  %6955 = vmatprep.subr.bf16.mxu0 0
  %6956 = vmatpush1.bf16.msra.mxu0 0
  %6957 = vmatprep.subr.bf16.mxu0 0
  %6958 = vmatpush1.bf16.msra.mxu0 0
  %6959 = vmatprep.subr.bf16.mxu0 0
  %6960 = vmatpush1.bf16.msra.mxu0 %v6943
  %6961 = vmatprep.subr.bf16.mxu0 0
  %6962 = vmatpush2.bf16.msra.mxu0 0
  %6963 = vmatprep.subr.bf16.mxu0 0
  %6964 = vmatpush2.bf16.msra.mxu0 0
  %6965 = vmatprep.subr.bf16.mxu0 0
  %6966 = vmatpush2.bf16.msra.mxu0 0
  %6967 = vmatprep.subr.bf16.mxu0 0
  %6968 = vmatpush2.bf16.msra.mxu0 0
  %6969 = vmatprep.subr.bf16.mxu0 0
  %6970 = vmatpush2.bf16.msra.mxu0 0
  %6971 = vmatprep.subr.bf16.mxu0 0
  %6972 = vmatpush2.bf16.msra.mxu0 0
  %6973 = vmatprep.subr.bf16.mxu0 0
  %6974 = vmatpush2.bf16.msra.mxu0 0
  %6975 = vmatprep.subr.bf16.mxu0 0
  %6976 = vmatpush2.bf16.msra.mxu0 0
  %6977 = vmatprep.mubr.bf16.mxu0 0
  %6978 = vmatmul.mubr.bf16.gmra.mxu0 %v6820
  %v6979 = vpop.f32.mrf.mxu0
  %v6980 = vadd.f32 0.0, %v6979
  %v6981 = vpop.f32.mrf.mxu0
  %v6982 = vpop.f32.mrf.mxu0
  %v6983 = vadd.f32 0.0, %v6982
  %v6984 = vpop.f32.mrf.mxu0
  %6985 = vmatprep.mubr.bf16.mxu0 0
  %6986 = vmatmul.mubr.bf16.gmra.mxu0 %v6823
  %v6987 = vpop.f32.mrf.mxu0
  %v6988 = vadd.f32 0.0, %v6987
  %v6989 = vpop.f32.mrf.mxu0
  %v6990 = vpop.f32.mrf.mxu0
  %v6991 = vadd.f32 0.0, %v6990
  %v6992 = vpop.f32.mrf.mxu0
  %6993 = vmatprep.mubr.bf16.mxu0 0
  %6994 = vmatmul.mubr.bf16.gmra.mxu0 %v6826
  %v6995 = vpop.f32.mrf.mxu0
  %v6996 = vadd.f32 0.0, %v6995
  %v6997 = vpop.f32.mrf.mxu0
  %v6998 = vpop.f32.mrf.mxu0
  %v6999 = vadd.f32 0.0, %v6998
  %v7000 = vpop.f32.mrf.mxu0
  %7001 = vmatprep.mubr.bf16.mxu0 0
  %7002 = vmatmul.mubr.bf16.gmra.mxu0 %v6829
  %v7003 = vpop.f32.mrf.mxu0
  %v7004 = vadd.f32 0.0, %v7003
  %v7005 = vpop.f32.mrf.mxu0
  %v7006 = vpop.f32.mrf.mxu0
  %v7007 = vadd.f32 0.0, %v7006
  %v7008 = vpop.f32.mrf.mxu0
  %7009 = vmatprep.mubr.bf16.mxu0 0
  %7010 = vmatmul.mubr.bf16.gmra.mxu0 %v6832
  %v7011 = vpop.f32.mrf.mxu0
  %v7012 = vadd.f32 0.0, %v7011
  %v7013 = vpop.f32.mrf.mxu0
  %v7014 = vpop.f32.mrf.mxu0
  %v7015 = vadd.f32 0.0, %v7014
  %v7016 = vpop.f32.mrf.mxu0
  %7017 = vmatprep.mubr.bf16.mxu0 0
  %7018 = vmatmul.mubr.bf16.gmra.mxu0 %v6835
  %v7019 = vpop.f32.mrf.mxu0
  %v7020 = vadd.f32 0.0, %v7019
  %v7021 = vpop.f32.mrf.mxu0
  %v7022 = vpop.f32.mrf.mxu0
  %v7023 = vadd.f32 0.0, %v7022
  %v7024 = vpop.f32.mrf.mxu0
  %7025 = vmatprep.mubr.bf16.mxu0 0
  %7026 = vmatmul.mubr.bf16.gmra.mxu0 %v6838
  %v7027 = vpop.f32.mrf.mxu0
  %v7028 = vadd.f32 0.0, %v7027
  %v7029 = vpop.f32.mrf.mxu0
  %v7030 = vpop.f32.mrf.mxu0
  %v7031 = vadd.f32 0.0, %v7030
  %v7032 = vpop.f32.mrf.mxu0
  %7033 = vmatprep.mubr.bf16.mxu0 0
  %7034 = vmatmul.mubr.bf16.gmra.mxu0 %v6841
  %v7035 = vpop.f32.mrf.mxu0
  %v7036 = vadd.f32 0.0, %v7035
  %v7037 = vpop.f32.mrf.mxu0
  %v7038 = vpop.f32.mrf.mxu0
  %v7039 = vadd.f32 0.0, %v7038
  %v7040 = vpop.f32.mrf.mxu0
  %7041 = vmatprep.mubr.bf16.mxu0 0
  %7042 = vmatmul.mubr.bf16.gmra.mxu0 %v6844
  %v7043 = vpop.f32.mrf.mxu0
  %v7044 = vadd.f32 0.0, %v7043
  %v7045 = vpop.f32.mrf.mxu0
  %v7046 = vpop.f32.mrf.mxu0
  %v7047 = vadd.f32 0.0, %v7046
  %v7048 = vpop.f32.mrf.mxu0
  %7049 = vmatprep.mubr.bf16.mxu0 0
  %7050 = vmatmul.mubr.bf16.gmra.mxu0 %v6847
  %v7051 = vpop.f32.mrf.mxu0
  %v7052 = vadd.f32 0.0, %v7051
  %v7053 = vpop.f32.mrf.mxu0
  %v7054 = vpop.f32.mrf.mxu0
  %v7055 = vadd.f32 0.0, %v7054
  %v7056 = vpop.f32.mrf.mxu0
  %7057 = vmatprep.mubr.bf16.mxu0 0
  %7058 = vmatmul.mubr.bf16.gmra.mxu0 %v6850
  %v7059 = vpop.f32.mrf.mxu0
  %v7060 = vadd.f32 0.0, %v7059
  %v7061 = vpop.f32.mrf.mxu0
  %v7062 = vpop.f32.mrf.mxu0
  %v7063 = vadd.f32 0.0, %v7062
  %v7064 = vpop.f32.mrf.mxu0
  %7065 = vmatprep.mubr.bf16.mxu0 0
  %7066 = vmatmul.mubr.bf16.gmra.mxu0 %v6853
  %v7067 = vpop.f32.mrf.mxu0
  %v7068 = vadd.f32 0.0, %v7067
  %v7069 = vpop.f32.mrf.mxu0
  %v7070 = vpop.f32.mrf.mxu0
  %v7071 = vadd.f32 0.0, %v7070
  %v7072 = vpop.f32.mrf.mxu0
  %7073 = vmatprep.mubr.bf16.mxu0 0
  %7074 = vmatmul.mubr.bf16.gmra.mxu0 %v6856
  %v7075 = vpop.f32.mrf.mxu0
  %v7076 = vadd.f32 0.0, %v7075
  %v7077 = vpop.f32.mrf.mxu0
  %v7078 = vpop.f32.mrf.mxu0
  %v7079 = vadd.f32 0.0, %v7078
  %v7080 = vpop.f32.mrf.mxu0
  %7081 = vmatprep.mubr.bf16.mxu0 0
  %7082 = vmatmul.mubr.bf16.gmra.mxu0 %v6859
  %v7083 = vpop.f32.mrf.mxu0
  %v7084 = vadd.f32 0.0, %v7083
  %v7085 = vpop.f32.mrf.mxu0
  %v7086 = vpop.f32.mrf.mxu0
  %v7087 = vadd.f32 0.0, %v7086
  %v7088 = vpop.f32.mrf.mxu0
  %7089 = vmatprep.mubr.bf16.mxu0 0
  %7090 = vmatmul.mubr.bf16.gmra.mxu0 %v6862
  %v7091 = vpop.f32.mrf.mxu0
  %v7092 = vadd.f32 0.0, %v7091
  %v7093 = vpop.f32.mrf.mxu0
  %v7094 = vpop.f32.mrf.mxu0
  %v7095 = vadd.f32 0.0, %v7094
  %v7096 = vpop.f32.mrf.mxu0
  %7097 = vmatprep.mubr.bf16.mxu0 0
  %7098 = vmatmul.mubr.bf16.gmra.mxu0 %v6865
  %v7099 = vpop.f32.mrf.mxu0
  %v7100 = vadd.f32 0.0, %v7099
  %v7101 = vpop.f32.mrf.mxu0
  %v7102 = vpop.f32.mrf.mxu0
  %v7103 = vadd.f32 0.0, %v7102
  %v7104 = vpop.f32.mrf.mxu0
  %7105 = vmatprep.mubr.bf16.mxu0 0
  %7106 = vmatmul.mubr.bf16.gmra.mxu0 %v6868
  %v7107 = vpop.f32.mrf.mxu0
  %v7108 = vadd.f32 0.0, %v7107
  %v7109 = vpop.f32.mrf.mxu0
  %v7110 = vpop.f32.mrf.mxu0
  %v7111 = vadd.f32 0.0, %v7110
  %v7112 = vpop.f32.mrf.mxu0
  %7113 = vmatprep.mubr.bf16.mxu0 0
  %7114 = vmatmul.mubr.bf16.gmra.mxu0 %v6871
  %v7115 = vpop.f32.mrf.mxu0
  %v7116 = vadd.f32 0.0, %v7115
  %v7117 = vpop.f32.mrf.mxu0
  %v7118 = vpop.f32.mrf.mxu0
  %v7119 = vadd.f32 0.0, %v7118
  %v7120 = vpop.f32.mrf.mxu0
  %7121 = vmatprep.mubr.bf16.mxu0 0
  %7122 = vmatmul.mubr.bf16.gmra.mxu0 %v6874
  %v7123 = vpop.f32.mrf.mxu0
  %v7124 = vadd.f32 0.0, %v7123
  %v7125 = vpop.f32.mrf.mxu0
  %v7126 = vpop.f32.mrf.mxu0
  %v7127 = vadd.f32 0.0, %v7126
  %v7128 = vpop.f32.mrf.mxu0
  %7129 = vmatprep.mubr.bf16.mxu0 0
  %7130 = vmatmul.mubr.bf16.gmra.mxu0 %v6877
  %v7131 = vpop.f32.mrf.mxu0
  %v7132 = vadd.f32 0.0, %v7131
  %v7133 = vpop.f32.mrf.mxu0
  %v7134 = vpop.f32.mrf.mxu0
  %v7135 = vadd.f32 0.0, %v7134
  %v7136 = vpop.f32.mrf.mxu0
  %7137 = vmatprep.mubr.bf16.mxu0 0
  %7138 = vmatmul.mubr.bf16.gmra.mxu0 %v6880
  %v7139 = vpop.f32.mrf.mxu0
  %v7140 = vadd.f32 0.0, %v7139
  %v7141 = vpop.f32.mrf.mxu0
  %v7142 = vpop.f32.mrf.mxu0
  %v7143 = vadd.f32 0.0, %v7142
  %v7144 = vpop.f32.mrf.mxu0
  %7145 = vmatprep.mubr.bf16.mxu0 0
  %7146 = vmatmul.mubr.bf16.gmra.mxu0 %v6883
  %v7147 = vpop.f32.mrf.mxu0
  %v7148 = vadd.f32 0.0, %v7147
  %v7149 = vpop.f32.mrf.mxu0
  %v7150 = vpop.f32.mrf.mxu0
  %v7151 = vadd.f32 0.0, %v7150
  %v7152 = vpop.f32.mrf.mxu0
  %7153 = vmatprep.mubr.bf16.mxu0 0
  %7154 = vmatmul.mubr.bf16.gmra.mxu0 %v6886
  %v7155 = vpop.f32.mrf.mxu0
  %v7156 = vadd.f32 0.0, %v7155
  %v7157 = vpop.f32.mrf.mxu0
  %v7158 = vpop.f32.mrf.mxu0
  %v7159 = vadd.f32 0.0, %v7158
  %v7160 = vpop.f32.mrf.mxu0
  %7161 = vmatprep.mubr.bf16.mxu0 0
  %7162 = vmatmul.mubr.bf16.gmra.mxu0 %v6889
  %v7163 = vpop.f32.mrf.mxu0
  %v7164 = vadd.f32 0.0, %v7163
  %v7165 = vpop.f32.mrf.mxu0
  %v7166 = vpop.f32.mrf.mxu0
  %v7167 = vadd.f32 0.0, %v7166
  %v7168 = vpop.f32.mrf.mxu0
  %7169 = vmatprep.mubr.bf16.mxu0 0
  %7170 = vmatmul.mubr.bf16.gmra.mxu0 %v6892
  %v7171 = vpop.f32.mrf.mxu0
  %v7172 = vadd.f32 0.0, %v7171
  %v7173 = vpop.f32.mrf.mxu0
  %v7174 = vpop.f32.mrf.mxu0
  %v7175 = vadd.f32 0.0, %v7174
  %v7176 = vpop.f32.mrf.mxu0
  %7177 = vmatprep.mubr.bf16.mxu0 0
  %7178 = vmatmul.mubr.bf16.gmra.mxu0 %v6895
  %v7179 = vpop.f32.mrf.mxu0
  %v7180 = vadd.f32 0.0, %v7179
  %v7181 = vpop.f32.mrf.mxu0
  %v7182 = vpop.f32.mrf.mxu0
  %v7183 = vadd.f32 0.0, %v7182
  %v7184 = vpop.f32.mrf.mxu0
  %7185 = vmatprep.mubr.bf16.mxu0 0
  %7186 = vmatmul.mubr.bf16.gmra.mxu0 %v6898
  %v7187 = vpop.f32.mrf.mxu0
  %v7188 = vadd.f32 0.0, %v7187
  %v7189 = vpop.f32.mrf.mxu0
  %v7190 = vpop.f32.mrf.mxu0
  %v7191 = vadd.f32 0.0, %v7190
  %v7192 = vpop.f32.mrf.mxu0
  %7193 = vmatprep.mubr.bf16.mxu0 0
  %7194 = vmatmul.mubr.bf16.gmra.mxu0 %v6901
  %v7195 = vpop.f32.mrf.mxu0
  %v7196 = vadd.f32 0.0, %v7195
  %v7197 = vpop.f32.mrf.mxu0
  %v7198 = vpop.f32.mrf.mxu0
  %v7199 = vadd.f32 0.0, %v7198
  %v7200 = vpop.f32.mrf.mxu0
  %7201 = vmatprep.mubr.bf16.mxu0 0
  %7202 = vmatmul.mubr.bf16.gmra.mxu0 %v6904
  %v7203 = vpop.f32.mrf.mxu0
  %v7204 = vadd.f32 0.0, %v7203
  %v7205 = vpop.f32.mrf.mxu0
  %v7206 = vpop.f32.mrf.mxu0
  %v7207 = vadd.f32 0.0, %v7206
  %v7208 = vpop.f32.mrf.mxu0
  %7209 = vmatprep.mubr.bf16.mxu0 0
  %7210 = vmatmul.mubr.bf16.gmra.mxu0 %v6907
  %v7211 = vpop.f32.mrf.mxu0
  %v7212 = vadd.f32 0.0, %v7211
  %v7213 = vpop.f32.mrf.mxu0
  %v7214 = vpop.f32.mrf.mxu0
  %v7215 = vadd.f32 0.0, %v7214
  %v7216 = vpop.f32.mrf.mxu0
  %7217 = vmatprep.mubr.bf16.mxu0 0
  %7218 = vmatmul.mubr.bf16.gmra.mxu0 %v6910
  %v7219 = vpop.f32.mrf.mxu0
  %v7220 = vadd.f32 0.0, %v7219
  %v7221 = vpop.f32.mrf.mxu0
  %v7222 = vpop.f32.mrf.mxu0
  %v7223 = vadd.f32 0.0, %v7222
  %v7224 = vpop.f32.mrf.mxu0
  %7225 = vmatprep.mubr.bf16.mxu0 0
  %7226 = vmatmul.mubr.bf16.gmra.mxu0 %v6913
  %v7227 = vpop.f32.mrf.mxu0
  %v7228 = vadd.f32 0.0, %v7227
  %v7229 = vpop.f32.mrf.mxu0
  %v7230 = vpop.f32.mrf.mxu0
  %v7231 = vadd.f32 0.0, %v7230
  %v7232 = vpop.f32.mrf.mxu0
  %7233 = vmatprep.mubr.bf16.mxu0 0
  %7234 = vmatmul.mubr.bf16.gmra.mxu0 %v6916
  %v7235 = vpop.f32.mrf.mxu0
  %v7236 = vadd.f32 0.0, %v7235
  %v7237 = vpop.f32.mrf.mxu0
  %v7238 = vpop.f32.mrf.mxu0
  %v7239 = vadd.f32 0.0, %v7238
  %v7240 = vpop.f32.mrf.mxu0
  %7241 = vmatprep.mubr.bf16.mxu0 0
  %7242 = vmatmul.mubr.bf16.gmra.mxu0 %v6919
  %v7243 = vpop.f32.mrf.mxu0
  %v7244 = vadd.f32 0.0, %v7243
  %v7245 = vpop.f32.mrf.mxu0
  %v7246 = vpop.f32.mrf.mxu0
  %v7247 = vadd.f32 0.0, %v7246
  %v7248 = vpop.f32.mrf.mxu0
  %7249 = vmatprep.mubr.bf16.mxu0 0
  %7250 = vmatmul.mubr.bf16.gmra.mxu0 %v6922
  %v7251 = vpop.f32.mrf.mxu0
  %v7252 = vadd.f32 0.0, %v7251
  %v7253 = vpop.f32.mrf.mxu0
  %v7254 = vpop.f32.mrf.mxu0
  %v7255 = vadd.f32 0.0, %v7254
  %v7256 = vpop.f32.mrf.mxu0
  %7257 = vmatprep.mubr.bf16.mxu0 0
  %7258 = vmatmul.mubr.bf16.gmra.mxu0 %v6925
  %v7259 = vpop.f32.mrf.mxu0
  %v7260 = vadd.f32 0.0, %v7259
  %v7261 = vpop.f32.mrf.mxu0
  %v7262 = vpop.f32.mrf.mxu0
  %v7263 = vadd.f32 0.0, %v7262
  %v7264 = vpop.f32.mrf.mxu0
  %7265 = vmatprep.mubr.bf16.mxu0 0
  %7266 = vmatmul.mubr.bf16.gmra.mxu0 %v6928
  %v7267 = vpop.f32.mrf.mxu0
  %v7268 = vadd.f32 0.0, %v7267
  %v7269 = vpop.f32.mrf.mxu0
  %v7270 = vpop.f32.mrf.mxu0
  %v7271 = vadd.f32 0.0, %v7270
  %v7272 = vpop.f32.mrf.mxu0
  %7273 = vmatprep.mubr.bf16.mxu0 0
  %7274 = vmatmul.mubr.bf16.gmra.mxu0 %v6931
  %v7275 = vpop.f32.mrf.mxu0
  %v7276 = vadd.f32 0.0, %v7275
  %v7277 = vpop.f32.mrf.mxu0
  %v7278 = vpop.f32.mrf.mxu0
  %v7279 = vadd.f32 0.0, %v7278
  %v7280 = vpop.f32.mrf.mxu0
  %7281 = vmatprep.mubr.bf16.mxu0 0
  %7282 = vmatmul.mubr.bf16.gmra.mxu0 %v6934
  %v7283 = vpop.f32.mrf.mxu0
  %v7284 = vadd.f32 0.0, %v7283
  %v7285 = vpop.f32.mrf.mxu0
  %v7286 = vpop.f32.mrf.mxu0
  %v7287 = vadd.f32 0.0, %v7286
  %v7288 = vpop.f32.mrf.mxu0
  %7289 = vmatprep.mubr.bf16.mxu0 0
  %7290 = vmatmul.mubr.bf16.gmra.mxu0 %v6937
  %v7291 = vpop.f32.mrf.mxu0
  %v7292 = vadd.f32 0.0, %v7291
  %v7293 = vpop.f32.mrf.mxu0
  %v7294 = vpop.f32.mrf.mxu0
  %v7295 = vadd.f32 0.0, %v7294
  %v7296 = vpop.f32.mrf.mxu0
  %7297 = vmatprep.mubr.bf16.mxu0 0
  %7298 = vmatmul.mubr.bf16.gmra.mxu0 %v6940
  %v7299 = vpop.f32.mrf.mxu0
  %v7300 = vadd.f32 0.0, %v7299
  %v7301 = vpop.f32.mrf.mxu0
  %v7302 = vpop.f32.mrf.mxu0
  %v7303 = vpop.f32.mrf.mxu0
  %7304 = vdwg.mxu0
  %v7305 = vadd.f32 %v6614, %v6980
  %v7306 = vadd.f32 %v6615, %v6983
  %v7307 = vadd.f32 %v6616, %v6988
  %v7308 = vadd.f32 %v6617, %v6991
  %v7309 = vadd.f32 %v6618, %v6996
  %v7310 = vadd.f32 %v6619, %v6999
  %v7311 = vadd.f32 %v6620, %v7004
  %v7312 = vadd.f32 %v6621, %v7007
  %v7313 = vadd.f32 %v6622, %v7012
  %v7314 = vadd.f32 %v6623, %v7015
  %v7315 = vadd.f32 %v6624, %v7020
  %v7316 = vadd.f32 %v6625, %v7023
  %v7317 = vadd.f32 %v6626, %v7028
  %v7318 = vadd.f32 %v6627, %v7031
  %v7319 = vadd.f32 %v6628, %v7036
  %v7320 = vadd.f32 %v6629, %v7039
  %v7321 = vadd.f32 %v6630, %v7044
  %v7322 = vadd.f32 %v6631, %v7047
  %v7323 = vadd.f32 %v6632, %v7052
  %v7324 = vadd.f32 %v6633, %v7055
  %v7325 = vadd.f32 %v6634, %v7060
  %v7326 = vadd.f32 %v6635, %v7063
  %v7327 = vadd.f32 %v6636, %v7068
  %v7328 = vadd.f32 %v6637, %v7071
  %v7329 = vadd.f32 %v6638, %v7076
  %v7330 = vadd.f32 %v6639, %v7079
  %v7331 = vadd.f32 %v6640, %v7084
  %v7332 = vadd.f32 %v6641, %v7087
  %v7333 = vadd.f32 %v6642, %v7092
  %v7334 = vadd.f32 %v6643, %v7095
  %v7335 = vadd.f32 %v6644, %v7100
  %v7336 = vadd.f32 %v6645, %v7103
  %v7337 = vadd.f32 %v6646, %v7108
  %v7338 = vadd.f32 %v6647, %v7111
  %v7339 = vadd.f32 %v6648, %v7116
  %v7340 = vadd.f32 %v6649, %v7119
  %v7341 = vadd.f32 %v6650, %v7124
  %v7342 = vadd.f32 %v6651, %v7127
  %v7343 = vadd.f32 %v6652, %v7132
  %v7344 = vadd.f32 %v6653, %v7135
  %v7345 = vadd.f32 %v6654, %v7140
  %v7346 = vadd.f32 %v6655, %v7143
  %v7347 = vadd.f32 %v6656, %v7148
  %v7348 = vadd.f32 %v6657, %v7151
  %v7349 = vadd.f32 %v6658, %v7156
  %v7350 = vadd.f32 %v6659, %v7159
  %v7351 = vadd.f32 %v6660, %v7164
  %v7352 = vadd.f32 %v6661, %v7167
  %v7353 = vadd.f32 %v6662, %v7172
  %v7354 = vadd.f32 %v6663, %v7175
  %v7355 = vadd.f32 %v6664, %v7180
  %v7356 = vadd.f32 %v6665, %v7183
  %v7357 = vadd.f32 %v6666, %v7188
  %v7358 = vadd.f32 %v6667, %v7191
  %v7359 = vadd.f32 %v6668, %v7196
  %v7360 = vadd.f32 %v6669, %v7199
  %v7361 = vadd.f32 %v6670, %v7204
  %v7362 = vadd.f32 %v6671, %v7207
  %v7363 = vadd.f32 %v6672, %v7212
  %v7364 = vadd.f32 %v6673, %v7215
  %v7365 = vadd.f32 %v6674, %v7220
  %v7366 = vadd.f32 %v6675, %v7223
  %v7367 = vadd.f32 %v6676, %v7228
  %v7368 = vadd.f32 %v6677, %v7231
  %v7369 = vadd.f32 %v6678, %v7236
  %v7370 = vadd.f32 %v6679, %v7239
  %v7371 = vadd.f32 %v6680, %v7244
  %v7372 = vadd.f32 %v6681, %v7247
  %v7373 = vadd.f32 %v6682, %v7252
  %v7374 = vadd.f32 %v6683, %v7255
  %v7375 = vadd.f32 %v6684, %v7260
  %v7376 = vadd.f32 %v6685, %v7263
  %v7377 = vadd.f32 %v6686, %v7268
  %v7378 = vadd.f32 %v6687, %v7271
  %v7379 = vadd.f32 %v6688, %v7276
  %v7380 = vadd.f32 %v6689, %v7279
  %v7381 = vadd.f32 %v6690, %v7284
  %v7382 = vadd.f32 %v6691, %v7287
  %v7383 = vadd.f32 %v6692, %v7292
  %v7384 = vadd.f32 %v6693, %v7295
  %v7385 = vadd.f32 %v6694, %v7300
  %v7386 = vld [vmem:[#allocation2 + $0x25] sm:$0xff]
  %v7387 = vld [vmem:[#allocation2 + $0x2d] sm:$0xff]
  %v7388 = vld [vmem:[#allocation2 + $0x35] sm:$0xff]
  %v7389 = vld [vmem:[#allocation2 + $0x3d] sm:$0xff]
  %v7390 = vld [vmem:[#allocation2 + $0x45] sm:$0xff]
  %v7391 = vld [vmem:[#allocation2 + $0x4d] sm:$0xff]
  %v7392 = vld [vmem:[#allocation2 + $0x55] sm:$0xff]
  %v7393 = vld [vmem:[#allocation2 + $0x5d] sm:$0xff]
  %v7394 = vld [vmem:[#allocation2 + $0x65] sm:$0xff]
  %v7395 = vld [vmem:[#allocation2 + $0x6d] sm:$0xff]
  %v7396 = vld [vmem:[#allocation2 + $0x75] sm:$0xff]
  %v7397 = vld [vmem:[#allocation2 + $0x7d] sm:$0xff]
  %v7398 = vld [vmem:[#allocation2 + $0x85] sm:$0xff]
  %v7399 = vld [vmem:[#allocation2 + $0x8d] sm:$0xff]
  %v7400 = vld [vmem:[#allocation2 + $0x95] sm:$0xff]
  %v7401 = vld [vmem:[#allocation2 + $0x9d] sm:$0xff]
  %v7402 = vld [vmem:[#allocation2 + $0xa5] sm:$0xff]
  %v7403 = vld [vmem:[#allocation2 + $0xad] sm:$0xff]
  %v7404 = vld [vmem:[#allocation2 + $0xb5] sm:$0xff]
  %v7405 = vld [vmem:[#allocation2 + $0xbd] sm:$0xff]
  %v7406 = vld [vmem:[#allocation2 + $0xc5] sm:$0xff]
  %v7407 = vld [vmem:[#allocation2 + $0xcd] sm:$0xff]
  %v7408 = vld [vmem:[#allocation2 + $0xd5] sm:$0xff]
  %v7409 = vld [vmem:[#allocation2 + $0xdd] sm:$0xff]
  %v7410 = vld [vmem:[#allocation2 + $0xe5] sm:$0xff]
  %v7411 = vld [vmem:[#allocation2 + $0xed] sm:$0xff]
  %v7412 = vld [vmem:[#allocation2 + $0xf5] sm:$0xff]
  %v7413 = vld [vmem:[#allocation2 + $0xfd] sm:$0xff]
  %v7414 = vld [vmem:[#allocation2 + $0x105] sm:$0xff]
  %v7415 = vld [vmem:[#allocation2 + $0x10d] sm:$0xff]
  %v7416 = vld [vmem:[#allocation2 + $0x115] sm:$0xff]
  %v7417 = vld [vmem:[#allocation2 + $0x11d] sm:$0xff]
  %v7418 = vld [vmem:[#allocation2 + $0x125] sm:$0xff]
  %v7419 = vld [vmem:[#allocation2 + $0x12d] sm:$0xff]
  %v7420 = vld [vmem:[#allocation2 + $0x135] sm:$0xff]
  %v7421 = vld [vmem:[#allocation2 + $0x13d] sm:$0xff]
  %v7422 = vld [vmem:[#allocation2 + $0x145] sm:$0xff]
  %v7423 = vld [vmem:[#allocation2 + $0x14d] sm:$0xff]
  %v7424 = vld [vmem:[#allocation2 + $0x155] sm:$0xff]
  %v7425 = vld [vmem:[#allocation2 + $0x15d] sm:$0xff]
  %v7426 = vld [vmem:[#allocation2 + $0x165] sm:$0xff]
  %v7427 = vld [vmem:[#allocation2 + $0x16d] sm:$0xff]
  %v7428 = vld [vmem:[#allocation2 + $0x175] sm:$0xff]
  %v7429 = vld [vmem:[#allocation2 + $0x17d] sm:$0xff]
  %v7430 = vld [vmem:[#allocation2 + $0x185] sm:$0xff]
  %v7431 = vld [vmem:[#allocation2 + $0x18d] sm:$0xff]
  %v7432 = vld [vmem:[#allocation2 + $0x195] sm:$0xff]
  %v7433 = vld [vmem:[#allocation2 + $0x19d] sm:$0xff]
  %v7434 = vld [vmem:[#allocation2 + $0x1a5] sm:$0xff]
  %v7435 = vld [vmem:[#allocation2 + $0x1ad] sm:$0xff]
  %v7436 = vld [vmem:[#allocation2 + $0x1b5] sm:$0xff]
  %v7437 = vld [vmem:[#allocation2 + $0x1bd] sm:$0xff]
  %v7438 = vld [vmem:[#allocation2 + $0x1c5] sm:$0xff]
  %v7439 = vld [vmem:[#allocation2 + $0x1cd] sm:$0xff]
  %v7440 = vld [vmem:[#allocation2 + $0x1d5] sm:$0xff]
  %v7441 = vld [vmem:[#allocation2 + $0x1dd] sm:$0xff]
  %v7442 = vld [vmem:[#allocation2 + $0x1e5] sm:$0xff]
  %v7443 = vld [vmem:[#allocation2 + $0x1ed] sm:$0xff]
  %v7444 = vld [vmem:[#allocation2 + $0x1f5] sm:$0xff]
  %v7445 = vld [vmem:[#allocation2 + $0x1fd] sm:$0xff]
  %v7446 = vld [vmem:[#allocation2 + $0x205] sm:$0xff]
  %v7447 = vld [vmem:[#allocation2 + $0x20d] sm:$0xff]
  %v7448 = vld [vmem:[#allocation2 + $0x215] sm:$0xff]
  %v7449 = vld [vmem:[#allocation2 + $0x21d] sm:$0xff]
  %v7450 = vld [vmem:[#allocation2 + $0x225] sm:$0xff]
  %v7451 = vld [vmem:[#allocation2 + $0x22d] sm:$0xff]
  %v7452 = vld [vmem:[#allocation2 + $0x235] sm:$0xff]
  %v7453 = vld [vmem:[#allocation2 + $0x23d] sm:$0xff]
  %v7454 = vld [vmem:[#allocation2 + $0x245] sm:$0xff]
  %v7455 = vld [vmem:[#allocation2 + $0x24d] sm:$0xff]
  %v7456 = vld [vmem:[#allocation2 + $0x255] sm:$0xff]
  %v7457 = vld [vmem:[#allocation2 + $0x25d] sm:$0xff]
  %v7458 = vld [vmem:[#allocation2 + $0x265] sm:$0xff]
  %v7459 = vld [vmem:[#allocation2 + $0x26d] sm:$0xff]
  %v7460 = vld [vmem:[#allocation2 + $0x275] sm:$0xff]
  %v7461 = vld [vmem:[#allocation2 + $0x27d] sm:$0xff]
  %v7462 = vld [vmem:[#allocation2 + $0x285] sm:$0xff]
  %v7463 = vld [vmem:[#allocation2 + $0x28d] sm:$0xff]
  %v7464 = vld [vmem:[#allocation2 + $0x295] sm:$0xff]
  %v7465 = vld [vmem:[#allocation2 + $0x29d] sm:$0xff]
  %v7466 = vld [vmem:[#allocation2 + $0x2a5] sm:$0xff]
  %v7467 = vpack.c.bf16 %v7387, %v7386
  %v7468 = vpack.c.bf16 %v7389, %v7388
  %v7469 = vpack.c.bf16 %v7391, %v7390
  %v7470 = vpack.c.bf16 %v7393, %v7392
  %v7471 = vpack.c.bf16 %v7395, %v7394
  %v7472 = vpack.c.bf16 %v7397, %v7396
  %v7473 = vpack.c.bf16 %v7399, %v7398
  %v7474 = vpack.c.bf16 %v7401, %v7400
  %v7475 = vpack.c.bf16 %v7403, %v7402
  %v7476 = vpack.c.bf16 %v7405, %v7404
  %v7477 = vpack.c.bf16 %v7407, %v7406
  %v7478 = vpack.c.bf16 %v7409, %v7408
  %v7479 = vpack.c.bf16 %v7411, %v7410
  %v7480 = vpack.c.bf16 %v7413, %v7412
  %v7481 = vpack.c.bf16 %v7415, %v7414
  %v7482 = vpack.c.bf16 %v7417, %v7416
  %v7483 = vpack.c.bf16 %v7419, %v7418
  %v7484 = vpack.c.bf16 %v7421, %v7420
  %v7485 = vpack.c.bf16 %v7423, %v7422
  %v7486 = vpack.c.bf16 %v7425, %v7424
  %v7487 = vpack.c.bf16 %v7427, %v7426
  %v7488 = vpack.c.bf16 %v7429, %v7428
  %v7489 = vpack.c.bf16 %v7431, %v7430
  %v7490 = vpack.c.bf16 %v7433, %v7432
  %v7491 = vpack.c.bf16 %v7435, %v7434
  %v7492 = vpack.c.bf16 %v7437, %v7436
  %v7493 = vpack.c.bf16 %v7439, %v7438
  %v7494 = vpack.c.bf16 %v7441, %v7440
  %v7495 = vpack.c.bf16 %v7443, %v7442
  %v7496 = vpack.c.bf16 %v7445, %v7444
  %v7497 = vpack.c.bf16 %v7447, %v7446
  %v7498 = vpack.c.bf16 %v7449, %v7448
  %v7499 = vpack.c.bf16 %v7451, %v7450
  %v7500 = vpack.c.bf16 %v7453, %v7452
  %v7501 = vpack.c.bf16 %v7455, %v7454
  %v7502 = vpack.c.bf16 %v7457, %v7456
  %v7503 = vpack.c.bf16 %v7459, %v7458
  %v7504 = vpack.c.bf16 %v7461, %v7460
  %v7505 = vpack.c.bf16 %v7463, %v7462
  %v7506 = vpack.c.bf16 %v7465, %v7464
  %v7507 = vpack.c.bf16 %v7466, %v7466
  %s7508 = scalar_lea.vmem %s7, 28
  %v7509 = vld [vmem:[%s7508] sm:$0xf]
  %v7511 = vsel %vm361, %v7467, 0
  %v7514 = vsel %vm361, %v7468, 0
  %v7517 = vsel %vm361, %v7469, 0
  %v7520 = vsel %vm361, %v7470, 0
  %v7523 = vsel %vm361, %v7471, 0
  %v7526 = vsel %vm361, %v7472, 0
  %v7529 = vsel %vm361, %v7473, 0
  %v7532 = vsel %vm361, %v7474, 0
  %v7535 = vsel %vm361, %v7475, 0
  %v7538 = vsel %vm361, %v7476, 0
  %v7541 = vsel %vm361, %v7477, 0
  %v7544 = vsel %vm361, %v7478, 0
  %v7547 = vsel %vm361, %v7479, 0
  %v7550 = vsel %vm361, %v7480, 0
  %v7553 = vsel %vm361, %v7481, 0
  %v7556 = vsel %vm361, %v7482, 0
  %v7559 = vsel %vm361, %v7483, 0
  %v7562 = vsel %vm361, %v7484, 0
  %v7565 = vsel %vm361, %v7485, 0
  %v7568 = vsel %vm361, %v7486, 0
  %v7571 = vsel %vm361, %v7487, 0
  %v7574 = vsel %vm361, %v7488, 0
  %v7577 = vsel %vm361, %v7489, 0
  %v7580 = vsel %vm361, %v7490, 0
  %v7583 = vsel %vm361, %v7491, 0
  %v7586 = vsel %vm361, %v7492, 0
  %v7589 = vsel %vm361, %v7493, 0
  %v7592 = vsel %vm361, %v7494, 0
  %v7595 = vsel %vm361, %v7495, 0
  %v7598 = vsel %vm361, %v7496, 0
  %v7601 = vsel %vm361, %v7497, 0
  %v7604 = vsel %vm361, %v7498, 0
  %v7607 = vsel %vm361, %v7499, 0
  %v7610 = vsel %vm361, %v7500, 0
  %v7613 = vsel %vm361, %v7501, 0
  %v7616 = vsel %vm361, %v7502, 0
  %v7619 = vsel %vm361, %v7503, 0
  %v7622 = vsel %vm361, %v7504, 0
  %v7625 = vsel %vm361, %v7505, 0
  %v7628 = vsel %vm361, %v7506, 0
  %v7631 = vsel %vm361, %v7507, 0
  %v7634 = vsel %vm491, %v7509, 0
  %7636 = vmatprep.subr.bf16.mxu0 0
  %7637 = vmatpush1.bf16.msra.mxu0 0
  %7638 = vmatprep.subr.bf16.mxu0 0
  %7639 = vmatpush1.bf16.msra.mxu0 0
  %7640 = vmatprep.subr.bf16.mxu0 0
  %7641 = vmatpush1.bf16.msra.mxu0 0
  %7642 = vmatprep.subr.bf16.mxu0 0
  %7643 = vmatpush1.bf16.msra.mxu0 0
  %7644 = vmatprep.subr.bf16.mxu0 0
  %7645 = vmatpush1.bf16.msra.mxu0 0
  %7646 = vmatprep.subr.bf16.mxu0 0
  %7647 = vmatpush1.bf16.msra.mxu0 0
  %7648 = vmatprep.subr.bf16.mxu0 0
  %7649 = vmatpush1.bf16.msra.mxu0 0
  %7650 = vmatprep.subr.bf16.mxu0 0
  %7651 = vmatpush1.bf16.msra.mxu0 %v7634
  %7652 = vmatprep.subr.bf16.mxu0 0
  %7653 = vmatpush2.bf16.msra.mxu0 0
  %7654 = vmatprep.subr.bf16.mxu0 0
  %7655 = vmatpush2.bf16.msra.mxu0 0
  %7656 = vmatprep.subr.bf16.mxu0 0
  %7657 = vmatpush2.bf16.msra.mxu0 0
  %7658 = vmatprep.subr.bf16.mxu0 0
  %7659 = vmatpush2.bf16.msra.mxu0 0
  %7660 = vmatprep.subr.bf16.mxu0 0
  %7661 = vmatpush2.bf16.msra.mxu0 0
  %7662 = vmatprep.subr.bf16.mxu0 0
  %7663 = vmatpush2.bf16.msra.mxu0 0
  %7664 = vmatprep.subr.bf16.mxu0 0
  %7665 = vmatpush2.bf16.msra.mxu0 0
  %7666 = vmatprep.subr.bf16.mxu0 0
  %7667 = vmatpush2.bf16.msra.mxu0 0
  %7668 = vmatprep.mubr.bf16.mxu0 0
  %7669 = vmatmul.mubr.bf16.gmra.mxu0 %v7511
  %v7670 = vpop.f32.mrf.mxu0
  %v7671 = vadd.f32 0.0, %v7670
  %v7672 = vpop.f32.mrf.mxu0
  %v7673 = vpop.f32.mrf.mxu0
  %v7674 = vadd.f32 0.0, %v7673
  %v7675 = vpop.f32.mrf.mxu0
  %7676 = vmatprep.mubr.bf16.mxu0 0
  %7677 = vmatmul.mubr.bf16.gmra.mxu0 %v7514
  %v7678 = vpop.f32.mrf.mxu0
  %v7679 = vadd.f32 0.0, %v7678
  %v7680 = vpop.f32.mrf.mxu0
  %v7681 = vpop.f32.mrf.mxu0
  %v7682 = vadd.f32 0.0, %v7681
  %v7683 = vpop.f32.mrf.mxu0
  %7684 = vmatprep.mubr.bf16.mxu0 0
  %7685 = vmatmul.mubr.bf16.gmra.mxu0 %v7517
  %v7686 = vpop.f32.mrf.mxu0
  %v7687 = vadd.f32 0.0, %v7686
  %v7688 = vpop.f32.mrf.mxu0
  %v7689 = vpop.f32.mrf.mxu0
  %v7690 = vadd.f32 0.0, %v7689
  %v7691 = vpop.f32.mrf.mxu0
  %7692 = vmatprep.mubr.bf16.mxu0 0
  %7693 = vmatmul.mubr.bf16.gmra.mxu0 %v7520
  %v7694 = vpop.f32.mrf.mxu0
  %v7695 = vadd.f32 0.0, %v7694
  %v7696 = vpop.f32.mrf.mxu0
  %v7697 = vpop.f32.mrf.mxu0
  %v7698 = vadd.f32 0.0, %v7697
  %v7699 = vpop.f32.mrf.mxu0
  %7700 = vmatprep.mubr.bf16.mxu0 0
  %7701 = vmatmul.mubr.bf16.gmra.mxu0 %v7523
  %v7702 = vpop.f32.mrf.mxu0
  %v7703 = vadd.f32 0.0, %v7702
  %v7704 = vpop.f32.mrf.mxu0
  %v7705 = vpop.f32.mrf.mxu0
  %v7706 = vadd.f32 0.0, %v7705
  %v7707 = vpop.f32.mrf.mxu0
  %7708 = vmatprep.mubr.bf16.mxu0 0
  %7709 = vmatmul.mubr.bf16.gmra.mxu0 %v7526
  %v7710 = vpop.f32.mrf.mxu0
  %v7711 = vadd.f32 0.0, %v7710
  %v7712 = vpop.f32.mrf.mxu0
  %v7713 = vpop.f32.mrf.mxu0
  %v7714 = vadd.f32 0.0, %v7713
  %v7715 = vpop.f32.mrf.mxu0
  %7716 = vmatprep.mubr.bf16.mxu0 0
  %7717 = vmatmul.mubr.bf16.gmra.mxu0 %v7529
  %v7718 = vpop.f32.mrf.mxu0
  %v7719 = vadd.f32 0.0, %v7718
  %v7720 = vpop.f32.mrf.mxu0
  %v7721 = vpop.f32.mrf.mxu0
  %v7722 = vadd.f32 0.0, %v7721
  %v7723 = vpop.f32.mrf.mxu0
  %7724 = vmatprep.mubr.bf16.mxu0 0
  %7725 = vmatmul.mubr.bf16.gmra.mxu0 %v7532
  %v7726 = vpop.f32.mrf.mxu0
  %v7727 = vadd.f32 0.0, %v7726
  %v7728 = vpop.f32.mrf.mxu0
  %v7729 = vpop.f32.mrf.mxu0
  %v7730 = vadd.f32 0.0, %v7729
  %v7731 = vpop.f32.mrf.mxu0
  %7732 = vmatprep.mubr.bf16.mxu0 0
  %7733 = vmatmul.mubr.bf16.gmra.mxu0 %v7535
  %v7734 = vpop.f32.mrf.mxu0
  %v7735 = vadd.f32 0.0, %v7734
  %v7736 = vpop.f32.mrf.mxu0
  %v7737 = vpop.f32.mrf.mxu0
  %v7738 = vadd.f32 0.0, %v7737
  %v7739 = vpop.f32.mrf.mxu0
  %7740 = vmatprep.mubr.bf16.mxu0 0
  %7741 = vmatmul.mubr.bf16.gmra.mxu0 %v7538
  %v7742 = vpop.f32.mrf.mxu0
  %v7743 = vadd.f32 0.0, %v7742
  %v7744 = vpop.f32.mrf.mxu0
  %v7745 = vpop.f32.mrf.mxu0
  %v7746 = vadd.f32 0.0, %v7745
  %v7747 = vpop.f32.mrf.mxu0
  %7748 = vmatprep.mubr.bf16.mxu0 0
  %7749 = vmatmul.mubr.bf16.gmra.mxu0 %v7541
  %v7750 = vpop.f32.mrf.mxu0
  %v7751 = vadd.f32 0.0, %v7750
  %v7752 = vpop.f32.mrf.mxu0
  %v7753 = vpop.f32.mrf.mxu0
  %v7754 = vadd.f32 0.0, %v7753
  %v7755 = vpop.f32.mrf.mxu0
  %7756 = vmatprep.mubr.bf16.mxu0 0
  %7757 = vmatmul.mubr.bf16.gmra.mxu0 %v7544
  %v7758 = vpop.f32.mrf.mxu0
  %v7759 = vadd.f32 0.0, %v7758
  %v7760 = vpop.f32.mrf.mxu0
  %v7761 = vpop.f32.mrf.mxu0
  %v7762 = vadd.f32 0.0, %v7761
  %v7763 = vpop.f32.mrf.mxu0
  %7764 = vmatprep.mubr.bf16.mxu0 0
  %7765 = vmatmul.mubr.bf16.gmra.mxu0 %v7547
  %v7766 = vpop.f32.mrf.mxu0
  %v7767 = vadd.f32 0.0, %v7766
  %v7768 = vpop.f32.mrf.mxu0
  %v7769 = vpop.f32.mrf.mxu0
  %v7770 = vadd.f32 0.0, %v7769
  %v7771 = vpop.f32.mrf.mxu0
  %7772 = vmatprep.mubr.bf16.mxu0 0
  %7773 = vmatmul.mubr.bf16.gmra.mxu0 %v7550
  %v7774 = vpop.f32.mrf.mxu0
  %v7775 = vadd.f32 0.0, %v7774
  %v7776 = vpop.f32.mrf.mxu0
  %v7777 = vpop.f32.mrf.mxu0
  %v7778 = vadd.f32 0.0, %v7777
  %v7779 = vpop.f32.mrf.mxu0
  %7780 = vmatprep.mubr.bf16.mxu0 0
  %7781 = vmatmul.mubr.bf16.gmra.mxu0 %v7553
  %v7782 = vpop.f32.mrf.mxu0
  %v7783 = vadd.f32 0.0, %v7782
  %v7784 = vpop.f32.mrf.mxu0
  %v7785 = vpop.f32.mrf.mxu0
  %v7786 = vadd.f32 0.0, %v7785
  %v7787 = vpop.f32.mrf.mxu0
  %7788 = vmatprep.mubr.bf16.mxu0 0
  %7789 = vmatmul.mubr.bf16.gmra.mxu0 %v7556
  %v7790 = vpop.f32.mrf.mxu0
  %v7791 = vadd.f32 0.0, %v7790
  %v7792 = vpop.f32.mrf.mxu0
  %v7793 = vpop.f32.mrf.mxu0
  %v7794 = vadd.f32 0.0, %v7793
  %v7795 = vpop.f32.mrf.mxu0
  %7796 = vmatprep.mubr.bf16.mxu0 0
  %7797 = vmatmul.mubr.bf16.gmra.mxu0 %v7559
  %v7798 = vpop.f32.mrf.mxu0
  %v7799 = vadd.f32 0.0, %v7798
  %v7800 = vpop.f32.mrf.mxu0
  %v7801 = vpop.f32.mrf.mxu0
  %v7802 = vadd.f32 0.0, %v7801
  %v7803 = vpop.f32.mrf.mxu0
  %7804 = vmatprep.mubr.bf16.mxu0 0
  %7805 = vmatmul.mubr.bf16.gmra.mxu0 %v7562
  %v7806 = vpop.f32.mrf.mxu0
  %v7807 = vadd.f32 0.0, %v7806
  %v7808 = vpop.f32.mrf.mxu0
  %v7809 = vpop.f32.mrf.mxu0
  %v7810 = vadd.f32 0.0, %v7809
  %v7811 = vpop.f32.mrf.mxu0
  %7812 = vmatprep.mubr.bf16.mxu0 0
  %7813 = vmatmul.mubr.bf16.gmra.mxu0 %v7565
  %v7814 = vpop.f32.mrf.mxu0
  %v7815 = vadd.f32 0.0, %v7814
  %v7816 = vpop.f32.mrf.mxu0
  %v7817 = vpop.f32.mrf.mxu0
  %v7818 = vadd.f32 0.0, %v7817
  %v7819 = vpop.f32.mrf.mxu0
  %7820 = vmatprep.mubr.bf16.mxu0 0
  %7821 = vmatmul.mubr.bf16.gmra.mxu0 %v7568
  %v7822 = vpop.f32.mrf.mxu0
  %v7823 = vadd.f32 0.0, %v7822
  %v7824 = vpop.f32.mrf.mxu0
  %v7825 = vpop.f32.mrf.mxu0
  %v7826 = vadd.f32 0.0, %v7825
  %v7827 = vpop.f32.mrf.mxu0
  %7828 = vmatprep.mubr.bf16.mxu0 0
  %7829 = vmatmul.mubr.bf16.gmra.mxu0 %v7571
  %v7830 = vpop.f32.mrf.mxu0
  %v7831 = vadd.f32 0.0, %v7830
  %v7832 = vpop.f32.mrf.mxu0
  %v7833 = vpop.f32.mrf.mxu0
  %v7834 = vadd.f32 0.0, %v7833
  %v7835 = vpop.f32.mrf.mxu0
  %7836 = vmatprep.mubr.bf16.mxu0 0
  %7837 = vmatmul.mubr.bf16.gmra.mxu0 %v7574
  %v7838 = vpop.f32.mrf.mxu0
  %v7839 = vadd.f32 0.0, %v7838
  %v7840 = vpop.f32.mrf.mxu0
  %v7841 = vpop.f32.mrf.mxu0
  %v7842 = vadd.f32 0.0, %v7841
  %v7843 = vpop.f32.mrf.mxu0
  %7844 = vmatprep.mubr.bf16.mxu0 0
  %7845 = vmatmul.mubr.bf16.gmra.mxu0 %v7577
  %v7846 = vpop.f32.mrf.mxu0
  %v7847 = vadd.f32 0.0, %v7846
  %v7848 = vpop.f32.mrf.mxu0
  %v7849 = vpop.f32.mrf.mxu0
  %v7850 = vadd.f32 0.0, %v7849
  %v7851 = vpop.f32.mrf.mxu0
  %7852 = vmatprep.mubr.bf16.mxu0 0
  %7853 = vmatmul.mubr.bf16.gmra.mxu0 %v7580
  %v7854 = vpop.f32.mrf.mxu0
  %v7855 = vadd.f32 0.0, %v7854
  %v7856 = vpop.f32.mrf.mxu0
  %v7857 = vpop.f32.mrf.mxu0
  %v7858 = vadd.f32 0.0, %v7857
  %v7859 = vpop.f32.mrf.mxu0
  %7860 = vmatprep.mubr.bf16.mxu0 0
  %7861 = vmatmul.mubr.bf16.gmra.mxu0 %v7583
  %v7862 = vpop.f32.mrf.mxu0
  %v7863 = vadd.f32 0.0, %v7862
  %v7864 = vpop.f32.mrf.mxu0
  %v7865 = vpop.f32.mrf.mxu0
  %v7866 = vadd.f32 0.0, %v7865
  %v7867 = vpop.f32.mrf.mxu0
  %7868 = vmatprep.mubr.bf16.mxu0 0
  %7869 = vmatmul.mubr.bf16.gmra.mxu0 %v7586
  %v7870 = vpop.f32.mrf.mxu0
  %v7871 = vadd.f32 0.0, %v7870
  %v7872 = vpop.f32.mrf.mxu0
  %v7873 = vpop.f32.mrf.mxu0
  %v7874 = vadd.f32 0.0, %v7873
  %v7875 = vpop.f32.mrf.mxu0
  %7876 = vmatprep.mubr.bf16.mxu0 0
  %7877 = vmatmul.mubr.bf16.gmra.mxu0 %v7589
  %v7878 = vpop.f32.mrf.mxu0
  %v7879 = vadd.f32 0.0, %v7878
  %v7880 = vpop.f32.mrf.mxu0
  %v7881 = vpop.f32.mrf.mxu0
  %v7882 = vadd.f32 0.0, %v7881
  %v7883 = vpop.f32.mrf.mxu0
  %7884 = vmatprep.mubr.bf16.mxu0 0
  %7885 = vmatmul.mubr.bf16.gmra.mxu0 %v7592
  %v7886 = vpop.f32.mrf.mxu0
  %v7887 = vadd.f32 0.0, %v7886
  %v7888 = vpop.f32.mrf.mxu0
  %v7889 = vpop.f32.mrf.mxu0
  %v7890 = vadd.f32 0.0, %v7889
  %v7891 = vpop.f32.mrf.mxu0
  %7892 = vmatprep.mubr.bf16.mxu0 0
  %7893 = vmatmul.mubr.bf16.gmra.mxu0 %v7595
  %v7894 = vpop.f32.mrf.mxu0
  %v7895 = vadd.f32 0.0, %v7894
  %v7896 = vpop.f32.mrf.mxu0
  %v7897 = vpop.f32.mrf.mxu0
  %v7898 = vadd.f32 0.0, %v7897
  %v7899 = vpop.f32.mrf.mxu0
  %7900 = vmatprep.mubr.bf16.mxu0 0
  %7901 = vmatmul.mubr.bf16.gmra.mxu0 %v7598
  %v7902 = vpop.f32.mrf.mxu0
  %v7903 = vadd.f32 0.0, %v7902
  %v7904 = vpop.f32.mrf.mxu0
  %v7905 = vpop.f32.mrf.mxu0
  %v7906 = vadd.f32 0.0, %v7905
  %v7907 = vpop.f32.mrf.mxu0
  %7908 = vmatprep.mubr.bf16.mxu0 0
  %7909 = vmatmul.mubr.bf16.gmra.mxu0 %v7601
  %v7910 = vpop.f32.mrf.mxu0
  %v7911 = vadd.f32 0.0, %v7910
  %v7912 = vpop.f32.mrf.mxu0
  %v7913 = vpop.f32.mrf.mxu0
  %v7914 = vadd.f32 0.0, %v7913
  %v7915 = vpop.f32.mrf.mxu0
  %7916 = vmatprep.mubr.bf16.mxu0 0
  %7917 = vmatmul.mubr.bf16.gmra.mxu0 %v7604
  %v7918 = vpop.f32.mrf.mxu0
  %v7919 = vadd.f32 0.0, %v7918
  %v7920 = vpop.f32.mrf.mxu0
  %v7921 = vpop.f32.mrf.mxu0
  %v7922 = vadd.f32 0.0, %v7921
  %v7923 = vpop.f32.mrf.mxu0
  %7924 = vmatprep.mubr.bf16.mxu0 0
  %7925 = vmatmul.mubr.bf16.gmra.mxu0 %v7607
  %v7926 = vpop.f32.mrf.mxu0
  %v7927 = vadd.f32 0.0, %v7926
  %v7928 = vpop.f32.mrf.mxu0
  %v7929 = vpop.f32.mrf.mxu0
  %v7930 = vadd.f32 0.0, %v7929
  %v7931 = vpop.f32.mrf.mxu0
  %7932 = vmatprep.mubr.bf16.mxu0 0
  %7933 = vmatmul.mubr.bf16.gmra.mxu0 %v7610
  %v7934 = vpop.f32.mrf.mxu0
  %v7935 = vadd.f32 0.0, %v7934
  %v7936 = vpop.f32.mrf.mxu0
  %v7937 = vpop.f32.mrf.mxu0
  %v7938 = vadd.f32 0.0, %v7937
  %v7939 = vpop.f32.mrf.mxu0
  %7940 = vmatprep.mubr.bf16.mxu0 0
  %7941 = vmatmul.mubr.bf16.gmra.mxu0 %v7613
  %v7942 = vpop.f32.mrf.mxu0
  %v7943 = vadd.f32 0.0, %v7942
  %v7944 = vpop.f32.mrf.mxu0
  %v7945 = vpop.f32.mrf.mxu0
  %v7946 = vadd.f32 0.0, %v7945
  %v7947 = vpop.f32.mrf.mxu0
  %7948 = vmatprep.mubr.bf16.mxu0 0
  %7949 = vmatmul.mubr.bf16.gmra.mxu0 %v7616
  %v7950 = vpop.f32.mrf.mxu0
  %v7951 = vadd.f32 0.0, %v7950
  %v7952 = vpop.f32.mrf.mxu0
  %v7953 = vpop.f32.mrf.mxu0
  %v7954 = vadd.f32 0.0, %v7953
  %v7955 = vpop.f32.mrf.mxu0
  %7956 = vmatprep.mubr.bf16.mxu0 0
  %7957 = vmatmul.mubr.bf16.gmra.mxu0 %v7619
  %v7958 = vpop.f32.mrf.mxu0
  %v7959 = vadd.f32 0.0, %v7958
  %v7960 = vpop.f32.mrf.mxu0
  %v7961 = vpop.f32.mrf.mxu0
  %v7962 = vadd.f32 0.0, %v7961
  %v7963 = vpop.f32.mrf.mxu0
  %7964 = vmatprep.mubr.bf16.mxu0 0
  %7965 = vmatmul.mubr.bf16.gmra.mxu0 %v7622
  %v7966 = vpop.f32.mrf.mxu0
  %v7967 = vadd.f32 0.0, %v7966
  %v7968 = vpop.f32.mrf.mxu0
  %v7969 = vpop.f32.mrf.mxu0
  %v7970 = vadd.f32 0.0, %v7969
  %v7971 = vpop.f32.mrf.mxu0
  %7972 = vmatprep.mubr.bf16.mxu0 0
  %7973 = vmatmul.mubr.bf16.gmra.mxu0 %v7625
  %v7974 = vpop.f32.mrf.mxu0
  %v7975 = vadd.f32 0.0, %v7974
  %v7976 = vpop.f32.mrf.mxu0
  %v7977 = vpop.f32.mrf.mxu0
  %v7978 = vadd.f32 0.0, %v7977
  %v7979 = vpop.f32.mrf.mxu0
  %7980 = vmatprep.mubr.bf16.mxu0 0
  %7981 = vmatmul.mubr.bf16.gmra.mxu0 %v7628
  %v7982 = vpop.f32.mrf.mxu0
  %v7983 = vadd.f32 0.0, %v7982
  %v7984 = vpop.f32.mrf.mxu0
  %v7985 = vpop.f32.mrf.mxu0
  %v7986 = vadd.f32 0.0, %v7985
  %v7987 = vpop.f32.mrf.mxu0
  %7988 = vmatprep.mubr.bf16.mxu0 0
  %7989 = vmatmul.mubr.bf16.gmra.mxu0 %v7631
  %v7990 = vpop.f32.mrf.mxu0
  %v7991 = vadd.f32 0.0, %v7990
  %v7992 = vpop.f32.mrf.mxu0
  %v7993 = vpop.f32.mrf.mxu0
  %v7994 = vpop.f32.mrf.mxu0
  %7995 = vdwg.mxu0
  %v7996 = vadd.f32 %v7305, %v7671
  %v7997 = vadd.f32 %v7306, %v7674
  %v7998 = vadd.f32 %v7307, %v7679
  %v7999 = vadd.f32 %v7308, %v7682
  %v8000 = vadd.f32 %v7309, %v7687
  %v8001 = vadd.f32 %v7310, %v7690
  %v8002 = vadd.f32 %v7311, %v7695
  %v8003 = vadd.f32 %v7312, %v7698
  %v8004 = vadd.f32 %v7313, %v7703
  %v8005 = vadd.f32 %v7314, %v7706
  %v8006 = vadd.f32 %v7315, %v7711
  %v8007 = vadd.f32 %v7316, %v7714
  %v8008 = vadd.f32 %v7317, %v7719
  %v8009 = vadd.f32 %v7318, %v7722
  %v8010 = vadd.f32 %v7319, %v7727
  %v8011 = vadd.f32 %v7320, %v7730
  %v8012 = vadd.f32 %v7321, %v7735
  %v8013 = vadd.f32 %v7322, %v7738
  %v8014 = vadd.f32 %v7323, %v7743
  %v8015 = vadd.f32 %v7324, %v7746
  %v8016 = vadd.f32 %v7325, %v7751
  %v8017 = vadd.f32 %v7326, %v7754
  %v8018 = vadd.f32 %v7327, %v7759
  %v8019 = vadd.f32 %v7328, %v7762
  %v8020 = vadd.f32 %v7329, %v7767
  %v8021 = vadd.f32 %v7330, %v7770
  %v8022 = vadd.f32 %v7331, %v7775
  %v8023 = vadd.f32 %v7332, %v7778
  %v8024 = vadd.f32 %v7333, %v7783
  %v8025 = vadd.f32 %v7334, %v7786
  %v8026 = vadd.f32 %v7335, %v7791
  %v8027 = vadd.f32 %v7336, %v7794
  %v8028 = vadd.f32 %v7337, %v7799
  %v8029 = vadd.f32 %v7338, %v7802
  %v8030 = vadd.f32 %v7339, %v7807
  %v8031 = vadd.f32 %v7340, %v7810
  %v8032 = vadd.f32 %v7341, %v7815
  %v8033 = vadd.f32 %v7342, %v7818
  %v8034 = vadd.f32 %v7343, %v7823
  %v8035 = vadd.f32 %v7344, %v7826
  %v8036 = vadd.f32 %v7345, %v7831
  %v8037 = vadd.f32 %v7346, %v7834
  %v8038 = vadd.f32 %v7347, %v7839
  %v8039 = vadd.f32 %v7348, %v7842
  %v8040 = vadd.f32 %v7349, %v7847
  %v8041 = vadd.f32 %v7350, %v7850
  %v8042 = vadd.f32 %v7351, %v7855
  %v8043 = vadd.f32 %v7352, %v7858
  %v8044 = vadd.f32 %v7353, %v7863
  %v8045 = vadd.f32 %v7354, %v7866
  %v8046 = vadd.f32 %v7355, %v7871
  %v8047 = vadd.f32 %v7356, %v7874
  %v8048 = vadd.f32 %v7357, %v7879
  %v8049 = vadd.f32 %v7358, %v7882
  %v8050 = vadd.f32 %v7359, %v7887
  %v8051 = vadd.f32 %v7360, %v7890
  %v8052 = vadd.f32 %v7361, %v7895
  %v8053 = vadd.f32 %v7362, %v7898
  %v8054 = vadd.f32 %v7363, %v7903
  %v8055 = vadd.f32 %v7364, %v7906
  %v8056 = vadd.f32 %v7365, %v7911
  %v8057 = vadd.f32 %v7366, %v7914
  %v8058 = vadd.f32 %v7367, %v7919
  %v8059 = vadd.f32 %v7368, %v7922
  %v8060 = vadd.f32 %v7369, %v7927
  %v8061 = vadd.f32 %v7370, %v7930
  %v8062 = vadd.f32 %v7371, %v7935
  %v8063 = vadd.f32 %v7372, %v7938
  %v8064 = vadd.f32 %v7373, %v7943
  %v8065 = vadd.f32 %v7374, %v7946
  %v8066 = vadd.f32 %v7375, %v7951
  %v8067 = vadd.f32 %v7376, %v7954
  %v8068 = vadd.f32 %v7377, %v7959
  %v8069 = vadd.f32 %v7378, %v7962
  %v8070 = vadd.f32 %v7379, %v7967
  %v8071 = vadd.f32 %v7380, %v7970
  %v8072 = vadd.f32 %v7381, %v7975
  %v8073 = vadd.f32 %v7382, %v7978
  %v8074 = vadd.f32 %v7383, %v7983
  %v8075 = vadd.f32 %v7384, %v7986
  %v8076 = vadd.f32 %v7385, %v7991
  %v8077 = vld [vmem:[#allocation2 + $0x26] sm:$0xff]
  %v8078 = vld [vmem:[#allocation2 + $0x2e] sm:$0xff]
  %v8079 = vld [vmem:[#allocation2 + $0x36] sm:$0xff]
  %v8080 = vld [vmem:[#allocation2 + $0x3e] sm:$0xff]
  %v8081 = vld [vmem:[#allocation2 + $0x46] sm:$0xff]
  %v8082 = vld [vmem:[#allocation2 + $0x4e] sm:$0xff]
  %v8083 = vld [vmem:[#allocation2 + $0x56] sm:$0xff]
  %v8084 = vld [vmem:[#allocation2 + $0x5e] sm:$0xff]
  %v8085 = vld [vmem:[#allocation2 + $0x66] sm:$0xff]
  %v8086 = vld [vmem:[#allocation2 + $0x6e] sm:$0xff]
  %v8087 = vld [vmem:[#allocation2 + $0x76] sm:$0xff]
  %v8088 = vld [vmem:[#allocation2 + $0x7e] sm:$0xff]
  %v8089 = vld [vmem:[#allocation2 + $0x86] sm:$0xff]
  %v8090 = vld [vmem:[#allocation2 + $0x8e] sm:$0xff]
  %v8091 = vld [vmem:[#allocation2 + $0x96] sm:$0xff]
  %v8092 = vld [vmem:[#allocation2 + $0x9e] sm:$0xff]
  %v8093 = vld [vmem:[#allocation2 + $0xa6] sm:$0xff]
  %v8094 = vld [vmem:[#allocation2 + $0xae] sm:$0xff]
  %v8095 = vld [vmem:[#allocation2 + $0xb6] sm:$0xff]
  %v8096 = vld [vmem:[#allocation2 + $0xbe] sm:$0xff]
  %v8097 = vld [vmem:[#allocation2 + $0xc6] sm:$0xff]
  %v8098 = vld [vmem:[#allocation2 + $0xce] sm:$0xff]
  %v8099 = vld [vmem:[#allocation2 + $0xd6] sm:$0xff]
  %v8100 = vld [vmem:[#allocation2 + $0xde] sm:$0xff]
  %v8101 = vld [vmem:[#allocation2 + $0xe6] sm:$0xff]
  %v8102 = vld [vmem:[#allocation2 + $0xee] sm:$0xff]
  %v8103 = vld [vmem:[#allocation2 + $0xf6] sm:$0xff]
  %v8104 = vld [vmem:[#allocation2 + $0xfe] sm:$0xff]
  %v8105 = vld [vmem:[#allocation2 + $0x106] sm:$0xff]
  %v8106 = vld [vmem:[#allocation2 + $0x10e] sm:$0xff]
  %v8107 = vld [vmem:[#allocation2 + $0x116] sm:$0xff]
  %v8108 = vld [vmem:[#allocation2 + $0x11e] sm:$0xff]
  %v8109 = vld [vmem:[#allocation2 + $0x126] sm:$0xff]
  %v8110 = vld [vmem:[#allocation2 + $0x12e] sm:$0xff]
  %v8111 = vld [vmem:[#allocation2 + $0x136] sm:$0xff]
  %v8112 = vld [vmem:[#allocation2 + $0x13e] sm:$0xff]
  %v8113 = vld [vmem:[#allocation2 + $0x146] sm:$0xff]
  %v8114 = vld [vmem:[#allocation2 + $0x14e] sm:$0xff]
  %v8115 = vld [vmem:[#allocation2 + $0x156] sm:$0xff]
  %v8116 = vld [vmem:[#allocation2 + $0x15e] sm:$0xff]
  %v8117 = vld [vmem:[#allocation2 + $0x166] sm:$0xff]
  %v8118 = vld [vmem:[#allocation2 + $0x16e] sm:$0xff]
  %v8119 = vld [vmem:[#allocation2 + $0x176] sm:$0xff]
  %v8120 = vld [vmem:[#allocation2 + $0x17e] sm:$0xff]
  %v8121 = vld [vmem:[#allocation2 + $0x186] sm:$0xff]
  %v8122 = vld [vmem:[#allocation2 + $0x18e] sm:$0xff]
  %v8123 = vld [vmem:[#allocation2 + $0x196] sm:$0xff]
  %v8124 = vld [vmem:[#allocation2 + $0x19e] sm:$0xff]
  %v8125 = vld [vmem:[#allocation2 + $0x1a6] sm:$0xff]
  %v8126 = vld [vmem:[#allocation2 + $0x1ae] sm:$0xff]
  %v8127 = vld [vmem:[#allocation2 + $0x1b6] sm:$0xff]
  %v8128 = vld [vmem:[#allocation2 + $0x1be] sm:$0xff]
  %v8129 = vld [vmem:[#allocation2 + $0x1c6] sm:$0xff]
  %v8130 = vld [vmem:[#allocation2 + $0x1ce] sm:$0xff]
  %v8131 = vld [vmem:[#allocation2 + $0x1d6] sm:$0xff]
  %v8132 = vld [vmem:[#allocation2 + $0x1de] sm:$0xff]
  %v8133 = vld [vmem:[#allocation2 + $0x1e6] sm:$0xff]
  %v8134 = vld [vmem:[#allocation2 + $0x1ee] sm:$0xff]
  %v8135 = vld [vmem:[#allocation2 + $0x1f6] sm:$0xff]
  %v8136 = vld [vmem:[#allocation2 + $0x1fe] sm:$0xff]
  %v8137 = vld [vmem:[#allocation2 + $0x206] sm:$0xff]
  %v8138 = vld [vmem:[#allocation2 + $0x20e] sm:$0xff]
  %v8139 = vld [vmem:[#allocation2 + $0x216] sm:$0xff]
  %v8140 = vld [vmem:[#allocation2 + $0x21e] sm:$0xff]
  %v8141 = vld [vmem:[#allocation2 + $0x226] sm:$0xff]
  %v8142 = vld [vmem:[#allocation2 + $0x22e] sm:$0xff]
  %v8143 = vld [vmem:[#allocation2 + $0x236] sm:$0xff]
  %v8144 = vld [vmem:[#allocation2 + $0x23e] sm:$0xff]
  %v8145 = vld [vmem:[#allocation2 + $0x246] sm:$0xff]
  %v8146 = vld [vmem:[#allocation2 + $0x24e] sm:$0xff]
  %v8147 = vld [vmem:[#allocation2 + $0x256] sm:$0xff]
  %v8148 = vld [vmem:[#allocation2 + $0x25e] sm:$0xff]
  %v8149 = vld [vmem:[#allocation2 + $0x266] sm:$0xff]
  %v8150 = vld [vmem:[#allocation2 + $0x26e] sm:$0xff]
  %v8151 = vld [vmem:[#allocation2 + $0x276] sm:$0xff]
  %v8152 = vld [vmem:[#allocation2 + $0x27e] sm:$0xff]
  %v8153 = vld [vmem:[#allocation2 + $0x286] sm:$0xff]
  %v8154 = vld [vmem:[#allocation2 + $0x28e] sm:$0xff]
  %v8155 = vld [vmem:[#allocation2 + $0x296] sm:$0xff]
  %v8156 = vld [vmem:[#allocation2 + $0x29e] sm:$0xff]
  %v8157 = vld [vmem:[#allocation2 + $0x2a6] sm:$0xff]
  %v8158 = vpack.c.bf16 %v8078, %v8077
  %v8159 = vpack.c.bf16 %v8080, %v8079
  %v8160 = vpack.c.bf16 %v8082, %v8081
  %v8161 = vpack.c.bf16 %v8084, %v8083
  %v8162 = vpack.c.bf16 %v8086, %v8085
  %v8163 = vpack.c.bf16 %v8088, %v8087
  %v8164 = vpack.c.bf16 %v8090, %v8089
  %v8165 = vpack.c.bf16 %v8092, %v8091
  %v8166 = vpack.c.bf16 %v8094, %v8093
  %v8167 = vpack.c.bf16 %v8096, %v8095
  %v8168 = vpack.c.bf16 %v8098, %v8097
  %v8169 = vpack.c.bf16 %v8100, %v8099
  %v8170 = vpack.c.bf16 %v8102, %v8101
  %v8171 = vpack.c.bf16 %v8104, %v8103
  %v8172 = vpack.c.bf16 %v8106, %v8105
  %v8173 = vpack.c.bf16 %v8108, %v8107
  %v8174 = vpack.c.bf16 %v8110, %v8109
  %v8175 = vpack.c.bf16 %v8112, %v8111
  %v8176 = vpack.c.bf16 %v8114, %v8113
  %v8177 = vpack.c.bf16 %v8116, %v8115
  %v8178 = vpack.c.bf16 %v8118, %v8117
  %v8179 = vpack.c.bf16 %v8120, %v8119
  %v8180 = vpack.c.bf16 %v8122, %v8121
  %v8181 = vpack.c.bf16 %v8124, %v8123
  %v8182 = vpack.c.bf16 %v8126, %v8125
  %v8183 = vpack.c.bf16 %v8128, %v8127
  %v8184 = vpack.c.bf16 %v8130, %v8129
  %v8185 = vpack.c.bf16 %v8132, %v8131
  %v8186 = vpack.c.bf16 %v8134, %v8133
  %v8187 = vpack.c.bf16 %v8136, %v8135
  %v8188 = vpack.c.bf16 %v8138, %v8137
  %v8189 = vpack.c.bf16 %v8140, %v8139
  %v8190 = vpack.c.bf16 %v8142, %v8141
  %v8191 = vpack.c.bf16 %v8144, %v8143
  %v8192 = vpack.c.bf16 %v8146, %v8145
  %v8193 = vpack.c.bf16 %v8148, %v8147
  %v8194 = vpack.c.bf16 %v8150, %v8149
  %v8195 = vpack.c.bf16 %v8152, %v8151
  %v8196 = vpack.c.bf16 %v8154, %v8153
  %v8197 = vpack.c.bf16 %v8156, %v8155
  %v8198 = vpack.c.bf16 %v8157, %v8157
  %s8199 = scalar_lea.vmem %s7, 32
  %v8200 = vld [vmem:[%s8199] sm:$0xf]
  %v8202 = vsel %vm361, %v8158, 0
  %v8205 = vsel %vm361, %v8159, 0
  %v8208 = vsel %vm361, %v8160, 0
  %v8211 = vsel %vm361, %v8161, 0
  %v8214 = vsel %vm361, %v8162, 0
  %v8217 = vsel %vm361, %v8163, 0
  %v8220 = vsel %vm361, %v8164, 0
  %v8223 = vsel %vm361, %v8165, 0
  %v8226 = vsel %vm361, %v8166, 0
  %v8229 = vsel %vm361, %v8167, 0
  %v8232 = vsel %vm361, %v8168, 0
  %v8235 = vsel %vm361, %v8169, 0
  %v8238 = vsel %vm361, %v8170, 0
  %v8241 = vsel %vm361, %v8171, 0
  %v8244 = vsel %vm361, %v8172, 0
  %v8247 = vsel %vm361, %v8173, 0
  %v8250 = vsel %vm361, %v8174, 0
  %v8253 = vsel %vm361, %v8175, 0
  %v8256 = vsel %vm361, %v8176, 0
  %v8259 = vsel %vm361, %v8177, 0
  %v8262 = vsel %vm361, %v8178, 0
  %v8265 = vsel %vm361, %v8179, 0
  %v8268 = vsel %vm361, %v8180, 0
  %v8271 = vsel %vm361, %v8181, 0
  %v8274 = vsel %vm361, %v8182, 0
  %v8277 = vsel %vm361, %v8183, 0
  %v8280 = vsel %vm361, %v8184, 0
  %v8283 = vsel %vm361, %v8185, 0
  %v8286 = vsel %vm361, %v8186, 0
  %v8289 = vsel %vm361, %v8187, 0
  %v8292 = vsel %vm361, %v8188, 0
  %v8295 = vsel %vm361, %v8189, 0
  %v8298 = vsel %vm361, %v8190, 0
  %v8301 = vsel %vm361, %v8191, 0
  %v8304 = vsel %vm361, %v8192, 0
  %v8307 = vsel %vm361, %v8193, 0
  %v8310 = vsel %vm361, %v8194, 0
  %v8313 = vsel %vm361, %v8195, 0
  %v8316 = vsel %vm361, %v8196, 0
  %v8319 = vsel %vm361, %v8197, 0
  %v8322 = vsel %vm361, %v8198, 0
  %v8325 = vsel %vm491, %v8200, 0
  %8327 = vmatprep.subr.bf16.mxu0 0
  %8328 = vmatpush1.bf16.msra.mxu0 0
  %8329 = vmatprep.subr.bf16.mxu0 0
  %8330 = vmatpush1.bf16.msra.mxu0 0
  %8331 = vmatprep.subr.bf16.mxu0 0
  %8332 = vmatpush1.bf16.msra.mxu0 0
  %8333 = vmatprep.subr.bf16.mxu0 0
  %8334 = vmatpush1.bf16.msra.mxu0 0
  %8335 = vmatprep.subr.bf16.mxu0 0
  %8336 = vmatpush1.bf16.msra.mxu0 0
  %8337 = vmatprep.subr.bf16.mxu0 0
  %8338 = vmatpush1.bf16.msra.mxu0 0
  %8339 = vmatprep.subr.bf16.mxu0 0
  %8340 = vmatpush1.bf16.msra.mxu0 0
  %8341 = vmatprep.subr.bf16.mxu0 0
  %8342 = vmatpush1.bf16.msra.mxu0 %v8325
  %8343 = vmatprep.subr.bf16.mxu0 0
  %8344 = vmatpush2.bf16.msra.mxu0 0
  %8345 = vmatprep.subr.bf16.mxu0 0
  %8346 = vmatpush2.bf16.msra.mxu0 0
  %8347 = vmatprep.subr.bf16.mxu0 0
  %8348 = vmatpush2.bf16.msra.mxu0 0
  %8349 = vmatprep.subr.bf16.mxu0 0
  %8350 = vmatpush2.bf16.msra.mxu0 0
  %8351 = vmatprep.subr.bf16.mxu0 0
  %8352 = vmatpush2.bf16.msra.mxu0 0
  %8353 = vmatprep.subr.bf16.mxu0 0
  %8354 = vmatpush2.bf16.msra.mxu0 0
  %8355 = vmatprep.subr.bf16.mxu0 0
  %8356 = vmatpush2.bf16.msra.mxu0 0
  %8357 = vmatprep.subr.bf16.mxu0 0
  %8358 = vmatpush2.bf16.msra.mxu0 0
  %8359 = vmatprep.mubr.bf16.mxu0 0
  %8360 = vmatmul.mubr.bf16.gmra.mxu0 %v8202
  %v8361 = vpop.f32.mrf.mxu0
  %v8362 = vadd.f32 0.0, %v8361
  %v8363 = vpop.f32.mrf.mxu0
  %v8364 = vpop.f32.mrf.mxu0
  %v8365 = vadd.f32 0.0, %v8364
  %v8366 = vpop.f32.mrf.mxu0
  %8367 = vmatprep.mubr.bf16.mxu0 0
  %8368 = vmatmul.mubr.bf16.gmra.mxu0 %v8205
  %v8369 = vpop.f32.mrf.mxu0
  %v8370 = vadd.f32 0.0, %v8369
  %v8371 = vpop.f32.mrf.mxu0
  %v8372 = vpop.f32.mrf.mxu0
  %v8373 = vadd.f32 0.0, %v8372
  %v8374 = vpop.f32.mrf.mxu0
  %8375 = vmatprep.mubr.bf16.mxu0 0
  %8376 = vmatmul.mubr.bf16.gmra.mxu0 %v8208
  %v8377 = vpop.f32.mrf.mxu0
  %v8378 = vadd.f32 0.0, %v8377
  %v8379 = vpop.f32.mrf.mxu0
  %v8380 = vpop.f32.mrf.mxu0
  %v8381 = vadd.f32 0.0, %v8380
  %v8382 = vpop.f32.mrf.mxu0
  %8383 = vmatprep.mubr.bf16.mxu0 0
  %8384 = vmatmul.mubr.bf16.gmra.mxu0 %v8211
  %v8385 = vpop.f32.mrf.mxu0
  %v8386 = vadd.f32 0.0, %v8385
  %v8387 = vpop.f32.mrf.mxu0
  %v8388 = vpop.f32.mrf.mxu0
  %v8389 = vadd.f32 0.0, %v8388
  %v8390 = vpop.f32.mrf.mxu0
  %8391 = vmatprep.mubr.bf16.mxu0 0
  %8392 = vmatmul.mubr.bf16.gmra.mxu0 %v8214
  %v8393 = vpop.f32.mrf.mxu0
  %v8394 = vadd.f32 0.0, %v8393
  %v8395 = vpop.f32.mrf.mxu0
  %v8396 = vpop.f32.mrf.mxu0
  %v8397 = vadd.f32 0.0, %v8396
  %v8398 = vpop.f32.mrf.mxu0
  %8399 = vmatprep.mubr.bf16.mxu0 0
  %8400 = vmatmul.mubr.bf16.gmra.mxu0 %v8217
  %v8401 = vpop.f32.mrf.mxu0
  %v8402 = vadd.f32 0.0, %v8401
  %v8403 = vpop.f32.mrf.mxu0
  %v8404 = vpop.f32.mrf.mxu0
  %v8405 = vadd.f32 0.0, %v8404
  %v8406 = vpop.f32.mrf.mxu0
  %8407 = vmatprep.mubr.bf16.mxu0 0
  %8408 = vmatmul.mubr.bf16.gmra.mxu0 %v8220
  %v8409 = vpop.f32.mrf.mxu0
  %v8410 = vadd.f32 0.0, %v8409
  %v8411 = vpop.f32.mrf.mxu0
  %v8412 = vpop.f32.mrf.mxu0
  %v8413 = vadd.f32 0.0, %v8412
  %v8414 = vpop.f32.mrf.mxu0
  %8415 = vmatprep.mubr.bf16.mxu0 0
  %8416 = vmatmul.mubr.bf16.gmra.mxu0 %v8223
  %v8417 = vpop.f32.mrf.mxu0
  %v8418 = vadd.f32 0.0, %v8417
  %v8419 = vpop.f32.mrf.mxu0
  %v8420 = vpop.f32.mrf.mxu0
  %v8421 = vadd.f32 0.0, %v8420
  %v8422 = vpop.f32.mrf.mxu0
  %8423 = vmatprep.mubr.bf16.mxu0 0
  %8424 = vmatmul.mubr.bf16.gmra.mxu0 %v8226
  %v8425 = vpop.f32.mrf.mxu0
  %v8426 = vadd.f32 0.0, %v8425
  %v8427 = vpop.f32.mrf.mxu0
  %v8428 = vpop.f32.mrf.mxu0
  %v8429 = vadd.f32 0.0, %v8428
  %v8430 = vpop.f32.mrf.mxu0
  %8431 = vmatprep.mubr.bf16.mxu0 0
  %8432 = vmatmul.mubr.bf16.gmra.mxu0 %v8229
  %v8433 = vpop.f32.mrf.mxu0
  %v8434 = vadd.f32 0.0, %v8433
  %v8435 = vpop.f32.mrf.mxu0
  %v8436 = vpop.f32.mrf.mxu0
  %v8437 = vadd.f32 0.0, %v8436
  %v8438 = vpop.f32.mrf.mxu0
  %8439 = vmatprep.mubr.bf16.mxu0 0
  %8440 = vmatmul.mubr.bf16.gmra.mxu0 %v8232
  %v8441 = vpop.f32.mrf.mxu0
  %v8442 = vadd.f32 0.0, %v8441
  %v8443 = vpop.f32.mrf.mxu0
  %v8444 = vpop.f32.mrf.mxu0
  %v8445 = vadd.f32 0.0, %v8444
  %v8446 = vpop.f32.mrf.mxu0
  %8447 = vmatprep.mubr.bf16.mxu0 0
  %8448 = vmatmul.mubr.bf16.gmra.mxu0 %v8235
  %v8449 = vpop.f32.mrf.mxu0
  %v8450 = vadd.f32 0.0, %v8449
  %v8451 = vpop.f32.mrf.mxu0
  %v8452 = vpop.f32.mrf.mxu0
  %v8453 = vadd.f32 0.0, %v8452
  %v8454 = vpop.f32.mrf.mxu0
  %8455 = vmatprep.mubr.bf16.mxu0 0
  %8456 = vmatmul.mubr.bf16.gmra.mxu0 %v8238
  %v8457 = vpop.f32.mrf.mxu0
  %v8458 = vadd.f32 0.0, %v8457
  %v8459 = vpop.f32.mrf.mxu0
  %v8460 = vpop.f32.mrf.mxu0
  %v8461 = vadd.f32 0.0, %v8460
  %v8462 = vpop.f32.mrf.mxu0
  %8463 = vmatprep.mubr.bf16.mxu0 0
  %8464 = vmatmul.mubr.bf16.gmra.mxu0 %v8241
  %v8465 = vpop.f32.mrf.mxu0
  %v8466 = vadd.f32 0.0, %v8465
  %v8467 = vpop.f32.mrf.mxu0
  %v8468 = vpop.f32.mrf.mxu0
  %v8469 = vadd.f32 0.0, %v8468
  %v8470 = vpop.f32.mrf.mxu0
  %8471 = vmatprep.mubr.bf16.mxu0 0
  %8472 = vmatmul.mubr.bf16.gmra.mxu0 %v8244
  %v8473 = vpop.f32.mrf.mxu0
  %v8474 = vadd.f32 0.0, %v8473
  %v8475 = vpop.f32.mrf.mxu0
  %v8476 = vpop.f32.mrf.mxu0
  %v8477 = vadd.f32 0.0, %v8476
  %v8478 = vpop.f32.mrf.mxu0
  %8479 = vmatprep.mubr.bf16.mxu0 0
  %8480 = vmatmul.mubr.bf16.gmra.mxu0 %v8247
  %v8481 = vpop.f32.mrf.mxu0
  %v8482 = vadd.f32 0.0, %v8481
  %v8483 = vpop.f32.mrf.mxu0
  %v8484 = vpop.f32.mrf.mxu0
  %v8485 = vadd.f32 0.0, %v8484
  %v8486 = vpop.f32.mrf.mxu0
  %8487 = vmatprep.mubr.bf16.mxu0 0
  %8488 = vmatmul.mubr.bf16.gmra.mxu0 %v8250
  %v8489 = vpop.f32.mrf.mxu0
  %v8490 = vadd.f32 0.0, %v8489
  %v8491 = vpop.f32.mrf.mxu0
  %v8492 = vpop.f32.mrf.mxu0
  %v8493 = vadd.f32 0.0, %v8492
  %v8494 = vpop.f32.mrf.mxu0
  %8495 = vmatprep.mubr.bf16.mxu0 0
  %8496 = vmatmul.mubr.bf16.gmra.mxu0 %v8253
  %v8497 = vpop.f32.mrf.mxu0
  %v8498 = vadd.f32 0.0, %v8497
  %v8499 = vpop.f32.mrf.mxu0
  %v8500 = vpop.f32.mrf.mxu0
  %v8501 = vadd.f32 0.0, %v8500
  %v8502 = vpop.f32.mrf.mxu0
  %8503 = vmatprep.mubr.bf16.mxu0 0
  %8504 = vmatmul.mubr.bf16.gmra.mxu0 %v8256
  %v8505 = vpop.f32.mrf.mxu0
  %v8506 = vadd.f32 0.0, %v8505
  %v8507 = vpop.f32.mrf.mxu0
  %v8508 = vpop.f32.mrf.mxu0
  %v8509 = vadd.f32 0.0, %v8508
  %v8510 = vpop.f32.mrf.mxu0
  %8511 = vmatprep.mubr.bf16.mxu0 0
  %8512 = vmatmul.mubr.bf16.gmra.mxu0 %v8259
  %v8513 = vpop.f32.mrf.mxu0
  %v8514 = vadd.f32 0.0, %v8513
  %v8515 = vpop.f32.mrf.mxu0
  %v8516 = vpop.f32.mrf.mxu0
  %v8517 = vadd.f32 0.0, %v8516
  %v8518 = vpop.f32.mrf.mxu0
  %8519 = vmatprep.mubr.bf16.mxu0 0
  %8520 = vmatmul.mubr.bf16.gmra.mxu0 %v8262
  %v8521 = vpop.f32.mrf.mxu0
  %v8522 = vadd.f32 0.0, %v8521
  %v8523 = vpop.f32.mrf.mxu0
  %v8524 = vpop.f32.mrf.mxu0
  %v8525 = vadd.f32 0.0, %v8524
  %v8526 = vpop.f32.mrf.mxu0
  %8527 = vmatprep.mubr.bf16.mxu0 0
  %8528 = vmatmul.mubr.bf16.gmra.mxu0 %v8265
  %v8529 = vpop.f32.mrf.mxu0
  %v8530 = vadd.f32 0.0, %v8529
  %v8531 = vpop.f32.mrf.mxu0
  %v8532 = vpop.f32.mrf.mxu0
  %v8533 = vadd.f32 0.0, %v8532
  %v8534 = vpop.f32.mrf.mxu0
  %8535 = vmatprep.mubr.bf16.mxu0 0
  %8536 = vmatmul.mubr.bf16.gmra.mxu0 %v8268
  %v8537 = vpop.f32.mrf.mxu0
  %v8538 = vadd.f32 0.0, %v8537
  %v8539 = vpop.f32.mrf.mxu0
  %v8540 = vpop.f32.mrf.mxu0
  %v8541 = vadd.f32 0.0, %v8540
  %v8542 = vpop.f32.mrf.mxu0
  %8543 = vmatprep.mubr.bf16.mxu0 0
  %8544 = vmatmul.mubr.bf16.gmra.mxu0 %v8271
  %v8545 = vpop.f32.mrf.mxu0
  %v8546 = vadd.f32 0.0, %v8545
  %v8547 = vpop.f32.mrf.mxu0
  %v8548 = vpop.f32.mrf.mxu0
  %v8549 = vadd.f32 0.0, %v8548
  %v8550 = vpop.f32.mrf.mxu0
  %8551 = vmatprep.mubr.bf16.mxu0 0
  %8552 = vmatmul.mubr.bf16.gmra.mxu0 %v8274
  %v8553 = vpop.f32.mrf.mxu0
  %v8554 = vadd.f32 0.0, %v8553
  %v8555 = vpop.f32.mrf.mxu0
  %v8556 = vpop.f32.mrf.mxu0
  %v8557 = vadd.f32 0.0, %v8556
  %v8558 = vpop.f32.mrf.mxu0
  %8559 = vmatprep.mubr.bf16.mxu0 0
  %8560 = vmatmul.mubr.bf16.gmra.mxu0 %v8277
  %v8561 = vpop.f32.mrf.mxu0
  %v8562 = vadd.f32 0.0, %v8561
  %v8563 = vpop.f32.mrf.mxu0
  %v8564 = vpop.f32.mrf.mxu0
  %v8565 = vadd.f32 0.0, %v8564
  %v8566 = vpop.f32.mrf.mxu0
  %8567 = vmatprep.mubr.bf16.mxu0 0
  %8568 = vmatmul.mubr.bf16.gmra.mxu0 %v8280
  %v8569 = vpop.f32.mrf.mxu0
  %v8570 = vadd.f32 0.0, %v8569
  %v8571 = vpop.f32.mrf.mxu0
  %v8572 = vpop.f32.mrf.mxu0
  %v8573 = vadd.f32 0.0, %v8572
  %v8574 = vpop.f32.mrf.mxu0
  %8575 = vmatprep.mubr.bf16.mxu0 0
  %8576 = vmatmul.mubr.bf16.gmra.mxu0 %v8283
  %v8577 = vpop.f32.mrf.mxu0
  %v8578 = vadd.f32 0.0, %v8577
  %v8579 = vpop.f32.mrf.mxu0
  %v8580 = vpop.f32.mrf.mxu0
  %v8581 = vadd.f32 0.0, %v8580
  %v8582 = vpop.f32.mrf.mxu0
  %8583 = vmatprep.mubr.bf16.mxu0 0
  %8584 = vmatmul.mubr.bf16.gmra.mxu0 %v8286
  %v8585 = vpop.f32.mrf.mxu0
  %v8586 = vadd.f32 0.0, %v8585
  %v8587 = vpop.f32.mrf.mxu0
  %v8588 = vpop.f32.mrf.mxu0
  %v8589 = vadd.f32 0.0, %v8588
  %v8590 = vpop.f32.mrf.mxu0
  %8591 = vmatprep.mubr.bf16.mxu0 0
  %8592 = vmatmul.mubr.bf16.gmra.mxu0 %v8289
  %v8593 = vpop.f32.mrf.mxu0
  %v8594 = vadd.f32 0.0, %v8593
  %v8595 = vpop.f32.mrf.mxu0
  %v8596 = vpop.f32.mrf.mxu0
  %v8597 = vadd.f32 0.0, %v8596
  %v8598 = vpop.f32.mrf.mxu0
  %8599 = vmatprep.mubr.bf16.mxu0 0
  %8600 = vmatmul.mubr.bf16.gmra.mxu0 %v8292
  %v8601 = vpop.f32.mrf.mxu0
  %v8602 = vadd.f32 0.0, %v8601
  %v8603 = vpop.f32.mrf.mxu0
  %v8604 = vpop.f32.mrf.mxu0
  %v8605 = vadd.f32 0.0, %v8604
  %v8606 = vpop.f32.mrf.mxu0
  %8607 = vmatprep.mubr.bf16.mxu0 0
  %8608 = vmatmul.mubr.bf16.gmra.mxu0 %v8295
  %v8609 = vpop.f32.mrf.mxu0
  %v8610 = vadd.f32 0.0, %v8609
  %v8611 = vpop.f32.mrf.mxu0
  %v8612 = vpop.f32.mrf.mxu0
  %v8613 = vadd.f32 0.0, %v8612
  %v8614 = vpop.f32.mrf.mxu0
  %8615 = vmatprep.mubr.bf16.mxu0 0
  %8616 = vmatmul.mubr.bf16.gmra.mxu0 %v8298
  %v8617 = vpop.f32.mrf.mxu0
  %v8618 = vadd.f32 0.0, %v8617
  %v8619 = vpop.f32.mrf.mxu0
  %v8620 = vpop.f32.mrf.mxu0
  %v8621 = vadd.f32 0.0, %v8620
  %v8622 = vpop.f32.mrf.mxu0
  %8623 = vmatprep.mubr.bf16.mxu0 0
  %8624 = vmatmul.mubr.bf16.gmra.mxu0 %v8301
  %v8625 = vpop.f32.mrf.mxu0
  %v8626 = vadd.f32 0.0, %v8625
  %v8627 = vpop.f32.mrf.mxu0
  %v8628 = vpop.f32.mrf.mxu0
  %v8629 = vadd.f32 0.0, %v8628
  %v8630 = vpop.f32.mrf.mxu0
  %8631 = vmatprep.mubr.bf16.mxu0 0
  %8632 = vmatmul.mubr.bf16.gmra.mxu0 %v8304
  %v8633 = vpop.f32.mrf.mxu0
  %v8634 = vadd.f32 0.0, %v8633
  %v8635 = vpop.f32.mrf.mxu0
  %v8636 = vpop.f32.mrf.mxu0
  %v8637 = vadd.f32 0.0, %v8636
  %v8638 = vpop.f32.mrf.mxu0
  %8639 = vmatprep.mubr.bf16.mxu0 0
  %8640 = vmatmul.mubr.bf16.gmra.mxu0 %v8307
  %v8641 = vpop.f32.mrf.mxu0
  %v8642 = vadd.f32 0.0, %v8641
  %v8643 = vpop.f32.mrf.mxu0
  %v8644 = vpop.f32.mrf.mxu0
  %v8645 = vadd.f32 0.0, %v8644
  %v8646 = vpop.f32.mrf.mxu0
  %8647 = vmatprep.mubr.bf16.mxu0 0
  %8648 = vmatmul.mubr.bf16.gmra.mxu0 %v8310
  %v8649 = vpop.f32.mrf.mxu0
  %v8650 = vadd.f32 0.0, %v8649
  %v8651 = vpop.f32.mrf.mxu0
  %v8652 = vpop.f32.mrf.mxu0
  %v8653 = vadd.f32 0.0, %v8652
  %v8654 = vpop.f32.mrf.mxu0
  %8655 = vmatprep.mubr.bf16.mxu0 0
  %8656 = vmatmul.mubr.bf16.gmra.mxu0 %v8313
  %v8657 = vpop.f32.mrf.mxu0
  %v8658 = vadd.f32 0.0, %v8657
  %v8659 = vpop.f32.mrf.mxu0
  %v8660 = vpop.f32.mrf.mxu0
  %v8661 = vadd.f32 0.0, %v8660
  %v8662 = vpop.f32.mrf.mxu0
  %8663 = vmatprep.mubr.bf16.mxu0 0
  %8664 = vmatmul.mubr.bf16.gmra.mxu0 %v8316
  %v8665 = vpop.f32.mrf.mxu0
  %v8666 = vadd.f32 0.0, %v8665
  %v8667 = vpop.f32.mrf.mxu0
  %v8668 = vpop.f32.mrf.mxu0
  %v8669 = vadd.f32 0.0, %v8668
  %v8670 = vpop.f32.mrf.mxu0
  %8671 = vmatprep.mubr.bf16.mxu0 0
  %8672 = vmatmul.mubr.bf16.gmra.mxu0 %v8319
  %v8673 = vpop.f32.mrf.mxu0
  %v8674 = vadd.f32 0.0, %v8673
  %v8675 = vpop.f32.mrf.mxu0
  %v8676 = vpop.f32.mrf.mxu0
  %v8677 = vadd.f32 0.0, %v8676
  %v8678 = vpop.f32.mrf.mxu0
  %8679 = vmatprep.mubr.bf16.mxu0 0
  %8680 = vmatmul.mubr.bf16.gmra.mxu0 %v8322
  %v8681 = vpop.f32.mrf.mxu0
  %v8682 = vadd.f32 0.0, %v8681
  %v8683 = vpop.f32.mrf.mxu0
  %v8684 = vpop.f32.mrf.mxu0
  %v8685 = vpop.f32.mrf.mxu0
  %8686 = vdwg.mxu0
  %v8687 = vadd.f32 %v7996, %v8362
  %v8688 = vadd.f32 %v7997, %v8365
  %v8689 = vadd.f32 %v7998, %v8370
  %v8690 = vadd.f32 %v7999, %v8373
  %v8691 = vadd.f32 %v8000, %v8378
  %v8692 = vadd.f32 %v8001, %v8381
  %v8693 = vadd.f32 %v8002, %v8386
  %v8694 = vadd.f32 %v8003, %v8389
  %v8695 = vadd.f32 %v8004, %v8394
  %v8696 = vadd.f32 %v8005, %v8397
  %v8697 = vadd.f32 %v8006, %v8402
  %v8698 = vadd.f32 %v8007, %v8405
  %v8699 = vadd.f32 %v8008, %v8410
  %v8700 = vadd.f32 %v8009, %v8413
  %v8701 = vadd.f32 %v8010, %v8418
  %v8702 = vadd.f32 %v8011, %v8421
  %v8703 = vadd.f32 %v8012, %v8426
  %v8704 = vadd.f32 %v8013, %v8429
  %v8705 = vadd.f32 %v8014, %v8434
  %v8706 = vadd.f32 %v8015, %v8437
  %v8707 = vadd.f32 %v8016, %v8442
  %v8708 = vadd.f32 %v8017, %v8445
  %v8709 = vadd.f32 %v8018, %v8450
  %v8710 = vadd.f32 %v8019, %v8453
  %v8711 = vadd.f32 %v8020, %v8458
  %v8712 = vadd.f32 %v8021, %v8461
  %v8713 = vadd.f32 %v8022, %v8466
  %v8714 = vadd.f32 %v8023, %v8469
  %v8715 = vadd.f32 %v8024, %v8474
  %v8716 = vadd.f32 %v8025, %v8477
  %v8717 = vadd.f32 %v8026, %v8482
  %v8718 = vadd.f32 %v8027, %v8485
  %v8719 = vadd.f32 %v8028, %v8490
  %v8720 = vadd.f32 %v8029, %v8493
  %v8721 = vadd.f32 %v8030, %v8498
  %v8722 = vadd.f32 %v8031, %v8501
  %v8723 = vadd.f32 %v8032, %v8506
  %v8724 = vadd.f32 %v8033, %v8509
  %v8725 = vadd.f32 %v8034, %v8514
  %v8726 = vadd.f32 %v8035, %v8517
  %v8727 = vadd.f32 %v8036, %v8522
  %v8728 = vadd.f32 %v8037, %v8525
  %v8729 = vadd.f32 %v8038, %v8530
  %v8730 = vadd.f32 %v8039, %v8533
  %v8731 = vadd.f32 %v8040, %v8538
  %v8732 = vadd.f32 %v8041, %v8541
  %v8733 = vadd.f32 %v8042, %v8546
  %v8734 = vadd.f32 %v8043, %v8549
  %v8735 = vadd.f32 %v8044, %v8554
  %v8736 = vadd.f32 %v8045, %v8557
  %v8737 = vadd.f32 %v8046, %v8562
  %v8738 = vadd.f32 %v8047, %v8565
  %v8739 = vadd.f32 %v8048, %v8570
  %v8740 = vadd.f32 %v8049, %v8573
  %v8741 = vadd.f32 %v8050, %v8578
  %v8742 = vadd.f32 %v8051, %v8581
  %v8743 = vadd.f32 %v8052, %v8586
  %v8744 = vadd.f32 %v8053, %v8589
  %v8745 = vadd.f32 %v8054, %v8594
  %v8746 = vadd.f32 %v8055, %v8597
  %v8747 = vadd.f32 %v8056, %v8602
  %v8748 = vadd.f32 %v8057, %v8605
  %v8749 = vadd.f32 %v8058, %v8610
  %v8750 = vadd.f32 %v8059, %v8613
  %v8751 = vadd.f32 %v8060, %v8618
  %v8752 = vadd.f32 %v8061, %v8621
  %v8753 = vadd.f32 %v8062, %v8626
  %v8754 = vadd.f32 %v8063, %v8629
  %v8755 = vadd.f32 %v8064, %v8634
  %v8756 = vadd.f32 %v8065, %v8637
  %v8757 = vadd.f32 %v8066, %v8642
  %v8758 = vadd.f32 %v8067, %v8645
  %v8759 = vadd.f32 %v8068, %v8650
  %v8760 = vadd.f32 %v8069, %v8653
  %v8761 = vadd.f32 %v8070, %v8658
  %v8762 = vadd.f32 %v8071, %v8661
  %v8763 = vadd.f32 %v8072, %v8666
  %v8764 = vadd.f32 %v8073, %v8669
  %v8765 = vadd.f32 %v8074, %v8674
  %v8766 = vadd.f32 %v8075, %v8677
  %v8767 = vadd.f32 %v8076, %v8682
  %v8768 = vld [vmem:[%s8] sm:$0x1]
  %v8770 = vlaneseq
  %v8771 = vshrl.u32 %v8770, 7
  %v8772 = vsub.s32 0, %v8771
  %v8773 = vrot.slane %v8768, %v8772
  %v8775 = vadd.f32 %v8687, %v8773
  %v8776 = vadd.f32 %v8688, %v8773
  %v8777 = vadd.f32 %v8689, %v8773
  %v8778 = vadd.f32 %v8690, %v8773
  %v8779 = vadd.f32 %v8691, %v8773
  %v8780 = vadd.f32 %v8692, %v8773
  %v8781 = vadd.f32 %v8693, %v8773
  %v8782 = vadd.f32 %v8694, %v8773
  %v8783 = vadd.f32 %v8695, %v8773
  %v8784 = vadd.f32 %v8696, %v8773
  %v8785 = vadd.f32 %v8697, %v8773
  %v8786 = vadd.f32 %v8698, %v8773
  %v8787 = vadd.f32 %v8699, %v8773
  %v8788 = vadd.f32 %v8700, %v8773
  %v8789 = vadd.f32 %v8701, %v8773
  %v8790 = vadd.f32 %v8702, %v8773
  %v8791 = vadd.f32 %v8703, %v8773
  %v8792 = vadd.f32 %v8704, %v8773
  %v8793 = vadd.f32 %v8705, %v8773
  %v8794 = vadd.f32 %v8706, %v8773
  %v8795 = vadd.f32 %v8707, %v8773
  %v8796 = vadd.f32 %v8708, %v8773
  %v8797 = vadd.f32 %v8709, %v8773
  %v8798 = vadd.f32 %v8710, %v8773
  %v8799 = vadd.f32 %v8711, %v8773
  %v8800 = vadd.f32 %v8712, %v8773
  %v8801 = vadd.f32 %v8713, %v8773
  %v8802 = vadd.f32 %v8714, %v8773
  %v8803 = vadd.f32 %v8715, %v8773
  %v8804 = vadd.f32 %v8716, %v8773
  %v8805 = vadd.f32 %v8717, %v8773
  %v8806 = vadd.f32 %v8718, %v8773
  %v8807 = vadd.f32 %v8719, %v8773
  %v8808 = vadd.f32 %v8720, %v8773
  %v8809 = vadd.f32 %v8721, %v8773
  %v8810 = vadd.f32 %v8722, %v8773
  %v8811 = vadd.f32 %v8723, %v8773
  %v8812 = vadd.f32 %v8724, %v8773
  %v8813 = vadd.f32 %v8725, %v8773
  %v8814 = vadd.f32 %v8726, %v8773
  %v8815 = vadd.f32 %v8727, %v8773
  %v8816 = vadd.f32 %v8728, %v8773
  %v8817 = vadd.f32 %v8729, %v8773
  %v8818 = vadd.f32 %v8730, %v8773
  %v8819 = vadd.f32 %v8731, %v8773
  %v8820 = vadd.f32 %v8732, %v8773
  %v8821 = vadd.f32 %v8733, %v8773
  %v8822 = vadd.f32 %v8734, %v8773
  %v8823 = vadd.f32 %v8735, %v8773
  %v8824 = vadd.f32 %v8736, %v8773
  %v8825 = vadd.f32 %v8737, %v8773
  %v8826 = vadd.f32 %v8738, %v8773
  %v8827 = vadd.f32 %v8739, %v8773
  %v8828 = vadd.f32 %v8740, %v8773
  %v8829 = vadd.f32 %v8741, %v8773
  %v8830 = vadd.f32 %v8742, %v8773
  %v8831 = vadd.f32 %v8743, %v8773
  %v8832 = vadd.f32 %v8744, %v8773
  %v8833 = vadd.f32 %v8745, %v8773
  %v8834 = vadd.f32 %v8746, %v8773
  %v8835 = vadd.f32 %v8747, %v8773
  %v8836 = vadd.f32 %v8748, %v8773
  %v8837 = vadd.f32 %v8749, %v8773
  %v8838 = vadd.f32 %v8750, %v8773
  %v8839 = vadd.f32 %v8751, %v8773
  %v8840 = vadd.f32 %v8752, %v8773
  %v8841 = vadd.f32 %v8753, %v8773
  %v8842 = vadd.f32 %v8754, %v8773
  %v8843 = vadd.f32 %v8755, %v8773
  %v8844 = vadd.f32 %v8756, %v8773
  %v8845 = vadd.f32 %v8757, %v8773
  %v8846 = vadd.f32 %v8758, %v8773
  %v8847 = vadd.f32 %v8759, %v8773
  %v8848 = vadd.f32 %v8760, %v8773
  %v8849 = vadd.f32 %v8761, %v8773
  %v8850 = vadd.f32 %v8762, %v8773
  %v8851 = vadd.f32 %v8763, %v8773
  %v8852 = vadd.f32 %v8764, %v8773
  %v8853 = vadd.f32 %v8765, %v8773
  %v8854 = vadd.f32 %v8766, %v8773
  %v8855 = vadd.f32 %v8767, %v8773
  %v8856 = vld [vmem:[%s9] sm:$0x1]
  %v8857 = vld [vmem:[%s10] sm:$0x1]
  %8859 = vset.pattern.permute.xlu0 0
  %8860 = vperm.xlu0 %8859, %v143
  %v8861 = vpop.permute.xlu0 %8860
  %8864 = vset.pattern.permute.xlu0 0
  %8865 = vperm.xlu0 %8864, %v144
  %v8866 = vpop.permute.xlu0 %8865
  %8869 = vset.pattern.permute.xlu0 0
  %8870 = vperm.xlu0 %8869, %v145
  %v8871 = vpop.permute.xlu0 %8870
  %8874 = vset.pattern.permute.xlu0 0
  %8875 = vperm.xlu0 %8874, %v146
  %v8876 = vpop.permute.xlu0 %8875
  %8879 = vset.pattern.permute.xlu0 0
  %8880 = vperm.xlu0 %8879, %v147
  %v8881 = vpop.permute.xlu0 %8880
  %8884 = vset.pattern.permute.xlu0 0
  %8885 = vperm.xlu0 %8884, %v148
  %v8886 = vpop.permute.xlu0 %8885
  %8889 = vset.pattern.permute.xlu0 0
  %8890 = vperm.xlu0 %8889, %v149
  %v8891 = vpop.permute.xlu0 %8890
  %8894 = vset.pattern.permute.xlu0 0
  %8895 = vperm.xlu0 %8894, %v150
  %v8896 = vpop.permute.xlu0 %8895
  %8899 = vset.pattern.permute.xlu0 0
  %8900 = vperm.xlu0 %8899, %v151
  %v8901 = vpop.permute.xlu0 %8900
  %8904 = vset.pattern.permute.xlu0 0
  %8905 = vperm.xlu0 %8904, %v152
  %v8906 = vpop.permute.xlu0 %8905
  %8909 = vset.pattern.permute.xlu0 0
  %8910 = vperm.xlu0 %8909, %v153
  %v8911 = vpop.permute.xlu0 %8910
  %8914 = vset.pattern.permute.xlu0 0
  %8915 = vperm.xlu0 %8914, %v154
  %v8916 = vpop.permute.xlu0 %8915
  %8919 = vset.pattern.permute.xlu0 0
  %8920 = vperm.xlu0 %8919, %v155
  %v8921 = vpop.permute.xlu0 %8920
  %8924 = vset.pattern.permute.xlu0 0
  %8925 = vperm.xlu0 %8924, %v156
  %v8926 = vpop.permute.xlu0 %8925
  %8929 = vset.pattern.permute.xlu0 0
  %8930 = vperm.xlu0 %8929, %v157
  %v8931 = vpop.permute.xlu0 %8930
  %8934 = vset.pattern.permute.xlu0 0
  %8935 = vperm.xlu0 %8934, %v158
  %v8936 = vpop.permute.xlu0 %8935
  %8939 = vset.pattern.permute.xlu0 0
  %8940 = vperm.xlu0 %8939, %v159
  %v8941 = vpop.permute.xlu0 %8940
  %8944 = vset.pattern.permute.xlu0 0
  %8945 = vperm.xlu0 %8944, %v160
  %v8946 = vpop.permute.xlu0 %8945
  %8949 = vset.pattern.permute.xlu0 0
  %8950 = vperm.xlu0 %8949, %v161
  %v8951 = vpop.permute.xlu0 %8950
  %8954 = vset.pattern.permute.xlu0 0
  %8955 = vperm.xlu0 %8954, %v162
  %v8956 = vpop.permute.xlu0 %8955
  %8959 = vset.pattern.permute.xlu0 0
  %8960 = vperm.xlu0 %8959, %v163
  %v8961 = vpop.permute.xlu0 %8960
  %8964 = vset.pattern.permute.xlu0 0
  %8965 = vperm.xlu0 %8964, %v164
  %v8966 = vpop.permute.xlu0 %8965
  %8969 = vset.pattern.permute.xlu0 0
  %8970 = vperm.xlu0 %8969, %v165
  %v8971 = vpop.permute.xlu0 %8970
  %8974 = vset.pattern.permute.xlu0 0
  %8975 = vperm.xlu0 %8974, %v166
  %v8976 = vpop.permute.xlu0 %8975
  %8979 = vset.pattern.permute.xlu0 0
  %8980 = vperm.xlu0 %8979, %v167
  %v8981 = vpop.permute.xlu0 %8980
  %8984 = vset.pattern.permute.xlu0 0
  %8985 = vperm.xlu0 %8984, %v168
  %v8986 = vpop.permute.xlu0 %8985
  %8989 = vset.pattern.permute.xlu0 0
  %8990 = vperm.xlu0 %8989, %v169
  %v8991 = vpop.permute.xlu0 %8990
  %8994 = vset.pattern.permute.xlu0 0
  %8995 = vperm.xlu0 %8994, %v170
  %v8996 = vpop.permute.xlu0 %8995
  %8999 = vset.pattern.permute.xlu0 0
  %9000 = vperm.xlu0 %8999, %v171
  %v9001 = vpop.permute.xlu0 %9000
  %9004 = vset.pattern.permute.xlu0 0
  %9005 = vperm.xlu0 %9004, %v172
  %v9006 = vpop.permute.xlu0 %9005
  %9009 = vset.pattern.permute.xlu0 0
  %9010 = vperm.xlu0 %9009, %v173
  %v9011 = vpop.permute.xlu0 %9010
  %9014 = vset.pattern.permute.xlu0 0
  %9015 = vperm.xlu0 %9014, %v174
  %v9016 = vpop.permute.xlu0 %9015
  %9019 = vset.pattern.permute.xlu0 0
  %9020 = vperm.xlu0 %9019, %v175
  %v9021 = vpop.permute.xlu0 %9020
  %9024 = vset.pattern.permute.xlu0 0
  %9025 = vperm.xlu0 %9024, %v176
  %v9026 = vpop.permute.xlu0 %9025
  %9029 = vset.pattern.permute.xlu0 0
  %9030 = vperm.xlu0 %9029, %v177
  %v9031 = vpop.permute.xlu0 %9030
  %9034 = vset.pattern.permute.xlu0 0
  %9035 = vperm.xlu0 %9034, %v178
  %v9036 = vpop.permute.xlu0 %9035
  %9039 = vset.pattern.permute.xlu0 0
  %9040 = vperm.xlu0 %9039, %v179
  %v9041 = vpop.permute.xlu0 %9040
  %9044 = vset.pattern.permute.xlu0 0
  %9045 = vperm.xlu0 %9044, %v180
  %v9046 = vpop.permute.xlu0 %9045
  %9049 = vset.pattern.permute.xlu0 0
  %9050 = vperm.xlu0 %9049, %v181
  %v9051 = vpop.permute.xlu0 %9050
  %9054 = vset.pattern.permute.xlu0 0
  %9055 = vperm.xlu0 %9054, %v182
  %v9056 = vpop.permute.xlu0 %9055
  %9059 = vset.pattern.permute.xlu0 0
  %9060 = vperm.xlu0 %9059, %v183
  %v9061 = vpop.permute.xlu0 %9060
  %9064 = vset.pattern.permute.xlu0 0
  %9065 = vperm.xlu0 %9064, %v184
  %v9066 = vpop.permute.xlu0 %9065
  %9069 = vset.pattern.permute.xlu0 0
  %9070 = vperm.xlu0 %9069, %v185
  %v9071 = vpop.permute.xlu0 %9070
  %9074 = vset.pattern.permute.xlu0 0
  %9075 = vperm.xlu0 %9074, %v186
  %v9076 = vpop.permute.xlu0 %9075
  %9079 = vset.pattern.permute.xlu0 0
  %9080 = vperm.xlu0 %9079, %v187
  %v9081 = vpop.permute.xlu0 %9080
  %9084 = vset.pattern.permute.xlu0 0
  %9085 = vperm.xlu0 %9084, %v188
  %v9086 = vpop.permute.xlu0 %9085
  %9089 = vset.pattern.permute.xlu0 0
  %9090 = vperm.xlu0 %9089, %v189
  %v9091 = vpop.permute.xlu0 %9090
  %9094 = vset.pattern.permute.xlu0 0
  %9095 = vperm.xlu0 %9094, %v190
  %v9096 = vpop.permute.xlu0 %9095
  %9099 = vset.pattern.permute.xlu0 0
  %9100 = vperm.xlu0 %9099, %v191
  %v9101 = vpop.permute.xlu0 %9100
  %9104 = vset.pattern.permute.xlu0 0
  %9105 = vperm.xlu0 %9104, %v192
  %v9106 = vpop.permute.xlu0 %9105
  %9109 = vset.pattern.permute.xlu0 0
  %9110 = vperm.xlu0 %9109, %v193
  %v9111 = vpop.permute.xlu0 %9110
  %9114 = vset.pattern.permute.xlu0 0
  %9115 = vperm.xlu0 %9114, %v194
  %v9116 = vpop.permute.xlu0 %9115
  %9119 = vset.pattern.permute.xlu0 0
  %9120 = vperm.xlu0 %9119, %v195
  %v9121 = vpop.permute.xlu0 %9120
  %9124 = vset.pattern.permute.xlu0 0
  %9125 = vperm.xlu0 %9124, %v196
  %v9126 = vpop.permute.xlu0 %9125
  %9129 = vset.pattern.permute.xlu0 0
  %9130 = vperm.xlu0 %9129, %v197
  %v9131 = vpop.permute.xlu0 %9130
  %9134 = vset.pattern.permute.xlu0 0
  %9135 = vperm.xlu0 %9134, %v198
  %v9136 = vpop.permute.xlu0 %9135
  %9139 = vset.pattern.permute.xlu0 0
  %9140 = vperm.xlu0 %9139, %v199
  %v9141 = vpop.permute.xlu0 %9140
  %9144 = vset.pattern.permute.xlu0 0
  %9145 = vperm.xlu0 %9144, %v200
  %v9146 = vpop.permute.xlu0 %9145
  %9149 = vset.pattern.permute.xlu0 0
  %9150 = vperm.xlu0 %9149, %v201
  %v9151 = vpop.permute.xlu0 %9150
  %9154 = vset.pattern.permute.xlu0 0
  %9155 = vperm.xlu0 %9154, %v202
  %v9156 = vpop.permute.xlu0 %9155
  %9159 = vset.pattern.permute.xlu0 0
  %9160 = vperm.xlu0 %9159, %v203
  %v9161 = vpop.permute.xlu0 %9160
  %9164 = vset.pattern.permute.xlu0 0
  %9165 = vperm.xlu0 %9164, %v204
  %v9166 = vpop.permute.xlu0 %9165
  %9169 = vset.pattern.permute.xlu0 0
  %9170 = vperm.xlu0 %9169, %v205
  %v9171 = vpop.permute.xlu0 %9170
  %9174 = vset.pattern.permute.xlu0 0
  %9175 = vperm.xlu0 %9174, %v206
  %v9176 = vpop.permute.xlu0 %9175
  %9179 = vset.pattern.permute.xlu0 0
  %9180 = vperm.xlu0 %9179, %v207
  %v9181 = vpop.permute.xlu0 %9180
  %9184 = vset.pattern.permute.xlu0 0
  %9185 = vperm.xlu0 %9184, %v208
  %v9186 = vpop.permute.xlu0 %9185
  %9189 = vset.pattern.permute.xlu0 0
  %9190 = vperm.xlu0 %9189, %v209
  %v9191 = vpop.permute.xlu0 %9190
  %9194 = vset.pattern.permute.xlu0 0
  %9195 = vperm.xlu0 %9194, %v210
  %v9196 = vpop.permute.xlu0 %9195
  %9199 = vset.pattern.permute.xlu0 0
  %9200 = vperm.xlu0 %9199, %v211
  %v9201 = vpop.permute.xlu0 %9200
  %9204 = vset.pattern.permute.xlu0 0
  %9205 = vperm.xlu0 %9204, %v212
  %v9206 = vpop.permute.xlu0 %9205
  %9209 = vset.pattern.permute.xlu0 0
  %9210 = vperm.xlu0 %9209, %v213
  %v9211 = vpop.permute.xlu0 %9210
  %9214 = vset.pattern.permute.xlu0 0
  %9215 = vperm.xlu0 %9214, %v214
  %v9216 = vpop.permute.xlu0 %9215
  %9219 = vset.pattern.permute.xlu0 0
  %9220 = vperm.xlu0 %9219, %v215
  %v9221 = vpop.permute.xlu0 %9220
  %9224 = vset.pattern.permute.xlu0 0
  %9225 = vperm.xlu0 %9224, %v216
  %v9226 = vpop.permute.xlu0 %9225
  %9229 = vset.pattern.permute.xlu0 0
  %9230 = vperm.xlu0 %9229, %v217
  %v9231 = vpop.permute.xlu0 %9230
  %9234 = vset.pattern.permute.xlu0 0
  %9235 = vperm.xlu0 %9234, %v218
  %v9236 = vpop.permute.xlu0 %9235
  %9239 = vset.pattern.permute.xlu0 0
  %9240 = vperm.xlu0 %9239, %v219
  %v9241 = vpop.permute.xlu0 %9240
  %9244 = vset.pattern.permute.xlu0 0
  %9245 = vperm.xlu0 %9244, %v220
  %v9246 = vpop.permute.xlu0 %9245
  %9249 = vset.pattern.permute.xlu0 0
  %9250 = vperm.xlu0 %9249, %v221
  %v9251 = vpop.permute.xlu0 %9250
  %9254 = vset.pattern.permute.xlu0 0
  %9255 = vperm.xlu0 %9254, %v222
  %v9256 = vpop.permute.xlu0 %9255
  %9259 = vset.pattern.permute.xlu0 0
  %9260 = vperm.xlu0 %9259, %v223
  %v9261 = vpop.permute.xlu0 %9260
  %v9263 = vmul.f32 %v8775, %v8861
  %v9264 = vmul.f32 %v8776, %v8866
  %v9265 = vmul.f32 %v8777, %v8871
  %v9266 = vmul.f32 %v8778, %v8876
  %v9267 = vmul.f32 %v8779, %v8881
  %v9268 = vmul.f32 %v8780, %v8886
  %v9269 = vmul.f32 %v8781, %v8891
  %v9270 = vmul.f32 %v8782, %v8896
  %v9271 = vmul.f32 %v8783, %v8901
  %v9272 = vmul.f32 %v8784, %v8906
  %v9273 = vmul.f32 %v8785, %v8911
  %v9274 = vmul.f32 %v8786, %v8916
  %v9275 = vmul.f32 %v8787, %v8921
  %v9276 = vmul.f32 %v8788, %v8926
  %v9277 = vmul.f32 %v8789, %v8931
  %v9278 = vmul.f32 %v8790, %v8936
  %v9279 = vmul.f32 %v8791, %v8941
  %v9280 = vmul.f32 %v8792, %v8946
  %v9281 = vmul.f32 %v8793, %v8951
  %v9282 = vmul.f32 %v8794, %v8956
  %v9283 = vmul.f32 %v8795, %v8961
  %v9284 = vmul.f32 %v8796, %v8966
  %v9285 = vmul.f32 %v8797, %v8971
  %v9286 = vmul.f32 %v8798, %v8976
  %v9287 = vmul.f32 %v8799, %v8981
  %v9288 = vmul.f32 %v8800, %v8986
  %v9289 = vmul.f32 %v8801, %v8991
  %v9290 = vmul.f32 %v8802, %v8996
  %v9291 = vmul.f32 %v8803, %v9001
  %v9292 = vmul.f32 %v8804, %v9006
  %v9293 = vmul.f32 %v8805, %v9011
  %v9294 = vmul.f32 %v8806, %v9016
  %v9295 = vmul.f32 %v8807, %v9021
  %v9296 = vmul.f32 %v8808, %v9026
  %v9297 = vmul.f32 %v8809, %v9031
  %v9298 = vmul.f32 %v8810, %v9036
  %v9299 = vmul.f32 %v8811, %v9041
  %v9300 = vmul.f32 %v8812, %v9046
  %v9301 = vmul.f32 %v8813, %v9051
  %v9302 = vmul.f32 %v8814, %v9056
  %v9303 = vmul.f32 %v8815, %v9061
  %v9304 = vmul.f32 %v8816, %v9066
  %v9305 = vmul.f32 %v8817, %v9071
  %v9306 = vmul.f32 %v8818, %v9076
  %v9307 = vmul.f32 %v8819, %v9081
  %v9308 = vmul.f32 %v8820, %v9086
  %v9309 = vmul.f32 %v8821, %v9091
  %v9310 = vmul.f32 %v8822, %v9096
  %v9311 = vmul.f32 %v8823, %v9101
  %v9312 = vmul.f32 %v8824, %v9106
  %v9313 = vmul.f32 %v8825, %v9111
  %v9314 = vmul.f32 %v8826, %v9116
  %v9315 = vmul.f32 %v8827, %v9121
  %v9316 = vmul.f32 %v8828, %v9126
  %v9317 = vmul.f32 %v8829, %v9131
  %v9318 = vmul.f32 %v8830, %v9136
  %v9319 = vmul.f32 %v8831, %v9141
  %v9320 = vmul.f32 %v8832, %v9146
  %v9321 = vmul.f32 %v8833, %v9151
  %v9322 = vmul.f32 %v8834, %v9156
  %v9323 = vmul.f32 %v8835, %v9161
  %v9324 = vmul.f32 %v8836, %v9166
  %v9325 = vmul.f32 %v8837, %v9171
  %v9326 = vmul.f32 %v8838, %v9176
  %v9327 = vmul.f32 %v8839, %v9181
  %v9328 = vmul.f32 %v8840, %v9186
  %v9329 = vmul.f32 %v8841, %v9191
  %v9330 = vmul.f32 %v8842, %v9196
  %v9331 = vmul.f32 %v8843, %v9201
  %v9332 = vmul.f32 %v8844, %v9206
  %v9333 = vmul.f32 %v8845, %v9211
  %v9334 = vmul.f32 %v8846, %v9216
  %v9335 = vmul.f32 %v8847, %v9221
  %v9336 = vmul.f32 %v8848, %v9226
  %v9337 = vmul.f32 %v8849, %v9231
  %v9338 = vmul.f32 %v8850, %v9236
  %v9339 = vmul.f32 %v8851, %v9241
  %v9340 = vmul.f32 %v8852, %v9246
  %v9341 = vmul.f32 %v8853, %v9251
  %v9342 = vmul.f32 %v8854, %v9256
  %v9343 = vmul.f32 %v8855, %v9261
  %v9344 = vsel %vm361, %v9263, 0.0
  %v9345 = vsel %vm361, %v9264, 0.0
  %v9346 = vadd.f32 %v9344, %v9345
  %v9347 = vsel %vm361, %v9265, 0.0
  %v9348 = vadd.f32 %v9346, %v9347
  %v9349 = vsel %vm361, %v9266, 0.0
  %v9350 = vadd.f32 %v9348, %v9349
  %v9351 = vsel %vm361, %v9267, 0.0
  %v9352 = vadd.f32 %v9350, %v9351
  %v9353 = vsel %vm361, %v9268, 0.0
  %v9354 = vadd.f32 %v9352, %v9353
  %v9355 = vsel %vm361, %v9269, 0.0
  %v9356 = vadd.f32 %v9354, %v9355
  %v9357 = vsel %vm361, %v9270, 0.0
  %v9358 = vadd.f32 %v9356, %v9357
  %v9359 = vsel %vm361, %v9271, 0.0
  %v9360 = vadd.f32 %v9358, %v9359
  %v9361 = vsel %vm361, %v9272, 0.0
  %v9362 = vadd.f32 %v9360, %v9361
  %v9363 = vsel %vm361, %v9273, 0.0
  %v9364 = vadd.f32 %v9362, %v9363
  %v9365 = vsel %vm361, %v9274, 0.0
  %v9366 = vadd.f32 %v9364, %v9365
  %v9367 = vsel %vm361, %v9275, 0.0
  %v9368 = vadd.f32 %v9366, %v9367
  %v9369 = vsel %vm361, %v9276, 0.0
  %v9370 = vadd.f32 %v9368, %v9369
  %v9371 = vsel %vm361, %v9277, 0.0
  %v9372 = vadd.f32 %v9370, %v9371
  %v9373 = vsel %vm361, %v9278, 0.0
  %v9374 = vadd.f32 %v9372, %v9373
  %v9375 = vsel %vm361, %v9279, 0.0
  %v9376 = vadd.f32 %v9374, %v9375
  %v9377 = vsel %vm361, %v9280, 0.0
  %v9378 = vadd.f32 %v9376, %v9377
  %v9379 = vsel %vm361, %v9281, 0.0
  %v9380 = vadd.f32 %v9378, %v9379
  %v9381 = vsel %vm361, %v9282, 0.0
  %v9382 = vadd.f32 %v9380, %v9381
  %v9383 = vsel %vm361, %v9283, 0.0
  %v9384 = vadd.f32 %v9382, %v9383
  %v9385 = vsel %vm361, %v9284, 0.0
  %v9386 = vadd.f32 %v9384, %v9385
  %v9387 = vsel %vm361, %v9285, 0.0
  %v9388 = vadd.f32 %v9386, %v9387
  %v9389 = vsel %vm361, %v9286, 0.0
  %v9390 = vadd.f32 %v9388, %v9389
  %v9391 = vsel %vm361, %v9287, 0.0
  %v9392 = vadd.f32 %v9390, %v9391
  %v9393 = vsel %vm361, %v9288, 0.0
  %v9394 = vadd.f32 %v9392, %v9393
  %v9395 = vsel %vm361, %v9289, 0.0
  %v9396 = vadd.f32 %v9394, %v9395
  %v9397 = vsel %vm361, %v9290, 0.0
  %v9398 = vadd.f32 %v9396, %v9397
  %v9399 = vsel %vm361, %v9291, 0.0
  %v9400 = vadd.f32 %v9398, %v9399
  %v9401 = vsel %vm361, %v9292, 0.0
  %v9402 = vadd.f32 %v9400, %v9401
  %v9403 = vsel %vm361, %v9293, 0.0
  %v9404 = vadd.f32 %v9402, %v9403
  %v9405 = vsel %vm361, %v9294, 0.0
  %v9406 = vadd.f32 %v9404, %v9405
  %v9407 = vsel %vm361, %v9295, 0.0
  %v9408 = vadd.f32 %v9406, %v9407
  %v9409 = vsel %vm361, %v9296, 0.0
  %v9410 = vadd.f32 %v9408, %v9409
  %v9411 = vsel %vm361, %v9297, 0.0
  %v9412 = vadd.f32 %v9410, %v9411
  %v9413 = vsel %vm361, %v9298, 0.0
  %v9414 = vadd.f32 %v9412, %v9413
  %v9415 = vsel %vm361, %v9299, 0.0
  %v9416 = vadd.f32 %v9414, %v9415
  %v9417 = vsel %vm361, %v9300, 0.0
  %v9418 = vadd.f32 %v9416, %v9417
  %v9419 = vsel %vm361, %v9301, 0.0
  %v9420 = vadd.f32 %v9418, %v9419
  %v9421 = vsel %vm361, %v9302, 0.0
  %v9422 = vadd.f32 %v9420, %v9421
  %v9423 = vsel %vm361, %v9303, 0.0
  %v9424 = vadd.f32 %v9422, %v9423
  %v9425 = vsel %vm361, %v9304, 0.0
  %v9426 = vadd.f32 %v9424, %v9425
  %v9427 = vsel %vm361, %v9305, 0.0
  %v9428 = vadd.f32 %v9426, %v9427
  %v9429 = vsel %vm361, %v9306, 0.0
  %v9430 = vadd.f32 %v9428, %v9429
  %v9431 = vsel %vm361, %v9307, 0.0
  %v9432 = vadd.f32 %v9430, %v9431
  %v9433 = vsel %vm361, %v9308, 0.0
  %v9434 = vadd.f32 %v9432, %v9433
  %v9435 = vsel %vm361, %v9309, 0.0
  %v9436 = vadd.f32 %v9434, %v9435
  %v9437 = vsel %vm361, %v9310, 0.0
  %v9438 = vadd.f32 %v9436, %v9437
  %v9439 = vsel %vm361, %v9311, 0.0
  %v9440 = vadd.f32 %v9438, %v9439
  %v9441 = vsel %vm361, %v9312, 0.0
  %v9442 = vadd.f32 %v9440, %v9441
  %v9443 = vsel %vm361, %v9313, 0.0
  %v9444 = vadd.f32 %v9442, %v9443
  %v9445 = vsel %vm361, %v9314, 0.0
  %v9446 = vadd.f32 %v9444, %v9445
  %v9447 = vsel %vm361, %v9315, 0.0
  %v9448 = vadd.f32 %v9446, %v9447
  %v9449 = vsel %vm361, %v9316, 0.0
  %v9450 = vadd.f32 %v9448, %v9449
  %v9451 = vsel %vm361, %v9317, 0.0
  %v9452 = vadd.f32 %v9450, %v9451
  %v9453 = vsel %vm361, %v9318, 0.0
  %v9454 = vadd.f32 %v9452, %v9453
  %v9455 = vsel %vm361, %v9319, 0.0
  %v9456 = vadd.f32 %v9454, %v9455
  %v9457 = vsel %vm361, %v9320, 0.0
  %v9458 = vadd.f32 %v9456, %v9457
  %v9459 = vsel %vm361, %v9321, 0.0
  %v9460 = vadd.f32 %v9458, %v9459
  %v9461 = vsel %vm361, %v9322, 0.0
  %v9462 = vadd.f32 %v9460, %v9461
  %v9463 = vsel %vm361, %v9323, 0.0
  %v9464 = vadd.f32 %v9462, %v9463
  %v9465 = vsel %vm361, %v9324, 0.0
  %v9466 = vadd.f32 %v9464, %v9465
  %v9467 = vsel %vm361, %v9325, 0.0
  %v9468 = vadd.f32 %v9466, %v9467
  %v9469 = vsel %vm361, %v9326, 0.0
  %v9470 = vadd.f32 %v9468, %v9469
  %v9471 = vsel %vm361, %v9327, 0.0
  %v9472 = vadd.f32 %v9470, %v9471
  %v9473 = vsel %vm361, %v9328, 0.0
  %v9474 = vadd.f32 %v9472, %v9473
  %v9475 = vsel %vm361, %v9329, 0.0
  %v9476 = vadd.f32 %v9474, %v9475
  %v9477 = vsel %vm361, %v9330, 0.0
  %v9478 = vadd.f32 %v9476, %v9477
  %v9479 = vsel %vm361, %v9331, 0.0
  %v9480 = vadd.f32 %v9478, %v9479
  %v9481 = vsel %vm361, %v9332, 0.0
  %v9482 = vadd.f32 %v9480, %v9481
  %v9483 = vsel %vm361, %v9333, 0.0
  %v9484 = vadd.f32 %v9482, %v9483
  %v9485 = vsel %vm361, %v9334, 0.0
  %v9486 = vadd.f32 %v9484, %v9485
  %v9487 = vsel %vm361, %v9335, 0.0
  %v9488 = vadd.f32 %v9486, %v9487
  %v9489 = vsel %vm361, %v9336, 0.0
  %v9490 = vadd.f32 %v9488, %v9489
  %v9491 = vsel %vm361, %v9337, 0.0
  %v9492 = vadd.f32 %v9490, %v9491
  %v9493 = vsel %vm361, %v9338, 0.0
  %v9494 = vadd.f32 %v9492, %v9493
  %v9495 = vsel %vm361, %v9339, 0.0
  %v9496 = vadd.f32 %v9494, %v9495
  %v9497 = vsel %vm361, %v9340, 0.0
  %v9498 = vadd.f32 %v9496, %v9497
  %v9499 = vsel %vm361, %v9341, 0.0
  %v9500 = vadd.f32 %v9498, %v9499
  %v9501 = vsel %vm361, %v9342, 0.0
  %v9502 = vadd.f32 %v9500, %v9501
  %v9503 = vsel %vm361, %v9343, 0.0
  %v9504 = vadd.f32 %v9502, %v9503
  %v9505 = vrot.slane %v9504, 4
  %v9506 = vadd.f32 %v9504, %v9505
  %v9507 = vrot.slane %v9506, 2
  %v9508 = vadd.f32 %v9506, %v9507
  %v9509 = vrot.slane %v9508, 1
  %v9510 = vadd.f32 %v9508, %v9509
  %v9511 = vmul.f32 %v9263, %v9263
  %v9512 = vmul.f32 %v9264, %v9264
  %v9513 = vmul.f32 %v9265, %v9265
  %v9514 = vmul.f32 %v9266, %v9266
  %v9515 = vmul.f32 %v9267, %v9267
  %v9516 = vmul.f32 %v9268, %v9268
  %v9517 = vmul.f32 %v9269, %v9269
  %v9518 = vmul.f32 %v9270, %v9270
  %v9519 = vmul.f32 %v9271, %v9271
  %v9520 = vmul.f32 %v9272, %v9272
  %v9521 = vmul.f32 %v9273, %v9273
  %v9522 = vmul.f32 %v9274, %v9274
  %v9523 = vmul.f32 %v9275, %v9275
  %v9524 = vmul.f32 %v9276, %v9276
  %v9525 = vmul.f32 %v9277, %v9277
  %v9526 = vmul.f32 %v9278, %v9278
  %v9527 = vmul.f32 %v9279, %v9279
  %v9528 = vmul.f32 %v9280, %v9280
  %v9529 = vmul.f32 %v9281, %v9281
  %v9530 = vmul.f32 %v9282, %v9282
  %v9531 = vmul.f32 %v9283, %v9283
  %v9532 = vmul.f32 %v9284, %v9284
  %v9533 = vmul.f32 %v9285, %v9285
  %v9534 = vmul.f32 %v9286, %v9286
  %v9535 = vmul.f32 %v9287, %v9287
  %v9536 = vmul.f32 %v9288, %v9288
  %v9537 = vmul.f32 %v9289, %v9289
  %v9538 = vmul.f32 %v9290, %v9290
  %v9539 = vmul.f32 %v9291, %v9291
  %v9540 = vmul.f32 %v9292, %v9292
  %v9541 = vmul.f32 %v9293, %v9293
  %v9542 = vmul.f32 %v9294, %v9294
  %v9543 = vmul.f32 %v9295, %v9295
  %v9544 = vmul.f32 %v9296, %v9296
  %v9545 = vmul.f32 %v9297, %v9297
  %v9546 = vmul.f32 %v9298, %v9298
  %v9547 = vmul.f32 %v9299, %v9299
  %v9548 = vmul.f32 %v9300, %v9300
  %v9549 = vmul.f32 %v9301, %v9301
  %v9550 = vmul.f32 %v9302, %v9302
  %v9551 = vmul.f32 %v9303, %v9303
  %v9552 = vmul.f32 %v9304, %v9304
  %v9553 = vmul.f32 %v9305, %v9305
  %v9554 = vmul.f32 %v9306, %v9306
  %v9555 = vmul.f32 %v9307, %v9307
  %v9556 = vmul.f32 %v9308, %v9308
  %v9557 = vmul.f32 %v9309, %v9309
  %v9558 = vmul.f32 %v9310, %v9310
  %v9559 = vmul.f32 %v9311, %v9311
  %v9560 = vmul.f32 %v9312, %v9312
  %v9561 = vmul.f32 %v9313, %v9313
  %v9562 = vmul.f32 %v9314, %v9314
  %v9563 = vmul.f32 %v9315, %v9315
  %v9564 = vmul.f32 %v9316, %v9316
  %v9565 = vmul.f32 %v9317, %v9317
  %v9566 = vmul.f32 %v9318, %v9318
  %v9567 = vmul.f32 %v9319, %v9319
  %v9568 = vmul.f32 %v9320, %v9320
  %v9569 = vmul.f32 %v9321, %v9321
  %v9570 = vmul.f32 %v9322, %v9322
  %v9571 = vmul.f32 %v9323, %v9323
  %v9572 = vmul.f32 %v9324, %v9324
  %v9573 = vmul.f32 %v9325, %v9325
  %v9574 = vmul.f32 %v9326, %v9326
  %v9575 = vmul.f32 %v9327, %v9327
  %v9576 = vmul.f32 %v9328, %v9328
  %v9577 = vmul.f32 %v9329, %v9329
  %v9578 = vmul.f32 %v9330, %v9330
  %v9579 = vmul.f32 %v9331, %v9331
  %v9580 = vmul.f32 %v9332, %v9332
  %v9581 = vmul.f32 %v9333, %v9333
  %v9582 = vmul.f32 %v9334, %v9334
  %v9583 = vmul.f32 %v9335, %v9335
  %v9584 = vmul.f32 %v9336, %v9336
  %v9585 = vmul.f32 %v9337, %v9337
  %v9586 = vmul.f32 %v9338, %v9338
  %v9587 = vmul.f32 %v9339, %v9339
  %v9588 = vmul.f32 %v9340, %v9340
  %v9589 = vmul.f32 %v9341, %v9341
  %v9590 = vmul.f32 %v9342, %v9342
  %v9591 = vmul.f32 %v9343, %v9343
  %v9592 = vsel %vm361, %v9511, 0.0
  %v9593 = vsel %vm361, %v9512, 0.0
  %v9594 = vadd.f32 %v9592, %v9593
  %v9595 = vsel %vm361, %v9513, 0.0
  %v9596 = vadd.f32 %v9594, %v9595
  %v9597 = vsel %vm361, %v9514, 0.0
  %v9598 = vadd.f32 %v9596, %v9597
  %v9599 = vsel %vm361, %v9515, 0.0
  %v9600 = vadd.f32 %v9598, %v9599
  %v9601 = vsel %vm361, %v9516, 0.0
  %v9602 = vadd.f32 %v9600, %v9601
  %v9603 = vsel %vm361, %v9517, 0.0
  %v9604 = vadd.f32 %v9602, %v9603
  %v9605 = vsel %vm361, %v9518, 0.0
  %v9606 = vadd.f32 %v9604, %v9605
  %v9607 = vsel %vm361, %v9519, 0.0
  %v9608 = vadd.f32 %v9606, %v9607
  %v9609 = vsel %vm361, %v9520, 0.0
  %v9610 = vadd.f32 %v9608, %v9609
  %v9611 = vsel %vm361, %v9521, 0.0
  %v9612 = vadd.f32 %v9610, %v9611
  %v9613 = vsel %vm361, %v9522, 0.0
  %v9614 = vadd.f32 %v9612, %v9613
  %v9615 = vsel %vm361, %v9523, 0.0
  %v9616 = vadd.f32 %v9614, %v9615
  %v9617 = vsel %vm361, %v9524, 0.0
  %v9618 = vadd.f32 %v9616, %v9617
  %v9619 = vsel %vm361, %v9525, 0.0
  %v9620 = vadd.f32 %v9618, %v9619
  %v9621 = vsel %vm361, %v9526, 0.0
  %v9622 = vadd.f32 %v9620, %v9621
  %v9623 = vsel %vm361, %v9527, 0.0
  %v9624 = vadd.f32 %v9622, %v9623
  %v9625 = vsel %vm361, %v9528, 0.0
  %v9626 = vadd.f32 %v9624, %v9625
  %v9627 = vsel %vm361, %v9529, 0.0
  %v9628 = vadd.f32 %v9626, %v9627
  %v9629 = vsel %vm361, %v9530, 0.0
  %v9630 = vadd.f32 %v9628, %v9629
  %v9631 = vsel %vm361, %v9531, 0.0
  %v9632 = vadd.f32 %v9630, %v9631
  %v9633 = vsel %vm361, %v9532, 0.0
  %v9634 = vadd.f32 %v9632, %v9633
  %v9635 = vsel %vm361, %v9533, 0.0
  %v9636 = vadd.f32 %v9634, %v9635
  %v9637 = vsel %vm361, %v9534, 0.0
  %v9638 = vadd.f32 %v9636, %v9637
  %v9639 = vsel %vm361, %v9535, 0.0
  %v9640 = vadd.f32 %v9638, %v9639
  %v9641 = vsel %vm361, %v9536, 0.0
  %v9642 = vadd.f32 %v9640, %v9641
  %v9643 = vsel %vm361, %v9537, 0.0
  %v9644 = vadd.f32 %v9642, %v9643
  %v9645 = vsel %vm361, %v9538, 0.0
  %v9646 = vadd.f32 %v9644, %v9645
  %v9647 = vsel %vm361, %v9539, 0.0
  %v9648 = vadd.f32 %v9646, %v9647
  %v9649 = vsel %vm361, %v9540, 0.0
  %v9650 = vadd.f32 %v9648, %v9649
  %v9651 = vsel %vm361, %v9541, 0.0
  %v9652 = vadd.f32 %v9650, %v9651
  %v9653 = vsel %vm361, %v9542, 0.0
  %v9654 = vadd.f32 %v9652, %v9653
  %v9655 = vsel %vm361, %v9543, 0.0
  %v9656 = vadd.f32 %v9654, %v9655
  %v9657 = vsel %vm361, %v9544, 0.0
  %v9658 = vadd.f32 %v9656, %v9657
  %v9659 = vsel %vm361, %v9545, 0.0
  %v9660 = vadd.f32 %v9658, %v9659
  %v9661 = vsel %vm361, %v9546, 0.0
  %v9662 = vadd.f32 %v9660, %v9661
  %v9663 = vsel %vm361, %v9547, 0.0
  %v9664 = vadd.f32 %v9662, %v9663
  %v9665 = vsel %vm361, %v9548, 0.0
  %v9666 = vadd.f32 %v9664, %v9665
  %v9667 = vsel %vm361, %v9549, 0.0
  %v9668 = vadd.f32 %v9666, %v9667
  %v9669 = vsel %vm361, %v9550, 0.0
  %v9670 = vadd.f32 %v9668, %v9669
  %v9671 = vsel %vm361, %v9551, 0.0
  %v9672 = vadd.f32 %v9670, %v9671
  %v9673 = vsel %vm361, %v9552, 0.0
  %v9674 = vadd.f32 %v9672, %v9673
  %v9675 = vsel %vm361, %v9553, 0.0
  %v9676 = vadd.f32 %v9674, %v9675
  %v9677 = vsel %vm361, %v9554, 0.0
  %v9678 = vadd.f32 %v9676, %v9677
  %v9679 = vsel %vm361, %v9555, 0.0
  %v9680 = vadd.f32 %v9678, %v9679
  %v9681 = vsel %vm361, %v9556, 0.0
  %v9682 = vadd.f32 %v9680, %v9681
  %v9683 = vsel %vm361, %v9557, 0.0
  %v9684 = vadd.f32 %v9682, %v9683
  %v9685 = vsel %vm361, %v9558, 0.0
  %v9686 = vadd.f32 %v9684, %v9685
  %v9687 = vsel %vm361, %v9559, 0.0
  %v9688 = vadd.f32 %v9686, %v9687
  %v9689 = vsel %vm361, %v9560, 0.0
  %v9690 = vadd.f32 %v9688, %v9689
  %v9691 = vsel %vm361, %v9561, 0.0
  %v9692 = vadd.f32 %v9690, %v9691
  %v9693 = vsel %vm361, %v9562, 0.0
  %v9694 = vadd.f32 %v9692, %v9693
  %v9695 = vsel %vm361, %v9563, 0.0
  %v9696 = vadd.f32 %v9694, %v9695
  %v9697 = vsel %vm361, %v9564, 0.0
  %v9698 = vadd.f32 %v9696, %v9697
  %v9699 = vsel %vm361, %v9565, 0.0
  %v9700 = vadd.f32 %v9698, %v9699
  %v9701 = vsel %vm361, %v9566, 0.0
  %v9702 = vadd.f32 %v9700, %v9701
  %v9703 = vsel %vm361, %v9567, 0.0
  %v9704 = vadd.f32 %v9702, %v9703
  %v9705 = vsel %vm361, %v9568, 0.0
  %v9706 = vadd.f32 %v9704, %v9705
  %v9707 = vsel %vm361, %v9569, 0.0
  %v9708 = vadd.f32 %v9706, %v9707
  %v9709 = vsel %vm361, %v9570, 0.0
  %v9710 = vadd.f32 %v9708, %v9709
  %v9711 = vsel %vm361, %v9571, 0.0
  %v9712 = vadd.f32 %v9710, %v9711
  %v9713 = vsel %vm361, %v9572, 0.0
  %v9714 = vadd.f32 %v9712, %v9713
  %v9715 = vsel %vm361, %v9573, 0.0
  %v9716 = vadd.f32 %v9714, %v9715
  %v9717 = vsel %vm361, %v9574, 0.0
  %v9718 = vadd.f32 %v9716, %v9717
  %v9719 = vsel %vm361, %v9575, 0.0
  %v9720 = vadd.f32 %v9718, %v9719
  %v9721 = vsel %vm361, %v9576, 0.0
  %v9722 = vadd.f32 %v9720, %v9721
  %v9723 = vsel %vm361, %v9577, 0.0
  %v9724 = vadd.f32 %v9722, %v9723
  %v9725 = vsel %vm361, %v9578, 0.0
  %v9726 = vadd.f32 %v9724, %v9725
  %v9727 = vsel %vm361, %v9579, 0.0
  %v9728 = vadd.f32 %v9726, %v9727
  %v9729 = vsel %vm361, %v9580, 0.0
  %v9730 = vadd.f32 %v9728, %v9729
  %v9731 = vsel %vm361, %v9581, 0.0
  %v9732 = vadd.f32 %v9730, %v9731
  %v9733 = vsel %vm361, %v9582, 0.0
  %v9734 = vadd.f32 %v9732, %v9733
  %v9735 = vsel %vm361, %v9583, 0.0
  %v9736 = vadd.f32 %v9734, %v9735
  %v9737 = vsel %vm361, %v9584, 0.0
  %v9738 = vadd.f32 %v9736, %v9737
  %v9739 = vsel %vm361, %v9585, 0.0
  %v9740 = vadd.f32 %v9738, %v9739
  %v9741 = vsel %vm361, %v9586, 0.0
  %v9742 = vadd.f32 %v9740, %v9741
  %v9743 = vsel %vm361, %v9587, 0.0
  %v9744 = vadd.f32 %v9742, %v9743
  %v9745 = vsel %vm361, %v9588, 0.0
  %v9746 = vadd.f32 %v9744, %v9745
  %v9747 = vsel %vm361, %v9589, 0.0
  %v9748 = vadd.f32 %v9746, %v9747
  %v9749 = vsel %vm361, %v9590, 0.0
  %v9750 = vadd.f32 %v9748, %v9749
  %v9751 = vsel %vm361, %v9591, 0.0
  %v9752 = vadd.f32 %v9750, %v9751
  %v9753 = vrot.slane %v9752, 4
  %v9754 = vadd.f32 %v9752, %v9753
  %v9755 = vrot.slane %v9754, 2
  %v9756 = vadd.f32 %v9754, %v9755
  %v9757 = vrot.slane %v9756, 1
  %v9758 = vadd.f32 %v9756, %v9757
  %v9759 = vmul.f32 %v9510, 0.0078125
  %v9760 = vmul.f32 %v9758, 0.0078125
  %v9761 = vmul.f32 %v9759, %v9759
  %v9762 = vsub.f32 %v9760, %v9761
  %v9763 = vmax.f32 %v9762, 0.0
  %v9764 = vadd.f32 %v9763, 1e-05
  %v9765 = vrsqrt.pop %v9764
  %v9766 = vmul.f32 %v8856, %v9765
  %v9767 = vmul.f32 %v9759, %v9766
  %v9768 = vsub.f32 %v8857, %v9767
  %v9770 = vlaneseq
  %v9771 = vshrl.u32 %v9770, 7
  %v9772 = vsub.s32 0, %v9771
  %v9773 = vrot.slane %v9766, %v9772
  %v9775 = vmul.f32 %v8775, %v9773
  %v9776 = vmul.f32 %v8776, %v9773
  %v9777 = vmul.f32 %v8777, %v9773
  %v9778 = vmul.f32 %v8778, %v9773
  %v9779 = vmul.f32 %v8779, %v9773
  %v9780 = vmul.f32 %v8780, %v9773
  %v9781 = vmul.f32 %v8781, %v9773
  %v9782 = vmul.f32 %v8782, %v9773
  %v9783 = vmul.f32 %v8783, %v9773
  %v9784 = vmul.f32 %v8784, %v9773
  %v9785 = vmul.f32 %v8785, %v9773
  %v9786 = vmul.f32 %v8786, %v9773
  %v9787 = vmul.f32 %v8787, %v9773
  %v9788 = vmul.f32 %v8788, %v9773
  %v9789 = vmul.f32 %v8789, %v9773
  %v9790 = vmul.f32 %v8790, %v9773
  %v9791 = vmul.f32 %v8791, %v9773
  %v9792 = vmul.f32 %v8792, %v9773
  %v9793 = vmul.f32 %v8793, %v9773
  %v9794 = vmul.f32 %v8794, %v9773
  %v9795 = vmul.f32 %v8795, %v9773
  %v9796 = vmul.f32 %v8796, %v9773
  %v9797 = vmul.f32 %v8797, %v9773
  %v9798 = vmul.f32 %v8798, %v9773
  %v9799 = vmul.f32 %v8799, %v9773
  %v9800 = vmul.f32 %v8800, %v9773
  %v9801 = vmul.f32 %v8801, %v9773
  %v9802 = vmul.f32 %v8802, %v9773
  %v9803 = vmul.f32 %v8803, %v9773
  %v9804 = vmul.f32 %v8804, %v9773
  %v9805 = vmul.f32 %v8805, %v9773
  %v9806 = vmul.f32 %v8806, %v9773
  %v9807 = vmul.f32 %v8807, %v9773
  %v9808 = vmul.f32 %v8808, %v9773
  %v9809 = vmul.f32 %v8809, %v9773
  %v9810 = vmul.f32 %v8810, %v9773
  %v9811 = vmul.f32 %v8811, %v9773
  %v9812 = vmul.f32 %v8812, %v9773
  %v9813 = vmul.f32 %v8813, %v9773
  %v9814 = vmul.f32 %v8814, %v9773
  %v9815 = vmul.f32 %v8815, %v9773
  %v9816 = vmul.f32 %v8816, %v9773
  %v9817 = vmul.f32 %v8817, %v9773
  %v9818 = vmul.f32 %v8818, %v9773
  %v9819 = vmul.f32 %v8819, %v9773
  %v9820 = vmul.f32 %v8820, %v9773
  %v9821 = vmul.f32 %v8821, %v9773
  %v9822 = vmul.f32 %v8822, %v9773
  %v9823 = vmul.f32 %v8823, %v9773
  %v9824 = vmul.f32 %v8824, %v9773
  %v9825 = vmul.f32 %v8825, %v9773
  %v9826 = vmul.f32 %v8826, %v9773
  %v9827 = vmul.f32 %v8827, %v9773
  %v9828 = vmul.f32 %v8828, %v9773
  %v9829 = vmul.f32 %v8829, %v9773
  %v9830 = vmul.f32 %v8830, %v9773
  %v9831 = vmul.f32 %v8831, %v9773
  %v9832 = vmul.f32 %v8832, %v9773
  %v9833 = vmul.f32 %v8833, %v9773
  %v9834 = vmul.f32 %v8834, %v9773
  %v9835 = vmul.f32 %v8835, %v9773
  %v9836 = vmul.f32 %v8836, %v9773
  %v9837 = vmul.f32 %v8837, %v9773
  %v9838 = vmul.f32 %v8838, %v9773
  %v9839 = vmul.f32 %v8839, %v9773
  %v9840 = vmul.f32 %v8840, %v9773
  %v9841 = vmul.f32 %v8841, %v9773
  %v9842 = vmul.f32 %v8842, %v9773
  %v9843 = vmul.f32 %v8843, %v9773
  %v9844 = vmul.f32 %v8844, %v9773
  %v9845 = vmul.f32 %v8845, %v9773
  %v9846 = vmul.f32 %v8846, %v9773
  %v9847 = vmul.f32 %v8847, %v9773
  %v9848 = vmul.f32 %v8848, %v9773
  %v9849 = vmul.f32 %v8849, %v9773
  %v9850 = vmul.f32 %v8850, %v9773
  %v9851 = vmul.f32 %v8851, %v9773
  %v9852 = vmul.f32 %v8852, %v9773
  %v9853 = vmul.f32 %v8853, %v9773
  %v9854 = vmul.f32 %v8854, %v9773
  %v9855 = vmul.f32 %v8855, %v9773
  %v9857 = vlaneseq
  %v9858 = vshrl.u32 %v9857, 7
  %v9859 = vsub.s32 0, %v9858
  %v9860 = vrot.slane %v9768, %v9859
  %v9862 = vadd.f32 %v9775, %v9860
  %v9863 = vadd.f32 %v9776, %v9860
  %v9864 = vadd.f32 %v9777, %v9860
  %v9865 = vadd.f32 %v9778, %v9860
  %v9866 = vadd.f32 %v9779, %v9860
  %v9867 = vadd.f32 %v9780, %v9860
  %v9868 = vadd.f32 %v9781, %v9860
  %v9869 = vadd.f32 %v9782, %v9860
  %v9870 = vadd.f32 %v9783, %v9860
  %v9871 = vadd.f32 %v9784, %v9860
  %v9872 = vadd.f32 %v9785, %v9860
  %v9873 = vadd.f32 %v9786, %v9860
  %v9874 = vadd.f32 %v9787, %v9860
  %v9875 = vadd.f32 %v9788, %v9860
  %v9876 = vadd.f32 %v9789, %v9860
  %v9877 = vadd.f32 %v9790, %v9860
  %v9878 = vadd.f32 %v9791, %v9860
  %v9879 = vadd.f32 %v9792, %v9860
  %v9880 = vadd.f32 %v9793, %v9860
  %v9881 = vadd.f32 %v9794, %v9860
  %v9882 = vadd.f32 %v9795, %v9860
  %v9883 = vadd.f32 %v9796, %v9860
  %v9884 = vadd.f32 %v9797, %v9860
  %v9885 = vadd.f32 %v9798, %v9860
  %v9886 = vadd.f32 %v9799, %v9860
  %v9887 = vadd.f32 %v9800, %v9860
  %v9888 = vadd.f32 %v9801, %v9860
  %v9889 = vadd.f32 %v9802, %v9860
  %v9890 = vadd.f32 %v9803, %v9860
  %v9891 = vadd.f32 %v9804, %v9860
  %v9892 = vadd.f32 %v9805, %v9860
  %v9893 = vadd.f32 %v9806, %v9860
  %v9894 = vadd.f32 %v9807, %v9860
  %v9895 = vadd.f32 %v9808, %v9860
  %v9896 = vadd.f32 %v9809, %v9860
  %v9897 = vadd.f32 %v9810, %v9860
  %v9898 = vadd.f32 %v9811, %v9860
  %v9899 = vadd.f32 %v9812, %v9860
  %v9900 = vadd.f32 %v9813, %v9860
  %v9901 = vadd.f32 %v9814, %v9860
  %v9902 = vadd.f32 %v9815, %v9860
  %v9903 = vadd.f32 %v9816, %v9860
  %v9904 = vadd.f32 %v9817, %v9860
  %v9905 = vadd.f32 %v9818, %v9860
  %v9906 = vadd.f32 %v9819, %v9860
  %v9907 = vadd.f32 %v9820, %v9860
  %v9908 = vadd.f32 %v9821, %v9860
  %v9909 = vadd.f32 %v9822, %v9860
  %v9910 = vadd.f32 %v9823, %v9860
  %v9911 = vadd.f32 %v9824, %v9860
  %v9912 = vadd.f32 %v9825, %v9860
  %v9913 = vadd.f32 %v9826, %v9860
  %v9914 = vadd.f32 %v9827, %v9860
  %v9915 = vadd.f32 %v9828, %v9860
  %v9916 = vadd.f32 %v9829, %v9860
  %v9917 = vadd.f32 %v9830, %v9860
  %v9918 = vadd.f32 %v9831, %v9860
  %v9919 = vadd.f32 %v9832, %v9860
  %v9920 = vadd.f32 %v9833, %v9860
  %v9921 = vadd.f32 %v9834, %v9860
  %v9922 = vadd.f32 %v9835, %v9860
  %v9923 = vadd.f32 %v9836, %v9860
  %v9924 = vadd.f32 %v9837, %v9860
  %v9925 = vadd.f32 %v9838, %v9860
  %v9926 = vadd.f32 %v9839, %v9860
  %v9927 = vadd.f32 %v9840, %v9860
  %v9928 = vadd.f32 %v9841, %v9860
  %v9929 = vadd.f32 %v9842, %v9860
  %v9930 = vadd.f32 %v9843, %v9860
  %v9931 = vadd.f32 %v9844, %v9860
  %v9932 = vadd.f32 %v9845, %v9860
  %v9933 = vadd.f32 %v9846, %v9860
  %v9934 = vadd.f32 %v9847, %v9860
  %v9935 = vadd.f32 %v9848, %v9860
  %v9936 = vadd.f32 %v9849, %v9860
  %v9937 = vadd.f32 %v9850, %v9860
  %v9938 = vadd.f32 %v9851, %v9860
  %v9939 = vadd.f32 %v9852, %v9860
  %v9940 = vadd.f32 %v9853, %v9860
  %v9941 = vadd.f32 %v9854, %v9860
  %v9942 = vadd.f32 %v9855, %v9860
  %vm9943 = vcmp.gt.f32.partialorder %v9862, 0.0
  %vm9944 = vcmp.gt.f32.partialorder %v9863, 0.0
  %vm9945 = vcmp.gt.f32.partialorder %v9864, 0.0
  %vm9946 = vcmp.gt.f32.partialorder %v9865, 0.0
  %vm9947 = vcmp.gt.f32.partialorder %v9866, 0.0
  %vm9948 = vcmp.gt.f32.partialorder %v9867, 0.0
  %vm9949 = vcmp.gt.f32.partialorder %v9868, 0.0
  %vm9950 = vcmp.gt.f32.partialorder %v9869, 0.0
  %vm9951 = vcmp.gt.f32.partialorder %v9870, 0.0
  %vm9952 = vcmp.gt.f32.partialorder %v9871, 0.0
  %vm9953 = vcmp.gt.f32.partialorder %v9872, 0.0
  %vm9954 = vcmp.gt.f32.partialorder %v9873, 0.0
  %vm9955 = vcmp.gt.f32.partialorder %v9874, 0.0
  %vm9956 = vcmp.gt.f32.partialorder %v9875, 0.0
  %vm9957 = vcmp.gt.f32.partialorder %v9876, 0.0
  %vm9958 = vcmp.gt.f32.partialorder %v9877, 0.0
  %vm9959 = vcmp.gt.f32.partialorder %v9878, 0.0
  %vm9960 = vcmp.gt.f32.partialorder %v9879, 0.0
  %vm9961 = vcmp.gt.f32.partialorder %v9880, 0.0
  %vm9962 = vcmp.gt.f32.partialorder %v9881, 0.0
  %vm9963 = vcmp.gt.f32.partialorder %v9882, 0.0
  %vm9964 = vcmp.gt.f32.partialorder %v9883, 0.0
  %vm9965 = vcmp.gt.f32.partialorder %v9884, 0.0
  %vm9966 = vcmp.gt.f32.partialorder %v9885, 0.0
  %vm9967 = vcmp.gt.f32.partialorder %v9886, 0.0
  %vm9968 = vcmp.gt.f32.partialorder %v9887, 0.0
  %vm9969 = vcmp.gt.f32.partialorder %v9888, 0.0
  %vm9970 = vcmp.gt.f32.partialorder %v9889, 0.0
  %vm9971 = vcmp.gt.f32.partialorder %v9890, 0.0
  %vm9972 = vcmp.gt.f32.partialorder %v9891, 0.0
  %vm9973 = vcmp.gt.f32.partialorder %v9892, 0.0
  %vm9974 = vcmp.gt.f32.partialorder %v9893, 0.0
  %vm9975 = vcmp.gt.f32.partialorder %v9894, 0.0
  %vm9976 = vcmp.gt.f32.partialorder %v9895, 0.0
  %vm9977 = vcmp.gt.f32.partialorder %v9896, 0.0
  %vm9978 = vcmp.gt.f32.partialorder %v9897, 0.0
  %vm9979 = vcmp.gt.f32.partialorder %v9898, 0.0
  %vm9980 = vcmp.gt.f32.partialorder %v9899, 0.0
  %vm9981 = vcmp.gt.f32.partialorder %v9900, 0.0
  %vm9982 = vcmp.gt.f32.partialorder %v9901, 0.0
  %vm9983 = vcmp.gt.f32.partialorder %v9902, 0.0
  %vm9984 = vcmp.gt.f32.partialorder %v9903, 0.0
  %vm9985 = vcmp.gt.f32.partialorder %v9904, 0.0
  %vm9986 = vcmp.gt.f32.partialorder %v9905, 0.0
  %vm9987 = vcmp.gt.f32.partialorder %v9906, 0.0
  %vm9988 = vcmp.gt.f32.partialorder %v9907, 0.0
  %vm9989 = vcmp.gt.f32.partialorder %v9908, 0.0
  %vm9990 = vcmp.gt.f32.partialorder %v9909, 0.0
  %vm9991 = vcmp.gt.f32.partialorder %v9910, 0.0
  %vm9992 = vcmp.gt.f32.partialorder %v9911, 0.0
  %vm9993 = vcmp.gt.f32.partialorder %v9912, 0.0
  %vm9994 = vcmp.gt.f32.partialorder %v9913, 0.0
  %vm9995 = vcmp.gt.f32.partialorder %v9914, 0.0
  %vm9996 = vcmp.gt.f32.partialorder %v9915, 0.0
  %vm9997 = vcmp.gt.f32.partialorder %v9916, 0.0
  %vm9998 = vcmp.gt.f32.partialorder %v9917, 0.0
  %vm9999 = vcmp.gt.f32.partialorder %v9918, 0.0
  %vm10000 = vcmp.gt.f32.partialorder %v9919, 0.0
  %vm10001 = vcmp.gt.f32.partialorder %v9920, 0.0
  %vm10002 = vcmp.gt.f32.partialorder %v9921, 0.0
  %vm10003 = vcmp.gt.f32.partialorder %v9922, 0.0
  %vm10004 = vcmp.gt.f32.partialorder %v9923, 0.0
  %vm10005 = vcmp.gt.f32.partialorder %v9924, 0.0
  %vm10006 = vcmp.gt.f32.partialorder %v9925, 0.0
  %vm10007 = vcmp.gt.f32.partialorder %v9926, 0.0
  %vm10008 = vcmp.gt.f32.partialorder %v9927, 0.0
  %vm10009 = vcmp.gt.f32.partialorder %v9928, 0.0
  %vm10010 = vcmp.gt.f32.partialorder %v9929, 0.0
  %vm10011 = vcmp.gt.f32.partialorder %v9930, 0.0
  %vm10012 = vcmp.gt.f32.partialorder %v9931, 0.0
  %vm10013 = vcmp.gt.f32.partialorder %v9932, 0.0
  %vm10014 = vcmp.gt.f32.partialorder %v9933, 0.0
  %vm10015 = vcmp.gt.f32.partialorder %v9934, 0.0
  %vm10016 = vcmp.gt.f32.partialorder %v9935, 0.0
  %vm10017 = vcmp.gt.f32.partialorder %v9936, 0.0
  %vm10018 = vcmp.gt.f32.partialorder %v9937, 0.0
  %vm10019 = vcmp.gt.f32.partialorder %v9938, 0.0
  %vm10020 = vcmp.gt.f32.partialorder %v9939, 0.0
  %vm10021 = vcmp.gt.f32.partialorder %v9940, 0.0
  %vm10022 = vcmp.gt.f32.partialorder %v9941, 0.0
  %vm10023 = vcmp.gt.f32.partialorder %v9942, 0.0
  %v10024 = vmin.f32 %v9862, 0.0
  %v10025 = vmin.f32 %v9863, 0.0
  %v10026 = vmin.f32 %v9864, 0.0
  %v10027 = vmin.f32 %v9865, 0.0
  %v10028 = vmin.f32 %v9866, 0.0
  %v10029 = vmin.f32 %v9867, 0.0
  %v10030 = vmin.f32 %v9868, 0.0
  %v10031 = vmin.f32 %v9869, 0.0
  %v10032 = vmin.f32 %v9870, 0.0
  %v10033 = vmin.f32 %v9871, 0.0
  %v10034 = vmin.f32 %v9872, 0.0
  %v10035 = vmin.f32 %v9873, 0.0
  %v10036 = vmin.f32 %v9874, 0.0
  %v10037 = vmin.f32 %v9875, 0.0
  %v10038 = vmin.f32 %v9876, 0.0
  %v10039 = vmin.f32 %v9877, 0.0
  %v10040 = vmin.f32 %v9878, 0.0
  %v10041 = vmin.f32 %v9879, 0.0
  %v10042 = vmin.f32 %v9880, 0.0
  %v10043 = vmin.f32 %v9881, 0.0
  %v10044 = vmin.f32 %v9882, 0.0
  %v10045 = vmin.f32 %v9883, 0.0
  %v10046 = vmin.f32 %v9884, 0.0
  %v10047 = vmin.f32 %v9885, 0.0
  %v10048 = vmin.f32 %v9886, 0.0
  %v10049 = vmin.f32 %v9887, 0.0
  %v10050 = vmin.f32 %v9888, 0.0
  %v10051 = vmin.f32 %v9889, 0.0
  %v10052 = vmin.f32 %v9890, 0.0
  %v10053 = vmin.f32 %v9891, 0.0
  %v10054 = vmin.f32 %v9892, 0.0
  %v10055 = vmin.f32 %v9893, 0.0
  %v10056 = vmin.f32 %v9894, 0.0
  %v10057 = vmin.f32 %v9895, 0.0
  %v10058 = vmin.f32 %v9896, 0.0
  %v10059 = vmin.f32 %v9897, 0.0
  %v10060 = vmin.f32 %v9898, 0.0
  %v10061 = vmin.f32 %v9899, 0.0
  %v10062 = vmin.f32 %v9900, 0.0
  %v10063 = vmin.f32 %v9901, 0.0
  %v10064 = vmin.f32 %v9902, 0.0
  %v10065 = vmin.f32 %v9903, 0.0
  %v10066 = vmin.f32 %v9904, 0.0
  %v10067 = vmin.f32 %v9905, 0.0
  %v10068 = vmin.f32 %v9906, 0.0
  %v10069 = vmin.f32 %v9907, 0.0
  %v10070 = vmin.f32 %v9908, 0.0
  %v10071 = vmin.f32 %v9909, 0.0
  %v10072 = vmin.f32 %v9910, 0.0
  %v10073 = vmin.f32 %v9911, 0.0
  %v10074 = vmin.f32 %v9912, 0.0
  %v10075 = vmin.f32 %v9913, 0.0
  %v10076 = vmin.f32 %v9914, 0.0
  %v10077 = vmin.f32 %v9915, 0.0
  %v10078 = vmin.f32 %v9916, 0.0
  %v10079 = vmin.f32 %v9917, 0.0
  %v10080 = vmin.f32 %v9918, 0.0
  %v10081 = vmin.f32 %v9919, 0.0
  %v10082 = vmin.f32 %v9920, 0.0
  %v10083 = vmin.f32 %v9921, 0.0
  %v10084 = vmin.f32 %v9922, 0.0
  %v10085 = vmin.f32 %v9923, 0.0
  %v10086 = vmin.f32 %v9924, 0.0
  %v10087 = vmin.f32 %v9925, 0.0
  %v10088 = vmin.f32 %v9926, 0.0
  %v10089 = vmin.f32 %v9927, 0.0
  %v10090 = vmin.f32 %v9928, 0.0
  %v10091 = vmin.f32 %v9929, 0.0
  %v10092 = vmin.f32 %v9930, 0.0
  %v10093 = vmin.f32 %v9931, 0.0
  %v10094 = vmin.f32 %v9932, 0.0
  %v10095 = vmin.f32 %v9933, 0.0
  %v10096 = vmin.f32 %v9934, 0.0
  %v10097 = vmin.f32 %v9935, 0.0
  %v10098 = vmin.f32 %v9936, 0.0
  %v10099 = vmin.f32 %v9937, 0.0
  %v10100 = vmin.f32 %v9938, 0.0
  %v10101 = vmin.f32 %v9939, 0.0
  %v10102 = vmin.f32 %v9940, 0.0
  %v10103 = vmin.f32 %v9941, 0.0
  %v10104 = vmin.f32 %v9942, 0.0
  %v10105 = vmul.f32 %v10024, 1.442695
  %v10106 = vpow.pop %v10105
  %v10107 = vmul.f32 %v10025, 1.442695
  %v10108 = vpow.pop %v10107
  %v10109 = vmul.f32 %v10026, 1.442695
  %v10110 = vpow.pop %v10109
  %v10111 = vmul.f32 %v10027, 1.442695
  %v10112 = vpow.pop %v10111
  %v10113 = vmul.f32 %v10028, 1.442695
  %v10114 = vpow.pop %v10113
  %v10115 = vmul.f32 %v10029, 1.442695
  %v10116 = vpow.pop %v10115
  %v10117 = vmul.f32 %v10030, 1.442695
  %v10118 = vpow.pop %v10117
  %v10119 = vmul.f32 %v10031, 1.442695
  %v10120 = vpow.pop %v10119
  %v10121 = vmul.f32 %v10032, 1.442695
  %v10122 = vpow.pop %v10121
  %v10123 = vmul.f32 %v10033, 1.442695
  %v10124 = vpow.pop %v10123
  %v10125 = vmul.f32 %v10034, 1.442695
  %v10126 = vpow.pop %v10125
  %v10127 = vmul.f32 %v10035, 1.442695
  %v10128 = vpow.pop %v10127
  %v10129 = vmul.f32 %v10036, 1.442695
  %v10130 = vpow.pop %v10129
  %v10131 = vmul.f32 %v10037, 1.442695
  %v10132 = vpow.pop %v10131
  %v10133 = vmul.f32 %v10038, 1.442695
  %v10134 = vpow.pop %v10133
  %v10135 = vmul.f32 %v10039, 1.442695
  %v10136 = vpow.pop %v10135
  %v10137 = vmul.f32 %v10040, 1.442695
  %v10138 = vpow.pop %v10137
  %v10139 = vmul.f32 %v10041, 1.442695
  %v10140 = vpow.pop %v10139
  %v10141 = vmul.f32 %v10042, 1.442695
  %v10142 = vpow.pop %v10141
  %v10143 = vmul.f32 %v10043, 1.442695
  %v10144 = vpow.pop %v10143
  %v10145 = vmul.f32 %v10044, 1.442695
  %v10146 = vpow.pop %v10145
  %v10147 = vmul.f32 %v10045, 1.442695
  %v10148 = vpow.pop %v10147
  %v10149 = vmul.f32 %v10046, 1.442695
  %v10150 = vpow.pop %v10149
  %v10151 = vmul.f32 %v10047, 1.442695
  %v10152 = vpow.pop %v10151
  %v10153 = vmul.f32 %v10048, 1.442695
  %v10154 = vpow.pop %v10153
  %v10155 = vmul.f32 %v10049, 1.442695
  %v10156 = vpow.pop %v10155
  %v10157 = vmul.f32 %v10050, 1.442695
  %v10158 = vpow.pop %v10157
  %v10159 = vmul.f32 %v10051, 1.442695
  %v10160 = vpow.pop %v10159
  %v10161 = vmul.f32 %v10052, 1.442695
  %v10162 = vpow.pop %v10161
  %v10163 = vmul.f32 %v10053, 1.442695
  %v10164 = vpow.pop %v10163
  %v10165 = vmul.f32 %v10054, 1.442695
  %v10166 = vpow.pop %v10165
  %v10167 = vmul.f32 %v10055, 1.442695
  %v10168 = vpow.pop %v10167
  %v10169 = vmul.f32 %v10056, 1.442695
  %v10170 = vpow.pop %v10169
  %v10171 = vmul.f32 %v10057, 1.442695
  %v10172 = vpow.pop %v10171
  %v10173 = vmul.f32 %v10058, 1.442695
  %v10174 = vpow.pop %v10173
  %v10175 = vmul.f32 %v10059, 1.442695
  %v10176 = vpow.pop %v10175
  %v10177 = vmul.f32 %v10060, 1.442695
  %v10178 = vpow.pop %v10177
  %v10179 = vmul.f32 %v10061, 1.442695
  %v10180 = vpow.pop %v10179
  %v10181 = vmul.f32 %v10062, 1.442695
  %v10182 = vpow.pop %v10181
  %v10183 = vmul.f32 %v10063, 1.442695
  %v10184 = vpow.pop %v10183
  %v10185 = vmul.f32 %v10064, 1.442695
  %v10186 = vpow.pop %v10185
  %v10187 = vmul.f32 %v10065, 1.442695
  %v10188 = vpow.pop %v10187
  %v10189 = vmul.f32 %v10066, 1.442695
  %v10190 = vpow.pop %v10189
  %v10191 = vmul.f32 %v10067, 1.442695
  %v10192 = vpow.pop %v10191
  %v10193 = vmul.f32 %v10068, 1.442695
  %v10194 = vpow.pop %v10193
  %v10195 = vmul.f32 %v10069, 1.442695
  %v10196 = vpow.pop %v10195
  %v10197 = vmul.f32 %v10070, 1.442695
  %v10198 = vpow.pop %v10197
  %v10199 = vmul.f32 %v10071, 1.442695
  %v10200 = vpow.pop %v10199
  %v10201 = vmul.f32 %v10072, 1.442695
  %v10202 = vpow.pop %v10201
  %v10203 = vmul.f32 %v10073, 1.442695
  %v10204 = vpow.pop %v10203
  %v10205 = vmul.f32 %v10074, 1.442695
  %v10206 = vpow.pop %v10205
  %v10207 = vmul.f32 %v10075, 1.442695
  %v10208 = vpow.pop %v10207
  %v10209 = vmul.f32 %v10076, 1.442695
  %v10210 = vpow.pop %v10209
  %v10211 = vmul.f32 %v10077, 1.442695
  %v10212 = vpow.pop %v10211
  %v10213 = vmul.f32 %v10078, 1.442695
  %v10214 = vpow.pop %v10213
  %v10215 = vmul.f32 %v10079, 1.442695
  %v10216 = vpow.pop %v10215
  %v10217 = vmul.f32 %v10080, 1.442695
  %v10218 = vpow.pop %v10217
  %v10219 = vmul.f32 %v10081, 1.442695
  %v10220 = vpow.pop %v10219
  %v10221 = vmul.f32 %v10082, 1.442695
  %v10222 = vpow.pop %v10221
  %v10223 = vmul.f32 %v10083, 1.442695
  %v10224 = vpow.pop %v10223
  %v10225 = vmul.f32 %v10084, 1.442695
  %v10226 = vpow.pop %v10225
  %v10227 = vmul.f32 %v10085, 1.442695
  %v10228 = vpow.pop %v10227
  %v10229 = vmul.f32 %v10086, 1.442695
  %v10230 = vpow.pop %v10229
  %v10231 = vmul.f32 %v10087, 1.442695
  %v10232 = vpow.pop %v10231
  %v10233 = vmul.f32 %v10088, 1.442695
  %v10234 = vpow.pop %v10233
  %v10235 = vmul.f32 %v10089, 1.442695
  %v10236 = vpow.pop %v10235
  %v10237 = vmul.f32 %v10090, 1.442695
  %v10238 = vpow.pop %v10237
  %v10239 = vmul.f32 %v10091, 1.442695
  %v10240 = vpow.pop %v10239
  %v10241 = vmul.f32 %v10092, 1.442695
  %v10242 = vpow.pop %v10241
  %v10243 = vmul.f32 %v10093, 1.442695
  %v10244 = vpow.pop %v10243
  %v10245 = vmul.f32 %v10094, 1.442695
  %v10246 = vpow.pop %v10245
  %v10247 = vmul.f32 %v10095, 1.442695
  %v10248 = vpow.pop %v10247
  %v10249 = vmul.f32 %v10096, 1.442695
  %v10250 = vpow.pop %v10249
  %v10251 = vmul.f32 %v10097, 1.442695
  %v10252 = vpow.pop %v10251
  %v10253 = vmul.f32 %v10098, 1.442695
  %v10254 = vpow.pop %v10253
  %v10255 = vmul.f32 %v10099, 1.442695
  %v10256 = vpow.pop %v10255
  %v10257 = vmul.f32 %v10100, 1.442695
  %v10258 = vpow.pop %v10257
  %v10259 = vmul.f32 %v10101, 1.442695
  %v10260 = vpow.pop %v10259
  %v10261 = vmul.f32 %v10102, 1.442695
  %v10262 = vpow.pop %v10261
  %v10263 = vmul.f32 %v10103, 1.442695
  %v10264 = vpow.pop %v10263
  %v10265 = vmul.f32 %v10104, 1.442695
  %v10266 = vpow.pop %v10265
  %v10267 = vsub.f32 %v10106, 1.0
  %v10268 = vsub.f32 %v10108, 1.0
  %v10269 = vsub.f32 %v10110, 1.0
  %v10270 = vsub.f32 %v10112, 1.0
  %v10271 = vsub.f32 %v10114, 1.0
  %v10272 = vsub.f32 %v10116, 1.0
  %v10273 = vsub.f32 %v10118, 1.0
  %v10274 = vsub.f32 %v10120, 1.0
  %v10275 = vsub.f32 %v10122, 1.0
  %v10276 = vsub.f32 %v10124, 1.0
  %v10277 = vsub.f32 %v10126, 1.0
  %v10278 = vsub.f32 %v10128, 1.0
  %v10279 = vsub.f32 %v10130, 1.0
  %v10280 = vsub.f32 %v10132, 1.0
  %v10281 = vsub.f32 %v10134, 1.0
  %v10282 = vsub.f32 %v10136, 1.0
  %v10283 = vsub.f32 %v10138, 1.0
  %v10284 = vsub.f32 %v10140, 1.0
  %v10285 = vsub.f32 %v10142, 1.0
  %v10286 = vsub.f32 %v10144, 1.0
  %v10287 = vsub.f32 %v10146, 1.0
  %v10288 = vsub.f32 %v10148, 1.0
  %v10289 = vsub.f32 %v10150, 1.0
  %v10290 = vsub.f32 %v10152, 1.0
  %v10291 = vsub.f32 %v10154, 1.0
  %v10292 = vsub.f32 %v10156, 1.0
  %v10293 = vsub.f32 %v10158, 1.0
  %v10294 = vsub.f32 %v10160, 1.0
  %v10295 = vsub.f32 %v10162, 1.0
  %v10296 = vsub.f32 %v10164, 1.0
  %v10297 = vsub.f32 %v10166, 1.0
  %v10298 = vsub.f32 %v10168, 1.0
  %v10299 = vsub.f32 %v10170, 1.0
  %v10300 = vsub.f32 %v10172, 1.0
  %v10301 = vsub.f32 %v10174, 1.0
  %v10302 = vsub.f32 %v10176, 1.0
  %v10303 = vsub.f32 %v10178, 1.0
  %v10304 = vsub.f32 %v10180, 1.0
  %v10305 = vsub.f32 %v10182, 1.0
  %v10306 = vsub.f32 %v10184, 1.0
  %v10307 = vsub.f32 %v10186, 1.0
  %v10308 = vsub.f32 %v10188, 1.0
  %v10309 = vsub.f32 %v10190, 1.0
  %v10310 = vsub.f32 %v10192, 1.0
  %v10311 = vsub.f32 %v10194, 1.0
  %v10312 = vsub.f32 %v10196, 1.0
  %v10313 = vsub.f32 %v10198, 1.0
  %v10314 = vsub.f32 %v10200, 1.0
  %v10315 = vsub.f32 %v10202, 1.0
  %v10316 = vsub.f32 %v10204, 1.0
  %v10317 = vsub.f32 %v10206, 1.0
  %v10318 = vsub.f32 %v10208, 1.0
  %v10319 = vsub.f32 %v10210, 1.0
  %v10320 = vsub.f32 %v10212, 1.0
  %v10321 = vsub.f32 %v10214, 1.0
  %v10322 = vsub.f32 %v10216, 1.0
  %v10323 = vsub.f32 %v10218, 1.0
  %v10324 = vsub.f32 %v10220, 1.0
  %v10325 = vsub.f32 %v10222, 1.0
  %v10326 = vsub.f32 %v10224, 1.0
  %v10327 = vsub.f32 %v10226, 1.0
  %v10328 = vsub.f32 %v10228, 1.0
  %v10329 = vsub.f32 %v10230, 1.0
  %v10330 = vsub.f32 %v10232, 1.0
  %v10331 = vsub.f32 %v10234, 1.0
  %v10332 = vsub.f32 %v10236, 1.0
  %v10333 = vsub.f32 %v10238, 1.0
  %v10334 = vsub.f32 %v10240, 1.0
  %v10335 = vsub.f32 %v10242, 1.0
  %v10336 = vsub.f32 %v10244, 1.0
  %v10337 = vsub.f32 %v10246, 1.0
  %v10338 = vsub.f32 %v10248, 1.0
  %v10339 = vsub.f32 %v10250, 1.0
  %v10340 = vsub.f32 %v10252, 1.0
  %v10341 = vsub.f32 %v10254, 1.0
  %v10342 = vsub.f32 %v10256, 1.0
  %v10343 = vsub.f32 %v10258, 1.0
  %v10344 = vsub.f32 %v10260, 1.0
  %v10345 = vsub.f32 %v10262, 1.0
  %v10346 = vsub.f32 %v10264, 1.0
  %v10347 = vsub.f32 %v10266, 1.0
  %v10348 = vsel %vm9943, %v9862, %v10267
  %v10349 = vsel %vm9944, %v9863, %v10268
  %v10350 = vsel %vm9945, %v9864, %v10269
  %v10351 = vsel %vm9946, %v9865, %v10270
  %v10352 = vsel %vm9947, %v9866, %v10271
  %v10353 = vsel %vm9948, %v9867, %v10272
  %v10354 = vsel %vm9949, %v9868, %v10273
  %v10355 = vsel %vm9950, %v9869, %v10274
  %v10356 = vsel %vm9951, %v9870, %v10275
  %v10357 = vsel %vm9952, %v9871, %v10276
  %v10358 = vsel %vm9953, %v9872, %v10277
  %v10359 = vsel %vm9954, %v9873, %v10278
  %v10360 = vsel %vm9955, %v9874, %v10279
  %v10361 = vsel %vm9956, %v9875, %v10280
  %v10362 = vsel %vm9957, %v9876, %v10281
  %v10363 = vsel %vm9958, %v9877, %v10282
  %v10364 = vsel %vm9959, %v9878, %v10283
  %v10365 = vsel %vm9960, %v9879, %v10284
  %v10366 = vsel %vm9961, %v9880, %v10285
  %v10367 = vsel %vm9962, %v9881, %v10286
  %v10368 = vsel %vm9963, %v9882, %v10287
  %v10369 = vsel %vm9964, %v9883, %v10288
  %v10370 = vsel %vm9965, %v9884, %v10289
  %v10371 = vsel %vm9966, %v9885, %v10290
  %v10372 = vsel %vm9967, %v9886, %v10291
  %v10373 = vsel %vm9968, %v9887, %v10292
  %v10374 = vsel %vm9969, %v9888, %v10293
  %v10375 = vsel %vm9970, %v9889, %v10294
  %v10376 = vsel %vm9971, %v9890, %v10295
  %v10377 = vsel %vm9972, %v9891, %v10296
  %v10378 = vsel %vm9973, %v9892, %v10297
  %v10379 = vsel %vm9974, %v9893, %v10298
  %v10380 = vsel %vm9975, %v9894, %v10299
  %v10381 = vsel %vm9976, %v9895, %v10300
  %v10382 = vsel %vm9977, %v9896, %v10301
  %v10383 = vsel %vm9978, %v9897, %v10302
  %v10384 = vsel %vm9979, %v9898, %v10303
  %v10385 = vsel %vm9980, %v9899, %v10304
  %v10386 = vsel %vm9981, %v9900, %v10305
  %v10387 = vsel %vm9982, %v9901, %v10306
  %v10388 = vsel %vm9983, %v9902, %v10307
  %v10389 = vsel %vm9984, %v9903, %v10308
  %v10390 = vsel %vm9985, %v9904, %v10309
  %v10391 = vsel %vm9986, %v9905, %v10310
  %v10392 = vsel %vm9987, %v9906, %v10311
  %v10393 = vsel %vm9988, %v9907, %v10312
  %v10394 = vsel %vm9989, %v9908, %v10313
  %v10395 = vsel %vm9990, %v9909, %v10314
  %v10396 = vsel %vm9991, %v9910, %v10315
  %v10397 = vsel %vm9992, %v9911, %v10316
  %v10398 = vsel %vm9993, %v9912, %v10317
  %v10399 = vsel %vm9994, %v9913, %v10318
  %v10400 = vsel %vm9995, %v9914, %v10319
  %v10401 = vsel %vm9996, %v9915, %v10320
  %v10402 = vsel %vm9997, %v9916, %v10321
  %v10403 = vsel %vm9998, %v9917, %v10322
  %v10404 = vsel %vm9999, %v9918, %v10323
  %v10405 = vsel %vm10000, %v9919, %v10324
  %v10406 = vsel %vm10001, %v9920, %v10325
  %v10407 = vsel %vm10002, %v9921, %v10326
  %v10408 = vsel %vm10003, %v9922, %v10327
  %v10409 = vsel %vm10004, %v9923, %v10328
  %v10410 = vsel %vm10005, %v9924, %v10329
  %v10411 = vsel %vm10006, %v9925, %v10330
  %v10412 = vsel %vm10007, %v9926, %v10331
  %v10413 = vsel %vm10008, %v9927, %v10332
  %v10414 = vsel %vm10009, %v9928, %v10333
  %v10415 = vsel %vm10010, %v9929, %v10334
  %v10416 = vsel %vm10011, %v9930, %v10335
  %v10417 = vsel %vm10012, %v9931, %v10336
  %v10418 = vsel %vm10013, %v9932, %v10337
  %v10419 = vsel %vm10014, %v9933, %v10338
  %v10420 = vsel %vm10015, %v9934, %v10339
  %v10421 = vsel %vm10016, %v9935, %v10340
  %v10422 = vsel %vm10017, %v9936, %v10341
  %v10423 = vsel %vm10018, %v9937, %v10342
  %v10424 = vsel %vm10019, %v9938, %v10343
  %v10425 = vsel %vm10020, %v9939, %v10344
  %v10426 = vsel %vm10021, %v9940, %v10345
  %v10427 = vsel %vm10022, %v9941, %v10346
  %v10428 = vsel %vm10023, %v9942, %v10347
  %v10429 = vpack.c.bf16 %v10349, %v10348
  %v10430 = vpack.c.bf16 %v10351, %v10350
  %v10431 = vpack.c.bf16 %v10353, %v10352
  %v10432 = vpack.c.bf16 %v10355, %v10354
  %v10433 = vpack.c.bf16 %v10357, %v10356
  %v10434 = vpack.c.bf16 %v10359, %v10358
  %v10435 = vpack.c.bf16 %v10361, %v10360
  %v10436 = vpack.c.bf16 %v10363, %v10362
  %v10437 = vpack.c.bf16 %v10365, %v10364
  %v10438 = vpack.c.bf16 %v10367, %v10366
  %v10439 = vpack.c.bf16 %v10369, %v10368
  %v10440 = vpack.c.bf16 %v10371, %v10370
  %v10441 = vpack.c.bf16 %v10373, %v10372
  %v10442 = vpack.c.bf16 %v10375, %v10374
  %v10443 = vpack.c.bf16 %v10377, %v10376
  %v10444 = vpack.c.bf16 %v10379, %v10378
  %v10445 = vpack.c.bf16 %v10381, %v10380
  %v10446 = vpack.c.bf16 %v10383, %v10382
  %v10447 = vpack.c.bf16 %v10385, %v10384
  %v10448 = vpack.c.bf16 %v10387, %v10386
  %v10449 = vpack.c.bf16 %v10389, %v10388
  %v10450 = vpack.c.bf16 %v10391, %v10390
  %v10451 = vpack.c.bf16 %v10393, %v10392
  %v10452 = vpack.c.bf16 %v10395, %v10394
  %v10453 = vpack.c.bf16 %v10397, %v10396
  %v10454 = vpack.c.bf16 %v10399, %v10398
  %v10455 = vpack.c.bf16 %v10401, %v10400
  %v10456 = vpack.c.bf16 %v10403, %v10402
  %v10457 = vpack.c.bf16 %v10405, %v10404
  %v10458 = vpack.c.bf16 %v10407, %v10406
  %v10459 = vpack.c.bf16 %v10409, %v10408
  %v10460 = vpack.c.bf16 %v10411, %v10410
  %v10461 = vpack.c.bf16 %v10413, %v10412
  %v10462 = vpack.c.bf16 %v10415, %v10414
  %v10463 = vpack.c.bf16 %v10417, %v10416
  %v10464 = vpack.c.bf16 %v10419, %v10418
  %v10465 = vpack.c.bf16 %v10421, %v10420
  %v10466 = vpack.c.bf16 %v10423, %v10422
  %v10467 = vpack.c.bf16 %v10425, %v10424
  %v10468 = vpack.c.bf16 %v10427, %v10426
  %v10469 = vpack.c.bf16 %v10428, %v10428
  %v10470 = vld [vmem:[%s11] sm:$0xf]
  %v10471 = vld [vmem:[%s12] sm:$0x1]
  %v10473 = vlaneseq
  %v10474 = vshrl.u32 %v10473, 7
  %v10475 = vsub.s32 0, %v10474
  %v10476 = vrot.slane %v10471, %v10475
  %v10479 = vsel %vm361, %v10429, 0
  %v10482 = vsel %vm361, %v10430, 0
  %v10485 = vsel %vm361, %v10431, 0
  %v10488 = vsel %vm361, %v10432, 0
  %v10491 = vsel %vm361, %v10433, 0
  %v10494 = vsel %vm361, %v10434, 0
  %v10497 = vsel %vm361, %v10435, 0
  %v10500 = vsel %vm361, %v10436, 0
  %v10503 = vsel %vm361, %v10437, 0
  %v10506 = vsel %vm361, %v10438, 0
  %v10509 = vsel %vm361, %v10439, 0
  %v10512 = vsel %vm361, %v10440, 0
  %v10515 = vsel %vm361, %v10441, 0
  %v10518 = vsel %vm361, %v10442, 0
  %v10521 = vsel %vm361, %v10443, 0
  %v10524 = vsel %vm361, %v10444, 0
  %v10527 = vsel %vm361, %v10445, 0
  %v10530 = vsel %vm361, %v10446, 0
  %v10533 = vsel %vm361, %v10447, 0
  %v10536 = vsel %vm361, %v10448, 0
  %v10539 = vsel %vm361, %v10449, 0
  %v10542 = vsel %vm361, %v10450, 0
  %v10545 = vsel %vm361, %v10451, 0
  %v10548 = vsel %vm361, %v10452, 0
  %v10551 = vsel %vm361, %v10453, 0
  %v10554 = vsel %vm361, %v10454, 0
  %v10557 = vsel %vm361, %v10455, 0
  %v10560 = vsel %vm361, %v10456, 0
  %v10563 = vsel %vm361, %v10457, 0
  %v10566 = vsel %vm361, %v10458, 0
  %v10569 = vsel %vm361, %v10459, 0
  %v10572 = vsel %vm361, %v10460, 0
  %v10575 = vsel %vm361, %v10461, 0
  %v10578 = vsel %vm361, %v10462, 0
  %v10581 = vsel %vm361, %v10463, 0
  %v10584 = vsel %vm361, %v10464, 0
  %v10587 = vsel %vm361, %v10465, 0
  %v10590 = vsel %vm361, %v10466, 0
  %v10593 = vsel %vm361, %v10467, 0
  %v10596 = vsel %vm361, %v10468, 0
  %v10599 = vsel %vm361, %v10469, 0
  %v10602 = vsel %vm491, %v10470, 0
  %10604 = vmatprep.subr.bf16.mxu0 0
  %10605 = vmatpush1.bf16.msra.mxu0 0
  %10606 = vmatprep.subr.bf16.mxu0 0
  %10607 = vmatpush1.bf16.msra.mxu0 0
  %10608 = vmatprep.subr.bf16.mxu0 0
  %10609 = vmatpush1.bf16.msra.mxu0 0
  %10610 = vmatprep.subr.bf16.mxu0 0
  %10611 = vmatpush1.bf16.msra.mxu0 0
  %10612 = vmatprep.subr.bf16.mxu0 0
  %10613 = vmatpush1.bf16.msra.mxu0 0
  %10614 = vmatprep.subr.bf16.mxu0 0
  %10615 = vmatpush1.bf16.msra.mxu0 0
  %10616 = vmatprep.subr.bf16.mxu0 0
  %10617 = vmatpush1.bf16.msra.mxu0 0
  %10618 = vmatprep.subr.bf16.mxu0 0
  %10619 = vmatpush1.bf16.msra.mxu0 %v10602
  %10620 = vmatprep.subr.bf16.mxu0 0
  %10621 = vmatpush2.bf16.msra.mxu0 0
  %10622 = vmatprep.subr.bf16.mxu0 0
  %10623 = vmatpush2.bf16.msra.mxu0 0
  %10624 = vmatprep.subr.bf16.mxu0 0
  %10625 = vmatpush2.bf16.msra.mxu0 0
  %10626 = vmatprep.subr.bf16.mxu0 0
  %10627 = vmatpush2.bf16.msra.mxu0 0
  %10628 = vmatprep.subr.bf16.mxu0 0
  %10629 = vmatpush2.bf16.msra.mxu0 0
  %10630 = vmatprep.subr.bf16.mxu0 0
  %10631 = vmatpush2.bf16.msra.mxu0 0
  %10632 = vmatprep.subr.bf16.mxu0 0
  %10633 = vmatpush2.bf16.msra.mxu0 0
  %10634 = vmatprep.subr.bf16.mxu0 0
  %10635 = vmatpush2.bf16.msra.mxu0 0
  %10636 = vmatprep.mubr.bf16.mxu0 0
  %10637 = vmatmul.mubr.bf16.gmra.mxu0 %v10479
  %v10638 = vpop.f32.mrf.mxu0
  %v10639 = vadd.f32 %v10476, %v10638
  %v10640 = vpop.f32.mrf.mxu0
  %v10641 = vpop.f32.mrf.mxu0
  %v10642 = vadd.f32 %v10476, %v10641
  %v10643 = vpop.f32.mrf.mxu0
  %10644 = vmatprep.mubr.bf16.mxu0 0
  %10645 = vmatmul.mubr.bf16.gmra.mxu0 %v10482
  %v10646 = vpop.f32.mrf.mxu0
  %v10647 = vadd.f32 %v10476, %v10646
  %v10648 = vpop.f32.mrf.mxu0
  %v10649 = vpop.f32.mrf.mxu0
  %v10650 = vadd.f32 %v10476, %v10649
  %v10651 = vpop.f32.mrf.mxu0
  %10652 = vmatprep.mubr.bf16.mxu0 0
  %10653 = vmatmul.mubr.bf16.gmra.mxu0 %v10485
  %v10654 = vpop.f32.mrf.mxu0
  %v10655 = vadd.f32 %v10476, %v10654
  %v10656 = vpop.f32.mrf.mxu0
  %v10657 = vpop.f32.mrf.mxu0
  %v10658 = vadd.f32 %v10476, %v10657
  %v10659 = vpop.f32.mrf.mxu0
  %10660 = vmatprep.mubr.bf16.mxu0 0
  %10661 = vmatmul.mubr.bf16.gmra.mxu0 %v10488
  %v10662 = vpop.f32.mrf.mxu0
  %v10663 = vadd.f32 %v10476, %v10662
  %v10664 = vpop.f32.mrf.mxu0
  %v10665 = vpop.f32.mrf.mxu0
  %v10666 = vadd.f32 %v10476, %v10665
  %v10667 = vpop.f32.mrf.mxu0
  %10668 = vmatprep.mubr.bf16.mxu0 0
  %10669 = vmatmul.mubr.bf16.gmra.mxu0 %v10491
  %v10670 = vpop.f32.mrf.mxu0
  %v10671 = vadd.f32 %v10476, %v10670
  %v10672 = vpop.f32.mrf.mxu0
  %v10673 = vpop.f32.mrf.mxu0
  %v10674 = vadd.f32 %v10476, %v10673
  %v10675 = vpop.f32.mrf.mxu0
  %10676 = vmatprep.mubr.bf16.mxu0 0
  %10677 = vmatmul.mubr.bf16.gmra.mxu0 %v10494
  %v10678 = vpop.f32.mrf.mxu0
  %v10679 = vadd.f32 %v10476, %v10678
  %v10680 = vpop.f32.mrf.mxu0
  %v10681 = vpop.f32.mrf.mxu0
  %v10682 = vadd.f32 %v10476, %v10681
  %v10683 = vpop.f32.mrf.mxu0
  %10684 = vmatprep.mubr.bf16.mxu0 0
  %10685 = vmatmul.mubr.bf16.gmra.mxu0 %v10497
  %v10686 = vpop.f32.mrf.mxu0
  %v10687 = vadd.f32 %v10476, %v10686
  %v10688 = vpop.f32.mrf.mxu0
  %v10689 = vpop.f32.mrf.mxu0
  %v10690 = vadd.f32 %v10476, %v10689
  %v10691 = vpop.f32.mrf.mxu0
  %10692 = vmatprep.mubr.bf16.mxu0 0
  %10693 = vmatmul.mubr.bf16.gmra.mxu0 %v10500
  %v10694 = vpop.f32.mrf.mxu0
  %v10695 = vadd.f32 %v10476, %v10694
  %v10696 = vpop.f32.mrf.mxu0
  %v10697 = vpop.f32.mrf.mxu0
  %v10698 = vadd.f32 %v10476, %v10697
  %v10699 = vpop.f32.mrf.mxu0
  %10700 = vmatprep.mubr.bf16.mxu0 0
  %10701 = vmatmul.mubr.bf16.gmra.mxu0 %v10503
  %v10702 = vpop.f32.mrf.mxu0
  %v10703 = vadd.f32 %v10476, %v10702
  %v10704 = vpop.f32.mrf.mxu0
  %v10705 = vpop.f32.mrf.mxu0
  %v10706 = vadd.f32 %v10476, %v10705
  %v10707 = vpop.f32.mrf.mxu0
  %10708 = vmatprep.mubr.bf16.mxu0 0
  %10709 = vmatmul.mubr.bf16.gmra.mxu0 %v10506
  %v10710 = vpop.f32.mrf.mxu0
  %v10711 = vadd.f32 %v10476, %v10710
  %v10712 = vpop.f32.mrf.mxu0
  %v10713 = vpop.f32.mrf.mxu0
  %v10714 = vadd.f32 %v10476, %v10713
  %v10715 = vpop.f32.mrf.mxu0
  %10716 = vmatprep.mubr.bf16.mxu0 0
  %10717 = vmatmul.mubr.bf16.gmra.mxu0 %v10509
  %v10718 = vpop.f32.mrf.mxu0
  %v10719 = vadd.f32 %v10476, %v10718
  %v10720 = vpop.f32.mrf.mxu0
  %v10721 = vpop.f32.mrf.mxu0
  %v10722 = vadd.f32 %v10476, %v10721
  %v10723 = vpop.f32.mrf.mxu0
  %10724 = vmatprep.mubr.bf16.mxu0 0
  %10725 = vmatmul.mubr.bf16.gmra.mxu0 %v10512
  %v10726 = vpop.f32.mrf.mxu0
  %v10727 = vadd.f32 %v10476, %v10726
  %v10728 = vpop.f32.mrf.mxu0
  %v10729 = vpop.f32.mrf.mxu0
  %v10730 = vadd.f32 %v10476, %v10729
  %v10731 = vpop.f32.mrf.mxu0
  %10732 = vmatprep.mubr.bf16.mxu0 0
  %10733 = vmatmul.mubr.bf16.gmra.mxu0 %v10515
  %v10734 = vpop.f32.mrf.mxu0
  %v10735 = vadd.f32 %v10476, %v10734
  %v10736 = vpop.f32.mrf.mxu0
  %v10737 = vpop.f32.mrf.mxu0
  %v10738 = vadd.f32 %v10476, %v10737
  %v10739 = vpop.f32.mrf.mxu0
  %10740 = vmatprep.mubr.bf16.mxu0 0
  %10741 = vmatmul.mubr.bf16.gmra.mxu0 %v10518
  %v10742 = vpop.f32.mrf.mxu0
  %v10743 = vadd.f32 %v10476, %v10742
  %v10744 = vpop.f32.mrf.mxu0
  %v10745 = vpop.f32.mrf.mxu0
  %v10746 = vadd.f32 %v10476, %v10745
  %v10747 = vpop.f32.mrf.mxu0
  %10748 = vmatprep.mubr.bf16.mxu0 0
  %10749 = vmatmul.mubr.bf16.gmra.mxu0 %v10521
  %v10750 = vpop.f32.mrf.mxu0
  %v10751 = vadd.f32 %v10476, %v10750
  %v10752 = vpop.f32.mrf.mxu0
  %v10753 = vpop.f32.mrf.mxu0
  %v10754 = vadd.f32 %v10476, %v10753
  %v10755 = vpop.f32.mrf.mxu0
  %10756 = vmatprep.mubr.bf16.mxu0 0
  %10757 = vmatmul.mubr.bf16.gmra.mxu0 %v10524
  %v10758 = vpop.f32.mrf.mxu0
  %v10759 = vadd.f32 %v10476, %v10758
  %v10760 = vpop.f32.mrf.mxu0
  %v10761 = vpop.f32.mrf.mxu0
  %v10762 = vadd.f32 %v10476, %v10761
  %v10763 = vpop.f32.mrf.mxu0
  %10764 = vmatprep.mubr.bf16.mxu0 0
  %10765 = vmatmul.mubr.bf16.gmra.mxu0 %v10527
  %v10766 = vpop.f32.mrf.mxu0
  %v10767 = vadd.f32 %v10476, %v10766
  %v10768 = vpop.f32.mrf.mxu0
  %v10769 = vpop.f32.mrf.mxu0
  %v10770 = vadd.f32 %v10476, %v10769
  %v10771 = vpop.f32.mrf.mxu0
  %10772 = vmatprep.mubr.bf16.mxu0 0
  %10773 = vmatmul.mubr.bf16.gmra.mxu0 %v10530
  %v10774 = vpop.f32.mrf.mxu0
  %v10775 = vadd.f32 %v10476, %v10774
  %v10776 = vpop.f32.mrf.mxu0
  %v10777 = vpop.f32.mrf.mxu0
  %v10778 = vadd.f32 %v10476, %v10777
  %v10779 = vpop.f32.mrf.mxu0
  %10780 = vmatprep.mubr.bf16.mxu0 0
  %10781 = vmatmul.mubr.bf16.gmra.mxu0 %v10533
  %v10782 = vpop.f32.mrf.mxu0
  %v10783 = vadd.f32 %v10476, %v10782
  %v10784 = vpop.f32.mrf.mxu0
  %v10785 = vpop.f32.mrf.mxu0
  %v10786 = vadd.f32 %v10476, %v10785
  %v10787 = vpop.f32.mrf.mxu0
  %10788 = vmatprep.mubr.bf16.mxu0 0
  %10789 = vmatmul.mubr.bf16.gmra.mxu0 %v10536
  %v10790 = vpop.f32.mrf.mxu0
  %v10791 = vadd.f32 %v10476, %v10790
  %v10792 = vpop.f32.mrf.mxu0
  %v10793 = vpop.f32.mrf.mxu0
  %v10794 = vadd.f32 %v10476, %v10793
  %v10795 = vpop.f32.mrf.mxu0
  %10796 = vmatprep.mubr.bf16.mxu0 0
  %10797 = vmatmul.mubr.bf16.gmra.mxu0 %v10539
  %v10798 = vpop.f32.mrf.mxu0
  %v10799 = vadd.f32 %v10476, %v10798
  %v10800 = vpop.f32.mrf.mxu0
  %v10801 = vpop.f32.mrf.mxu0
  %v10802 = vadd.f32 %v10476, %v10801
  %v10803 = vpop.f32.mrf.mxu0
  %10804 = vmatprep.mubr.bf16.mxu0 0
  %10805 = vmatmul.mubr.bf16.gmra.mxu0 %v10542
  %v10806 = vpop.f32.mrf.mxu0
  %v10807 = vadd.f32 %v10476, %v10806
  %v10808 = vpop.f32.mrf.mxu0
  %v10809 = vpop.f32.mrf.mxu0
  %v10810 = vadd.f32 %v10476, %v10809
  %v10811 = vpop.f32.mrf.mxu0
  %10812 = vmatprep.mubr.bf16.mxu0 0
  %10813 = vmatmul.mubr.bf16.gmra.mxu0 %v10545
  %v10814 = vpop.f32.mrf.mxu0
  %v10815 = vadd.f32 %v10476, %v10814
  %v10816 = vpop.f32.mrf.mxu0
  %v10817 = vpop.f32.mrf.mxu0
  %v10818 = vadd.f32 %v10476, %v10817
  %v10819 = vpop.f32.mrf.mxu0
  %10820 = vmatprep.mubr.bf16.mxu0 0
  %10821 = vmatmul.mubr.bf16.gmra.mxu0 %v10548
  %v10822 = vpop.f32.mrf.mxu0
  %v10823 = vadd.f32 %v10476, %v10822
  %v10824 = vpop.f32.mrf.mxu0
  %v10825 = vpop.f32.mrf.mxu0
  %v10826 = vadd.f32 %v10476, %v10825
  %v10827 = vpop.f32.mrf.mxu0
  %10828 = vmatprep.mubr.bf16.mxu0 0
  %10829 = vmatmul.mubr.bf16.gmra.mxu0 %v10551
  %v10830 = vpop.f32.mrf.mxu0
  %v10831 = vadd.f32 %v10476, %v10830
  %v10832 = vpop.f32.mrf.mxu0
  %v10833 = vpop.f32.mrf.mxu0
  %v10834 = vadd.f32 %v10476, %v10833
  %v10835 = vpop.f32.mrf.mxu0
  %10836 = vmatprep.mubr.bf16.mxu0 0
  %10837 = vmatmul.mubr.bf16.gmra.mxu0 %v10554
  %v10838 = vpop.f32.mrf.mxu0
  %v10839 = vadd.f32 %v10476, %v10838
  %v10840 = vpop.f32.mrf.mxu0
  %v10841 = vpop.f32.mrf.mxu0
  %v10842 = vadd.f32 %v10476, %v10841
  %v10843 = vpop.f32.mrf.mxu0
  %10844 = vmatprep.mubr.bf16.mxu0 0
  %10845 = vmatmul.mubr.bf16.gmra.mxu0 %v10557
  %v10846 = vpop.f32.mrf.mxu0
  %v10847 = vadd.f32 %v10476, %v10846
  %v10848 = vpop.f32.mrf.mxu0
  %v10849 = vpop.f32.mrf.mxu0
  %v10850 = vadd.f32 %v10476, %v10849
  %v10851 = vpop.f32.mrf.mxu0
  %10852 = vmatprep.mubr.bf16.mxu0 0
  %10853 = vmatmul.mubr.bf16.gmra.mxu0 %v10560
  %v10854 = vpop.f32.mrf.mxu0
  %v10855 = vadd.f32 %v10476, %v10854
  %v10856 = vpop.f32.mrf.mxu0
  %v10857 = vpop.f32.mrf.mxu0
  %v10858 = vadd.f32 %v10476, %v10857
  %v10859 = vpop.f32.mrf.mxu0
  %10860 = vmatprep.mubr.bf16.mxu0 0
  %10861 = vmatmul.mubr.bf16.gmra.mxu0 %v10563
  %v10862 = vpop.f32.mrf.mxu0
  %v10863 = vadd.f32 %v10476, %v10862
  %v10864 = vpop.f32.mrf.mxu0
  %v10865 = vpop.f32.mrf.mxu0
  %v10866 = vadd.f32 %v10476, %v10865
  %v10867 = vpop.f32.mrf.mxu0
  %10868 = vmatprep.mubr.bf16.mxu0 0
  %10869 = vmatmul.mubr.bf16.gmra.mxu0 %v10566
  %v10870 = vpop.f32.mrf.mxu0
  %v10871 = vadd.f32 %v10476, %v10870
  %v10872 = vpop.f32.mrf.mxu0
  %v10873 = vpop.f32.mrf.mxu0
  %v10874 = vadd.f32 %v10476, %v10873
  %v10875 = vpop.f32.mrf.mxu0
  %10876 = vmatprep.mubr.bf16.mxu0 0
  %10877 = vmatmul.mubr.bf16.gmra.mxu0 %v10569
  %v10878 = vpop.f32.mrf.mxu0
  %v10879 = vadd.f32 %v10476, %v10878
  %v10880 = vpop.f32.mrf.mxu0
  %v10881 = vpop.f32.mrf.mxu0
  %v10882 = vadd.f32 %v10476, %v10881
  %v10883 = vpop.f32.mrf.mxu0
  %10884 = vmatprep.mubr.bf16.mxu0 0
  %10885 = vmatmul.mubr.bf16.gmra.mxu0 %v10572
  %v10886 = vpop.f32.mrf.mxu0
  %v10887 = vadd.f32 %v10476, %v10886
  %v10888 = vpop.f32.mrf.mxu0
  %v10889 = vpop.f32.mrf.mxu0
  %v10890 = vadd.f32 %v10476, %v10889
  %v10891 = vpop.f32.mrf.mxu0
  %10892 = vmatprep.mubr.bf16.mxu0 0
  %10893 = vmatmul.mubr.bf16.gmra.mxu0 %v10575
  %v10894 = vpop.f32.mrf.mxu0
  %v10895 = vadd.f32 %v10476, %v10894
  %v10896 = vpop.f32.mrf.mxu0
  %v10897 = vpop.f32.mrf.mxu0
  %v10898 = vadd.f32 %v10476, %v10897
  %v10899 = vpop.f32.mrf.mxu0
  %10900 = vmatprep.mubr.bf16.mxu0 0
  %10901 = vmatmul.mubr.bf16.gmra.mxu0 %v10578
  %v10902 = vpop.f32.mrf.mxu0
  %v10903 = vadd.f32 %v10476, %v10902
  %v10904 = vpop.f32.mrf.mxu0
  %v10905 = vpop.f32.mrf.mxu0
  %v10906 = vadd.f32 %v10476, %v10905
  %v10907 = vpop.f32.mrf.mxu0
  %10908 = vmatprep.mubr.bf16.mxu0 0
  %10909 = vmatmul.mubr.bf16.gmra.mxu0 %v10581
  %v10910 = vpop.f32.mrf.mxu0
  %v10911 = vadd.f32 %v10476, %v10910
  %v10912 = vpop.f32.mrf.mxu0
  %v10913 = vpop.f32.mrf.mxu0
  %v10914 = vadd.f32 %v10476, %v10913
  %v10915 = vpop.f32.mrf.mxu0
  %10916 = vmatprep.mubr.bf16.mxu0 0
  %10917 = vmatmul.mubr.bf16.gmra.mxu0 %v10584
  %v10918 = vpop.f32.mrf.mxu0
  %v10919 = vadd.f32 %v10476, %v10918
  %v10920 = vpop.f32.mrf.mxu0
  %v10921 = vpop.f32.mrf.mxu0
  %v10922 = vadd.f32 %v10476, %v10921
  %v10923 = vpop.f32.mrf.mxu0
  %10924 = vmatprep.mubr.bf16.mxu0 0
  %10925 = vmatmul.mubr.bf16.gmra.mxu0 %v10587
  %v10926 = vpop.f32.mrf.mxu0
  %v10927 = vadd.f32 %v10476, %v10926
  %v10928 = vpop.f32.mrf.mxu0
  %v10929 = vpop.f32.mrf.mxu0
  %v10930 = vadd.f32 %v10476, %v10929
  %v10931 = vpop.f32.mrf.mxu0
  %10932 = vmatprep.mubr.bf16.mxu0 0
  %10933 = vmatmul.mubr.bf16.gmra.mxu0 %v10590
  %v10934 = vpop.f32.mrf.mxu0
  %v10935 = vadd.f32 %v10476, %v10934
  %v10936 = vpop.f32.mrf.mxu0
  %v10937 = vpop.f32.mrf.mxu0
  %v10938 = vadd.f32 %v10476, %v10937
  %v10939 = vpop.f32.mrf.mxu0
  %10940 = vmatprep.mubr.bf16.mxu0 0
  %10941 = vmatmul.mubr.bf16.gmra.mxu0 %v10593
  %v10942 = vpop.f32.mrf.mxu0
  %v10943 = vadd.f32 %v10476, %v10942
  %v10944 = vpop.f32.mrf.mxu0
  %v10945 = vpop.f32.mrf.mxu0
  %v10946 = vadd.f32 %v10476, %v10945
  %v10947 = vpop.f32.mrf.mxu0
  %10948 = vmatprep.mubr.bf16.mxu0 0
  %10949 = vmatmul.mubr.bf16.gmra.mxu0 %v10596
  %v10950 = vpop.f32.mrf.mxu0
  %v10951 = vadd.f32 %v10476, %v10950
  %v10952 = vpop.f32.mrf.mxu0
  %v10953 = vpop.f32.mrf.mxu0
  %v10954 = vadd.f32 %v10476, %v10953
  %v10955 = vpop.f32.mrf.mxu0
  %10956 = vmatprep.mubr.bf16.mxu0 0
  %10957 = vmatmul.mubr.bf16.gmra.mxu0 %v10599
  %v10958 = vpop.f32.mrf.mxu0
  %v10959 = vadd.f32 %v10476, %v10958
  %v10960 = vpop.f32.mrf.mxu0
  %v10961 = vpop.f32.mrf.mxu0
  %v10962 = vpop.f32.mrf.mxu0
  %10963 = vdwg.mxu0
  %v10964 = vld [vmem:[%s0 + $0x13] sm:$0xff]
  %v10965 = vld [vmem:[%s0 + $0x1b] sm:$0xff]
  %v10966 = vld [vmem:[%s0 + $0x23] sm:$0xff]
  %v10967 = vld [vmem:[%s0 + $0x2b] sm:$0xff]
  %v10968 = vld [vmem:[%s0 + $0x33] sm:$0xff]
  %v10969 = vld [vmem:[%s0 + $0x3b] sm:$0xff]
  %v10970 = vld [vmem:[%s0 + $0x43] sm:$0xff]
  %v10971 = vld [vmem:[%s0 + $0x4b] sm:$0xff]
  %v10972 = vld [vmem:[%s0 + $0x53] sm:$0xff]
  %v10973 = vld [vmem:[%s0 + $0x5b] sm:$0xff]
  %v10974 = vld [vmem:[%s0 + $0x63] sm:$0xff]
  %v10975 = vld [vmem:[%s0 + $0x6b] sm:$0xff]
  %v10976 = vld [vmem:[%s0 + $0x73] sm:$0xff]
  %v10977 = vld [vmem:[%s0 + $0x7b] sm:$0xff]
  %v10978 = vld [vmem:[%s0 + $0x83] sm:$0xff]
  %v10979 = vld [vmem:[%s0 + $0x8b] sm:$0xff]
  %v10980 = vld [vmem:[%s0 + $0x93] sm:$0xff]
  %v10981 = vld [vmem:[%s0 + $0x9b] sm:$0xff]
  %v10982 = vld [vmem:[%s0 + $0xa3] sm:$0xff]
  %v10983 = vld [vmem:[%s0 + $0xab] sm:$0xff]
  %v10984 = vld [vmem:[%s0 + $0xb3] sm:$0xff]
  %v10985 = vld [vmem:[%s0 + $0xbb] sm:$0xff]
  %v10986 = vld [vmem:[%s0 + $0xc3] sm:$0xff]
  %v10987 = vld [vmem:[%s0 + $0xcb] sm:$0xff]
  %v10988 = vld [vmem:[%s0 + $0xd3] sm:$0xff]
  %v10989 = vld [vmem:[%s0 + $0xdb] sm:$0xff]
  %v10990 = vld [vmem:[%s0 + $0xe3] sm:$0xff]
  %v10991 = vld [vmem:[%s0 + $0xeb] sm:$0xff]
  %v10992 = vld [vmem:[%s0 + $0xf3] sm:$0xff]
  %v10993 = vld [vmem:[%s0 + $0xfb] sm:$0xff]
  %v10994 = vld [vmem:[%s0 + $0x103] sm:$0xff]
  %v10995 = vld [vmem:[%s0 + $0x10b] sm:$0xff]
  %v10996 = vld [vmem:[%s0 + $0x113] sm:$0xff]
  %v10997 = vld [vmem:[%s0 + $0x11b] sm:$0xff]
  %v10998 = vld [vmem:[%s0 + $0x123] sm:$0xff]
  %v10999 = vld [vmem:[%s0 + $0x12b] sm:$0xff]
  %v11000 = vld [vmem:[%s0 + $0x133] sm:$0xff]
  %v11001 = vld [vmem:[%s0 + $0x13b] sm:$0xff]
  %v11002 = vld [vmem:[%s0 + $0x143] sm:$0xff]
  %v11003 = vld [vmem:[%s0 + $0x14b] sm:$0xff]
  %v11004 = vld [vmem:[%s0 + $0x153] sm:$0xff]
  %v11005 = vld [vmem:[%s0 + $0x15b] sm:$0xff]
  %v11006 = vld [vmem:[%s0 + $0x163] sm:$0xff]
  %v11007 = vld [vmem:[%s0 + $0x16b] sm:$0xff]
  %v11008 = vld [vmem:[%s0 + $0x173] sm:$0xff]
  %v11009 = vld [vmem:[%s0 + $0x17b] sm:$0xff]
  %v11010 = vld [vmem:[%s0 + $0x183] sm:$0xff]
  %v11011 = vld [vmem:[%s0 + $0x18b] sm:$0xff]
  %v11012 = vld [vmem:[%s0 + $0x193] sm:$0xff]
  %v11013 = vld [vmem:[%s0 + $0x19b] sm:$0xff]
  %v11014 = vld [vmem:[%s0 + $0x1a3] sm:$0xff]
  %v11015 = vld [vmem:[%s0 + $0x1ab] sm:$0xff]
  %v11016 = vld [vmem:[%s0 + $0x1b3] sm:$0xff]
  %v11017 = vld [vmem:[%s0 + $0x1bb] sm:$0xff]
  %v11018 = vld [vmem:[%s0 + $0x1c3] sm:$0xff]
  %v11019 = vld [vmem:[%s0 + $0x1cb] sm:$0xff]
  %v11020 = vld [vmem:[%s0 + $0x1d3] sm:$0xff]
  %v11021 = vld [vmem:[%s0 + $0x1db] sm:$0xff]
  %v11022 = vld [vmem:[%s0 + $0x1e3] sm:$0xff]
  %v11023 = vld [vmem:[%s0 + $0x1eb] sm:$0xff]
  %v11024 = vld [vmem:[%s0 + $0x1f3] sm:$0xff]
  %v11025 = vld [vmem:[%s0 + $0x1fb] sm:$0xff]
  %v11026 = vld [vmem:[%s0 + $0x203] sm:$0xff]
  %v11027 = vld [vmem:[%s0 + $0x20b] sm:$0xff]
  %v11028 = vld [vmem:[%s0 + $0x213] sm:$0xff]
  %v11029 = vld [vmem:[%s0 + $0x21b] sm:$0xff]
  %v11030 = vld [vmem:[%s0 + $0x223] sm:$0xff]
  %v11031 = vld [vmem:[%s0 + $0x22b] sm:$0xff]
  %v11032 = vld [vmem:[%s0 + $0x233] sm:$0xff]
  %v11033 = vld [vmem:[%s0 + $0x23b] sm:$0xff]
  %v11034 = vld [vmem:[%s0 + $0x243] sm:$0xff]
  %v11035 = vld [vmem:[%s0 + $0x24b] sm:$0xff]
  %v11036 = vld [vmem:[%s0 + $0x253] sm:$0xff]
  %v11037 = vld [vmem:[%s0 + $0x25b] sm:$0xff]
  %v11038 = vld [vmem:[%s0 + $0x263] sm:$0xff]
  %v11039 = vld [vmem:[%s0 + $0x26b] sm:$0xff]
  %v11040 = vld [vmem:[%s0 + $0x273] sm:$0xff]
  %v11041 = vld [vmem:[%s0 + $0x27b] sm:$0xff]
  %v11042 = vld [vmem:[%s0 + $0x283] sm:$0xff]
  %v11043 = vld [vmem:[%s0 + $0x28b] sm:$0xff]
  %v11044 = vld [vmem:[%s0 + $0x293] sm:$0xff]
  %v11045 = vpack.c.bf16 %v10965, %v10964
  %v11046 = vpack.c.bf16 %v10967, %v10966
  %v11047 = vpack.c.bf16 %v10969, %v10968
  %v11048 = vpack.c.bf16 %v10971, %v10970
  %v11049 = vpack.c.bf16 %v10973, %v10972
  %v11050 = vpack.c.bf16 %v10975, %v10974
  %v11051 = vpack.c.bf16 %v10977, %v10976
  %v11052 = vpack.c.bf16 %v10979, %v10978
  %v11053 = vpack.c.bf16 %v10981, %v10980
  %v11054 = vpack.c.bf16 %v10983, %v10982
  %v11055 = vpack.c.bf16 %v10985, %v10984
  %v11056 = vpack.c.bf16 %v10987, %v10986
  %v11057 = vpack.c.bf16 %v10989, %v10988
  %v11058 = vpack.c.bf16 %v10991, %v10990
  %v11059 = vpack.c.bf16 %v10993, %v10992
  %v11060 = vpack.c.bf16 %v10995, %v10994
  %v11061 = vpack.c.bf16 %v10997, %v10996
  %v11062 = vpack.c.bf16 %v10999, %v10998
  %v11063 = vpack.c.bf16 %v11001, %v11000
  %v11064 = vpack.c.bf16 %v11003, %v11002
  %v11065 = vpack.c.bf16 %v11005, %v11004
  %v11066 = vpack.c.bf16 %v11007, %v11006
  %v11067 = vpack.c.bf16 %v11009, %v11008
  %v11068 = vpack.c.bf16 %v11011, %v11010
  %v11069 = vpack.c.bf16 %v11013, %v11012
  %v11070 = vpack.c.bf16 %v11015, %v11014
  %v11071 = vpack.c.bf16 %v11017, %v11016
  %v11072 = vpack.c.bf16 %v11019, %v11018
  %v11073 = vpack.c.bf16 %v11021, %v11020
  %v11074 = vpack.c.bf16 %v11023, %v11022
  %v11075 = vpack.c.bf16 %v11025, %v11024
  %v11076 = vpack.c.bf16 %v11027, %v11026
  %v11077 = vpack.c.bf16 %v11029, %v11028
  %v11078 = vpack.c.bf16 %v11031, %v11030
  %v11079 = vpack.c.bf16 %v11033, %v11032
  %v11080 = vpack.c.bf16 %v11035, %v11034
  %v11081 = vpack.c.bf16 %v11037, %v11036
  %v11082 = vpack.c.bf16 %v11039, %v11038
  %v11083 = vpack.c.bf16 %v11041, %v11040
  %v11084 = vpack.c.bf16 %v11043, %v11042
  %v11085 = vpack.c.bf16 %v11044, %v11044
  %v11086 = vld [vmem:[%s13] sm:$0xf]
  %v11087 = vld [vmem:[%s14] sm:$0x1]
  %v11089 = vlaneseq
  %v11090 = vshrl.u32 %v11089, 7
  %v11091 = vsub.s32 0, %v11090
  %v11092 = vrot.slane %v11087, %v11091
  %v11095 = vsel %vm361, %v11045, 0
  %v11098 = vsel %vm361, %v11046, 0
  %v11101 = vsel %vm361, %v11047, 0
  %v11104 = vsel %vm361, %v11048, 0
  %v11107 = vsel %vm361, %v11049, 0
  %v11110 = vsel %vm361, %v11050, 0
  %v11113 = vsel %vm361, %v11051, 0
  %v11116 = vsel %vm361, %v11052, 0
  %v11119 = vsel %vm361, %v11053, 0
  %v11122 = vsel %vm361, %v11054, 0
  %v11125 = vsel %vm361, %v11055, 0
  %v11128 = vsel %vm361, %v11056, 0
  %v11131 = vsel %vm361, %v11057, 0
  %v11134 = vsel %vm361, %v11058, 0
  %v11137 = vsel %vm361, %v11059, 0
  %v11140 = vsel %vm361, %v11060, 0
  %v11143 = vsel %vm361, %v11061, 0
  %v11146 = vsel %vm361, %v11062, 0
  %v11149 = vsel %vm361, %v11063, 0
  %v11152 = vsel %vm361, %v11064, 0
  %v11155 = vsel %vm361, %v11065, 0
  %v11158 = vsel %vm361, %v11066, 0
  %v11161 = vsel %vm361, %v11067, 0
  %v11164 = vsel %vm361, %v11068, 0
  %v11167 = vsel %vm361, %v11069, 0
  %v11170 = vsel %vm361, %v11070, 0
  %v11173 = vsel %vm361, %v11071, 0
  %v11176 = vsel %vm361, %v11072, 0
  %v11179 = vsel %vm361, %v11073, 0
  %v11182 = vsel %vm361, %v11074, 0
  %v11185 = vsel %vm361, %v11075, 0
  %v11188 = vsel %vm361, %v11076, 0
  %v11191 = vsel %vm361, %v11077, 0
  %v11194 = vsel %vm361, %v11078, 0
  %v11197 = vsel %vm361, %v11079, 0
  %v11200 = vsel %vm361, %v11080, 0
  %v11203 = vsel %vm361, %v11081, 0
  %v11206 = vsel %vm361, %v11082, 0
  %v11209 = vsel %vm361, %v11083, 0
  %v11212 = vsel %vm361, %v11084, 0
  %v11215 = vsel %vm361, %v11085, 0
  %v11218 = vsel %vm491, %v11086, 0
  %11220 = vmatprep.subr.bf16.mxu0 0
  %11221 = vmatpush1.bf16.msra.mxu0 0
  %11222 = vmatprep.subr.bf16.mxu0 0
  %11223 = vmatpush1.bf16.msra.mxu0 0
  %11224 = vmatprep.subr.bf16.mxu0 0
  %11225 = vmatpush1.bf16.msra.mxu0 0
  %11226 = vmatprep.subr.bf16.mxu0 0
  %11227 = vmatpush1.bf16.msra.mxu0 0
  %11228 = vmatprep.subr.bf16.mxu0 0
  %11229 = vmatpush1.bf16.msra.mxu0 0
  %11230 = vmatprep.subr.bf16.mxu0 0
  %11231 = vmatpush1.bf16.msra.mxu0 0
  %11232 = vmatprep.subr.bf16.mxu0 0
  %11233 = vmatpush1.bf16.msra.mxu0 0
  %11234 = vmatprep.subr.bf16.mxu0 0
  %11235 = vmatpush1.bf16.msra.mxu0 %v11218
  %11236 = vmatprep.subr.bf16.mxu0 0
  %11237 = vmatpush2.bf16.msra.mxu0 0
  %11238 = vmatprep.subr.bf16.mxu0 0
  %11239 = vmatpush2.bf16.msra.mxu0 0
  %11240 = vmatprep.subr.bf16.mxu0 0
  %11241 = vmatpush2.bf16.msra.mxu0 0
  %11242 = vmatprep.subr.bf16.mxu0 0
  %11243 = vmatpush2.bf16.msra.mxu0 0
  %11244 = vmatprep.subr.bf16.mxu0 0
  %11245 = vmatpush2.bf16.msra.mxu0 0
  %11246 = vmatprep.subr.bf16.mxu0 0
  %11247 = vmatpush2.bf16.msra.mxu0 0
  %11248 = vmatprep.subr.bf16.mxu0 0
  %11249 = vmatpush2.bf16.msra.mxu0 0
  %11250 = vmatprep.subr.bf16.mxu0 0
  %11251 = vmatpush2.bf16.msra.mxu0 0
  %11252 = vmatprep.mubr.bf16.mxu0 0
  %11253 = vmatmul.mubr.bf16.gmra.mxu0 %v11095
  %v11254 = vpop.f32.mrf.mxu0
  %v11255 = vadd.f32 %v11092, %v11254
  %v11256 = vpop.f32.mrf.mxu0
  %v11257 = vpop.f32.mrf.mxu0
  %v11258 = vadd.f32 %v11092, %v11257
  %v11259 = vpop.f32.mrf.mxu0
  %11260 = vmatprep.mubr.bf16.mxu0 0
  %11261 = vmatmul.mubr.bf16.gmra.mxu0 %v11098
  %v11262 = vpop.f32.mrf.mxu0
  %v11263 = vadd.f32 %v11092, %v11262
  %v11264 = vpop.f32.mrf.mxu0
  %v11265 = vpop.f32.mrf.mxu0
  %v11266 = vadd.f32 %v11092, %v11265
  %v11267 = vpop.f32.mrf.mxu0
  %11268 = vmatprep.mubr.bf16.mxu0 0
  %11269 = vmatmul.mubr.bf16.gmra.mxu0 %v11101
  %v11270 = vpop.f32.mrf.mxu0
  %v11271 = vadd.f32 %v11092, %v11270
  %v11272 = vpop.f32.mrf.mxu0
  %v11273 = vpop.f32.mrf.mxu0
  %v11274 = vadd.f32 %v11092, %v11273
  %v11275 = vpop.f32.mrf.mxu0
  %11276 = vmatprep.mubr.bf16.mxu0 0
  %11277 = vmatmul.mubr.bf16.gmra.mxu0 %v11104
  %v11278 = vpop.f32.mrf.mxu0
  %v11279 = vadd.f32 %v11092, %v11278
  %v11280 = vpop.f32.mrf.mxu0
  %v11281 = vpop.f32.mrf.mxu0
  %v11282 = vadd.f32 %v11092, %v11281
  %v11283 = vpop.f32.mrf.mxu0
  %11284 = vmatprep.mubr.bf16.mxu0 0
  %11285 = vmatmul.mubr.bf16.gmra.mxu0 %v11107
  %v11286 = vpop.f32.mrf.mxu0
  %v11287 = vadd.f32 %v11092, %v11286
  %v11288 = vpop.f32.mrf.mxu0
  %v11289 = vpop.f32.mrf.mxu0
  %v11290 = vadd.f32 %v11092, %v11289
  %v11291 = vpop.f32.mrf.mxu0
  %11292 = vmatprep.mubr.bf16.mxu0 0
  %11293 = vmatmul.mubr.bf16.gmra.mxu0 %v11110
  %v11294 = vpop.f32.mrf.mxu0
  %v11295 = vadd.f32 %v11092, %v11294
  %v11296 = vpop.f32.mrf.mxu0
  %v11297 = vpop.f32.mrf.mxu0
  %v11298 = vadd.f32 %v11092, %v11297
  %v11299 = vpop.f32.mrf.mxu0
  %11300 = vmatprep.mubr.bf16.mxu0 0
  %11301 = vmatmul.mubr.bf16.gmra.mxu0 %v11113
  %v11302 = vpop.f32.mrf.mxu0
  %v11303 = vadd.f32 %v11092, %v11302
  %v11304 = vpop.f32.mrf.mxu0
  %v11305 = vpop.f32.mrf.mxu0
  %v11306 = vadd.f32 %v11092, %v11305
  %v11307 = vpop.f32.mrf.mxu0
  %11308 = vmatprep.mubr.bf16.mxu0 0
  %11309 = vmatmul.mubr.bf16.gmra.mxu0 %v11116
  %v11310 = vpop.f32.mrf.mxu0
  %v11311 = vadd.f32 %v11092, %v11310
  %v11312 = vpop.f32.mrf.mxu0
  %v11313 = vpop.f32.mrf.mxu0
  %v11314 = vadd.f32 %v11092, %v11313
  %v11315 = vpop.f32.mrf.mxu0
  %11316 = vmatprep.mubr.bf16.mxu0 0
  %11317 = vmatmul.mubr.bf16.gmra.mxu0 %v11119
  %v11318 = vpop.f32.mrf.mxu0
  %v11319 = vadd.f32 %v11092, %v11318
  %v11320 = vpop.f32.mrf.mxu0
  %v11321 = vpop.f32.mrf.mxu0
  %v11322 = vadd.f32 %v11092, %v11321
  %v11323 = vpop.f32.mrf.mxu0
  %11324 = vmatprep.mubr.bf16.mxu0 0
  %11325 = vmatmul.mubr.bf16.gmra.mxu0 %v11122
  %v11326 = vpop.f32.mrf.mxu0
  %v11327 = vadd.f32 %v11092, %v11326
  %v11328 = vpop.f32.mrf.mxu0
  %v11329 = vpop.f32.mrf.mxu0
  %v11330 = vadd.f32 %v11092, %v11329
  %v11331 = vpop.f32.mrf.mxu0
  %11332 = vmatprep.mubr.bf16.mxu0 0
  %11333 = vmatmul.mubr.bf16.gmra.mxu0 %v11125
  %v11334 = vpop.f32.mrf.mxu0
  %v11335 = vadd.f32 %v11092, %v11334
  %v11336 = vpop.f32.mrf.mxu0
  %v11337 = vpop.f32.mrf.mxu0
  %v11338 = vadd.f32 %v11092, %v11337
  %v11339 = vpop.f32.mrf.mxu0
  %11340 = vmatprep.mubr.bf16.mxu0 0
  %11341 = vmatmul.mubr.bf16.gmra.mxu0 %v11128
  %v11342 = vpop.f32.mrf.mxu0
  %v11343 = vadd.f32 %v11092, %v11342
  %v11344 = vpop.f32.mrf.mxu0
  %v11345 = vpop.f32.mrf.mxu0
  %v11346 = vadd.f32 %v11092, %v11345
  %v11347 = vpop.f32.mrf.mxu0
  %11348 = vmatprep.mubr.bf16.mxu0 0
  %11349 = vmatmul.mubr.bf16.gmra.mxu0 %v11131
  %v11350 = vpop.f32.mrf.mxu0
  %v11351 = vadd.f32 %v11092, %v11350
  %v11352 = vpop.f32.mrf.mxu0
  %v11353 = vpop.f32.mrf.mxu0
  %v11354 = vadd.f32 %v11092, %v11353
  %v11355 = vpop.f32.mrf.mxu0
  %11356 = vmatprep.mubr.bf16.mxu0 0
  %11357 = vmatmul.mubr.bf16.gmra.mxu0 %v11134
  %v11358 = vpop.f32.mrf.mxu0
  %v11359 = vadd.f32 %v11092, %v11358
  %v11360 = vpop.f32.mrf.mxu0
  %v11361 = vpop.f32.mrf.mxu0
  %v11362 = vadd.f32 %v11092, %v11361
  %v11363 = vpop.f32.mrf.mxu0
  %11364 = vmatprep.mubr.bf16.mxu0 0
  %11365 = vmatmul.mubr.bf16.gmra.mxu0 %v11137
  %v11366 = vpop.f32.mrf.mxu0
  %v11367 = vadd.f32 %v11092, %v11366
  %v11368 = vpop.f32.mrf.mxu0
  %v11369 = vpop.f32.mrf.mxu0
  %v11370 = vadd.f32 %v11092, %v11369
  %v11371 = vpop.f32.mrf.mxu0
  %11372 = vmatprep.mubr.bf16.mxu0 0
  %11373 = vmatmul.mubr.bf16.gmra.mxu0 %v11140
  %v11374 = vpop.f32.mrf.mxu0
  %v11375 = vadd.f32 %v11092, %v11374
  %v11376 = vpop.f32.mrf.mxu0
  %v11377 = vpop.f32.mrf.mxu0
  %v11378 = vadd.f32 %v11092, %v11377
  %v11379 = vpop.f32.mrf.mxu0
  %11380 = vmatprep.mubr.bf16.mxu0 0
  %11381 = vmatmul.mubr.bf16.gmra.mxu0 %v11143
  %v11382 = vpop.f32.mrf.mxu0
  %v11383 = vadd.f32 %v11092, %v11382
  %v11384 = vpop.f32.mrf.mxu0
  %v11385 = vpop.f32.mrf.mxu0
  %v11386 = vadd.f32 %v11092, %v11385
  %v11387 = vpop.f32.mrf.mxu0
  %11388 = vmatprep.mubr.bf16.mxu0 0
  %11389 = vmatmul.mubr.bf16.gmra.mxu0 %v11146
  %v11390 = vpop.f32.mrf.mxu0
  %v11391 = vadd.f32 %v11092, %v11390
  %v11392 = vpop.f32.mrf.mxu0
  %v11393 = vpop.f32.mrf.mxu0
  %v11394 = vadd.f32 %v11092, %v11393
  %v11395 = vpop.f32.mrf.mxu0
  %11396 = vmatprep.mubr.bf16.mxu0 0
  %11397 = vmatmul.mubr.bf16.gmra.mxu0 %v11149
  %v11398 = vpop.f32.mrf.mxu0
  %v11399 = vadd.f32 %v11092, %v11398
  %v11400 = vpop.f32.mrf.mxu0
  %v11401 = vpop.f32.mrf.mxu0
  %v11402 = vadd.f32 %v11092, %v11401
  %v11403 = vpop.f32.mrf.mxu0
  %11404 = vmatprep.mubr.bf16.mxu0 0
  %11405 = vmatmul.mubr.bf16.gmra.mxu0 %v11152
  %v11406 = vpop.f32.mrf.mxu0
  %v11407 = vadd.f32 %v11092, %v11406
  %v11408 = vpop.f32.mrf.mxu0
  %v11409 = vpop.f32.mrf.mxu0
  %v11410 = vadd.f32 %v11092, %v11409
  %v11411 = vpop.f32.mrf.mxu0
  %11412 = vmatprep.mubr.bf16.mxu0 0
  %11413 = vmatmul.mubr.bf16.gmra.mxu0 %v11155
  %v11414 = vpop.f32.mrf.mxu0
  %v11415 = vadd.f32 %v11092, %v11414
  %v11416 = vpop.f32.mrf.mxu0
  %v11417 = vpop.f32.mrf.mxu0
  %v11418 = vadd.f32 %v11092, %v11417
  %v11419 = vpop.f32.mrf.mxu0
  %11420 = vmatprep.mubr.bf16.mxu0 0
  %11421 = vmatmul.mubr.bf16.gmra.mxu0 %v11158
  %v11422 = vpop.f32.mrf.mxu0
  %v11423 = vadd.f32 %v11092, %v11422
  %v11424 = vpop.f32.mrf.mxu0
  %v11425 = vpop.f32.mrf.mxu0
  %v11426 = vadd.f32 %v11092, %v11425
  %v11427 = vpop.f32.mrf.mxu0
  %11428 = vmatprep.mubr.bf16.mxu0 0
  %11429 = vmatmul.mubr.bf16.gmra.mxu0 %v11161
  %v11430 = vpop.f32.mrf.mxu0
  %v11431 = vadd.f32 %v11092, %v11430
  %v11432 = vpop.f32.mrf.mxu0
  %v11433 = vpop.f32.mrf.mxu0
  %v11434 = vadd.f32 %v11092, %v11433
  %v11435 = vpop.f32.mrf.mxu0
  %11436 = vmatprep.mubr.bf16.mxu0 0
  %11437 = vmatmul.mubr.bf16.gmra.mxu0 %v11164
  %v11438 = vpop.f32.mrf.mxu0
  %v11439 = vadd.f32 %v11092, %v11438
  %v11440 = vpop.f32.mrf.mxu0
  %v11441 = vpop.f32.mrf.mxu0
  %v11442 = vadd.f32 %v11092, %v11441
  %v11443 = vpop.f32.mrf.mxu0
  %11444 = vmatprep.mubr.bf16.mxu0 0
  %11445 = vmatmul.mubr.bf16.gmra.mxu0 %v11167
  %v11446 = vpop.f32.mrf.mxu0
  %v11447 = vadd.f32 %v11092, %v11446
  %v11448 = vpop.f32.mrf.mxu0
  %v11449 = vpop.f32.mrf.mxu0
  %v11450 = vadd.f32 %v11092, %v11449
  %v11451 = vpop.f32.mrf.mxu0
  %11452 = vmatprep.mubr.bf16.mxu0 0
  %11453 = vmatmul.mubr.bf16.gmra.mxu0 %v11170
  %v11454 = vpop.f32.mrf.mxu0
  %v11455 = vadd.f32 %v11092, %v11454
  %v11456 = vpop.f32.mrf.mxu0
  %v11457 = vpop.f32.mrf.mxu0
  %v11458 = vadd.f32 %v11092, %v11457
  %v11459 = vpop.f32.mrf.mxu0
  %11460 = vmatprep.mubr.bf16.mxu0 0
  %11461 = vmatmul.mubr.bf16.gmra.mxu0 %v11173
  %v11462 = vpop.f32.mrf.mxu0
  %v11463 = vadd.f32 %v11092, %v11462
  %v11464 = vpop.f32.mrf.mxu0
  %v11465 = vpop.f32.mrf.mxu0
  %v11466 = vadd.f32 %v11092, %v11465
  %v11467 = vpop.f32.mrf.mxu0
  %11468 = vmatprep.mubr.bf16.mxu0 0
  %11469 = vmatmul.mubr.bf16.gmra.mxu0 %v11176
  %v11470 = vpop.f32.mrf.mxu0
  %v11471 = vadd.f32 %v11092, %v11470
  %v11472 = vpop.f32.mrf.mxu0
  %v11473 = vpop.f32.mrf.mxu0
  %v11474 = vadd.f32 %v11092, %v11473
  %v11475 = vpop.f32.mrf.mxu0
  %11476 = vmatprep.mubr.bf16.mxu0 0
  %11477 = vmatmul.mubr.bf16.gmra.mxu0 %v11179
  %v11478 = vpop.f32.mrf.mxu0
  %v11479 = vadd.f32 %v11092, %v11478
  %v11480 = vpop.f32.mrf.mxu0
  %v11481 = vpop.f32.mrf.mxu0
  %v11482 = vadd.f32 %v11092, %v11481
  %v11483 = vpop.f32.mrf.mxu0
  %11484 = vmatprep.mubr.bf16.mxu0 0
  %11485 = vmatmul.mubr.bf16.gmra.mxu0 %v11182
  %v11486 = vpop.f32.mrf.mxu0
  %v11487 = vadd.f32 %v11092, %v11486
  %v11488 = vpop.f32.mrf.mxu0
  %v11489 = vpop.f32.mrf.mxu0
  %v11490 = vadd.f32 %v11092, %v11489
  %v11491 = vpop.f32.mrf.mxu0
  %11492 = vmatprep.mubr.bf16.mxu0 0
  %11493 = vmatmul.mubr.bf16.gmra.mxu0 %v11185
  %v11494 = vpop.f32.mrf.mxu0
  %v11495 = vadd.f32 %v11092, %v11494
  %v11496 = vpop.f32.mrf.mxu0
  %v11497 = vpop.f32.mrf.mxu0
  %v11498 = vadd.f32 %v11092, %v11497
  %v11499 = vpop.f32.mrf.mxu0
  %11500 = vmatprep.mubr.bf16.mxu0 0
  %11501 = vmatmul.mubr.bf16.gmra.mxu0 %v11188
  %v11502 = vpop.f32.mrf.mxu0
  %v11503 = vadd.f32 %v11092, %v11502
  %v11504 = vpop.f32.mrf.mxu0
  %v11505 = vpop.f32.mrf.mxu0
  %v11506 = vadd.f32 %v11092, %v11505
  %v11507 = vpop.f32.mrf.mxu0
  %11508 = vmatprep.mubr.bf16.mxu0 0
  %11509 = vmatmul.mubr.bf16.gmra.mxu0 %v11191
  %v11510 = vpop.f32.mrf.mxu0
  %v11511 = vadd.f32 %v11092, %v11510
  %v11512 = vpop.f32.mrf.mxu0
  %v11513 = vpop.f32.mrf.mxu0
  %v11514 = vadd.f32 %v11092, %v11513
  %v11515 = vpop.f32.mrf.mxu0
  %11516 = vmatprep.mubr.bf16.mxu0 0
  %11517 = vmatmul.mubr.bf16.gmra.mxu0 %v11194
  %v11518 = vpop.f32.mrf.mxu0
  %v11519 = vadd.f32 %v11092, %v11518
  %v11520 = vpop.f32.mrf.mxu0
  %v11521 = vpop.f32.mrf.mxu0
  %v11522 = vadd.f32 %v11092, %v11521
  %v11523 = vpop.f32.mrf.mxu0
  %11524 = vmatprep.mubr.bf16.mxu0 0
  %11525 = vmatmul.mubr.bf16.gmra.mxu0 %v11197
  %v11526 = vpop.f32.mrf.mxu0
  %v11527 = vadd.f32 %v11092, %v11526
  %v11528 = vpop.f32.mrf.mxu0
  %v11529 = vpop.f32.mrf.mxu0
  %v11530 = vadd.f32 %v11092, %v11529
  %v11531 = vpop.f32.mrf.mxu0
  %11532 = vmatprep.mubr.bf16.mxu0 0
  %11533 = vmatmul.mubr.bf16.gmra.mxu0 %v11200
  %v11534 = vpop.f32.mrf.mxu0
  %v11535 = vadd.f32 %v11092, %v11534
  %v11536 = vpop.f32.mrf.mxu0
  %v11537 = vpop.f32.mrf.mxu0
  %v11538 = vadd.f32 %v11092, %v11537
  %v11539 = vpop.f32.mrf.mxu0
  %11540 = vmatprep.mubr.bf16.mxu0 0
  %11541 = vmatmul.mubr.bf16.gmra.mxu0 %v11203
  %v11542 = vpop.f32.mrf.mxu0
  %v11543 = vadd.f32 %v11092, %v11542
  %v11544 = vpop.f32.mrf.mxu0
  %v11545 = vpop.f32.mrf.mxu0
  %v11546 = vadd.f32 %v11092, %v11545
  %v11547 = vpop.f32.mrf.mxu0
  %11548 = vmatprep.mubr.bf16.mxu0 0
  %11549 = vmatmul.mubr.bf16.gmra.mxu0 %v11206
  %v11550 = vpop.f32.mrf.mxu0
  %v11551 = vadd.f32 %v11092, %v11550
  %v11552 = vpop.f32.mrf.mxu0
  %v11553 = vpop.f32.mrf.mxu0
  %v11554 = vadd.f32 %v11092, %v11553
  %v11555 = vpop.f32.mrf.mxu0
  %11556 = vmatprep.mubr.bf16.mxu0 0
  %11557 = vmatmul.mubr.bf16.gmra.mxu0 %v11209
  %v11558 = vpop.f32.mrf.mxu0
  %v11559 = vadd.f32 %v11092, %v11558
  %v11560 = vpop.f32.mrf.mxu0
  %v11561 = vpop.f32.mrf.mxu0
  %v11562 = vadd.f32 %v11092, %v11561
  %v11563 = vpop.f32.mrf.mxu0
  %11564 = vmatprep.mubr.bf16.mxu0 0
  %11565 = vmatmul.mubr.bf16.gmra.mxu0 %v11212
  %v11566 = vpop.f32.mrf.mxu0
  %v11567 = vadd.f32 %v11092, %v11566
  %v11568 = vpop.f32.mrf.mxu0
  %v11569 = vpop.f32.mrf.mxu0
  %v11570 = vadd.f32 %v11092, %v11569
  %v11571 = vpop.f32.mrf.mxu0
  %11572 = vmatprep.mubr.bf16.mxu0 0
  %11573 = vmatmul.mubr.bf16.gmra.mxu0 %v11215
  %v11574 = vpop.f32.mrf.mxu0
  %v11575 = vadd.f32 %v11092, %v11574
  %v11576 = vpop.f32.mrf.mxu0
  %v11577 = vpop.f32.mrf.mxu0
  %v11578 = vpop.f32.mrf.mxu0
  %11579 = vdwg.mxu0
  %v11580 = vadd.f32 %v10639, %v11255
  %v11581 = vadd.f32 %v10642, %v11258
  %v11582 = vadd.f32 %v10647, %v11263
  %v11583 = vadd.f32 %v10650, %v11266
  %v11584 = vadd.f32 %v10655, %v11271
  %v11585 = vadd.f32 %v10658, %v11274
  %v11586 = vadd.f32 %v10663, %v11279
  %v11587 = vadd.f32 %v10666, %v11282
  %v11588 = vadd.f32 %v10671, %v11287
  %v11589 = vadd.f32 %v10674, %v11290
  %v11590 = vadd.f32 %v10679, %v11295
  %v11591 = vadd.f32 %v10682, %v11298
  %v11592 = vadd.f32 %v10687, %v11303
  %v11593 = vadd.f32 %v10690, %v11306
  %v11594 = vadd.f32 %v10695, %v11311
  %v11595 = vadd.f32 %v10698, %v11314
  %v11596 = vadd.f32 %v10703, %v11319
  %v11597 = vadd.f32 %v10706, %v11322
  %v11598 = vadd.f32 %v10711, %v11327
  %v11599 = vadd.f32 %v10714, %v11330
  %v11600 = vadd.f32 %v10719, %v11335
  %v11601 = vadd.f32 %v10722, %v11338
  %v11602 = vadd.f32 %v10727, %v11343
  %v11603 = vadd.f32 %v10730, %v11346
  %v11604 = vadd.f32 %v10735, %v11351
  %v11605 = vadd.f32 %v10738, %v11354
  %v11606 = vadd.f32 %v10743, %v11359
  %v11607 = vadd.f32 %v10746, %v11362
  %v11608 = vadd.f32 %v10751, %v11367
  %v11609 = vadd.f32 %v10754, %v11370
  %v11610 = vadd.f32 %v10759, %v11375
  %v11611 = vadd.f32 %v10762, %v11378
  %v11612 = vadd.f32 %v10767, %v11383
  %v11613 = vadd.f32 %v10770, %v11386
  %v11614 = vadd.f32 %v10775, %v11391
  %v11615 = vadd.f32 %v10778, %v11394
  %v11616 = vadd.f32 %v10783, %v11399
  %v11617 = vadd.f32 %v10786, %v11402
  %v11618 = vadd.f32 %v10791, %v11407
  %v11619 = vadd.f32 %v10794, %v11410
  %v11620 = vadd.f32 %v10799, %v11415
  %v11621 = vadd.f32 %v10802, %v11418
  %v11622 = vadd.f32 %v10807, %v11423
  %v11623 = vadd.f32 %v10810, %v11426
  %v11624 = vadd.f32 %v10815, %v11431
  %v11625 = vadd.f32 %v10818, %v11434
  %v11626 = vadd.f32 %v10823, %v11439
  %v11627 = vadd.f32 %v10826, %v11442
  %v11628 = vadd.f32 %v10831, %v11447
  %v11629 = vadd.f32 %v10834, %v11450
  %v11630 = vadd.f32 %v10839, %v11455
  %v11631 = vadd.f32 %v10842, %v11458
  %v11632 = vadd.f32 %v10847, %v11463
  %v11633 = vadd.f32 %v10850, %v11466
  %v11634 = vadd.f32 %v10855, %v11471
  %v11635 = vadd.f32 %v10858, %v11474
  %v11636 = vadd.f32 %v10863, %v11479
  %v11637 = vadd.f32 %v10866, %v11482
  %v11638 = vadd.f32 %v10871, %v11487
  %v11639 = vadd.f32 %v10874, %v11490
  %v11640 = vadd.f32 %v10879, %v11495
  %v11641 = vadd.f32 %v10882, %v11498
  %v11642 = vadd.f32 %v10887, %v11503
  %v11643 = vadd.f32 %v10890, %v11506
  %v11644 = vadd.f32 %v10895, %v11511
  %v11645 = vadd.f32 %v10898, %v11514
  %v11646 = vadd.f32 %v10903, %v11519
  %v11647 = vadd.f32 %v10906, %v11522
  %v11648 = vadd.f32 %v10911, %v11527
  %v11649 = vadd.f32 %v10914, %v11530
  %v11650 = vadd.f32 %v10919, %v11535
  %v11651 = vadd.f32 %v10922, %v11538
  %v11652 = vadd.f32 %v10927, %v11543
  %v11653 = vadd.f32 %v10930, %v11546
  %v11654 = vadd.f32 %v10935, %v11551
  %v11655 = vadd.f32 %v10938, %v11554
  %v11656 = vadd.f32 %v10943, %v11559
  %v11657 = vadd.f32 %v10946, %v11562
  %v11658 = vadd.f32 %v10951, %v11567
  %v11659 = vadd.f32 %v10954, %v11570
  %v11660 = vadd.f32 %v10959, %v11575
  %v11661 = vld [vmem:[%s15] sm:$0x1]
  %v11662 = vld [vmem:[%s16] sm:$0x1]
  %v11663 = vmul.f32 %v11580, %v8861
  %v11664 = vmul.f32 %v11581, %v8866
  %v11665 = vmul.f32 %v11582, %v8871
  %v11666 = vmul.f32 %v11583, %v8876
  %v11667 = vmul.f32 %v11584, %v8881
  %v11668 = vmul.f32 %v11585, %v8886
  %v11669 = vmul.f32 %v11586, %v8891
  %v11670 = vmul.f32 %v11587, %v8896
  %v11671 = vmul.f32 %v11588, %v8901
  %v11672 = vmul.f32 %v11589, %v8906
  %v11673 = vmul.f32 %v11590, %v8911
  %v11674 = vmul.f32 %v11591, %v8916
  %v11675 = vmul.f32 %v11592, %v8921
  %v11676 = vmul.f32 %v11593, %v8926
  %v11677 = vmul.f32 %v11594, %v8931
  %v11678 = vmul.f32 %v11595, %v8936
  %v11679 = vmul.f32 %v11596, %v8941
  %v11680 = vmul.f32 %v11597, %v8946
  %v11681 = vmul.f32 %v11598, %v8951
  %v11682 = vmul.f32 %v11599, %v8956
  %v11683 = vmul.f32 %v11600, %v8961
  %v11684 = vmul.f32 %v11601, %v8966
  %v11685 = vmul.f32 %v11602, %v8971
  %v11686 = vmul.f32 %v11603, %v8976
  %v11687 = vmul.f32 %v11604, %v8981
  %v11688 = vmul.f32 %v11605, %v8986
  %v11689 = vmul.f32 %v11606, %v8991
  %v11690 = vmul.f32 %v11607, %v8996
  %v11691 = vmul.f32 %v11608, %v9001
  %v11692 = vmul.f32 %v11609, %v9006
  %v11693 = vmul.f32 %v11610, %v9011
  %v11694 = vmul.f32 %v11611, %v9016
  %v11695 = vmul.f32 %v11612, %v9021
  %v11696 = vmul.f32 %v11613, %v9026
  %v11697 = vmul.f32 %v11614, %v9031
  %v11698 = vmul.f32 %v11615, %v9036
  %v11699 = vmul.f32 %v11616, %v9041
  %v11700 = vmul.f32 %v11617, %v9046
  %v11701 = vmul.f32 %v11618, %v9051
  %v11702 = vmul.f32 %v11619, %v9056
  %v11703 = vmul.f32 %v11620, %v9061
  %v11704 = vmul.f32 %v11621, %v9066
  %v11705 = vmul.f32 %v11622, %v9071
  %v11706 = vmul.f32 %v11623, %v9076
  %v11707 = vmul.f32 %v11624, %v9081
  %v11708 = vmul.f32 %v11625, %v9086
  %v11709 = vmul.f32 %v11626, %v9091
  %v11710 = vmul.f32 %v11627, %v9096
  %v11711 = vmul.f32 %v11628, %v9101
  %v11712 = vmul.f32 %v11629, %v9106
  %v11713 = vmul.f32 %v11630, %v9111
  %v11714 = vmul.f32 %v11631, %v9116
  %v11715 = vmul.f32 %v11632, %v9121
  %v11716 = vmul.f32 %v11633, %v9126
  %v11717 = vmul.f32 %v11634, %v9131
  %v11718 = vmul.f32 %v11635, %v9136
  %v11719 = vmul.f32 %v11636, %v9141
  %v11720 = vmul.f32 %v11637, %v9146
  %v11721 = vmul.f32 %v11638, %v9151
  %v11722 = vmul.f32 %v11639, %v9156
  %v11723 = vmul.f32 %v11640, %v9161
  %v11724 = vmul.f32 %v11641, %v9166
  %v11725 = vmul.f32 %v11642, %v9171
  %v11726 = vmul.f32 %v11643, %v9176
  %v11727 = vmul.f32 %v11644, %v9181
  %v11728 = vmul.f32 %v11645, %v9186
  %v11729 = vmul.f32 %v11646, %v9191
  %v11730 = vmul.f32 %v11647, %v9196
  %v11731 = vmul.f32 %v11648, %v9201
  %v11732 = vmul.f32 %v11649, %v9206
  %v11733 = vmul.f32 %v11650, %v9211
  %v11734 = vmul.f32 %v11651, %v9216
  %v11735 = vmul.f32 %v11652, %v9221
  %v11736 = vmul.f32 %v11653, %v9226
  %v11737 = vmul.f32 %v11654, %v9231
  %v11738 = vmul.f32 %v11655, %v9236
  %v11739 = vmul.f32 %v11656, %v9241
  %v11740 = vmul.f32 %v11657, %v9246
  %v11741 = vmul.f32 %v11658, %v9251
  %v11742 = vmul.f32 %v11659, %v9256
  %v11743 = vmul.f32 %v11660, %v9261
  %vm11744 = vcmask 261120
  %v11745 = vsel %vm11744, %v11663, 0.0
  %v11746 = vsel %vm11744, %v11664, 0.0
  %v11747 = vadd.f32 %v11745, %v11746
  %v11748 = vsel %vm11744, %v11665, 0.0
  %v11749 = vadd.f32 %v11747, %v11748
  %v11750 = vsel %vm11744, %v11666, 0.0
  %v11751 = vadd.f32 %v11749, %v11750
  %v11752 = vsel %vm11744, %v11667, 0.0
  %v11753 = vadd.f32 %v11751, %v11752
  %v11754 = vsel %vm11744, %v11668, 0.0
  %v11755 = vadd.f32 %v11753, %v11754
  %v11756 = vsel %vm11744, %v11669, 0.0
  %v11757 = vadd.f32 %v11755, %v11756
  %v11758 = vsel %vm11744, %v11670, 0.0
  %v11759 = vadd.f32 %v11757, %v11758
  %v11760 = vsel %vm11744, %v11671, 0.0
  %v11761 = vadd.f32 %v11759, %v11760
  %v11762 = vsel %vm11744, %v11672, 0.0
  %v11763 = vadd.f32 %v11761, %v11762
  %v11764 = vsel %vm11744, %v11673, 0.0
  %v11765 = vadd.f32 %v11763, %v11764
  %v11766 = vsel %vm11744, %v11674, 0.0
  %v11767 = vadd.f32 %v11765, %v11766
  %v11768 = vsel %vm11744, %v11675, 0.0
  %v11769 = vadd.f32 %v11767, %v11768
  %v11770 = vsel %vm11744, %v11676, 0.0
  %v11771 = vadd.f32 %v11769, %v11770
  %v11772 = vsel %vm11744, %v11677, 0.0
  %v11773 = vadd.f32 %v11771, %v11772
  %v11774 = vsel %vm11744, %v11678, 0.0
  %v11775 = vadd.f32 %v11773, %v11774
  %v11776 = vsel %vm11744, %v11679, 0.0
  %v11777 = vadd.f32 %v11775, %v11776
  %v11778 = vsel %vm11744, %v11680, 0.0
  %v11779 = vadd.f32 %v11777, %v11778
  %v11780 = vsel %vm11744, %v11681, 0.0
  %v11781 = vadd.f32 %v11779, %v11780
  %v11782 = vsel %vm11744, %v11682, 0.0
  %v11783 = vadd.f32 %v11781, %v11782
  %v11784 = vsel %vm11744, %v11683, 0.0
  %v11785 = vadd.f32 %v11783, %v11784
  %v11786 = vsel %vm11744, %v11684, 0.0
  %v11787 = vadd.f32 %v11785, %v11786
  %v11788 = vsel %vm11744, %v11685, 0.0
  %v11789 = vadd.f32 %v11787, %v11788
  %v11790 = vsel %vm11744, %v11686, 0.0
  %v11791 = vadd.f32 %v11789, %v11790
  %v11792 = vsel %vm11744, %v11687, 0.0
  %v11793 = vadd.f32 %v11791, %v11792
  %v11794 = vsel %vm11744, %v11688, 0.0
  %v11795 = vadd.f32 %v11793, %v11794
  %v11796 = vsel %vm11744, %v11689, 0.0
  %v11797 = vadd.f32 %v11795, %v11796
  %v11798 = vsel %vm11744, %v11690, 0.0
  %v11799 = vadd.f32 %v11797, %v11798
  %v11800 = vsel %vm11744, %v11691, 0.0
  %v11801 = vadd.f32 %v11799, %v11800
  %v11802 = vsel %vm11744, %v11692, 0.0
  %v11803 = vadd.f32 %v11801, %v11802
  %v11804 = vsel %vm11744, %v11693, 0.0
  %v11805 = vadd.f32 %v11803, %v11804
  %v11806 = vsel %vm11744, %v11694, 0.0
  %v11807 = vadd.f32 %v11805, %v11806
  %v11808 = vsel %vm11744, %v11695, 0.0
  %v11809 = vadd.f32 %v11807, %v11808
  %v11810 = vsel %vm11744, %v11696, 0.0
  %v11811 = vadd.f32 %v11809, %v11810
  %v11812 = vsel %vm11744, %v11697, 0.0
  %v11813 = vadd.f32 %v11811, %v11812
  %v11814 = vsel %vm11744, %v11698, 0.0
  %v11815 = vadd.f32 %v11813, %v11814
  %v11816 = vsel %vm11744, %v11699, 0.0
  %v11817 = vadd.f32 %v11815, %v11816
  %v11818 = vsel %vm11744, %v11700, 0.0
  %v11819 = vadd.f32 %v11817, %v11818
  %v11820 = vsel %vm11744, %v11701, 0.0
  %v11821 = vadd.f32 %v11819, %v11820
  %v11822 = vsel %vm11744, %v11702, 0.0
  %v11823 = vadd.f32 %v11821, %v11822
  %v11824 = vsel %vm11744, %v11703, 0.0
  %v11825 = vadd.f32 %v11823, %v11824
  %v11826 = vsel %vm11744, %v11704, 0.0
  %v11827 = vadd.f32 %v11825, %v11826
  %v11828 = vsel %vm11744, %v11705, 0.0
  %v11829 = vadd.f32 %v11827, %v11828
  %v11830 = vsel %vm11744, %v11706, 0.0
  %v11831 = vadd.f32 %v11829, %v11830
  %v11832 = vsel %vm11744, %v11707, 0.0
  %v11833 = vadd.f32 %v11831, %v11832
  %v11834 = vsel %vm11744, %v11708, 0.0
  %v11835 = vadd.f32 %v11833, %v11834
  %v11836 = vsel %vm11744, %v11709, 0.0
  %v11837 = vadd.f32 %v11835, %v11836
  %v11838 = vsel %vm11744, %v11710, 0.0
  %v11839 = vadd.f32 %v11837, %v11838
  %v11840 = vsel %vm11744, %v11711, 0.0
  %v11841 = vadd.f32 %v11839, %v11840
  %v11842 = vsel %vm11744, %v11712, 0.0
  %v11843 = vadd.f32 %v11841, %v11842
  %v11844 = vsel %vm11744, %v11713, 0.0
  %v11845 = vadd.f32 %v11843, %v11844
  %v11846 = vsel %vm11744, %v11714, 0.0
  %v11847 = vadd.f32 %v11845, %v11846
  %v11848 = vsel %vm11744, %v11715, 0.0
  %v11849 = vadd.f32 %v11847, %v11848
  %v11850 = vsel %vm11744, %v11716, 0.0
  %v11851 = vadd.f32 %v11849, %v11850
  %v11852 = vsel %vm11744, %v11717, 0.0
  %v11853 = vadd.f32 %v11851, %v11852
  %v11854 = vsel %vm11744, %v11718, 0.0
  %v11855 = vadd.f32 %v11853, %v11854
  %v11856 = vsel %vm11744, %v11719, 0.0
  %v11857 = vadd.f32 %v11855, %v11856
  %v11858 = vsel %vm11744, %v11720, 0.0
  %v11859 = vadd.f32 %v11857, %v11858
  %v11860 = vsel %vm11744, %v11721, 0.0
  %v11861 = vadd.f32 %v11859, %v11860
  %v11862 = vsel %vm11744, %v11722, 0.0
  %v11863 = vadd.f32 %v11861, %v11862
  %v11864 = vsel %vm11744, %v11723, 0.0
  %v11865 = vadd.f32 %v11863, %v11864
  %v11866 = vsel %vm11744, %v11724, 0.0
  %v11867 = vadd.f32 %v11865, %v11866
  %v11868 = vsel %vm11744, %v11725, 0.0
  %v11869 = vadd.f32 %v11867, %v11868
  %v11870 = vsel %vm11744, %v11726, 0.0
  %v11871 = vadd.f32 %v11869, %v11870
  %v11872 = vsel %vm11744, %v11727, 0.0
  %v11873 = vadd.f32 %v11871, %v11872
  %v11874 = vsel %vm11744, %v11728, 0.0
  %v11875 = vadd.f32 %v11873, %v11874
  %v11876 = vsel %vm11744, %v11729, 0.0
  %v11877 = vadd.f32 %v11875, %v11876
  %v11878 = vsel %vm11744, %v11730, 0.0
  %v11879 = vadd.f32 %v11877, %v11878
  %v11880 = vsel %vm11744, %v11731, 0.0
  %v11881 = vadd.f32 %v11879, %v11880
  %v11882 = vsel %vm11744, %v11732, 0.0
  %v11883 = vadd.f32 %v11881, %v11882
  %v11884 = vsel %vm11744, %v11733, 0.0
  %v11885 = vadd.f32 %v11883, %v11884
  %v11886 = vsel %vm11744, %v11734, 0.0
  %v11887 = vadd.f32 %v11885, %v11886
  %v11888 = vsel %vm11744, %v11735, 0.0
  %v11889 = vadd.f32 %v11887, %v11888
  %v11890 = vsel %vm11744, %v11736, 0.0
  %v11891 = vadd.f32 %v11889, %v11890
  %v11892 = vsel %vm11744, %v11737, 0.0
  %v11893 = vadd.f32 %v11891, %v11892
  %v11894 = vsel %vm11744, %v11738, 0.0
  %v11895 = vadd.f32 %v11893, %v11894
  %v11896 = vsel %vm11744, %v11739, 0.0
  %v11897 = vadd.f32 %v11895, %v11896
  %v11898 = vsel %vm11744, %v11740, 0.0
  %v11899 = vadd.f32 %v11897, %v11898
  %v11900 = vsel %vm11744, %v11741, 0.0
  %v11901 = vadd.f32 %v11899, %v11900
  %v11902 = vsel %vm11744, %v11742, 0.0
  %v11903 = vadd.f32 %v11901, %v11902
  %v11904 = vsel %vm11744, %v11743, 0.0
  %v11905 = vadd.f32 %v11903, %v11904
  %v11906 = vrot.slane %v11905, 4
  %v11907 = vadd.f32 %v11905, %v11906
  %v11908 = vrot.slane %v11907, 2
  %v11909 = vadd.f32 %v11907, %v11908
  %v11910 = vrot.slane %v11909, 1
  %v11911 = vadd.f32 %v11909, %v11910
  %v11912 = vmul.f32 %v11663, %v11663
  %v11913 = vmul.f32 %v11664, %v11664
  %v11914 = vmul.f32 %v11665, %v11665
  %v11915 = vmul.f32 %v11666, %v11666
  %v11916 = vmul.f32 %v11667, %v11667
  %v11917 = vmul.f32 %v11668, %v11668
  %v11918 = vmul.f32 %v11669, %v11669
  %v11919 = vmul.f32 %v11670, %v11670
  %v11920 = vmul.f32 %v11671, %v11671
  %v11921 = vmul.f32 %v11672, %v11672
  %v11922 = vmul.f32 %v11673, %v11673
  %v11923 = vmul.f32 %v11674, %v11674
  %v11924 = vmul.f32 %v11675, %v11675
  %v11925 = vmul.f32 %v11676, %v11676
  %v11926 = vmul.f32 %v11677, %v11677
  %v11927 = vmul.f32 %v11678, %v11678
  %v11928 = vmul.f32 %v11679, %v11679
  %v11929 = vmul.f32 %v11680, %v11680
  %v11930 = vmul.f32 %v11681, %v11681
  %v11931 = vmul.f32 %v11682, %v11682
  %v11932 = vmul.f32 %v11683, %v11683
  %v11933 = vmul.f32 %v11684, %v11684
  %v11934 = vmul.f32 %v11685, %v11685
  %v11935 = vmul.f32 %v11686, %v11686
  %v11936 = vmul.f32 %v11687, %v11687
  %v11937 = vmul.f32 %v11688, %v11688
  %v11938 = vmul.f32 %v11689, %v11689
  %v11939 = vmul.f32 %v11690, %v11690
  %v11940 = vmul.f32 %v11691, %v11691
  %v11941 = vmul.f32 %v11692, %v11692
  %v11942 = vmul.f32 %v11693, %v11693
  %v11943 = vmul.f32 %v11694, %v11694
  %v11944 = vmul.f32 %v11695, %v11695
  %v11945 = vmul.f32 %v11696, %v11696
  %v11946 = vmul.f32 %v11697, %v11697
  %v11947 = vmul.f32 %v11698, %v11698
  %v11948 = vmul.f32 %v11699, %v11699
  %v11949 = vmul.f32 %v11700, %v11700
  %v11950 = vmul.f32 %v11701, %v11701
  %v11951 = vmul.f32 %v11702, %v11702
  %v11952 = vmul.f32 %v11703, %v11703
  %v11953 = vmul.f32 %v11704, %v11704
  %v11954 = vmul.f32 %v11705, %v11705
  %v11955 = vmul.f32 %v11706, %v11706
  %v11956 = vmul.f32 %v11707, %v11707
  %v11957 = vmul.f32 %v11708, %v11708
  %v11958 = vmul.f32 %v11709, %v11709
  %v11959 = vmul.f32 %v11710, %v11710
  %v11960 = vmul.f32 %v11711, %v11711
  %v11961 = vmul.f32 %v11712, %v11712
  %v11962 = vmul.f32 %v11713, %v11713
  %v11963 = vmul.f32 %v11714, %v11714
  %v11964 = vmul.f32 %v11715, %v11715
  %v11965 = vmul.f32 %v11716, %v11716
  %v11966 = vmul.f32 %v11717, %v11717
  %v11967 = vmul.f32 %v11718, %v11718
  %v11968 = vmul.f32 %v11719, %v11719
  %v11969 = vmul.f32 %v11720, %v11720
  %v11970 = vmul.f32 %v11721, %v11721
  %v11971 = vmul.f32 %v11722, %v11722
  %v11972 = vmul.f32 %v11723, %v11723
  %v11973 = vmul.f32 %v11724, %v11724
  %v11974 = vmul.f32 %v11725, %v11725
  %v11975 = vmul.f32 %v11726, %v11726
  %v11976 = vmul.f32 %v11727, %v11727
  %v11977 = vmul.f32 %v11728, %v11728
  %v11978 = vmul.f32 %v11729, %v11729
  %v11979 = vmul.f32 %v11730, %v11730
  %v11980 = vmul.f32 %v11731, %v11731
  %v11981 = vmul.f32 %v11732, %v11732
  %v11982 = vmul.f32 %v11733, %v11733
  %v11983 = vmul.f32 %v11734, %v11734
  %v11984 = vmul.f32 %v11735, %v11735
  %v11985 = vmul.f32 %v11736, %v11736
  %v11986 = vmul.f32 %v11737, %v11737
  %v11987 = vmul.f32 %v11738, %v11738
  %v11988 = vmul.f32 %v11739, %v11739
  %v11989 = vmul.f32 %v11740, %v11740
  %v11990 = vmul.f32 %v11741, %v11741
  %v11991 = vmul.f32 %v11742, %v11742
  %v11992 = vmul.f32 %v11743, %v11743
  %v11993 = vsel %vm11744, %v11912, 0.0
  %v11994 = vsel %vm11744, %v11913, 0.0
  %v11995 = vadd.f32 %v11993, %v11994
  %v11996 = vsel %vm11744, %v11914, 0.0
  %v11997 = vadd.f32 %v11995, %v11996
  %v11998 = vsel %vm11744, %v11915, 0.0
  %v11999 = vadd.f32 %v11997, %v11998
  %v12000 = vsel %vm11744, %v11916, 0.0
  %v12001 = vadd.f32 %v11999, %v12000
  %v12002 = vsel %vm11744, %v11917, 0.0
  %v12003 = vadd.f32 %v12001, %v12002
  %v12004 = vsel %vm11744, %v11918, 0.0
  %v12005 = vadd.f32 %v12003, %v12004
  %v12006 = vsel %vm11744, %v11919, 0.0
  %v12007 = vadd.f32 %v12005, %v12006
  %v12008 = vsel %vm11744, %v11920, 0.0
  %v12009 = vadd.f32 %v12007, %v12008
  %v12010 = vsel %vm11744, %v11921, 0.0
  %v12011 = vadd.f32 %v12009, %v12010
  %v12012 = vsel %vm11744, %v11922, 0.0
  %v12013 = vadd.f32 %v12011, %v12012
  %v12014 = vsel %vm11744, %v11923, 0.0
  %v12015 = vadd.f32 %v12013, %v12014
  %v12016 = vsel %vm11744, %v11924, 0.0
  %v12017 = vadd.f32 %v12015, %v12016
  %v12018 = vsel %vm11744, %v11925, 0.0
  %v12019 = vadd.f32 %v12017, %v12018
  %v12020 = vsel %vm11744, %v11926, 0.0
  %v12021 = vadd.f32 %v12019, %v12020
  %v12022 = vsel %vm11744, %v11927, 0.0
  %v12023 = vadd.f32 %v12021, %v12022
  %v12024 = vsel %vm11744, %v11928, 0.0
  %v12025 = vadd.f32 %v12023, %v12024
  %v12026 = vsel %vm11744, %v11929, 0.0
  %v12027 = vadd.f32 %v12025, %v12026
  %v12028 = vsel %vm11744, %v11930, 0.0
  %v12029 = vadd.f32 %v12027, %v12028
  %v12030 = vsel %vm11744, %v11931, 0.0
  %v12031 = vadd.f32 %v12029, %v12030
  %v12032 = vsel %vm11744, %v11932, 0.0
  %v12033 = vadd.f32 %v12031, %v12032
  %v12034 = vsel %vm11744, %v11933, 0.0
  %v12035 = vadd.f32 %v12033, %v12034
  %v12036 = vsel %vm11744, %v11934, 0.0
  %v12037 = vadd.f32 %v12035, %v12036
  %v12038 = vsel %vm11744, %v11935, 0.0
  %v12039 = vadd.f32 %v12037, %v12038
  %v12040 = vsel %vm11744, %v11936, 0.0
  %v12041 = vadd.f32 %v12039, %v12040
  %v12042 = vsel %vm11744, %v11937, 0.0
  %v12043 = vadd.f32 %v12041, %v12042
  %v12044 = vsel %vm11744, %v11938, 0.0
  %v12045 = vadd.f32 %v12043, %v12044
  %v12046 = vsel %vm11744, %v11939, 0.0
  %v12047 = vadd.f32 %v12045, %v12046
  %v12048 = vsel %vm11744, %v11940, 0.0
  %v12049 = vadd.f32 %v12047, %v12048
  %v12050 = vsel %vm11744, %v11941, 0.0
  %v12051 = vadd.f32 %v12049, %v12050
  %v12052 = vsel %vm11744, %v11942, 0.0
  %v12053 = vadd.f32 %v12051, %v12052
  %v12054 = vsel %vm11744, %v11943, 0.0
  %v12055 = vadd.f32 %v12053, %v12054
  %v12056 = vsel %vm11744, %v11944, 0.0
  %v12057 = vadd.f32 %v12055, %v12056
  %v12058 = vsel %vm11744, %v11945, 0.0
  %v12059 = vadd.f32 %v12057, %v12058
  %v12060 = vsel %vm11744, %v11946, 0.0
  %v12061 = vadd.f32 %v12059, %v12060
  %v12062 = vsel %vm11744, %v11947, 0.0
  %v12063 = vadd.f32 %v12061, %v12062
  %v12064 = vsel %vm11744, %v11948, 0.0
  %v12065 = vadd.f32 %v12063, %v12064
  %v12066 = vsel %vm11744, %v11949, 0.0
  %v12067 = vadd.f32 %v12065, %v12066
  %v12068 = vsel %vm11744, %v11950, 0.0
  %v12069 = vadd.f32 %v12067, %v12068
  %v12070 = vsel %vm11744, %v11951, 0.0
  %v12071 = vadd.f32 %v12069, %v12070
  %v12072 = vsel %vm11744, %v11952, 0.0
  %v12073 = vadd.f32 %v12071, %v12072
  %v12074 = vsel %vm11744, %v11953, 0.0
  %v12075 = vadd.f32 %v12073, %v12074
  %v12076 = vsel %vm11744, %v11954, 0.0
  %v12077 = vadd.f32 %v12075, %v12076
  %v12078 = vsel %vm11744, %v11955, 0.0
  %v12079 = vadd.f32 %v12077, %v12078
  %v12080 = vsel %vm11744, %v11956, 0.0
  %v12081 = vadd.f32 %v12079, %v12080
  %v12082 = vsel %vm11744, %v11957, 0.0
  %v12083 = vadd.f32 %v12081, %v12082
  %v12084 = vsel %vm11744, %v11958, 0.0
  %v12085 = vadd.f32 %v12083, %v12084
  %v12086 = vsel %vm11744, %v11959, 0.0
  %v12087 = vadd.f32 %v12085, %v12086
  %v12088 = vsel %vm11744, %v11960, 0.0
  %v12089 = vadd.f32 %v12087, %v12088
  %v12090 = vsel %vm11744, %v11961, 0.0
  %v12091 = vadd.f32 %v12089, %v12090
  %v12092 = vsel %vm11744, %v11962, 0.0
  %v12093 = vadd.f32 %v12091, %v12092
  %v12094 = vsel %vm11744, %v11963, 0.0
  %v12095 = vadd.f32 %v12093, %v12094
  %v12096 = vsel %vm11744, %v11964, 0.0
  %v12097 = vadd.f32 %v12095, %v12096
  %v12098 = vsel %vm11744, %v11965, 0.0
  %v12099 = vadd.f32 %v12097, %v12098
  %v12100 = vsel %vm11744, %v11966, 0.0
  %v12101 = vadd.f32 %v12099, %v12100
  %v12102 = vsel %vm11744, %v11967, 0.0
  %v12103 = vadd.f32 %v12101, %v12102
  %v12104 = vsel %vm11744, %v11968, 0.0
  %v12105 = vadd.f32 %v12103, %v12104
  %v12106 = vsel %vm11744, %v11969, 0.0
  %v12107 = vadd.f32 %v12105, %v12106
  %v12108 = vsel %vm11744, %v11970, 0.0
  %v12109 = vadd.f32 %v12107, %v12108
  %v12110 = vsel %vm11744, %v11971, 0.0
  %v12111 = vadd.f32 %v12109, %v12110
  %v12112 = vsel %vm11744, %v11972, 0.0
  %v12113 = vadd.f32 %v12111, %v12112
  %v12114 = vsel %vm11744, %v11973, 0.0
  %v12115 = vadd.f32 %v12113, %v12114
  %v12116 = vsel %vm11744, %v11974, 0.0
  %v12117 = vadd.f32 %v12115, %v12116
  %v12118 = vsel %vm11744, %v11975, 0.0
  %v12119 = vadd.f32 %v12117, %v12118
  %v12120 = vsel %vm11744, %v11976, 0.0
  %v12121 = vadd.f32 %v12119, %v12120
  %v12122 = vsel %vm11744, %v11977, 0.0
  %v12123 = vadd.f32 %v12121, %v12122
  %v12124 = vsel %vm11744, %v11978, 0.0
  %v12125 = vadd.f32 %v12123, %v12124
  %v12126 = vsel %vm11744, %v11979, 0.0
  %v12127 = vadd.f32 %v12125, %v12126
  %v12128 = vsel %vm11744, %v11980, 0.0
  %v12129 = vadd.f32 %v12127, %v12128
  %v12130 = vsel %vm11744, %v11981, 0.0
  %v12131 = vadd.f32 %v12129, %v12130
  %v12132 = vsel %vm11744, %v11982, 0.0
  %v12133 = vadd.f32 %v12131, %v12132
  %v12134 = vsel %vm11744, %v11983, 0.0
  %v12135 = vadd.f32 %v12133, %v12134
  %v12136 = vsel %vm11744, %v11984, 0.0
  %v12137 = vadd.f32 %v12135, %v12136
  %v12138 = vsel %vm11744, %v11985, 0.0
  %v12139 = vadd.f32 %v12137, %v12138
  %v12140 = vsel %vm11744, %v11986, 0.0
  %v12141 = vadd.f32 %v12139, %v12140
  %v12142 = vsel %vm11744, %v11987, 0.0
  %v12143 = vadd.f32 %v12141, %v12142
  %v12144 = vsel %vm11744, %v11988, 0.0
  %v12145 = vadd.f32 %v12143, %v12144
  %v12146 = vsel %vm11744, %v11989, 0.0
  %v12147 = vadd.f32 %v12145, %v12146
  %v12148 = vsel %vm11744, %v11990, 0.0
  %v12149 = vadd.f32 %v12147, %v12148
  %v12150 = vsel %vm11744, %v11991, 0.0
  %v12151 = vadd.f32 %v12149, %v12150
  %v12152 = vsel %vm11744, %v11992, 0.0
  %v12153 = vadd.f32 %v12151, %v12152
  %v12154 = vrot.slane %v12153, 4
  %v12155 = vadd.f32 %v12153, %v12154
  %v12156 = vrot.slane %v12155, 2
  %v12157 = vadd.f32 %v12155, %v12156
  %v12158 = vrot.slane %v12157, 1
  %v12159 = vadd.f32 %v12157, %v12158
  %v12160 = vmul.f32 %v11911, 0.0078125
  %v12161 = vmul.f32 %v12159, 0.0078125
  %v12162 = vmul.f32 %v12160, %v12160
  %v12163 = vsub.f32 %v12161, %v12162
  %v12164 = vmax.f32 %v12163, 0.0
  %v12165 = vadd.f32 %v12164, 1e-05
  %v12166 = vrsqrt.pop %v12165
  %v12167 = vmul.f32 %v11661, %v12166
  %v12168 = vmul.f32 %v12160, %v12167
  %v12169 = vsub.f32 %v11662, %v12168
  %v12171 = vlaneseq
  %v12172 = vshrl.u32 %v12171, 7
  %v12173 = vsub.s32 0, %v12172
  %v12174 = vrot.slane %v12167, %v12173
  %v12176 = vmul.f32 %v11580, %v12174
  %v12177 = vmul.f32 %v11581, %v12174
  %v12178 = vmul.f32 %v11582, %v12174
  %v12179 = vmul.f32 %v11583, %v12174
  %v12180 = vmul.f32 %v11584, %v12174
  %v12181 = vmul.f32 %v11585, %v12174
  %v12182 = vmul.f32 %v11586, %v12174
  %v12183 = vmul.f32 %v11587, %v12174
  %v12184 = vmul.f32 %v11588, %v12174
  %v12185 = vmul.f32 %v11589, %v12174
  %v12186 = vmul.f32 %v11590, %v12174
  %v12187 = vmul.f32 %v11591, %v12174
  %v12188 = vmul.f32 %v11592, %v12174
  %v12189 = vmul.f32 %v11593, %v12174
  %v12190 = vmul.f32 %v11594, %v12174
  %v12191 = vmul.f32 %v11595, %v12174
  %v12192 = vmul.f32 %v11596, %v12174
  %v12193 = vmul.f32 %v11597, %v12174
  %v12194 = vmul.f32 %v11598, %v12174
  %v12195 = vmul.f32 %v11599, %v12174
  %v12196 = vmul.f32 %v11600, %v12174
  %v12197 = vmul.f32 %v11601, %v12174
  %v12198 = vmul.f32 %v11602, %v12174
  %v12199 = vmul.f32 %v11603, %v12174
  %v12200 = vmul.f32 %v11604, %v12174
  %v12201 = vmul.f32 %v11605, %v12174
  %v12202 = vmul.f32 %v11606, %v12174
  %v12203 = vmul.f32 %v11607, %v12174
  %v12204 = vmul.f32 %v11608, %v12174
  %v12205 = vmul.f32 %v11609, %v12174
  %v12206 = vmul.f32 %v11610, %v12174
  %v12207 = vmul.f32 %v11611, %v12174
  %v12208 = vmul.f32 %v11612, %v12174
  %v12209 = vmul.f32 %v11613, %v12174
  %v12210 = vmul.f32 %v11614, %v12174
  %v12211 = vmul.f32 %v11615, %v12174
  %v12212 = vmul.f32 %v11616, %v12174
  %v12213 = vmul.f32 %v11617, %v12174
  %v12214 = vmul.f32 %v11618, %v12174
  %v12215 = vmul.f32 %v11619, %v12174
  %v12216 = vmul.f32 %v11620, %v12174
  %v12217 = vmul.f32 %v11621, %v12174
  %v12218 = vmul.f32 %v11622, %v12174
  %v12219 = vmul.f32 %v11623, %v12174
  %v12220 = vmul.f32 %v11624, %v12174
  %v12221 = vmul.f32 %v11625, %v12174
  %v12222 = vmul.f32 %v11626, %v12174
  %v12223 = vmul.f32 %v11627, %v12174
  %v12224 = vmul.f32 %v11628, %v12174
  %v12225 = vmul.f32 %v11629, %v12174
  %v12226 = vmul.f32 %v11630, %v12174
  %v12227 = vmul.f32 %v11631, %v12174
  %v12228 = vmul.f32 %v11632, %v12174
  %v12229 = vmul.f32 %v11633, %v12174
  %v12230 = vmul.f32 %v11634, %v12174
  %v12231 = vmul.f32 %v11635, %v12174
  %v12232 = vmul.f32 %v11636, %v12174
  %v12233 = vmul.f32 %v11637, %v12174
  %v12234 = vmul.f32 %v11638, %v12174
  %v12235 = vmul.f32 %v11639, %v12174
  %v12236 = vmul.f32 %v11640, %v12174
  %v12237 = vmul.f32 %v11641, %v12174
  %v12238 = vmul.f32 %v11642, %v12174
  %v12239 = vmul.f32 %v11643, %v12174
  %v12240 = vmul.f32 %v11644, %v12174
  %v12241 = vmul.f32 %v11645, %v12174
  %v12242 = vmul.f32 %v11646, %v12174
  %v12243 = vmul.f32 %v11647, %v12174
  %v12244 = vmul.f32 %v11648, %v12174
  %v12245 = vmul.f32 %v11649, %v12174
  %v12246 = vmul.f32 %v11650, %v12174
  %v12247 = vmul.f32 %v11651, %v12174
  %v12248 = vmul.f32 %v11652, %v12174
  %v12249 = vmul.f32 %v11653, %v12174
  %v12250 = vmul.f32 %v11654, %v12174
  %v12251 = vmul.f32 %v11655, %v12174
  %v12252 = vmul.f32 %v11656, %v12174
  %v12253 = vmul.f32 %v11657, %v12174
  %v12254 = vmul.f32 %v11658, %v12174
  %v12255 = vmul.f32 %v11659, %v12174
  %v12256 = vmul.f32 %v11660, %v12174
  %v12258 = vlaneseq
  %v12259 = vshrl.u32 %v12258, 7
  %v12260 = vsub.s32 0, %v12259
  %v12261 = vrot.slane %v12169, %v12260
  %v12263 = vadd.f32 %v12176, %v12261
  %v12264 = vadd.f32 %v12177, %v12261
  %v12265 = vadd.f32 %v12178, %v12261
  %v12266 = vadd.f32 %v12179, %v12261
  %v12267 = vadd.f32 %v12180, %v12261
  %v12268 = vadd.f32 %v12181, %v12261
  %v12269 = vadd.f32 %v12182, %v12261
  %v12270 = vadd.f32 %v12183, %v12261
  %v12271 = vadd.f32 %v12184, %v12261
  %v12272 = vadd.f32 %v12185, %v12261
  %v12273 = vadd.f32 %v12186, %v12261
  %v12274 = vadd.f32 %v12187, %v12261
  %v12275 = vadd.f32 %v12188, %v12261
  %v12276 = vadd.f32 %v12189, %v12261
  %v12277 = vadd.f32 %v12190, %v12261
  %v12278 = vadd.f32 %v12191, %v12261
  %v12279 = vadd.f32 %v12192, %v12261
  %v12280 = vadd.f32 %v12193, %v12261
  %v12281 = vadd.f32 %v12194, %v12261
  %v12282 = vadd.f32 %v12195, %v12261
  %v12283 = vadd.f32 %v12196, %v12261
  %v12284 = vadd.f32 %v12197, %v12261
  %v12285 = vadd.f32 %v12198, %v12261
  %v12286 = vadd.f32 %v12199, %v12261
  %v12287 = vadd.f32 %v12200, %v12261
  %v12288 = vadd.f32 %v12201, %v12261
  %v12289 = vadd.f32 %v12202, %v12261
  %v12290 = vadd.f32 %v12203, %v12261
  %v12291 = vadd.f32 %v12204, %v12261
  %v12292 = vadd.f32 %v12205, %v12261
  %v12293 = vadd.f32 %v12206, %v12261
  %v12294 = vadd.f32 %v12207, %v12261
  %v12295 = vadd.f32 %v12208, %v12261
  %v12296 = vadd.f32 %v12209, %v12261
  %v12297 = vadd.f32 %v12210, %v12261
  %v12298 = vadd.f32 %v12211, %v12261
  %v12299 = vadd.f32 %v12212, %v12261
  %v12300 = vadd.f32 %v12213, %v12261
  %v12301 = vadd.f32 %v12214, %v12261
  %v12302 = vadd.f32 %v12215, %v12261
  %v12303 = vadd.f32 %v12216, %v12261
  %v12304 = vadd.f32 %v12217, %v12261
  %v12305 = vadd.f32 %v12218, %v12261
  %v12306 = vadd.f32 %v12219, %v12261
  %v12307 = vadd.f32 %v12220, %v12261
  %v12308 = vadd.f32 %v12221, %v12261
  %v12309 = vadd.f32 %v12222, %v12261
  %v12310 = vadd.f32 %v12223, %v12261
  %v12311 = vadd.f32 %v12224, %v12261
  %v12312 = vadd.f32 %v12225, %v12261
  %v12313 = vadd.f32 %v12226, %v12261
  %v12314 = vadd.f32 %v12227, %v12261
  %v12315 = vadd.f32 %v12228, %v12261
  %v12316 = vadd.f32 %v12229, %v12261
  %v12317 = vadd.f32 %v12230, %v12261
  %v12318 = vadd.f32 %v12231, %v12261
  %v12319 = vadd.f32 %v12232, %v12261
  %v12320 = vadd.f32 %v12233, %v12261
  %v12321 = vadd.f32 %v12234, %v12261
  %v12322 = vadd.f32 %v12235, %v12261
  %v12323 = vadd.f32 %v12236, %v12261
  %v12324 = vadd.f32 %v12237, %v12261
  %v12325 = vadd.f32 %v12238, %v12261
  %v12326 = vadd.f32 %v12239, %v12261
  %v12327 = vadd.f32 %v12240, %v12261
  %v12328 = vadd.f32 %v12241, %v12261
  %v12329 = vadd.f32 %v12242, %v12261
  %v12330 = vadd.f32 %v12243, %v12261
  %v12331 = vadd.f32 %v12244, %v12261
  %v12332 = vadd.f32 %v12245, %v12261
  %v12333 = vadd.f32 %v12246, %v12261
  %v12334 = vadd.f32 %v12247, %v12261
  %v12335 = vadd.f32 %v12248, %v12261
  %v12336 = vadd.f32 %v12249, %v12261
  %v12337 = vadd.f32 %v12250, %v12261
  %v12338 = vadd.f32 %v12251, %v12261
  %v12339 = vadd.f32 %v12252, %v12261
  %v12340 = vadd.f32 %v12253, %v12261
  %v12341 = vadd.f32 %v12254, %v12261
  %v12342 = vadd.f32 %v12255, %v12261
  %v12343 = vadd.f32 %v12256, %v12261
  %vm12344 = vcmp.gt.f32.partialorder %v12263, 0.0
  %vm12345 = vcmp.gt.f32.partialorder %v12264, 0.0
  %vm12346 = vcmp.gt.f32.partialorder %v12265, 0.0
  %vm12347 = vcmp.gt.f32.partialorder %v12266, 0.0
  %vm12348 = vcmp.gt.f32.partialorder %v12267, 0.0
  %vm12349 = vcmp.gt.f32.partialorder %v12268, 0.0
  %vm12350 = vcmp.gt.f32.partialorder %v12269, 0.0
  %vm12351 = vcmp.gt.f32.partialorder %v12270, 0.0
  %vm12352 = vcmp.gt.f32.partialorder %v12271, 0.0
  %vm12353 = vcmp.gt.f32.partialorder %v12272, 0.0
  %vm12354 = vcmp.gt.f32.partialorder %v12273, 0.0
  %vm12355 = vcmp.gt.f32.partialorder %v12274, 0.0
  %vm12356 = vcmp.gt.f32.partialorder %v12275, 0.0
  %vm12357 = vcmp.gt.f32.partialorder %v12276, 0.0
  %vm12358 = vcmp.gt.f32.partialorder %v12277, 0.0
  %vm12359 = vcmp.gt.f32.partialorder %v12278, 0.0
  %vm12360 = vcmp.gt.f32.partialorder %v12279, 0.0
  %vm12361 = vcmp.gt.f32.partialorder %v12280, 0.0
  %vm12362 = vcmp.gt.f32.partialorder %v12281, 0.0
  %vm12363 = vcmp.gt.f32.partialorder %v12282, 0.0
  %vm12364 = vcmp.gt.f32.partialorder %v12283, 0.0
  %vm12365 = vcmp.gt.f32.partialorder %v12284, 0.0
  %vm12366 = vcmp.gt.f32.partialorder %v12285, 0.0
  %vm12367 = vcmp.gt.f32.partialorder %v12286, 0.0
  %vm12368 = vcmp.gt.f32.partialorder %v12287, 0.0
  %vm12369 = vcmp.gt.f32.partialorder %v12288, 0.0
  %vm12370 = vcmp.gt.f32.partialorder %v12289, 0.0
  %vm12371 = vcmp.gt.f32.partialorder %v12290, 0.0
  %vm12372 = vcmp.gt.f32.partialorder %v12291, 0.0
  %vm12373 = vcmp.gt.f32.partialorder %v12292, 0.0
  %vm12374 = vcmp.gt.f32.partialorder %v12293, 0.0
  %vm12375 = vcmp.gt.f32.partialorder %v12294, 0.0
  %vm12376 = vcmp.gt.f32.partialorder %v12295, 0.0
  %vm12377 = vcmp.gt.f32.partialorder %v12296, 0.0
  %vm12378 = vcmp.gt.f32.partialorder %v12297, 0.0
  %vm12379 = vcmp.gt.f32.partialorder %v12298, 0.0
  %vm12380 = vcmp.gt.f32.partialorder %v12299, 0.0
  %vm12381 = vcmp.gt.f32.partialorder %v12300, 0.0
  %vm12382 = vcmp.gt.f32.partialorder %v12301, 0.0
  %vm12383 = vcmp.gt.f32.partialorder %v12302, 0.0
  %vm12384 = vcmp.gt.f32.partialorder %v12303, 0.0
  %vm12385 = vcmp.gt.f32.partialorder %v12304, 0.0
  %vm12386 = vcmp.gt.f32.partialorder %v12305, 0.0
  %vm12387 = vcmp.gt.f32.partialorder %v12306, 0.0
  %vm12388 = vcmp.gt.f32.partialorder %v12307, 0.0
  %vm12389 = vcmp.gt.f32.partialorder %v12308, 0.0
  %vm12390 = vcmp.gt.f32.partialorder %v12309, 0.0
  %vm12391 = vcmp.gt.f32.partialorder %v12310, 0.0
  %vm12392 = vcmp.gt.f32.partialorder %v12311, 0.0
  %vm12393 = vcmp.gt.f32.partialorder %v12312, 0.0
  %vm12394 = vcmp.gt.f32.partialorder %v12313, 0.0
  %vm12395 = vcmp.gt.f32.partialorder %v12314, 0.0
  %vm12396 = vcmp.gt.f32.partialorder %v12315, 0.0
  %vm12397 = vcmp.gt.f32.partialorder %v12316, 0.0
  %vm12398 = vcmp.gt.f32.partialorder %v12317, 0.0
  %vm12399 = vcmp.gt.f32.partialorder %v12318, 0.0
  %vm12400 = vcmp.gt.f32.partialorder %v12319, 0.0
  %vm12401 = vcmp.gt.f32.partialorder %v12320, 0.0
  %vm12402 = vcmp.gt.f32.partialorder %v12321, 0.0
  %vm12403 = vcmp.gt.f32.partialorder %v12322, 0.0
  %vm12404 = vcmp.gt.f32.partialorder %v12323, 0.0
  %vm12405 = vcmp.gt.f32.partialorder %v12324, 0.0
  %vm12406 = vcmp.gt.f32.partialorder %v12325, 0.0
  %vm12407 = vcmp.gt.f32.partialorder %v12326, 0.0
  %vm12408 = vcmp.gt.f32.partialorder %v12327, 0.0
  %vm12409 = vcmp.gt.f32.partialorder %v12328, 0.0
  %vm12410 = vcmp.gt.f32.partialorder %v12329, 0.0
  %vm12411 = vcmp.gt.f32.partialorder %v12330, 0.0
  %vm12412 = vcmp.gt.f32.partialorder %v12331, 0.0
  %vm12413 = vcmp.gt.f32.partialorder %v12332, 0.0
  %vm12414 = vcmp.gt.f32.partialorder %v12333, 0.0
  %vm12415 = vcmp.gt.f32.partialorder %v12334, 0.0
  %vm12416 = vcmp.gt.f32.partialorder %v12335, 0.0
  %vm12417 = vcmp.gt.f32.partialorder %v12336, 0.0
  %vm12418 = vcmp.gt.f32.partialorder %v12337, 0.0
  %vm12419 = vcmp.gt.f32.partialorder %v12338, 0.0
  %vm12420 = vcmp.gt.f32.partialorder %v12339, 0.0
  %vm12421 = vcmp.gt.f32.partialorder %v12340, 0.0
  %vm12422 = vcmp.gt.f32.partialorder %v12341, 0.0
  %vm12423 = vcmp.gt.f32.partialorder %v12342, 0.0
  %vm12424 = vcmp.gt.f32.partialorder %v12343, 0.0
  %v12425 = vmin.f32 %v12263, 0.0
  %v12426 = vmin.f32 %v12264, 0.0
  %v12427 = vmin.f32 %v12265, 0.0
  %v12428 = vmin.f32 %v12266, 0.0
  %v12429 = vmin.f32 %v12267, 0.0
  %v12430 = vmin.f32 %v12268, 0.0
  %v12431 = vmin.f32 %v12269, 0.0
  %v12432 = vmin.f32 %v12270, 0.0
  %v12433 = vmin.f32 %v12271, 0.0
  %v12434 = vmin.f32 %v12272, 0.0
  %v12435 = vmin.f32 %v12273, 0.0
  %v12436 = vmin.f32 %v12274, 0.0
  %v12437 = vmin.f32 %v12275, 0.0
  %v12438 = vmin.f32 %v12276, 0.0
  %v12439 = vmin.f32 %v12277, 0.0
  %v12440 = vmin.f32 %v12278, 0.0
  %v12441 = vmin.f32 %v12279, 0.0
  %v12442 = vmin.f32 %v12280, 0.0
  %v12443 = vmin.f32 %v12281, 0.0
  %v12444 = vmin.f32 %v12282, 0.0
  %v12445 = vmin.f32 %v12283, 0.0
  %v12446 = vmin.f32 %v12284, 0.0
  %v12447 = vmin.f32 %v12285, 0.0
  %v12448 = vmin.f32 %v12286, 0.0
  %v12449 = vmin.f32 %v12287, 0.0
  %v12450 = vmin.f32 %v12288, 0.0
  %v12451 = vmin.f32 %v12289, 0.0
  %v12452 = vmin.f32 %v12290, 0.0
  %v12453 = vmin.f32 %v12291, 0.0
  %v12454 = vmin.f32 %v12292, 0.0
  %v12455 = vmin.f32 %v12293, 0.0
  %v12456 = vmin.f32 %v12294, 0.0
  %v12457 = vmin.f32 %v12295, 0.0
  %v12458 = vmin.f32 %v12296, 0.0
  %v12459 = vmin.f32 %v12297, 0.0
  %v12460 = vmin.f32 %v12298, 0.0
  %v12461 = vmin.f32 %v12299, 0.0
  %v12462 = vmin.f32 %v12300, 0.0
  %v12463 = vmin.f32 %v12301, 0.0
  %v12464 = vmin.f32 %v12302, 0.0
  %v12465 = vmin.f32 %v12303, 0.0
  %v12466 = vmin.f32 %v12304, 0.0
  %v12467 = vmin.f32 %v12305, 0.0
  %v12468 = vmin.f32 %v12306, 0.0
  %v12469 = vmin.f32 %v12307, 0.0
  %v12470 = vmin.f32 %v12308, 0.0
  %v12471 = vmin.f32 %v12309, 0.0
  %v12472 = vmin.f32 %v12310, 0.0
  %v12473 = vmin.f32 %v12311, 0.0
  %v12474 = vmin.f32 %v12312, 0.0
  %v12475 = vmin.f32 %v12313, 0.0
  %v12476 = vmin.f32 %v12314, 0.0
  %v12477 = vmin.f32 %v12315, 0.0
  %v12478 = vmin.f32 %v12316, 0.0
  %v12479 = vmin.f32 %v12317, 0.0
  %v12480 = vmin.f32 %v12318, 0.0
  %v12481 = vmin.f32 %v12319, 0.0
  %v12482 = vmin.f32 %v12320, 0.0
  %v12483 = vmin.f32 %v12321, 0.0
  %v12484 = vmin.f32 %v12322, 0.0
  %v12485 = vmin.f32 %v12323, 0.0
  %v12486 = vmin.f32 %v12324, 0.0
  %v12487 = vmin.f32 %v12325, 0.0
  %v12488 = vmin.f32 %v12326, 0.0
  %v12489 = vmin.f32 %v12327, 0.0
  %v12490 = vmin.f32 %v12328, 0.0
  %v12491 = vmin.f32 %v12329, 0.0
  %v12492 = vmin.f32 %v12330, 0.0
  %v12493 = vmin.f32 %v12331, 0.0
  %v12494 = vmin.f32 %v12332, 0.0
  %v12495 = vmin.f32 %v12333, 0.0
  %v12496 = vmin.f32 %v12334, 0.0
  %v12497 = vmin.f32 %v12335, 0.0
  %v12498 = vmin.f32 %v12336, 0.0
  %v12499 = vmin.f32 %v12337, 0.0
  %v12500 = vmin.f32 %v12338, 0.0
  %v12501 = vmin.f32 %v12339, 0.0
  %v12502 = vmin.f32 %v12340, 0.0
  %v12503 = vmin.f32 %v12341, 0.0
  %v12504 = vmin.f32 %v12342, 0.0
  %v12505 = vmin.f32 %v12343, 0.0
  %v12506 = vmul.f32 %v12425, 1.442695
  %v12507 = vpow.pop %v12506
  %v12508 = vmul.f32 %v12426, 1.442695
  %v12509 = vpow.pop %v12508
  %v12510 = vmul.f32 %v12427, 1.442695
  %v12511 = vpow.pop %v12510
  %v12512 = vmul.f32 %v12428, 1.442695
  %v12513 = vpow.pop %v12512
  %v12514 = vmul.f32 %v12429, 1.442695
  %v12515 = vpow.pop %v12514
  %v12516 = vmul.f32 %v12430, 1.442695
  %v12517 = vpow.pop %v12516
  %v12518 = vmul.f32 %v12431, 1.442695
  %v12519 = vpow.pop %v12518
  %v12520 = vmul.f32 %v12432, 1.442695
  %v12521 = vpow.pop %v12520
  %v12522 = vmul.f32 %v12433, 1.442695
  %v12523 = vpow.pop %v12522
  %v12524 = vmul.f32 %v12434, 1.442695
  %v12525 = vpow.pop %v12524
  %v12526 = vmul.f32 %v12435, 1.442695
  %v12527 = vpow.pop %v12526
  %v12528 = vmul.f32 %v12436, 1.442695
  %v12529 = vpow.pop %v12528
  %v12530 = vmul.f32 %v12437, 1.442695
  %v12531 = vpow.pop %v12530
  %v12532 = vmul.f32 %v12438, 1.442695
  %v12533 = vpow.pop %v12532
  %v12534 = vmul.f32 %v12439, 1.442695
  %v12535 = vpow.pop %v12534
  %v12536 = vmul.f32 %v12440, 1.442695
  %v12537 = vpow.pop %v12536
  %v12538 = vmul.f32 %v12441, 1.442695
  %v12539 = vpow.pop %v12538
  %v12540 = vmul.f32 %v12442, 1.442695
  %v12541 = vpow.pop %v12540
  %v12542 = vmul.f32 %v12443, 1.442695
  %v12543 = vpow.pop %v12542
  %v12544 = vmul.f32 %v12444, 1.442695
  %v12545 = vpow.pop %v12544
  %v12546 = vmul.f32 %v12445, 1.442695
  %v12547 = vpow.pop %v12546
  %v12548 = vmul.f32 %v12446, 1.442695
  %v12549 = vpow.pop %v12548
  %v12550 = vmul.f32 %v12447, 1.442695
  %v12551 = vpow.pop %v12550
  %v12552 = vmul.f32 %v12448, 1.442695
  %v12553 = vpow.pop %v12552
  %v12554 = vmul.f32 %v12449, 1.442695
  %v12555 = vpow.pop %v12554
  %v12556 = vmul.f32 %v12450, 1.442695
  %v12557 = vpow.pop %v12556
  %v12558 = vmul.f32 %v12451, 1.442695
  %v12559 = vpow.pop %v12558
  %v12560 = vmul.f32 %v12452, 1.442695
  %v12561 = vpow.pop %v12560
  %v12562 = vmul.f32 %v12453, 1.442695
  %v12563 = vpow.pop %v12562
  %v12564 = vmul.f32 %v12454, 1.442695
  %v12565 = vpow.pop %v12564
  %v12566 = vmul.f32 %v12455, 1.442695
  %v12567 = vpow.pop %v12566
  %v12568 = vmul.f32 %v12456, 1.442695
  %v12569 = vpow.pop %v12568
  %v12570 = vmul.f32 %v12457, 1.442695
  %v12571 = vpow.pop %v12570
  %v12572 = vmul.f32 %v12458, 1.442695
  %v12573 = vpow.pop %v12572
  %v12574 = vmul.f32 %v12459, 1.442695
  %v12575 = vpow.pop %v12574
  %v12576 = vmul.f32 %v12460, 1.442695
  %v12577 = vpow.pop %v12576
  %v12578 = vmul.f32 %v12461, 1.442695
  %v12579 = vpow.pop %v12578
  %v12580 = vmul.f32 %v12462, 1.442695
  %v12581 = vpow.pop %v12580
  %v12582 = vmul.f32 %v12463, 1.442695
  %v12583 = vpow.pop %v12582
  %v12584 = vmul.f32 %v12464, 1.442695
  %v12585 = vpow.pop %v12584
  %v12586 = vmul.f32 %v12465, 1.442695
  %v12587 = vpow.pop %v12586
  %v12588 = vmul.f32 %v12466, 1.442695
  %v12589 = vpow.pop %v12588
  %v12590 = vmul.f32 %v12467, 1.442695
  %v12591 = vpow.pop %v12590
  %v12592 = vmul.f32 %v12468, 1.442695
  %v12593 = vpow.pop %v12592
  %v12594 = vmul.f32 %v12469, 1.442695
  %v12595 = vpow.pop %v12594
  %v12596 = vmul.f32 %v12470, 1.442695
  %v12597 = vpow.pop %v12596
  %v12598 = vmul.f32 %v12471, 1.442695
  %v12599 = vpow.pop %v12598
  %v12600 = vmul.f32 %v12472, 1.442695
  %v12601 = vpow.pop %v12600
  %v12602 = vmul.f32 %v12473, 1.442695
  %v12603 = vpow.pop %v12602
  %v12604 = vmul.f32 %v12474, 1.442695
  %v12605 = vpow.pop %v12604
  %v12606 = vmul.f32 %v12475, 1.442695
  %v12607 = vpow.pop %v12606
  %v12608 = vmul.f32 %v12476, 1.442695
  %v12609 = vpow.pop %v12608
  %v12610 = vmul.f32 %v12477, 1.442695
  %v12611 = vpow.pop %v12610
  %v12612 = vmul.f32 %v12478, 1.442695
  %v12613 = vpow.pop %v12612
  %v12614 = vmul.f32 %v12479, 1.442695
  %v12615 = vpow.pop %v12614
  %v12616 = vmul.f32 %v12480, 1.442695
  %v12617 = vpow.pop %v12616
  %v12618 = vmul.f32 %v12481, 1.442695
  %v12619 = vpow.pop %v12618
  %v12620 = vmul.f32 %v12482, 1.442695
  %v12621 = vpow.pop %v12620
  %v12622 = vmul.f32 %v12483, 1.442695
  %v12623 = vpow.pop %v12622
  %v12624 = vmul.f32 %v12484, 1.442695
  %v12625 = vpow.pop %v12624
  %v12626 = vmul.f32 %v12485, 1.442695
  %v12627 = vpow.pop %v12626
  %v12628 = vmul.f32 %v12486, 1.442695
  %v12629 = vpow.pop %v12628
  %v12630 = vmul.f32 %v12487, 1.442695
  %v12631 = vpow.pop %v12630
  %v12632 = vmul.f32 %v12488, 1.442695
  %v12633 = vpow.pop %v12632
  %v12634 = vmul.f32 %v12489, 1.442695
  %v12635 = vpow.pop %v12634
  %v12636 = vmul.f32 %v12490, 1.442695
  %v12637 = vpow.pop %v12636
  %v12638 = vmul.f32 %v12491, 1.442695
  %v12639 = vpow.pop %v12638
  %v12640 = vmul.f32 %v12492, 1.442695
  %v12641 = vpow.pop %v12640
  %v12642 = vmul.f32 %v12493, 1.442695
  %v12643 = vpow.pop %v12642
  %v12644 = vmul.f32 %v12494, 1.442695
  %v12645 = vpow.pop %v12644
  %v12646 = vmul.f32 %v12495, 1.442695
  %v12647 = vpow.pop %v12646
  %v12648 = vmul.f32 %v12496, 1.442695
  %v12649 = vpow.pop %v12648
  %v12650 = vmul.f32 %v12497, 1.442695
  %v12651 = vpow.pop %v12650
  %v12652 = vmul.f32 %v12498, 1.442695
  %v12653 = vpow.pop %v12652
  %v12654 = vmul.f32 %v12499, 1.442695
  %v12655 = vpow.pop %v12654
  %v12656 = vmul.f32 %v12500, 1.442695
  %v12657 = vpow.pop %v12656
  %v12658 = vmul.f32 %v12501, 1.442695
  %v12659 = vpow.pop %v12658
  %v12660 = vmul.f32 %v12502, 1.442695
  %v12661 = vpow.pop %v12660
  %v12662 = vmul.f32 %v12503, 1.442695
  %v12663 = vpow.pop %v12662
  %v12664 = vmul.f32 %v12504, 1.442695
  %v12665 = vpow.pop %v12664
  %v12666 = vmul.f32 %v12505, 1.442695
  %v12667 = vpow.pop %v12666
  %v12668 = vsub.f32 %v12507, 1.0
  %v12669 = vsub.f32 %v12509, 1.0
  %v12670 = vsub.f32 %v12511, 1.0
  %v12671 = vsub.f32 %v12513, 1.0
  %v12672 = vsub.f32 %v12515, 1.0
  %v12673 = vsub.f32 %v12517, 1.0
  %v12674 = vsub.f32 %v12519, 1.0
  %v12675 = vsub.f32 %v12521, 1.0
  %v12676 = vsub.f32 %v12523, 1.0
  %v12677 = vsub.f32 %v12525, 1.0
  %v12678 = vsub.f32 %v12527, 1.0
  %v12679 = vsub.f32 %v12529, 1.0
  %v12680 = vsub.f32 %v12531, 1.0
  %v12681 = vsub.f32 %v12533, 1.0
  %v12682 = vsub.f32 %v12535, 1.0
  %v12683 = vsub.f32 %v12537, 1.0
  %v12684 = vsub.f32 %v12539, 1.0
  %v12685 = vsub.f32 %v12541, 1.0
  %v12686 = vsub.f32 %v12543, 1.0
  %v12687 = vsub.f32 %v12545, 1.0
  %v12688 = vsub.f32 %v12547, 1.0
  %v12689 = vsub.f32 %v12549, 1.0
  %v12690 = vsub.f32 %v12551, 1.0
  %v12691 = vsub.f32 %v12553, 1.0
  %v12692 = vsub.f32 %v12555, 1.0
  %v12693 = vsub.f32 %v12557, 1.0
  %v12694 = vsub.f32 %v12559, 1.0
  %v12695 = vsub.f32 %v12561, 1.0
  %v12696 = vsub.f32 %v12563, 1.0
  %v12697 = vsub.f32 %v12565, 1.0
  %v12698 = vsub.f32 %v12567, 1.0
  %v12699 = vsub.f32 %v12569, 1.0
  %v12700 = vsub.f32 %v12571, 1.0
  %v12701 = vsub.f32 %v12573, 1.0
  %v12702 = vsub.f32 %v12575, 1.0
  %v12703 = vsub.f32 %v12577, 1.0
  %v12704 = vsub.f32 %v12579, 1.0
  %v12705 = vsub.f32 %v12581, 1.0
  %v12706 = vsub.f32 %v12583, 1.0
  %v12707 = vsub.f32 %v12585, 1.0
  %v12708 = vsub.f32 %v12587, 1.0
  %v12709 = vsub.f32 %v12589, 1.0
  %v12710 = vsub.f32 %v12591, 1.0
  %v12711 = vsub.f32 %v12593, 1.0
  %v12712 = vsub.f32 %v12595, 1.0
  %v12713 = vsub.f32 %v12597, 1.0
  %v12714 = vsub.f32 %v12599, 1.0
  %v12715 = vsub.f32 %v12601, 1.0
  %v12716 = vsub.f32 %v12603, 1.0
  %v12717 = vsub.f32 %v12605, 1.0
  %v12718 = vsub.f32 %v12607, 1.0
  %v12719 = vsub.f32 %v12609, 1.0
  %v12720 = vsub.f32 %v12611, 1.0
  %v12721 = vsub.f32 %v12613, 1.0
  %v12722 = vsub.f32 %v12615, 1.0
  %v12723 = vsub.f32 %v12617, 1.0
  %v12724 = vsub.f32 %v12619, 1.0
  %v12725 = vsub.f32 %v12621, 1.0
  %v12726 = vsub.f32 %v12623, 1.0
  %v12727 = vsub.f32 %v12625, 1.0
  %v12728 = vsub.f32 %v12627, 1.0
  %v12729 = vsub.f32 %v12629, 1.0
  %v12730 = vsub.f32 %v12631, 1.0
  %v12731 = vsub.f32 %v12633, 1.0
  %v12732 = vsub.f32 %v12635, 1.0
  %v12733 = vsub.f32 %v12637, 1.0
  %v12734 = vsub.f32 %v12639, 1.0
  %v12735 = vsub.f32 %v12641, 1.0
  %v12736 = vsub.f32 %v12643, 1.0
  %v12737 = vsub.f32 %v12645, 1.0
  %v12738 = vsub.f32 %v12647, 1.0
  %v12739 = vsub.f32 %v12649, 1.0
  %v12740 = vsub.f32 %v12651, 1.0
  %v12741 = vsub.f32 %v12653, 1.0
  %v12742 = vsub.f32 %v12655, 1.0
  %v12743 = vsub.f32 %v12657, 1.0
  %v12744 = vsub.f32 %v12659, 1.0
  %v12745 = vsub.f32 %v12661, 1.0
  %v12746 = vsub.f32 %v12663, 1.0
  %v12747 = vsub.f32 %v12665, 1.0
  %v12748 = vsub.f32 %v12667, 1.0
  %v12749 = vsel %vm12344, %v12263, %v12668
  %v12750 = vsel %vm12345, %v12264, %v12669
  %v12751 = vsel %vm12346, %v12265, %v12670
  %v12752 = vsel %vm12347, %v12266, %v12671
  %v12753 = vsel %vm12348, %v12267, %v12672
  %v12754 = vsel %vm12349, %v12268, %v12673
  %v12755 = vsel %vm12350, %v12269, %v12674
  %v12756 = vsel %vm12351, %v12270, %v12675
  %v12757 = vsel %vm12352, %v12271, %v12676
  %v12758 = vsel %vm12353, %v12272, %v12677
  %v12759 = vsel %vm12354, %v12273, %v12678
  %v12760 = vsel %vm12355, %v12274, %v12679
  %v12761 = vsel %vm12356, %v12275, %v12680
  %v12762 = vsel %vm12357, %v12276, %v12681
  %v12763 = vsel %vm12358, %v12277, %v12682
  %v12764 = vsel %vm12359, %v12278, %v12683
  %v12765 = vsel %vm12360, %v12279, %v12684
  %v12766 = vsel %vm12361, %v12280, %v12685
  %v12767 = vsel %vm12362, %v12281, %v12686
  %v12768 = vsel %vm12363, %v12282, %v12687
  %v12769 = vsel %vm12364, %v12283, %v12688
  %v12770 = vsel %vm12365, %v12284, %v12689
  %v12771 = vsel %vm12366, %v12285, %v12690
  %v12772 = vsel %vm12367, %v12286, %v12691
  %v12773 = vsel %vm12368, %v12287, %v12692
  %v12774 = vsel %vm12369, %v12288, %v12693
  %v12775 = vsel %vm12370, %v12289, %v12694
  %v12776 = vsel %vm12371, %v12290, %v12695
  %v12777 = vsel %vm12372, %v12291, %v12696
  %v12778 = vsel %vm12373, %v12292, %v12697
  %v12779 = vsel %vm12374, %v12293, %v12698
  %v12780 = vsel %vm12375, %v12294, %v12699
  %v12781 = vsel %vm12376, %v12295, %v12700
  %v12782 = vsel %vm12377, %v12296, %v12701
  %v12783 = vsel %vm12378, %v12297, %v12702
  %v12784 = vsel %vm12379, %v12298, %v12703
  %v12785 = vsel %vm12380, %v12299, %v12704
  %v12786 = vsel %vm12381, %v12300, %v12705
  %v12787 = vsel %vm12382, %v12301, %v12706
  %v12788 = vsel %vm12383, %v12302, %v12707
  %v12789 = vsel %vm12384, %v12303, %v12708
  %v12790 = vsel %vm12385, %v12304, %v12709
  %v12791 = vsel %vm12386, %v12305, %v12710
  %v12792 = vsel %vm12387, %v12306, %v12711
  %v12793 = vsel %vm12388, %v12307, %v12712
  %v12794 = vsel %vm12389, %v12308, %v12713
  %v12795 = vsel %vm12390, %v12309, %v12714
  %v12796 = vsel %vm12391, %v12310, %v12715
  %v12797 = vsel %vm12392, %v12311, %v12716
  %v12798 = vsel %vm12393, %v12312, %v12717
  %v12799 = vsel %vm12394, %v12313, %v12718
  %v12800 = vsel %vm12395, %v12314, %v12719
  %v12801 = vsel %vm12396, %v12315, %v12720
  %v12802 = vsel %vm12397, %v12316, %v12721
  %v12803 = vsel %vm12398, %v12317, %v12722
  %v12804 = vsel %vm12399, %v12318, %v12723
  %v12805 = vsel %vm12400, %v12319, %v12724
  %v12806 = vsel %vm12401, %v12320, %v12725
  %v12807 = vsel %vm12402, %v12321, %v12726
  %v12808 = vsel %vm12403, %v12322, %v12727
  %v12809 = vsel %vm12404, %v12323, %v12728
  %v12810 = vsel %vm12405, %v12324, %v12729
  %v12811 = vsel %vm12406, %v12325, %v12730
  %v12812 = vsel %vm12407, %v12326, %v12731
  %v12813 = vsel %vm12408, %v12327, %v12732
  %v12814 = vsel %vm12409, %v12328, %v12733
  %v12815 = vsel %vm12410, %v12329, %v12734
  %v12816 = vsel %vm12411, %v12330, %v12735
  %v12817 = vsel %vm12412, %v12331, %v12736
  %v12818 = vsel %vm12413, %v12332, %v12737
  %v12819 = vsel %vm12414, %v12333, %v12738
  %v12820 = vsel %vm12415, %v12334, %v12739
  %v12821 = vsel %vm12416, %v12335, %v12740
  %v12822 = vsel %vm12417, %v12336, %v12741
  %v12823 = vsel %vm12418, %v12337, %v12742
  %v12824 = vsel %vm12419, %v12338, %v12743
  %v12825 = vsel %vm12420, %v12339, %v12744
  %v12826 = vsel %vm12421, %v12340, %v12745
  %v12827 = vsel %vm12422, %v12341, %v12746
  %v12828 = vsel %vm12423, %v12342, %v12747
  %v12829 = vsel %vm12424, %v12343, %v12748
  %12830 = vst.msk [vmem:[%s17] sm:$0xff] %vm11744, %v12749
  %12831 = vst.msk [vmem:[%s17 + $0x8] sm:$0xff] %vm11744, %v12750
  %12832 = vst.msk [vmem:[%s17 + $0x10] sm:$0xff] %vm11744, %v12751
  %12833 = vst.msk [vmem:[%s17 + $0x18] sm:$0xff] %vm11744, %v12752
  %12834 = vst.msk [vmem:[%s17 + $0x20] sm:$0xff] %vm11744, %v12753
  %12835 = vst.msk [vmem:[%s17 + $0x28] sm:$0xff] %vm11744, %v12754
  %12836 = vst.msk [vmem:[%s17 + $0x30] sm:$0xff] %vm11744, %v12755
  %12837 = vst.msk [vmem:[%s17 + $0x38] sm:$0xff] %vm11744, %v12756
  %12838 = vst.msk [vmem:[%s17 + $0x40] sm:$0xff] %vm11744, %v12757
  %12839 = vst.msk [vmem:[%s17 + $0x48] sm:$0xff] %vm11744, %v12758
  %12840 = vst.msk [vmem:[%s17 + $0x50] sm:$0xff] %vm11744, %v12759
  %12841 = vst.msk [vmem:[%s17 + $0x58] sm:$0xff] %vm11744, %v12760
  %12842 = vst.msk [vmem:[%s17 + $0x60] sm:$0xff] %vm11744, %v12761
  %12843 = vst.msk [vmem:[%s17 + $0x68] sm:$0xff] %vm11744, %v12762
  %12844 = vst.msk [vmem:[%s17 + $0x70] sm:$0xff] %vm11744, %v12763
  %12845 = vst.msk [vmem:[%s17 + $0x78] sm:$0xff] %vm11744, %v12764
  %12846 = vst.msk [vmem:[%s17 + $0x80] sm:$0xff] %vm11744, %v12765
  %12847 = vst.msk [vmem:[%s17 + $0x88] sm:$0xff] %vm11744, %v12766
  %12848 = vst.msk [vmem:[%s17 + $0x90] sm:$0xff] %vm11744, %v12767
  %12849 = vst.msk [vmem:[%s17 + $0x98] sm:$0xff] %vm11744, %v12768
  %12850 = vst.msk [vmem:[%s17 + $0xa0] sm:$0xff] %vm11744, %v12769
  %12851 = vst.msk [vmem:[%s17 + $0xa8] sm:$0xff] %vm11744, %v12770
  %12852 = vst.msk [vmem:[%s17 + $0xb0] sm:$0xff] %vm11744, %v12771
  %12853 = vst.msk [vmem:[%s17 + $0xb8] sm:$0xff] %vm11744, %v12772
  %12854 = vst.msk [vmem:[%s17 + $0xc0] sm:$0xff] %vm11744, %v12773
  %12855 = vst.msk [vmem:[%s17 + $0xc8] sm:$0xff] %vm11744, %v12774
  %12856 = vst.msk [vmem:[%s17 + $0xd0] sm:$0xff] %vm11744, %v12775
  %12857 = vst.msk [vmem:[%s17 + $0xd8] sm:$0xff] %vm11744, %v12776
  %12858 = vst.msk [vmem:[%s17 + $0xe0] sm:$0xff] %vm11744, %v12777
  %12859 = vst.msk [vmem:[%s17 + $0xe8] sm:$0xff] %vm11744, %v12778
  %12860 = vst.msk [vmem:[%s17 + $0xf0] sm:$0xff] %vm11744, %v12779
  %12861 = vst.msk [vmem:[%s17 + $0xf8] sm:$0xff] %vm11744, %v12780
  %12862 = vst.msk [vmem:[%s17 + $0x100] sm:$0xff] %vm11744, %v12781
  %12863 = vst.msk [vmem:[%s17 + $0x108] sm:$0xff] %vm11744, %v12782
  %12864 = vst.msk [vmem:[%s17 + $0x110] sm:$0xff] %vm11744, %v12783
  %12865 = vst.msk [vmem:[%s17 + $0x118] sm:$0xff] %vm11744, %v12784
  %12866 = vst.msk [vmem:[%s17 + $0x120] sm:$0xff] %vm11744, %v12785
  %12867 = vst.msk [vmem:[%s17 + $0x128] sm:$0xff] %vm11744, %v12786
  %12868 = vst.msk [vmem:[%s17 + $0x130] sm:$0xff] %vm11744, %v12787
  %12869 = vst.msk [vmem:[%s17 + $0x138] sm:$0xff] %vm11744, %v12788
  %12870 = vst.msk [vmem:[%s17 + $0x140] sm:$0xff] %vm11744, %v12789
  %12871 = vst.msk [vmem:[%s17 + $0x148] sm:$0xff] %vm11744, %v12790
  %12872 = vst.msk [vmem:[%s17 + $0x150] sm:$0xff] %vm11744, %v12791
  %12873 = vst.msk [vmem:[%s17 + $0x158] sm:$0xff] %vm11744, %v12792
  %12874 = vst.msk [vmem:[%s17 + $0x160] sm:$0xff] %vm11744, %v12793
  %12875 = vst.msk [vmem:[%s17 + $0x168] sm:$0xff] %vm11744, %v12794
  %12876 = vst.msk [vmem:[%s17 + $0x170] sm:$0xff] %vm11744, %v12795
  %12877 = vst.msk [vmem:[%s17 + $0x178] sm:$0xff] %vm11744, %v12796
  %12878 = vst.msk [vmem:[%s17 + $0x180] sm:$0xff] %vm11744, %v12797
  %12879 = vst.msk [vmem:[%s17 + $0x188] sm:$0xff] %vm11744, %v12798
  %12880 = vst.msk [vmem:[%s17 + $0x190] sm:$0xff] %vm11744, %v12799
  %12881 = vst.msk [vmem:[%s17 + $0x198] sm:$0xff] %vm11744, %v12800
  %12882 = vst.msk [vmem:[%s17 + $0x1a0] sm:$0xff] %vm11744, %v12801
  %12883 = vst.msk [vmem:[%s17 + $0x1a8] sm:$0xff] %vm11744, %v12802
  %12884 = vst.msk [vmem:[%s17 + $0x1b0] sm:$0xff] %vm11744, %v12803
  %12885 = vst.msk [vmem:[%s17 + $0x1b8] sm:$0xff] %vm11744, %v12804
  %12886 = vst.msk [vmem:[%s17 + $0x1c0] sm:$0xff] %vm11744, %v12805
  %12887 = vst.msk [vmem:[%s17 + $0x1c8] sm:$0xff] %vm11744, %v12806
  %12888 = vst.msk [vmem:[%s17 + $0x1d0] sm:$0xff] %vm11744, %v12807
  %12889 = vst.msk [vmem:[%s17 + $0x1d8] sm:$0xff] %vm11744, %v12808
  %12890 = vst.msk [vmem:[%s17 + $0x1e0] sm:$0xff] %vm11744, %v12809
  %12891 = vst.msk [vmem:[%s17 + $0x1e8] sm:$0xff] %vm11744, %v12810
  %12892 = vst.msk [vmem:[%s17 + $0x1f0] sm:$0xff] %vm11744, %v12811
  %12893 = vst.msk [vmem:[%s17 + $0x1f8] sm:$0xff] %vm11744, %v12812
  %12894 = vst.msk [vmem:[%s17 + $0x200] sm:$0xff] %vm11744, %v12813
  %12895 = vst.msk [vmem:[%s17 + $0x208] sm:$0xff] %vm11744, %v12814
  %12896 = vst.msk [vmem:[%s17 + $0x210] sm:$0xff] %vm11744, %v12815
  %12897 = vst.msk [vmem:[%s17 + $0x218] sm:$0xff] %vm11744, %v12816
  %12898 = vst.msk [vmem:[%s17 + $0x220] sm:$0xff] %vm11744, %v12817
  %12899 = vst.msk [vmem:[%s17 + $0x228] sm:$0xff] %vm11744, %v12818
  %12900 = vst.msk [vmem:[%s17 + $0x230] sm:$0xff] %vm11744, %v12819
  %12901 = vst.msk [vmem:[%s17 + $0x238] sm:$0xff] %vm11744, %v12820
  %12902 = vst.msk [vmem:[%s17 + $0x240] sm:$0xff] %vm11744, %v12821
  %12903 = vst.msk [vmem:[%s17 + $0x248] sm:$0xff] %vm11744, %v12822
  %12904 = vst.msk [vmem:[%s17 + $0x250] sm:$0xff] %vm11744, %v12823
  %12905 = vst.msk [vmem:[%s17 + $0x258] sm:$0xff] %vm11744, %v12824
  %12906 = vst.msk [vmem:[%s17 + $0x260] sm:$0xff] %vm11744, %v12825
  %12907 = vst.msk [vmem:[%s17 + $0x268] sm:$0xff] %vm11744, %v12826
  %12908 = vst.msk [vmem:[%s17 + $0x270] sm:$0xff] %vm11744, %v12827
  %12909 = vst.msk [vmem:[%s17 + $0x278] sm:$0xff] %vm11744, %v12828
  %12910 = vst.msk [vmem:[%s17 + $0x280] sm:$0xff] %vm11744, %v12829
  // Predicated region
  $region70: #{resconv_L_forward.1} parent=0 // pred_check
    _
  $region71: #{resconv_L_forward.1} parent=0 // pred_check_branch
    %12912 = sbr.rel (0) target = $region73
  $region72: #{resconv_L_forward.1} parent=0 // pred_region
    _
  $region73: #{resconv_L_forward.1} parent=0 // pred_fallthru
    _
  // Predicated region
  $region74: #{resconv_L_forward.1} parent=0 // pred_check
    _
  $region75: #{resconv_L_forward.1} parent=0 // pred_check_branch
    %12914 = sbr.rel (0) target = $region77
  $region76: #{resconv_L_forward.1} parent=0 // pred_region
    _
  $region77: #{resconv_L_forward.1} parent=0 // pred_fallthru
    _

</llo_original>
